<compile_context>
chip_gen: v7x
topology: tpu7x:2x2x1
jax: 0.10.0
libtpu: 0.0.40
codegen_flags: <defaults>
</compile_context>

<pallas_src>
import functools

import jax
import jax.numpy as jnp
from jax.experimental import pallas as pl
from jax.experimental.pallas import tpu as pltpu

_GUARD = 8  # guard rows around the flat VMEM staging buffers (multiple of 8)


def _basic_block_kernel(x_ref, w1_ref, w2_ref, bias_ref, o_ref,
                        xbuf_ref, hbuf_ref, *, Wp, TH, CP):
    """One (batch, row-strip) tile per grid step.

    x_ref   : (H+4, Wp, CP) bf16  padded image of this batch element
                                  (2 rows top/bottom, cols [1, W+1) hold data)
    w*_ref  : (9*CP, CP)    bf16  BN-scale-folded conv weights, tap-major
    bias_ref: (Wp+8, CP)    f32   rows [0,Wp): conv1 bias (-1e30 on pad cols),
                                  rows [Wp,Wp+8): conv2 bias
    o_ref   : (TH, Wp, CP)  bf16  output strip (padded width, padded channels)
    xbuf_ref: ((TH+4)*Wp + 16, CP) bf16  flat staged x window (+ guards)
    hbuf_ref: ((TH+2)*Wp + 16, CP) bf16  flat hidden activation (+ guards)
    """
    i = pl.program_id(1)
    n_strips = pl.num_programs(1)
    GB = _GUARD
    M1 = (TH + 2) * Wp          # conv1 rows: strip + 1-row halo top & bottom
    M2 = TH * Wp                # conv2 / output rows

    # --- stage this strip's x window into a flat VMEM buffer ----------------
    # Dynamic index only on the outer (row) dim; the reshape is layout
    # preserving because Wp % 8 == 0 and CP % 128 == 0.
    r0 = pl.multiple_of(i * TH, TH)
    xwin = x_ref[pl.ds(r0, TH + 4), :, :]                     # (TH+4, Wp, CP)
    xbuf_ref[pl.ds(0, GB), :] = jnp.zeros((GB, CP), jnp.bfloat16)
    xbuf_ref[pl.ds(GB + (TH + 4) * Wp, GB), :] = jnp.zeros((GB, CP),
                                                           jnp.bfloat16)
    xbuf_ref[pl.ds(GB, (TH + 4) * Wp), :] = xwin.reshape((TH + 4) * Wp, CP)

    # --- conv1: 9 accumulating MXU matmuls; each tap is a STATIC slice ------
    # tap(kh,kw)[j*Wp + wp] = x_pad[i*TH + j + kh, wp + kw - 1]
    acc1 = None
    for kh in range(3):
        for kw in range(3):
            k = kh * 3 + kw
            tap = xbuf_ref[pl.ds(GB + kh * Wp + (kw - 1), M1), :]
            part = jnp.dot(tap, w1_ref[k * CP:(k + 1) * CP, :],
                           preferred_element_type=jnp.float32)
            acc1 = part if acc1 is None else acc1 + part

    # --- bn1 bias + relu (column padding folded into the bias as -1e30) -----
    # TODO(synk): dropout is identity here (p=0 default / eval mode); no RNG.
    h = jnp.maximum(acc1.reshape(TH + 2, Wp, CP) + bias_ref[0:Wp, :], 0.0)

    # --- stage hidden activation (flat, contiguous) --------------------------
    hbuf_ref[pl.ds(0, GB), :] = jnp.zeros((GB, CP), jnp.bfloat16)
    hbuf_ref[pl.ds(GB + M1, GB), :] = jnp.zeros((GB, CP), jnp.bfloat16)
    hbuf_ref[pl.ds(GB, M1), :] = h.astype(jnp.bfloat16).reshape(M1, CP)

    # Halo rows outside the image act as conv2's zero row padding.
    @pl.when(i == 0)
    def _():
        hbuf_ref[pl.ds(GB, Wp), :] = jnp.zeros((Wp, CP), jnp.bfloat16)

    @pl.when(i == n_strips - 1)
    def _():
        hbuf_ref[pl.ds(GB + (TH + 1) * Wp, Wp), :] = jnp.zeros((Wp, CP),
                                                               jnp.bfloat16)

    # --- conv2: 9 accumulating MXU matmuls from the flat hidden buffer -------
    acc2 = None
    for kh in range(3):
        for kw in range(3):
            k = kh * 3 + kw
            tap = hbuf_ref[pl.ds(GB + kh * Wp + (kw - 1), M2), :]
            part = jnp.dot(tap, w2_ref[k * CP:(k + 1) * CP, :],
                           preferred_element_type=jnp.float32)
            acc2 = part if acc2 is None else acc2 + part

    # --- bn2 bias + residual add + relu; contiguous full-width bf16 store ----
    z = acc2 + bias_ref[Wp:Wp + 1, :]
    residual = xbuf_ref[pl.ds(GB + 2 * Wp, M2), :].astype(jnp.float32)
    z = jnp.maximum(z + residual, 0.0)
    o_ref[...] = z.astype(jnp.bfloat16).reshape(TH, Wp, CP)


def basic_block_forward(x_nchw, w1_oihw, w2_oihw,
                        gamma1, beta1, mean1, var1,
                        gamma2, beta2, mean2, var2, eps=1e-5):
    """x_nchw: (N, Cin, H, W) f32, PyTorch layout. Returns (N, Cout, H, W) f32."""
    N, Cin, H, W = x_nchw.shape
    Cout = w1_oihw.shape[0]
    # downsample=None / stride=1 path only (module defaults).
    assert Cin == Cout, "downsample=None path requires inplanes == planes"

    CP = ((max(Cin, Cout) + 127) // 128) * 128        # lane-dense channels
    Wp = ((W + 2 + 7) // 8) * 8                       # padded width, mult of 8
    # Strip height: largest divisor of H <= 32 (amortizes the 2-row halo).
    TH = max(d for d in range(1, min(H, 32) + 1) if H % d == 0)
    if TH < 4:                                        # degenerate (prime) H
        TH = H
    n_strips = H // TH

    # One fused prep pass: NCHW -> NHWC, bf16, rows +2/+2, cols to [1, W+1)
    # inside width Wp, channels to CP.
    x_prep = jnp.pad(
        jnp.transpose(x_nchw, (0, 2, 3, 1)).astype(jnp.bfloat16),
        ((0, 0), (2, 2), (1, Wp - W - 1), (0, CP - Cin)))  # (N, H+4, Wp, CP)

    def fold_bn(gamma, beta, mean, var):
        s = gamma / jnp.sqrt(var + eps)
        return s.astype(jnp.float32), (beta - mean * s).astype(jnp.float32)

    s1, b1 = fold_bn(gamma1, beta1, mean1, var1)
    s2, b2 = fold_bn(gamma2, beta2, mean2, var2)

    def prep_w(w_oihw, scale):
        # Fold the BN scale (per output channel) into the conv weight, then
        # lay out tap-major: rows (kh*3+kw)*CP + cin, cols cout, bf16.
        w = w_oihw.astype(jnp.float32) * scale[:, None, None, None]
        w = jnp.transpose(w, (2, 3, 1, 0))                     # (3,3,Cin,Cout)
        w = jnp.pad(w, ((0, 0), (0, 0), (0, CP - Cin), (0, CP - Cout)))
        return w.reshape(9 * CP, CP).astype(jnp.bfloat16)

    w1m = prep_w(w1_oihw, s1)
    w2m = prep_w(w2_oihw, s2)

    # Packed per-column bias: rows [0,Wp) = conv1 bias with -1e30 on padded
    # columns (relu then realizes conv2's zero column padding); rows [Wp,Wp+8)
    # = conv2 bias (replicated).
    col = jnp.arange(Wp)
    valid = jnp.logical_and(col >= 1, col <= W)[:, None]       # (Wp, 1)
    b1p = jnp.pad(b1, (0, CP - Cout))
    b2p = jnp.pad(b2, (0, CP - Cout))
    bias_pack = jnp.concatenate(
        [jnp.where(valid, b1p[None, :], -1e30),
         jnp.broadcast_to(b2p[None, :], (8, CP))],
        axis=0).astype(jnp.float32)                            # (Wp+8, CP)

    kernel = functools.partial(_basic_block_kernel, Wp=Wp, TH=TH, CP=CP)

    out = pl.pallas_call(
        kernel,
        out_shape=jax.ShapeDtypeStruct((N, H, Wp, CP), jnp.bfloat16),
        grid_spec=pltpu.PrefetchScalarGridSpec(
            num_scalar_prefetch=0,
            grid=(N, n_strips),
            in_specs=[
                # Full padded image of one batch element; block index depends
                # only on b so it stays resident across the strip axis.
                pl.BlockSpec((None, H + 4, Wp, CP), lambda b, i: (b, 0, 0, 0)),
                pl.BlockSpec((9 * CP, CP), lambda b, i: (0, 0)),
                pl.BlockSpec((9 * CP, CP), lambda b, i: (0, 0)),
                pl.BlockSpec((Wp + 8, CP), lambda b, i: (0, 0)),
            ],
            out_specs=pl.BlockSpec((None, TH, Wp, CP), lambda b, i: (b, i, 0, 0)),
            scratch_shapes=[
                pltpu.VMEM(((TH + 4) * Wp + 2 * _GUARD, CP), jnp.bfloat16),
                pltpu.VMEM(((TH + 2) * Wp + 2 * _GUARD, CP), jnp.bfloat16),
            ],
        ),
        compiler_params=pltpu.CompilerParams(
            dimension_semantics=("parallel", "parallel"),
            vmem_limit_bytes=32 * 1024 * 1024),
    )(x_prep, w1m, w2m, bias_pack)

    # Drop column/channel padding, NHWC -> NCHW, f32 for PyTorch API parity.
    return jnp.transpose(out[:, :, 1:W + 1, :Cout],
                         (0, 3, 1, 2)).astype(jnp.float32)


def _reference_forward(x, w1, w2, g1, be1, m1, v1, g2, be2, m2, v2, eps=1e-5):
    """Plain-JAX reference with the same quantization points as the kernel."""
    f32 = jnp.float32
    xq = x.astype(jnp.bfloat16).astype(f32)
    s1 = g1 / jnp.sqrt(v1 + eps)
    b1 = be1 - m1 * s1
    s2 = g2 / jnp.sqrt(v2 + eps)
    b2 = be2 - m2 * s2
    w1q = (w1 * s1[:, None, None, None]).astype(jnp.bfloat16).astype(f32)
    w2q = (w2 * s2[:, None, None, None]).astype(jnp.bfloat16).astype(f32)

    def conv(a, w):
        return jax.lax.conv_general_dilated(
            a, w, window_strides=(1, 1), padding=((1, 1), (1, 1)),
            dimension_numbers=("NCHW", "OIHW", "NCHW"),
            precision=jax.lax.Precision.HIGHEST)

    h = jnp.maximum(conv(xq, w1q) + b1.reshape(1, -1, 1, 1), 0.0)
    h = h.astype(jnp.bfloat16).astype(f32)
    out = conv(h, w2q) + b2.reshape(1, -1, 1, 1)
    out = jnp.maximum(out + xq, 0.0)
    return out.astype(jnp.bfloat16).astype(f32)


if __name__ == "__main__":
    N, C, H, W = 2, 4, 16, 16  # inplanes = planes = 4, stride = 1
    key = jax.random.PRNGKey(0)
    keys = jax.random.split(key, 11)

    x = jax.random.normal(keys[0], (N, C, H, W), dtype=jnp.float32)
    w1 = jax.random.normal(keys[1], (C, C, 3, 3), dtype=jnp.float32) * 0.1
    w2 = jax.random.normal(keys[2], (C, C, 3, 3), dtype=jnp.float32) * 0.1
    gamma1 = jax.random.uniform(keys[3], (C,), minval=0.5, maxval=1.5)
    beta1 = jax.random.normal(keys[4], (C,)) * 0.1
    mean1 = jax.random.normal(keys[5], (C,)) * 0.1
    var1 = jax.random.uniform(keys[6], (C,), minval=0.5, maxval=1.5)
    gamma2 = jax.random.uniform(keys[7], (C,), minval=0.5, maxval=1.5)
    beta2 = jax.random.normal(keys[8], (C,)) * 0.1
    mean2 = jax.random.normal(keys[9], (C,)) * 0.1
    var2 = jax.random.uniform(keys[10], (C,), minval=0.5, maxval=1.5)

    out = basic_block_forward(x, w1, w2, gamma1, beta1, mean1, var1,
                              gamma2, beta2, mean2, var2)
    out = jax.block_until_ready(out)

    ref = _reference_forward(x, w1, w2, gamma1, beta1, mean1, var1,
                             gamma2, beta2, mean2, var2)
    assert out.shape == (N, C, H, W)
    assert jnp.allclose(out, ref, atol=2e-2, rtol=2e-2), "mismatch vs reference"

    print("KERNEL_OK")
</pallas_src>

<mosaic_0001>
module attributes {stable_mosaic.version = 11 : i64} {
  func.func @_basic_block_kernel(%arg0: i32, %arg1: i32, %arg2: memref<1x20x24x128xbf16, #tpu.memory_space<vmem>>, %arg3: memref<1152x128xbf16, #tpu.memory_space<vmem>>, %arg4: memref<1152x128xbf16, #tpu.memory_space<vmem>>, %arg5: memref<32x128xf32, #tpu.memory_space<vmem>>, %arg6: memref<1x16x24x128xbf16, #tpu.memory_space<vmem>>, %arg7: memref<496x128xbf16, #tpu.memory_space<vmem>>, %arg8: memref<448x128xbf16, #tpu.memory_space<vmem>>) attributes {dimension_semantics = [#tpu.dimension_semantics<parallel>, #tpu.dimension_semantics<parallel>], iteration_bounds = array<i64: 2, 1>, scalar_prefetch = 0 : i64, scratch_operands = 2 : i64, tpu.core_type = #tpu.core_type<tc>, window_params = [{transform_indices = @transform_0, window_bounds = array<i64: 1, 20, 24, 128>}, {pipeline_mode = #tpu.pipeline_mode<synchronous>, transform_indices = @transform_1, window_bounds = array<i64: 1152, 128>}, {pipeline_mode = #tpu.pipeline_mode<synchronous>, transform_indices = @transform_2, window_bounds = array<i64: 1152, 128>}, {pipeline_mode = #tpu.pipeline_mode<synchronous>, transform_indices = @transform_3, window_bounds = array<i64: 32, 128>}, {transform_indices = @transform_4, window_bounds = array<i64: 1, 16, 24, 128>}]} {
    %c16_i32 = arith.constant 16 : i32
    %0 = arith.muli %arg1, %c16_i32 : i32
    %1 = tpu.assume_multiple %0, 16 : i32
    %c0 = arith.constant 0 : index
    %2 = arith.index_cast %1 : i32 to index
    %c0_0 = arith.constant 0 : index
    %c0_1 = arith.constant 0 : index
    %3 = vector.load %arg2[%c0, %2, %c0_0, %c0_1] : memref<1x20x24x128xbf16, #tpu.memory_space<vmem>>, vector<1x20x24x128xbf16>
    %4 = vector.shape_cast %3 : vector<1x20x24x128xbf16> to vector<20x24x128xbf16>
    %cst = arith.constant 0.000000e+00 : bf16
    %5 = vector.broadcast %cst : bf16 to vector<8x128xbf16>
    %c0_2 = arith.constant 0 : index
    %c0_3 = arith.constant 0 : index
    %6 = vector.load %arg7[%c0_2, %c0_3] : memref<496x128xbf16, #tpu.memory_space<vmem>>, vector<8x128xbf16>
    tpu.vector_store %arg7[%c0_2, %c0_3], %5 {strides = array<i32>} : memref<496x128xbf16, #tpu.memory_space<vmem>>, vector<8x128xbf16>,
    %cst_4 = arith.constant 0.000000e+00 : bf16
    %7 = vector.broadcast %cst_4 : bf16 to vector<8x128xbf16>
    %c488 = arith.constant 488 : index
    %c0_5 = arith.constant 0 : index
    %8 = vector.load %arg7[%c488, %c0_5] : memref<496x128xbf16, #tpu.memory_space<vmem>>, vector<8x128xbf16>
    tpu.vector_store %arg7[%c488, %c0_5], %7 {strides = array<i32>} : memref<496x128xbf16, #tpu.memory_space<vmem>>, vector<8x128xbf16>,
    %9 = vector.shape_cast %4 : vector<20x24x128xbf16> to vector<480x128xbf16>
    %c8 = arith.constant 8 : index
    %c0_6 = arith.constant 0 : index
    %10 = vector.load %arg7[%c8, %c0_6] : memref<496x128xbf16, #tpu.memory_space<vmem>>, vector<480x128xbf16>
    tpu.vector_store %arg7[%c8, %c0_6], %9 {strides = array<i32>} : memref<496x128xbf16, #tpu.memory_space<vmem>>, vector<480x128xbf16>,
    %c7 = arith.constant 7 : index
    %c0_7 = arith.constant 0 : index
    %11 = vector.load %arg7[%c7, %c0_7] : memref<496x128xbf16, #tpu.memory_space<vmem>>, vector<432x128xbf16>
    %c0_8 = arith.constant 0 : index
    %c0_9 = arith.constant 0 : index
    %12 = vector.load %arg3[%c0_8, %c0_9] : memref<1152x128xbf16, #tpu.memory_space<vmem>>, vector<128x128xbf16>
    %cst_10 = arith.constant dense<0.000000e+00> : vector<432x128xf32>
    %13 = tpu.matmul %11, %12, %cst_10 {dimension_numbers = #tpu.dot_dimension_numbers<[1], [0], [0], [1], [0, 0, 1, 1], [], []>} : vector<432x128xbf16>, vector<128x128xbf16>, vector<432x128xf32> -> vector<432x128xf32>
    %c8_11 = arith.constant 8 : index
    %c0_12 = arith.constant 0 : index
    %14 = vector.load %arg7[%c8_11, %c0_12] : memref<496x128xbf16, #tpu.memory_space<vmem>>, vector<432x128xbf16>
    %c128 = arith.constant 128 : index
    %c0_13 = arith.constant 0 : index
    %15 = vector.load %arg3[%c128, %c0_13] : memref<1152x128xbf16, #tpu.memory_space<vmem>>, vector<128x128xbf16>
    %cst_14 = arith.constant dense<0.000000e+00> : vector<432x128xf32>
    %16 = tpu.matmul %14, %15, %cst_14 {dimension_numbers = #tpu.dot_dimension_numbers<[1], [0], [0], [1], [0, 0, 1, 1], [], []>} : vector<432x128xbf16>, vector<128x128xbf16>, vector<432x128xf32> -> vector<432x128xf32>
    %17 = arith.addf %13, %16 : vector<432x128xf32>
    %c9 = arith.constant 9 : index
    %c0_15 = arith.constant 0 : index
    %18 = vector.load %arg7[%c9, %c0_15] : memref<496x128xbf16, #tpu.memory_space<vmem>>, vector<432x128xbf16>
    %c256 = arith.constant 256 : index
    %c0_16 = arith.constant 0 : index
    %19 = vector.load %arg3[%c256, %c0_16] : memref<1152x128xbf16, #tpu.memory_space<vmem>>, vector<128x128xbf16>
    %cst_17 = arith.constant dense<0.000000e+00> : vector<432x128xf32>
    %20 = tpu.matmul %18, %19, %cst_17 {dimension_numbers = #tpu.dot_dimension_numbers<[1], [0], [0], [1], [0, 0, 1, 1], [], []>} : vector<432x128xbf16>, vector<128x128xbf16>, vector<432x128xf32> -> vector<432x128xf32>
    %21 = arith.addf %17, %20 : vector<432x128xf32>
    %c31 = arith.constant 31 : index
    %c0_18 = arith.constant 0 : index
    %22 = vector.load %arg7[%c31, %c0_18] : memref<496x128xbf16, #tpu.memory_space<vmem>>, vector<432x128xbf16>
    %c384 = arith.constant 384 : index
    %c0_19 = arith.constant 0 : index
    %23 = vector.load %arg3[%c384, %c0_19] : memref<1152x128xbf16, #tpu.memory_space<vmem>>, vector<128x128xbf16>
    %cst_20 = arith.constant dense<0.000000e+00> : vector<432x128xf32>
    %24 = tpu.matmul %22, %23, %cst_20 {dimension_numbers = #tpu.dot_dimension_numbers<[1], [0], [0], [1], [0, 0, 1, 1], [], []>} : vector<432x128xbf16>, vector<128x128xbf16>, vector<432x128xf32> -> vector<432x128xf32>
    %25 = arith.addf %21, %24 : vector<432x128xf32>
    %c32 = arith.constant 32 : index
    %c0_21 = arith.constant 0 : index
    %26 = vector.load %arg7[%c32, %c0_21] : memref<496x128xbf16, #tpu.memory_space<vmem>>, vector<432x128xbf16>
    %c512 = arith.constant 512 : index
    %c0_22 = arith.constant 0 : index
    %27 = vector.load %arg3[%c512, %c0_22] : memref<1152x128xbf16, #tpu.memory_space<vmem>>, vector<128x128xbf16>
    %cst_23 = arith.constant dense<0.000000e+00> : vector<432x128xf32>
    %28 = tpu.matmul %26, %27, %cst_23 {dimension_numbers = #tpu.dot_dimension_numbers<[1], [0], [0], [1], [0, 0, 1, 1], [], []>} : vector<432x128xbf16>, vector<128x128xbf16>, vector<432x128xf32> -> vector<432x128xf32>
    %29 = arith.addf %25, %28 : vector<432x128xf32>
    %c33 = arith.constant 33 : index
    %c0_24 = arith.constant 0 : index
    %30 = vector.load %arg7[%c33, %c0_24] : memref<496x128xbf16, #tpu.memory_space<vmem>>, vector<432x128xbf16>
    %c640 = arith.constant 640 : index
    %c0_25 = arith.constant 0 : index
    %31 = vector.load %arg3[%c640, %c0_25] : memref<1152x128xbf16, #tpu.memory_space<vmem>>, vector<128x128xbf16>
    %cst_26 = arith.constant dense<0.000000e+00> : vector<432x128xf32>
    %32 = tpu.matmul %30, %31, %cst_26 {dimension_numbers = #tpu.dot_dimension_numbers<[1], [0], [0], [1], [0, 0, 1, 1], [], []>} : vector<432x128xbf16>, vector<128x128xbf16>, vector<432x128xf32> -> vector<432x128xf32>
    %33 = arith.addf %29, %32 : vector<432x128xf32>
    %c55 = arith.constant 55 : index
    %c0_27 = arith.constant 0 : index
    %34 = vector.load %arg7[%c55, %c0_27] : memref<496x128xbf16, #tpu.memory_space<vmem>>, vector<432x128xbf16>
    %c768 = arith.constant 768 : index
    %c0_28 = arith.constant 0 : index
    %35 = vector.load %arg3[%c768, %c0_28] : memref<1152x128xbf16, #tpu.memory_space<vmem>>, vector<128x128xbf16>
    %cst_29 = arith.constant dense<0.000000e+00> : vector<432x128xf32>
    %36 = tpu.matmul %34, %35, %cst_29 {dimension_numbers = #tpu.dot_dimension_numbers<[1], [0], [0], [1], [0, 0, 1, 1], [], []>} : vector<432x128xbf16>, vector<128x128xbf16>, vector<432x128xf32> -> vector<432x128xf32>
    %37 = arith.addf %33, %36 : vector<432x128xf32>
    %c56 = arith.constant 56 : index
    %c0_30 = arith.constant 0 : index
    %38 = vector.load %arg7[%c56, %c0_30] : memref<496x128xbf16, #tpu.memory_space<vmem>>, vector<432x128xbf16>
    %c896 = arith.constant 896 : index
    %c0_31 = arith.constant 0 : index
    %39 = vector.load %arg3[%c896, %c0_31] : memref<1152x128xbf16, #tpu.memory_space<vmem>>, vector<128x128xbf16>
    %cst_32 = arith.constant dense<0.000000e+00> : vector<432x128xf32>
    %40 = tpu.matmul %38, %39, %cst_32 {dimension_numbers = #tpu.dot_dimension_numbers<[1], [0], [0], [1], [0, 0, 1, 1], [], []>} : vector<432x128xbf16>, vector<128x128xbf16>, vector<432x128xf32> -> vector<432x128xf32>
    %41 = arith.addf %37, %40 : vector<432x128xf32>
    %c57 = arith.constant 57 : index
    %c0_33 = arith.constant 0 : index
    %42 = vector.load %arg7[%c57, %c0_33] : memref<496x128xbf16, #tpu.memory_space<vmem>>, vector<432x128xbf16>
    %c1024 = arith.constant 1024 : index
    %c0_34 = arith.constant 0 : index
    %43 = vector.load %arg3[%c1024, %c0_34] : memref<1152x128xbf16, #tpu.memory_space<vmem>>, vector<128x128xbf16>
    %cst_35 = arith.constant dense<0.000000e+00> : vector<432x128xf32>
    %44 = tpu.matmul %42, %43, %cst_35 {dimension_numbers = #tpu.dot_dimension_numbers<[1], [0], [0], [1], [0, 0, 1, 1], [], []>} : vector<432x128xbf16>, vector<128x128xbf16>, vector<432x128xf32> -> vector<432x128xf32>
    %45 = arith.addf %41, %44 : vector<432x128xf32>
    %46 = vector.shape_cast %45 : vector<432x128xf32> to vector<18x24x128xf32>
    %c0_36 = arith.constant 0 : index
    %c0_37 = arith.constant 0 : index
    %47 = vector.load %arg5[%c0_36, %c0_37] : memref<32x128xf32, #tpu.memory_space<vmem>>, vector<24x128xf32>
    %48 = vector.shape_cast %47 : vector<24x128xf32> to vector<1x24x128xf32>
    %49 = vector.broadcast %48 : vector<1x24x128xf32> to vector<18x24x128xf32>
    %50 = arith.addf %46, %49 : vector<18x24x128xf32>
    %cst_38 = arith.constant 0.000000e+00 : f32
    %51 = vector.broadcast %cst_38 : f32 to vector<18x24x128xf32>
    %52 = arith.maximumf %50, %51 : vector<18x24x128xf32>
    %cst_39 = arith.constant 0.000000e+00 : bf16
    %53 = vector.broadcast %cst_39 : bf16 to vector<8x128xbf16>
    %c0_40 = arith.constant 0 : index
    %c0_41 = arith.constant 0 : index
    %54 = vector.load %arg8[%c0_40, %c0_41] : memref<448x128xbf16, #tpu.memory_space<vmem>>, vector<8x128xbf16>
    tpu.vector_store %arg8[%c0_40, %c0_41], %53 {strides = array<i32>} : memref<448x128xbf16, #tpu.memory_space<vmem>>, vector<8x128xbf16>,
    %cst_42 = arith.constant 0.000000e+00 : bf16
    %55 = vector.broadcast %cst_42 : bf16 to vector<8x128xbf16>
    %c440 = arith.constant 440 : index
    %c0_43 = arith.constant 0 : index
    %56 = vector.load %arg8[%c440, %c0_43] : memref<448x128xbf16, #tpu.memory_space<vmem>>, vector<8x128xbf16>
    tpu.vector_store %arg8[%c440, %c0_43], %55 {strides = array<i32>} : memref<448x128xbf16, #tpu.memory_space<vmem>>, vector<8x128xbf16>,
    %57 = arith.truncf %52 : vector<18x24x128xf32> to vector<18x24x128xbf16>
    %58 = vector.shape_cast %57 : vector<18x24x128xbf16> to vector<432x128xbf16>
    %c8_44 = arith.constant 8 : index
    %c0_45 = arith.constant 0 : index
    %59 = vector.load %arg8[%c8_44, %c0_45] : memref<448x128xbf16, #tpu.memory_space<vmem>>, vector<432x128xbf16>
    tpu.vector_store %arg8[%c8_44, %c0_45], %58 {strides = array<i32>} : memref<448x128xbf16, #tpu.memory_space<vmem>>, vector<432x128xbf16>,
    %c0_i32 = arith.constant 0 : i32
    %60 = arith.cmpi eq, %arg1, %c0_i32 : i32
    %61 = arith.extui %60 : i1 to i32
    %c0_i32_46 = arith.constant 0 : i32
    %62 = arith.cmpi ne, %61, %c0_i32_46 : i32
    scf.if %62 {
      %cst_102 = arith.constant 0.000000e+00 : bf16
      %114 = vector.broadcast %cst_102 : bf16 to vector<24x128xbf16>
      %c8_103 = arith.constant 8 : index
      %c0_104 = arith.constant 0 : index
      %115 = vector.load %arg8[%c8_103, %c0_104] : memref<448x128xbf16, #tpu.memory_space<vmem>>, vector<24x128xbf16>
      tpu.vector_store %arg8[%c8_103, %c0_104], %114 {strides = array<i32>} : memref<448x128xbf16, #tpu.memory_space<vmem>>, vector<24x128xbf16>,
    } else {
    }
    %c0_i32_47 = arith.constant 0 : i32
    %63 = arith.cmpi eq, %arg1, %c0_i32_47 : i32
    %64 = arith.extui %63 : i1 to i32
    %c0_i32_48 = arith.constant 0 : i32
    %65 = arith.cmpi ne, %64, %c0_i32_48 : i32
    scf.if %65 {
      %cst_102 = arith.constant 0.000000e+00 : bf16
      %114 = vector.broadcast %cst_102 : bf16 to vector<24x128xbf16>
      %c416 = arith.constant 416 : index
      %c0_103 = arith.constant 0 : index
      %115 = vector.load %arg8[%c416, %c0_103] : memref<448x128xbf16, #tpu.memory_space<vmem>>, vector<24x128xbf16>
      tpu.vector_store %arg8[%c416, %c0_103], %114 {strides = array<i32>} : memref<448x128xbf16, #tpu.memory_space<vmem>>, vector<24x128xbf16>,
    } else {
    }
    %c7_49 = arith.constant 7 : index
    %c0_50 = arith.constant 0 : index
    %66 = vector.load %arg8[%c7_49, %c0_50] : memref<448x128xbf16, #tpu.memory_space<vmem>>, vector<384x128xbf16>
    %c0_51 = arith.constant 0 : index
    %c0_52 = arith.constant 0 : index
    %67 = vector.load %arg4[%c0_51, %c0_52] : memref<1152x128xbf16, #tpu.memory_space<vmem>>, vector<128x128xbf16>
    %cst_53 = arith.constant dense<0.000000e+00> : vector<384x128xf32>
    %68 = tpu.matmul %66, %67, %cst_53 {dimension_numbers = #tpu.dot_dimension_numbers<[1], [0], [0], [1], [0, 0, 1, 1], [], []>} : vector<384x128xbf16>, vector<128x128xbf16>, vector<384x128xf32> -> vector<384x128xf32>
    %c8_54 = arith.constant 8 : index
    %c0_55 = arith.constant 0 : index
    %69 = vector.load %arg8[%c8_54, %c0_55] : memref<448x128xbf16, #tpu.memory_space<vmem>>, vector<384x128xbf16>
    %c128_56 = arith.constant 128 : index
    %c0_57 = arith.constant 0 : index
    %70 = vector.load %arg4[%c128_56, %c0_57] : memref<1152x128xbf16, #tpu.memory_space<vmem>>, vector<128x128xbf16>
    %cst_58 = arith.constant dense<0.000000e+00> : vector<384x128xf32>
    %71 = tpu.matmul %69, %70, %cst_58 {dimension_numbers = #tpu.dot_dimension_numbers<[1], [0], [0], [1], [0, 0, 1, 1], [], []>} : vector<384x128xbf16>, vector<128x128xbf16>, vector<384x128xf32> -> vector<384x128xf32>
    %72 = arith.addf %68, %71 : vector<384x128xf32>
    %c9_59 = arith.constant 9 : index
    %c0_60 = arith.constant 0 : index
    %73 = vector.load %arg8[%c9_59, %c0_60] : memref<448x128xbf16, #tpu.memory_space<vmem>>, vector<384x128xbf16>
    %c256_61 = arith.constant 256 : index
    %c0_62 = arith.constant 0 : index
    %74 = vector.load %arg4[%c256_61, %c0_62] : memref<1152x128xbf16, #tpu.memory_space<vmem>>, vector<128x128xbf16>
    %cst_63 = arith.constant dense<0.000000e+00> : vector<384x128xf32>
    %75 = tpu.matmul %73, %74, %cst_63 {dimension_numbers = #tpu.dot_dimension_numbers<[1], [0], [0], [1], [0, 0, 1, 1], [], []>} : vector<384x128xbf16>, vector<128x128xbf16>, vector<384x128xf32> -> vector<384x128xf32>
    %76 = arith.addf %72, %75 : vector<384x128xf32>
    %c31_64 = arith.constant 31 : index
    %c0_65 = arith.constant 0 : index
    %77 = vector.load %arg8[%c31_64, %c0_65] : memref<448x128xbf16, #tpu.memory_space<vmem>>, vector<384x128xbf16>
    %c384_66 = arith.constant 384 : index
    %c0_67 = arith.constant 0 : index
    %78 = vector.load %arg4[%c384_66, %c0_67] : memref<1152x128xbf16, #tpu.memory_space<vmem>>, vector<128x128xbf16>
    %cst_68 = arith.constant dense<0.000000e+00> : vector<384x128xf32>
    %79 = tpu.matmul %77, %78, %cst_68 {dimension_numbers = #tpu.dot_dimension_numbers<[1], [0], [0], [1], [0, 0, 1, 1], [], []>} : vector<384x128xbf16>, vector<128x128xbf16>, vector<384x128xf32> -> vector<384x128xf32>
    %80 = arith.addf %76, %79 : vector<384x128xf32>
    %c32_69 = arith.constant 32 : index
    %c0_70 = arith.constant 0 : index
    %81 = vector.load %arg8[%c32_69, %c0_70] : memref<448x128xbf16, #tpu.memory_space<vmem>>, vector<384x128xbf16>
    %c512_71 = arith.constant 512 : index
    %c0_72 = arith.constant 0 : index
    %82 = vector.load %arg4[%c512_71, %c0_72] : memref<1152x128xbf16, #tpu.memory_space<vmem>>, vector<128x128xbf16>
    %cst_73 = arith.constant dense<0.000000e+00> : vector<384x128xf32>
    %83 = tpu.matmul %81, %82, %cst_73 {dimension_numbers = #tpu.dot_dimension_numbers<[1], [0], [0], [1], [0, 0, 1, 1], [], []>} : vector<384x128xbf16>, vector<128x128xbf16>, vector<384x128xf32> -> vector<384x128xf32>
    %84 = arith.addf %80, %83 : vector<384x128xf32>
    %c33_74 = arith.constant 33 : index
    %c0_75 = arith.constant 0 : index
    %85 = vector.load %arg8[%c33_74, %c0_75] : memref<448x128xbf16, #tpu.memory_space<vmem>>, vector<384x128xbf16>
    %c640_76 = arith.constant 640 : index
    %c0_77 = arith.constant 0 : index
    %86 = vector.load %arg4[%c640_76, %c0_77] : memref<1152x128xbf16, #tpu.memory_space<vmem>>, vector<128x128xbf16>
    %cst_78 = arith.constant dense<0.000000e+00> : vector<384x128xf32>
    %87 = tpu.matmul %85, %86, %cst_78 {dimension_numbers = #tpu.dot_dimension_numbers<[1], [0], [0], [1], [0, 0, 1, 1], [], []>} : vector<384x128xbf16>, vector<128x128xbf16>, vector<384x128xf32> -> vector<384x128xf32>
    %88 = arith.addf %84, %87 : vector<384x128xf32>
    %c55_79 = arith.constant 55 : index
    %c0_80 = arith.constant 0 : index
    %89 = vector.load %arg8[%c55_79, %c0_80] : memref<448x128xbf16, #tpu.memory_space<vmem>>, vector<384x128xbf16>
    %c768_81 = arith.constant 768 : index
    %c0_82 = arith.constant 0 : index
    %90 = vector.load %arg4[%c768_81, %c0_82] : memref<1152x128xbf16, #tpu.memory_space<vmem>>, vector<128x128xbf16>
    %cst_83 = arith.constant dense<0.000000e+00> : vector<384x128xf32>
    %91 = tpu.matmul %89, %90, %cst_83 {dimension_numbers = #tpu.dot_dimension_numbers<[1], [0], [0], [1], [0, 0, 1, 1], [], []>} : vector<384x128xbf16>, vector<128x128xbf16>, vector<384x128xf32> -> vector<384x128xf32>
    %92 = arith.addf %88, %91 : vector<384x128xf32>
    %c56_84 = arith.constant 56 : index
    %c0_85 = arith.constant 0 : index
    %93 = vector.load %arg8[%c56_84, %c0_85] : memref<448x128xbf16, #tpu.memory_space<vmem>>, vector<384x128xbf16>
    %c896_86 = arith.constant 896 : index
    %c0_87 = arith.constant 0 : index
    %94 = vector.load %arg4[%c896_86, %c0_87] : memref<1152x128xbf16, #tpu.memory_space<vmem>>, vector<128x128xbf16>
    %cst_88 = arith.constant dense<0.000000e+00> : vector<384x128xf32>
    %95 = tpu.matmul %93, %94, %cst_88 {dimension_numbers = #tpu.dot_dimension_numbers<[1], [0], [0], [1], [0, 0, 1, 1], [], []>} : vector<384x128xbf16>, vector<128x128xbf16>, vector<384x128xf32> -> vector<384x128xf32>
    %96 = arith.addf %92, %95 : vector<384x128xf32>
    %c57_89 = arith.constant 57 : index
    %c0_90 = arith.constant 0 : index
    %97 = vector.load %arg8[%c57_89, %c0_90] : memref<448x128xbf16, #tpu.memory_space<vmem>>, vector<384x128xbf16>
    %c1024_91 = arith.constant 1024 : index
    %c0_92 = arith.constant 0 : index
    %98 = vector.load %arg4[%c1024_91, %c0_92] : memref<1152x128xbf16, #tpu.memory_space<vmem>>, vector<128x128xbf16>
    %cst_93 = arith.constant dense<0.000000e+00> : vector<384x128xf32>
    %99 = tpu.matmul %97, %98, %cst_93 {dimension_numbers = #tpu.dot_dimension_numbers<[1], [0], [0], [1], [0, 0, 1, 1], [], []>} : vector<384x128xbf16>, vector<128x128xbf16>, vector<384x128xf32> -> vector<384x128xf32>
    %100 = arith.addf %96, %99 : vector<384x128xf32>
    %c24 = arith.constant 24 : index
    %c0_94 = arith.constant 0 : index
    %101 = vector.load %arg5[%c24, %c0_94] : memref<32x128xf32, #tpu.memory_space<vmem>>, vector<1x128xf32>
    %102 = vector.broadcast %101 : vector<1x128xf32> to vector<384x128xf32>
    %103 = arith.addf %100, %102 : vector<384x128xf32>
    %c56_95 = arith.constant 56 : index
    %c0_96 = arith.constant 0 : index
    %104 = vector.load %arg7[%c56_95, %c0_96] : memref<496x128xbf16, #tpu.memory_space<vmem>>, vector<384x128xbf16>
    %105 = arith.extf %104 : vector<384x128xbf16> to vector<384x128xf32>
    %106 = arith.addf %103, %105 : vector<384x128xf32>
    %cst_97 = arith.constant 0.000000e+00 : f32
    %107 = vector.broadcast %cst_97 : f32 to vector<384x128xf32>
    %108 = arith.maximumf %106, %107 : vector<384x128xf32>
    %109 = arith.truncf %108 : vector<384x128xf32> to vector<384x128xbf16>
    %110 = vector.shape_cast %109 : vector<384x128xbf16> to vector<16x24x128xbf16>
    %c0_98 = arith.constant 0 : index
    %c0_99 = arith.constant 0 : index
    %c0_100 = arith.constant 0 : index
    %c0_101 = arith.constant 0 : index
    %111 = vector.load %arg6[%c0_98, %c0_99, %c0_100, %c0_101] : memref<1x16x24x128xbf16, #tpu.memory_space<vmem>>, vector<1x16x24x128xbf16>
    %112 = vector.shape_cast %111 : vector<1x16x24x128xbf16> to vector<16x24x128xbf16>
    %113 = vector.shape_cast %110 : vector<16x24x128xbf16> to vector<1x16x24x128xbf16>
    tpu.vector_store %arg6[%c0_98, %c0_99, %c0_100, %c0_101], %113 {strides = array<i32>} : memref<1x16x24x128xbf16, #tpu.memory_space<vmem>>, vector<1x16x24x128xbf16>,
    return
  }
  func.func @transform_0(%arg0: i32, %arg1: i32) -> (i32, i32, i32, i32) {
    %c0_i32 = arith.constant 0 : i32
    %c0_i32_0 = arith.constant 0 : i32
    %c0_i32_1 = arith.constant 0 : i32
    %c0_i32_2 = arith.constant 0 : i32
    return %arg0, %c0_i32, %c0_i32_0, %c0_i32_1 : i32, i32, i32, i32
  }
  func.func @transform_1(%arg0: i32, %arg1: i32) -> (i32, i32) {
    %c0_i32 = arith.constant 0 : i32
    %c0_i32_0 = arith.constant 0 : i32
    %c0_i32_1 = arith.constant 0 : i32
    return %c0_i32, %c0_i32_0 : i32, i32
  }
  func.func @transform_2(%arg0: i32, %arg1: i32) -> (i32, i32) {
    %c0_i32 = arith.constant 0 : i32
    %c0_i32_0 = arith.constant 0 : i32
    %c0_i32_1 = arith.constant 0 : i32
    return %c0_i32, %c0_i32_0 : i32, i32
  }
  func.func @transform_3(%arg0: i32, %arg1: i32) -> (i32, i32) {
    %c0_i32 = arith.constant 0 : i32
    %c0_i32_0 = arith.constant 0 : i32
    %c0_i32_1 = arith.constant 0 : i32
    return %c0_i32, %c0_i32_0 : i32, i32
  }
  func.func @transform_4(%arg0: i32, %arg1: i32) -> (i32, i32, i32, i32) {
    %c0_i32 = arith.constant 0 : i32
    %c0_i32_0 = arith.constant 0 : i32
    %c0_i32_1 = arith.constant 0 : i32
    return %arg0, %arg1, %c0_i32, %c0_i32_0 : i32, i32, i32, i32
  }
}

</mosaic_0001>

<llo_original>
// kernel: tpu_custom_call.1
$region0: #{tpu_custom_call.1}
  #allocation0 [shape = 'u32[]', space=smem, size = 0x4, offset = 0x4, fixed_abs, tag = 'smem constant byte address 0x4 - core index']
  #allocation1 [shape = 'u32[144,128]{1,0:T(1,128)}', space=vmem, size = 0x12000, scoped, tag = 'internal scratch']
  #allocation2 [shape = 'bf16[496,128]{1,0:T(16,128)(2,1)}', space=vmem, size = 0x1f000, scoped, tag = 'scratch operand']
  #allocation3 [shape = 'bf16[448,128]{1,0:T(16,128)(2,1)}', space=vmem, size = 0x1c000, scoped, tag = 'scratch operand']
  %s0 = inlined_call_operand.hbm [shape: bf16[2,20,24,128], index: 0, kind: input, shape index: {}]
  %s1 = inlined_call_operand.hbm [shape: bf16[1152,128], index: 1, kind: input, shape index: {}]
  %s2 = inlined_call_operand.hbm [shape: bf16[1152,128], index: 2, kind: input, shape index: {}]
  %s3 = inlined_call_operand.hbm [shape: f32[32,128], index: 3, kind: input, shape index: {}]
  %s4 = inlined_call_operand.hbm [shape: bf16[2,16,24,128], index: 4, kind: output, shape index: {}]
  %s5 = sld [smem:[#allocation0]]
  $region69: #{tpu_custom_call.1} parent=0
    _
  %s7 = ssub.s32 1, %s5
  %s8 = scalar_select 0, %s7, %s5
  $region1: #{tpu_custom_call.1} parent=0
    #allocation4 [shape = 'u8[245760]{0}', space=vmem, size = 0x3c000, scoped, tag = 'input window, operand 0']
    #allocation5 [shape = 's32[2]{0}', space=sflag, size = 0x8, scoped, tag = 'scoped memory for tpu_custom_call.1']
    #allocation6 [shape = 's32[2]{0}', space=sflag, size = 0x8, scoped, tag = 'scoped memory for tpu_custom_call.1']
    #allocation7 [shape = 'u8[294912]{0}', space=vmem, size = 0x48000, scoped, tag = 'input window, operand 1, single buffered']
    #allocation8 [shape = 's32[1]{0}', space=sflag, size = 0x4, scoped, tag = 'scoped memory for tpu_custom_call.1']
    #allocation9 [shape = 'u8[294912]{0}', space=vmem, size = 0x48000, scoped, tag = 'input window, operand 2, single buffered']
    #allocation10 [shape = 'u8[16384]{0}', space=vmem, size = 0x4000, scoped, tag = 'input window, operand 3, single buffered']
    #allocation11 [shape = 's32[1]{0}', space=sflag, size = 0x4, scoped, tag = 'scoped memory for tpu_custom_call.1']
    #allocation12 [shape = 'u8[196608]{0}', space=vmem, size = 0x30000, scoped, tag = 'output window, operand 0']
    %9 = vsyncpa [#allocation5], 0
    %s10 = scalar_lea.sflag [#allocation5], 1
    %11 = vsyncpa %s10, 0
    %12 = vsyncpa [#allocation8], 0
    %13 = vsyncpa [#allocation11], 0
    %14 = vsyncpa [#allocation6], 0
    %s15 = scalar_lea.sflag [#allocation6], 1
    %16 = vsyncpa %s15, 0
    loop: start=0, step=1, limit=4
    $region2: #{tpu_custom_call.1} parent=1 // loop_pre_header
      _
    $region3: #{tpu_custom_call.1} parent=1 // loop_header
      %s18 = sphi 0, %s22
      %p19 = scmp.ge.s32.totalorder %s18, 4
      %s25 = sphi 0, %s37
      %s26 = sphi 0, %s33
      %s27 = sphi 0, %s25
      %s28 = sphi 0, %s26
      %s29 = sphi 0, %s27
      %s30 = sphi 0, %s28
      %s40 = sphi 0, %s42
      %s43 = sphi 0, %s40
      %s44 = sphi 0, %s43
      %s60 = sphi 0, %s44
      %s64 = sphi 0, %s64
      %s66 = sphi 0, %s64
      %s67 = sphi 0, %s66
      %s81 = sphi 0, %s67
      %s85 = sphi 0, %s85
      %s87 = sphi 0, %s85
      %s88 = sphi 0, %s87
      %s102 = sphi 0, %s88
      %s106 = sphi 0, %s106
      %s108 = sphi 0, %s106
      %s109 = sphi 0, %s108
      %s123 = sphi 0, %s109
      %s131 = sphi 0, %s133
      %s134 = sphi 0, %s131
      %s135 = sphi 0, %s134
      %s151 = sphi 0, %s135
    $region4: #{tpu_custom_call.1} parent=1 // loop_header_branch
      %21 = sbr.rel (%p19) target = $region8
    $region5: #{tpu_custom_call.1} parent=1 // loop_body
      %s23 = ssub.s32 %s18, 1
      %s24 = ssub.s32 %s18, 2
      %s31 = sadd.s32 1, %s26
      %p32 = scmp.ge.s32.totalorder %s31, 1
      %s33 = scalar_select %p32, 0, %s31
      %s34 = sadd.s32 1, %s25
      %s35 = scalar_select %p32, %s34, %s25
      %p36 = scmp.ge.s32.totalorder %s35, 2
      %s37 = scalar_select %p36, 0, %s35
      %s38 = ssub.s32 %s25, %s37
      %p39 = scmp.eq.s32.totalorder %s38, 0
      %s41 = sadd.s32 %s40, 1
      %s42 = scalar_select %p39, %s40, %s41
      %p45 = pneg %p39
      %p46 = scmp.eq.s32.totalorder %s18, 1
      %p47 = por %p45, %p46
      %p48 = scmp.ne.s32.totalorder %s40, %s43
      %p49 = scmp.eq.s32.totalorder %s18, 0
      %p50 = por %p48, %p49
      %p51 = scmp.ne.s32.totalorder %s40, %s43
      %p52 = scmp.eq.s32.totalorder %s23, 1
      %p53 = por %p51, %p52
      %p54 = scmp.ne.s32.totalorder %s43, %s44
      %p55 = scmp.eq.s32.totalorder %s23, 0
      %p56 = por %p54, %p55
      %p57 = scmp.ne.s32.totalorder %s43, %s44
      %p58 = scmp.eq.s32.totalorder %s24, 1
      %p59 = por %p57, %p58
      %p61 = scmp.ne.s32.totalorder %s44, %s60
      %p62 = scmp.eq.s32.totalorder %s24, 0
      %p63 = por %p61, %p62
      %s65 = sadd.s32 %s64, 1
      %p68 = scmp.eq.s32.totalorder %s18, 1
      %p69 = scmp.ne.s32.totalorder %s64, %s66
      %p70 = scmp.eq.s32.totalorder %s18, 0
      %p71 = por %p69, %p70
      %p72 = scmp.ne.s32.totalorder %s64, %s66
      %p73 = scmp.eq.s32.totalorder %s23, 1
      %p74 = por %p72, %p73
      %p75 = scmp.ne.s32.totalorder %s66, %s67
      %p76 = scmp.eq.s32.totalorder %s23, 0
      %p77 = por %p75, %p76
      %p78 = scmp.ne.s32.totalorder %s66, %s67
      %p79 = scmp.eq.s32.totalorder %s24, 1
      %p80 = por %p78, %p79
      %p82 = scmp.ne.s32.totalorder %s67, %s81
      %p83 = scmp.eq.s32.totalorder %s24, 0
      %p84 = por %p82, %p83
      %s86 = sadd.s32 %s85, 1
      %p89 = scmp.eq.s32.totalorder %s18, 1
      %p90 = scmp.ne.s32.totalorder %s85, %s87
      %p91 = scmp.eq.s32.totalorder %s18, 0
      %p92 = por %p90, %p91
      %p93 = scmp.ne.s32.totalorder %s85, %s87
      %p94 = scmp.eq.s32.totalorder %s23, 1
      %p95 = por %p93, %p94
      %p96 = scmp.ne.s32.totalorder %s87, %s88
      %p97 = scmp.eq.s32.totalorder %s23, 0
      %p98 = por %p96, %p97
      %p99 = scmp.ne.s32.totalorder %s87, %s88
      %p100 = scmp.eq.s32.totalorder %s24, 1
      %p101 = por %p99, %p100
      %p103 = scmp.ne.s32.totalorder %s88, %s102
      %p104 = scmp.eq.s32.totalorder %s24, 0
      %p105 = por %p103, %p104
      %s107 = sadd.s32 %s106, 1
      %p110 = scmp.eq.s32.totalorder %s18, 1
      %p111 = scmp.ne.s32.totalorder %s106, %s108
      %p112 = scmp.eq.s32.totalorder %s18, 0
      %p113 = por %p111, %p112
      %p114 = scmp.ne.s32.totalorder %s106, %s108
      %p115 = scmp.eq.s32.totalorder %s23, 1
      %p116 = por %p114, %p115
      %p117 = scmp.ne.s32.totalorder %s108, %s109
      %p118 = scmp.eq.s32.totalorder %s23, 0
      %p119 = por %p117, %p118
      %p120 = scmp.ne.s32.totalorder %s108, %s109
      %p121 = scmp.eq.s32.totalorder %s24, 1
      %p122 = por %p120, %p121
      %p124 = scmp.ne.s32.totalorder %s109, %s123
      %p125 = scmp.eq.s32.totalorder %s24, 0
      %p126 = por %p124, %p125
      %s127 = ssub.s32 %s25, %s37
      %s128 = ssub.s32 %s26, %s33
      %s129 = sor.u32 %s127, %s128
      %p130 = scmp.eq.s32.totalorder %s129, 0
      %s132 = sadd.s32 %s131, 1
      %s133 = scalar_select %p130, %s131, %s132
      %p136 = pneg %p130
      %p137 = scmp.eq.s32.totalorder %s18, 1
      %p138 = por %p136, %p137
      %p139 = scmp.ne.s32.totalorder %s131, %s134
      %p140 = scmp.eq.s32.totalorder %s18, 0
      %p141 = por %p139, %p140
      %p142 = scmp.ne.s32.totalorder %s131, %s134
      %p143 = scmp.eq.s32.totalorder %s23, 1
      %p144 = por %p142, %p143
      %p145 = scmp.ne.s32.totalorder %s134, %s135
      %p146 = scmp.eq.s32.totalorder %s23, 0
      %p147 = por %p145, %p146
      %p148 = scmp.ne.s32.totalorder %s134, %s135
      %p149 = scmp.eq.s32.totalorder %s24, 1
      %p150 = por %p148, %p149
      %p152 = scmp.ne.s32.totalorder %s135, %s151
      %p153 = scmp.eq.s32.totalorder %s24, 0
      %p154 = por %p152, %p153
      %p155 = scmp.le.s32.totalorder 1, %s18
      %p156 = scmp.lt.s32.totalorder %s18, 3
      %p157 = pnand %p155, %p156
      %p158 = pneg %p157
      // Predicated region
      $region9: #{tpu_custom_call.1} parent=5 // pred_check
        _
      $region10: #{tpu_custom_call.1} parent=5 // pred_check_branch
        %160 = sbr.rel (%p157) target = $region12
      $region11: #{tpu_custom_call.1} parent=5 // pred_region
        %s161 = ssub.s32 %s18, 1
        // Predicated region
        $region13: #{tpu_custom_call.1} parent=11 // pred_check
          %p162 = pneg %p77
        $region14: #{tpu_custom_call.1} parent=11 // pred_check_branch
          %164 = sbr.rel (%p162) target = $region16
        $region15: #{tpu_custom_call.1} parent=11 // pred_region
          %s166 = ssub.s32 9216, 9216
          %167 = vsyncadd [#allocation8], %s166
          %s168 = sshll.u32 [#allocation7], 4
          %s169 = int_to_ptr.vmem [resolvable:$true] %s168
          %174 = dma.hbm_to_vmem [thread:$0]  %s1, 9216, %s169, [#allocation8], 64, 64, 4
        $region16: #{tpu_custom_call.1} parent=11 // pred_fallthru
          _
        // Predicated region
        $region17: #{tpu_custom_call.1} parent=11 // pred_check
          %p175 = pneg %p98
        $region18: #{tpu_custom_call.1} parent=11 // pred_check_branch
          %177 = sbr.rel (%p175) target = $region20
        $region19: #{tpu_custom_call.1} parent=11 // pred_region
          %s179 = ssub.s32 9216, 9216
          %180 = vsyncadd [#allocation8], %s179
          %s181 = sshll.u32 [#allocation9], 4
          %s182 = int_to_ptr.vmem [resolvable:$true] %s181
          %187 = dma.hbm_to_vmem [thread:$0]  %s2, 9216, %s182, [#allocation8], 64, 64, 4
        $region20: #{tpu_custom_call.1} parent=11 // pred_fallthru
          _
        // Predicated region
        $region21: #{tpu_custom_call.1} parent=11 // pred_check
          %p188 = pneg %p119
        $region22: #{tpu_custom_call.1} parent=11 // pred_check_branch
          %190 = sbr.rel (%p188) target = $region24
        $region23: #{tpu_custom_call.1} parent=11 // pred_region
          %s192 = ssub.s32 512, 512
          %193 = vsyncadd [#allocation11], %s192
          %s194 = sshll.u32 [#allocation10], 4
          %s195 = int_to_ptr.vmem [resolvable:$true] %s194
          %200 = dma.hbm_to_vmem [thread:$0]  %s3, 512, %s195, [#allocation11], 128, 128, 8
        $region24: #{tpu_custom_call.1} parent=11 // pred_fallthru
          _
      $region12: #{tpu_custom_call.1} parent=5 // pred_fallthru
        _
      %p201 = scmp.lt.s32.totalorder %s18, 2
      // Predicated region
      $region25: #{tpu_custom_call.1} parent=5 // pred_check
        %p202 = pneg %p201
      $region26: #{tpu_custom_call.1} parent=5 // pred_check_branch
        %204 = sbr.rel (%p202) target = $region28
      $region27: #{tpu_custom_call.1} parent=5 // pred_region
        // Predicated region
        $region29: #{tpu_custom_call.1} parent=27 // pred_check
          %p205 = pneg %p50
        $region30: #{tpu_custom_call.1} parent=27 // pred_check_branch
          %207 = sbr.rel (%p205) target = $region32
        $region31: #{tpu_custom_call.1} parent=27 // pred_region
          %s208 = sand.u32 %s40, 1
          %s209 = scalar_lea.sflag [#allocation5], %s208
          %s210 = sand.u32 %s40, 1
          %s211 = smul.addr %s210, 240
          %s212 = scalar_lea.vmem [#allocation4], %s211
          %s214 = ssub.s32 3840, 3840
          %215 = vsyncadd %s209, %s214
          %s216 = smul.addr %s25, 60
          %s217 = smul.addr %s216, 64
          %s218 = scalar_lea.hbm %s0, %s217
          %s219 = sshll.u32 %s212, 4
          %s220 = int_to_ptr.vmem [resolvable:$true] %s219
          %225 = dma.hbm_to_vmem [thread:$0]  %s218, 3840, %s220, %s209, 64, 64, 4
        $region32: #{tpu_custom_call.1} parent=27 // pred_fallthru
          _
      $region28: #{tpu_custom_call.1} parent=5 // pred_fallthru
        _
      %p226 = scmp.le.s32.totalorder 1, %s18
      %p227 = scmp.lt.s32.totalorder %s18, 3
      %p228 = pnand %p226, %p227
      %p229 = pneg %p228
      // Predicated region
      $region33: #{tpu_custom_call.1} parent=5 // pred_check
        _
      $region34: #{tpu_custom_call.1} parent=5 // pred_check_branch
        %231 = sbr.rel (%p228) target = $region36
      $region35: #{tpu_custom_call.1} parent=5 // pred_region
        %s232 = ssub.s32 %s18, 1
        %s233 = sand.u32 %s43, 1
        %s234 = scalar_lea.sflag [#allocation5], %s233
        %s235 = sand.u32 %s43, 1
        %s236 = smul.addr %s235, 240
        %s237 = scalar_lea.vmem [#allocation4], %s236
        // Predicated region
        $region37: #{tpu_custom_call.1} parent=35 // pred_check
          %p238 = pneg %p56
        $region38: #{tpu_custom_call.1} parent=35 // pred_check_branch
          %240 = sbr.rel (%p238) target = $region40
        $region39: #{tpu_custom_call.1} parent=35 // pred_region
          %241 = dma.done %s234, 3840
        $region40: #{tpu_custom_call.1} parent=35 // pred_fallthru
          _
        // Predicated region
        $region41: #{tpu_custom_call.1} parent=35 // pred_check
          %p242 = pneg %p77
        $region42: #{tpu_custom_call.1} parent=35 // pred_check_branch
          %244 = sbr.rel (%p242) target = $region44
        $region43: #{tpu_custom_call.1} parent=35 // pred_region
          %245 = dma.done [#allocation8], 9216
        $region44: #{tpu_custom_call.1} parent=35 // pred_fallthru
          _
        // Predicated region
        $region45: #{tpu_custom_call.1} parent=35 // pred_check
          %p246 = pneg %p98
        $region46: #{tpu_custom_call.1} parent=35 // pred_check_branch
          %248 = sbr.rel (%p246) target = $region48
        $region47: #{tpu_custom_call.1} parent=35 // pred_region
          %249 = dma.done [#allocation8], 9216
        $region48: #{tpu_custom_call.1} parent=35 // pred_fallthru
          _
        // Predicated region
        $region49: #{tpu_custom_call.1} parent=35 // pred_check
          %p250 = pneg %p119
        $region50: #{tpu_custom_call.1} parent=35 // pred_check_branch
          %252 = sbr.rel (%p250) target = $region52
        $region51: #{tpu_custom_call.1} parent=35 // pred_region
          %253 = dma.done [#allocation11], 512
        $region52: #{tpu_custom_call.1} parent=35 // pred_fallthru
          _
        %s254 = sand.u32 %s43, 1
        %s255 = scalar_lea.sflag [#allocation5], %s254
        %s256 = sand.u32 %s43, 1
        %s257 = smul.addr %s256, 240
        %s258 = scalar_lea.vmem [#allocation4], %s257
        %p259 = pneg %p56
        %p260 = pneg %p53
        %p261 = pneg %p77
        %p262 = pneg %p74
        %p263 = pneg %p98
        %p264 = pneg %p95
        %p265 = pneg %p119
        %p266 = pneg %p116
        %p267 = pneg %p147
        %p268 = pneg %p144
        %s269 = sand.u32 %s134, 1
        %s270 = scalar_lea.sflag [#allocation6], %s269
        %s271 = sand.u32 %s134, 1
        %s272 = smul.addr %s271, 192
        %s273 = scalar_lea.vmem [#allocation12], %s272
        %s274 = smul.u32 16, %s28
        %s276 = smul.u32 %s28, 16
        %s277 = smul.u32 %s276, 3
        %s278 = smul.addr %s277, 4
        %s279 = scalar_lea.vmem %s237, %s278 [#allocation4]
        %v280 = vld [vmem:[%s279] sm:$0xf]
        %v281 = vld [vmem:[%s279 + $0x4] sm:$0xf]
        %v282 = vld [vmem:[%s279 + $0x8] sm:$0xf]
        %v283 = vld [vmem:[%s279 + $0xc] sm:$0xf]
        %v284 = vld [vmem:[%s279 + $0x10] sm:$0xf]
        %v285 = vld [vmem:[%s279 + $0x14] sm:$0xf]
        %v286 = vld [vmem:[%s279 + $0x18] sm:$0xf]
        %v287 = vld [vmem:[%s279 + $0x1c] sm:$0xf]
        %v288 = vld [vmem:[%s279 + $0x20] sm:$0xf]
        %v289 = vld [vmem:[%s279 + $0x24] sm:$0xf]
        %v290 = vld [vmem:[%s279 + $0x28] sm:$0xf]
        %v291 = vld [vmem:[%s279 + $0x2c] sm:$0xf]
        %v292 = vld [vmem:[%s279 + $0x30] sm:$0xf]
        %v293 = vld [vmem:[%s279 + $0x34] sm:$0xf]
        %v294 = vld [vmem:[%s279 + $0x38] sm:$0xf]
        %v295 = vld [vmem:[%s279 + $0x3c] sm:$0xf]
        %v296 = vld [vmem:[%s279 + $0x40] sm:$0xf]
        %v297 = vld [vmem:[%s279 + $0x44] sm:$0xf]
        %v298 = vld [vmem:[%s279 + $0x48] sm:$0xf]
        %v299 = vld [vmem:[%s279 + $0x4c] sm:$0xf]
        %v300 = vld [vmem:[%s279 + $0x50] sm:$0xf]
        %v301 = vld [vmem:[%s279 + $0x54] sm:$0xf]
        %v302 = vld [vmem:[%s279 + $0x58] sm:$0xf]
        %v303 = vld [vmem:[%s279 + $0x5c] sm:$0xf]
        %v304 = vld [vmem:[%s279 + $0x60] sm:$0xf]
        %v305 = vld [vmem:[%s279 + $0x64] sm:$0xf]
        %v306 = vld [vmem:[%s279 + $0x68] sm:$0xf]
        %v307 = vld [vmem:[%s279 + $0x6c] sm:$0xf]
        %v308 = vld [vmem:[%s279 + $0x70] sm:$0xf]
        %v309 = vld [vmem:[%s279 + $0x74] sm:$0xf]
        %v310 = vld [vmem:[%s279 + $0x78] sm:$0xf]
        %v311 = vld [vmem:[%s279 + $0x7c] sm:$0xf]
        %v312 = vld [vmem:[%s279 + $0x80] sm:$0xf]
        %v313 = vld [vmem:[%s279 + $0x84] sm:$0xf]
        %v314 = vld [vmem:[%s279 + $0x88] sm:$0xf]
        %v315 = vld [vmem:[%s279 + $0x8c] sm:$0xf]
        %v316 = vld [vmem:[%s279 + $0x90] sm:$0xf]
        %v317 = vld [vmem:[%s279 + $0x94] sm:$0xf]
        %v318 = vld [vmem:[%s279 + $0x98] sm:$0xf]
        %v319 = vld [vmem:[%s279 + $0x9c] sm:$0xf]
        %v320 = vld [vmem:[%s279 + $0xa0] sm:$0xf]
        %v321 = vld [vmem:[%s279 + $0xa4] sm:$0xf]
        %v322 = vld [vmem:[%s279 + $0xa8] sm:$0xf]
        %v323 = vld [vmem:[%s279 + $0xac] sm:$0xf]
        %v324 = vld [vmem:[%s279 + $0xb0] sm:$0xf]
        %v325 = vld [vmem:[%s279 + $0xb4] sm:$0xf]
        %v326 = vld [vmem:[%s279 + $0xb8] sm:$0xf]
        %v327 = vld [vmem:[%s279 + $0xbc] sm:$0xf]
        %v328 = vld [vmem:[%s279 + $0xc0] sm:$0xf]
        %v329 = vld [vmem:[%s279 + $0xc4] sm:$0xf]
        %v330 = vld [vmem:[%s279 + $0xc8] sm:$0xf]
        %v331 = vld [vmem:[%s279 + $0xcc] sm:$0xf]
        %v332 = vld [vmem:[%s279 + $0xd0] sm:$0xf]
        %v333 = vld [vmem:[%s279 + $0xd4] sm:$0xf]
        %v334 = vld [vmem:[%s279 + $0xd8] sm:$0xf]
        %v335 = vld [vmem:[%s279 + $0xdc] sm:$0xf]
        %v336 = vld [vmem:[%s279 + $0xe0] sm:$0xf]
        %v337 = vld [vmem:[%s279 + $0xe4] sm:$0xf]
        %v338 = vld [vmem:[%s279 + $0xe8] sm:$0xf]
        %v339 = vld [vmem:[%s279 + $0xec] sm:$0xf]
        %340 = vst [vmem:[#allocation2] sm:$0xf] 0
        %341 = vst [vmem:[#allocation2 + $0xf0] sm:$0xf0] 0
        %v402 = vunpack.c.l.b16 %v280
        %v403 = vunpack.c.l.b16 %v281
        %v404 = vunpack.c.l.b16 %v282
        %v405 = vunpack.c.l.b16 %v283
        %v406 = vunpack.c.l.b16 %v284
        %v407 = vunpack.c.l.b16 %v285
        %v408 = vunpack.c.l.b16 %v286
        %v409 = vunpack.c.l.b16 %v287
        %v410 = vunpack.c.l.b16 %v288
        %v411 = vunpack.c.l.b16 %v289
        %v412 = vunpack.c.l.b16 %v290
        %v413 = vunpack.c.l.b16 %v291
        %v414 = vunpack.c.l.b16 %v292
        %v415 = vunpack.c.l.b16 %v293
        %v416 = vunpack.c.l.b16 %v294
        %v417 = vunpack.c.l.b16 %v295
        %v418 = vunpack.c.l.b16 %v296
        %v419 = vunpack.c.l.b16 %v297
        %v420 = vunpack.c.l.b16 %v298
        %v421 = vunpack.c.l.b16 %v299
        %v422 = vunpack.c.l.b16 %v300
        %v423 = vunpack.c.l.b16 %v301
        %v424 = vunpack.c.l.b16 %v302
        %v425 = vunpack.c.l.b16 %v303
        %v426 = vunpack.c.l.b16 %v304
        %v427 = vunpack.c.l.b16 %v305
        %v428 = vunpack.c.l.b16 %v306
        %v429 = vunpack.c.l.b16 %v307
        %v430 = vunpack.c.l.b16 %v308
        %v431 = vunpack.c.l.b16 %v309
        %v432 = vunpack.c.l.b16 %v310
        %v433 = vunpack.c.l.b16 %v311
        %v434 = vunpack.c.l.b16 %v312
        %v435 = vunpack.c.l.b16 %v313
        %v436 = vunpack.c.l.b16 %v314
        %v437 = vunpack.c.l.b16 %v315
        %v438 = vunpack.c.l.b16 %v316
        %v439 = vunpack.c.l.b16 %v317
        %v440 = vunpack.c.l.b16 %v318
        %v441 = vunpack.c.l.b16 %v319
        %v442 = vunpack.c.l.b16 %v320
        %v443 = vunpack.c.l.b16 %v321
        %v444 = vunpack.c.l.b16 %v322
        %v445 = vunpack.c.l.b16 %v323
        %v446 = vunpack.c.l.b16 %v324
        %v447 = vunpack.c.l.b16 %v325
        %v448 = vunpack.c.l.b16 %v326
        %v449 = vunpack.c.l.b16 %v327
        %v450 = vunpack.c.l.b16 %v328
        %v451 = vunpack.c.l.b16 %v329
        %v452 = vunpack.c.l.b16 %v330
        %v453 = vunpack.c.l.b16 %v331
        %v454 = vunpack.c.l.b16 %v332
        %v455 = vunpack.c.l.b16 %v333
        %v456 = vunpack.c.l.b16 %v334
        %v457 = vunpack.c.l.b16 %v335
        %v458 = vunpack.c.l.b16 %v336
        %v459 = vunpack.c.l.b16 %v337
        %v460 = vunpack.c.l.b16 %v338
        %v461 = vunpack.c.l.b16 %v339
        %v462 = vpack.c.b16 %v402, %v402
        %v463 = vpack.c.b16 %v404, %v403
        %v464 = vpack.c.b16 %v406, %v405
        %v465 = vpack.c.b16 %v408, %v407
        %v466 = vpack.c.b16 %v410, %v409
        %v467 = vpack.c.b16 %v412, %v411
        %v468 = vpack.c.b16 %v414, %v413
        %v469 = vpack.c.b16 %v416, %v415
        %v470 = vpack.c.b16 %v418, %v417
        %v471 = vpack.c.b16 %v420, %v419
        %v472 = vpack.c.b16 %v422, %v421
        %v473 = vpack.c.b16 %v424, %v423
        %v474 = vpack.c.b16 %v426, %v425
        %v475 = vpack.c.b16 %v428, %v427
        %v476 = vpack.c.b16 %v430, %v429
        %v477 = vpack.c.b16 %v432, %v431
        %v478 = vpack.c.b16 %v434, %v433
        %v479 = vpack.c.b16 %v436, %v435
        %v480 = vpack.c.b16 %v438, %v437
        %v481 = vpack.c.b16 %v440, %v439
        %v482 = vpack.c.b16 %v442, %v441
        %v483 = vpack.c.b16 %v444, %v443
        %v484 = vpack.c.b16 %v446, %v445
        %v485 = vpack.c.b16 %v448, %v447
        %v486 = vpack.c.b16 %v450, %v449
        %v487 = vpack.c.b16 %v452, %v451
        %v488 = vpack.c.b16 %v454, %v453
        %v489 = vpack.c.b16 %v456, %v455
        %v490 = vpack.c.b16 %v458, %v457
        %v491 = vpack.c.b16 %v460, %v459
        %v492 = vpack.c.b16 %v461, %v461
        %524 = vst [vmem:[#allocation2] sm:$0xf0] %v462
        %525 = vst [vmem:[#allocation2 + $0x8] sm:$0xff] %v463
        %526 = vst [vmem:[#allocation2 + $0x10] sm:$0xff] %v464
        %527 = vst [vmem:[#allocation2 + $0x18] sm:$0xff] %v465
        %528 = vst [vmem:[#allocation2 + $0x20] sm:$0xff] %v466
        %529 = vst [vmem:[#allocation2 + $0x28] sm:$0xff] %v467
        %530 = vst [vmem:[#allocation2 + $0x30] sm:$0xff] %v468
        %531 = vst [vmem:[#allocation2 + $0x38] sm:$0xff] %v469
        %532 = vst [vmem:[#allocation2 + $0x40] sm:$0xff] %v470
        %533 = vst [vmem:[#allocation2 + $0x48] sm:$0xff] %v471
        %534 = vst [vmem:[#allocation2 + $0x50] sm:$0xff] %v472
        %535 = vst [vmem:[#allocation2 + $0x58] sm:$0xff] %v473
        %536 = vst [vmem:[#allocation2 + $0x60] sm:$0xff] %v474
        %537 = vst [vmem:[#allocation2 + $0x68] sm:$0xff] %v475
        %538 = vst [vmem:[#allocation2 + $0x70] sm:$0xff] %v476
        %539 = vst [vmem:[#allocation2 + $0x78] sm:$0xff] %v477
        %540 = vst [vmem:[#allocation2 + $0x80] sm:$0xff] %v478
        %541 = vst [vmem:[#allocation2 + $0x88] sm:$0xff] %v479
        %542 = vst [vmem:[#allocation2 + $0x90] sm:$0xff] %v480
        %543 = vst [vmem:[#allocation2 + $0x98] sm:$0xff] %v481
        %544 = vst [vmem:[#allocation2 + $0xa0] sm:$0xff] %v482
        %545 = vst [vmem:[#allocation2 + $0xa8] sm:$0xff] %v483
        %546 = vst [vmem:[#allocation2 + $0xb0] sm:$0xff] %v484
        %547 = vst [vmem:[#allocation2 + $0xb8] sm:$0xff] %v485
        %548 = vst [vmem:[#allocation2 + $0xc0] sm:$0xff] %v486
        %549 = vst [vmem:[#allocation2 + $0xc8] sm:$0xff] %v487
        %550 = vst [vmem:[#allocation2 + $0xd0] sm:$0xff] %v488
        %551 = vst [vmem:[#allocation2 + $0xd8] sm:$0xff] %v489
        %552 = vst [vmem:[#allocation2 + $0xe0] sm:$0xff] %v490
        %553 = vst [vmem:[#allocation2 + $0xe8] sm:$0xff] %v491
        %554 = vst [vmem:[#allocation2 + $0xf0] sm:$0xf] %v492
        %v555 = vld [vmem:[#allocation2] sm:$0xf8]
        %v556 = vld [vmem:[#allocation2 + $0x8] sm:$0xff]
        %v557 = vld [vmem:[#allocation2 + $0x10] sm:$0xff]
        %v558 = vld [vmem:[#allocation2 + $0x18] sm:$0xff]
        %v559 = vld [vmem:[#allocation2 + $0x20] sm:$0xff]
        %v560 = vld [vmem:[#allocation2 + $0x28] sm:$0xff]
        %v561 = vld [vmem:[#allocation2 + $0x30] sm:$0xff]
        %v562 = vld [vmem:[#allocation2 + $0x38] sm:$0xff]
        %v563 = vld [vmem:[#allocation2 + $0x40] sm:$0xff]
        %v564 = vld [vmem:[#allocation2 + $0x48] sm:$0xff]
        %v565 = vld [vmem:[#allocation2 + $0x50] sm:$0xff]
        %v566 = vld [vmem:[#allocation2 + $0x58] sm:$0xff]
        %v567 = vld [vmem:[#allocation2 + $0x60] sm:$0xff]
        %v568 = vld [vmem:[#allocation2 + $0x68] sm:$0xff]
        %v569 = vld [vmem:[#allocation2 + $0x70] sm:$0xff]
        %v570 = vld [vmem:[#allocation2 + $0x78] sm:$0xff]
        %v571 = vld [vmem:[#allocation2 + $0x80] sm:$0xff]
        %v572 = vld [vmem:[#allocation2 + $0x88] sm:$0xff]
        %v573 = vld [vmem:[#allocation2 + $0x90] sm:$0xff]
        %v574 = vld [vmem:[#allocation2 + $0x98] sm:$0xff]
        %v575 = vld [vmem:[#allocation2 + $0xa0] sm:$0xff]
        %v576 = vld [vmem:[#allocation2 + $0xa8] sm:$0xff]
        %v577 = vld [vmem:[#allocation2 + $0xb0] sm:$0xff]
        %v578 = vld [vmem:[#allocation2 + $0xb8] sm:$0xff]
        %v579 = vld [vmem:[#allocation2 + $0xc0] sm:$0xff]
        %v580 = vld [vmem:[#allocation2 + $0xc8] sm:$0xff]
        %v581 = vld [vmem:[#allocation2 + $0xd0] sm:$0xff]
        %v582 = vld [vmem:[#allocation2 + $0xd8] sm:$0xf]
        %v583 = vld [vmem:[#allocation7] sm:$0xf]
        %v584 = vld [vmem:[#allocation7 + $0x4] sm:$0xf]
        %v585 = vld [vmem:[#allocation7 + $0x8] sm:$0xf]
        %v586 = vld [vmem:[#allocation7 + $0xc] sm:$0xf]
        %v587 = vld [vmem:[#allocation7 + $0x10] sm:$0xf]
        %v588 = vld [vmem:[#allocation7 + $0x14] sm:$0xf]
        %v589 = vld [vmem:[#allocation7 + $0x18] sm:$0xf]
        %v590 = vld [vmem:[#allocation7 + $0x1c] sm:$0xf]
        %v591 = vld [vmem:[#allocation7 + $0x20] sm:$0xf]
        %v592 = vld [vmem:[#allocation7 + $0x24] sm:$0xf]
        %v593 = vld [vmem:[#allocation7 + $0x28] sm:$0xf]
        %v594 = vld [vmem:[#allocation7 + $0x2c] sm:$0xf]
        %v595 = vld [vmem:[#allocation7 + $0x30] sm:$0xf]
        %v596 = vld [vmem:[#allocation7 + $0x34] sm:$0xf]
        %v597 = vld [vmem:[#allocation7 + $0x38] sm:$0xf]
        %v598 = vld [vmem:[#allocation7 + $0x3c] sm:$0xf]
        %v599 = vld [vmem:[#allocation2] sm:$0xf0]
        %v600 = vld [vmem:[#allocation7 + $0x40] sm:$0xf]
        %v601 = vld [vmem:[#allocation7 + $0x44] sm:$0xf]
        %v602 = vld [vmem:[#allocation7 + $0x48] sm:$0xf]
        %v603 = vld [vmem:[#allocation7 + $0x4c] sm:$0xf]
        %v604 = vld [vmem:[#allocation7 + $0x50] sm:$0xf]
        %v605 = vld [vmem:[#allocation7 + $0x54] sm:$0xf]
        %v606 = vld [vmem:[#allocation7 + $0x58] sm:$0xf]
        %v607 = vld [vmem:[#allocation7 + $0x5c] sm:$0xf]
        %v608 = vld [vmem:[#allocation7 + $0x60] sm:$0xf]
        %v609 = vld [vmem:[#allocation7 + $0x64] sm:$0xf]
        %v610 = vld [vmem:[#allocation7 + $0x68] sm:$0xf]
        %v611 = vld [vmem:[#allocation7 + $0x6c] sm:$0xf]
        %v612 = vld [vmem:[#allocation7 + $0x70] sm:$0xf]
        %v613 = vld [vmem:[#allocation7 + $0x74] sm:$0xf]
        %v614 = vld [vmem:[#allocation7 + $0x78] sm:$0xf]
        %v615 = vld [vmem:[#allocation7 + $0x7c] sm:$0xf]
        %vm644 = vcmask 1043456
        %v645 = vrot.slane %v599, 4
        %v646 = vrot.slane %v556, 4
        %v647 = vsel %vm644, %v645, %v646
        %v648 = vrot.slane %v557, 4
        %v649 = vsel %vm644, %v646, %v648
        %v650 = vrot.slane %v558, 4
        %v651 = vsel %vm644, %v648, %v650
        %v652 = vrot.slane %v559, 4
        %v653 = vsel %vm644, %v650, %v652
        %v654 = vrot.slane %v560, 4
        %v655 = vsel %vm644, %v652, %v654
        %v656 = vrot.slane %v561, 4
        %v657 = vsel %vm644, %v654, %v656
        %v658 = vrot.slane %v562, 4
        %v659 = vsel %vm644, %v656, %v658
        %v660 = vrot.slane %v563, 4
        %v661 = vsel %vm644, %v658, %v660
        %v662 = vrot.slane %v564, 4
        %v663 = vsel %vm644, %v660, %v662
        %v664 = vrot.slane %v565, 4
        %v665 = vsel %vm644, %v662, %v664
        %v666 = vrot.slane %v566, 4
        %v667 = vsel %vm644, %v664, %v666
        %v668 = vrot.slane %v567, 4
        %v669 = vsel %vm644, %v666, %v668
        %v670 = vrot.slane %v568, 4
        %v671 = vsel %vm644, %v668, %v670
        %v672 = vrot.slane %v569, 4
        %v673 = vsel %vm644, %v670, %v672
        %v674 = vrot.slane %v570, 4
        %v675 = vsel %vm644, %v672, %v674
        %v676 = vrot.slane %v571, 4
        %v677 = vsel %vm644, %v674, %v676
        %v678 = vrot.slane %v572, 4
        %v679 = vsel %vm644, %v676, %v678
        %v680 = vrot.slane %v573, 4
        %v681 = vsel %vm644, %v678, %v680
        %v682 = vrot.slane %v574, 4
        %v683 = vsel %vm644, %v680, %v682
        %v684 = vrot.slane %v575, 4
        %v685 = vsel %vm644, %v682, %v684
        %v686 = vrot.slane %v576, 4
        %v687 = vsel %vm644, %v684, %v686
        %v688 = vrot.slane %v577, 4
        %v689 = vsel %vm644, %v686, %v688
        %v690 = vrot.slane %v578, 4
        %v691 = vsel %vm644, %v688, %v690
        %v692 = vrot.slane %v579, 4
        %v693 = vsel %vm644, %v690, %v692
        %v694 = vrot.slane %v580, 4
        %v695 = vsel %vm644, %v692, %v694
        %v696 = vrot.slane %v581, 4
        %v697 = vsel %vm644, %v694, %v696
        %v698 = vrot.slane %v582, 4
        %v699 = vsel %vm644, %v696, %v698
        %v743 = vunpack.c.l.b16 %v600
        %v744 = vunpack.c.l.b16 %v601
        %v745 = vunpack.c.l.b16 %v602
        %v746 = vunpack.c.l.b16 %v603
        %v747 = vunpack.c.l.b16 %v604
        %v748 = vunpack.c.l.b16 %v605
        %v749 = vunpack.c.l.b16 %v606
        %v750 = vunpack.c.l.b16 %v607
        %v751 = vunpack.c.l.b16 %v608
        %v752 = vunpack.c.l.b16 %v609
        %v753 = vunpack.c.l.b16 %v610
        %v754 = vunpack.c.l.b16 %v611
        %v755 = vunpack.c.l.b16 %v612
        %v756 = vunpack.c.l.b16 %v613
        %v757 = vunpack.c.l.b16 %v614
        %v758 = vunpack.c.l.b16 %v615
        %v759 = vpack.c.b16 %v744, %v743
        %v760 = vpack.c.b16 %v746, %v745
        %v761 = vpack.c.b16 %v748, %v747
        %v762 = vpack.c.b16 %v750, %v749
        %v763 = vpack.c.b16 %v752, %v751
        %v764 = vpack.c.b16 %v754, %v753
        %v765 = vpack.c.b16 %v756, %v755
        %v766 = vpack.c.b16 %v758, %v757
        %775 = vmatprep.subr.bf16.mxu0 0
        %776 = vmatpush1.bf16.msra.mxu0 %v759
        %777 = vmatprep.subr.bf16.mxu0 0
        %778 = vmatpush1.bf16.msra.mxu0 %v760
        %779 = vmatprep.subr.bf16.mxu0 0
        %780 = vmatpush1.bf16.msra.mxu0 %v761
        %781 = vmatprep.subr.bf16.mxu0 0
        %782 = vmatpush1.bf16.msra.mxu0 %v762
        %783 = vmatprep.subr.bf16.mxu0 0
        %784 = vmatpush1.bf16.msra.mxu0 %v763
        %785 = vmatprep.subr.bf16.mxu0 0
        %786 = vmatpush1.bf16.msra.mxu0 %v764
        %787 = vmatprep.subr.bf16.mxu0 0
        %788 = vmatpush1.bf16.msra.mxu0 %v765
        %789 = vmatprep.subr.bf16.mxu0 0
        %790 = vmatpush1.bf16.msra.mxu0 %v766
        %791 = vmatprep.subr.bf16.mxu0 0
        %792 = vmatpush1.bf16.msra.mxu0 0
        %793 = vmatprep.subr.bf16.mxu0 0
        %794 = vmatpush1.bf16.msra.mxu0 0
        %795 = vmatprep.subr.bf16.mxu0 0
        %796 = vmatpush1.bf16.msra.mxu0 0
        %797 = vmatprep.subr.bf16.mxu0 0
        %798 = vmatpush1.bf16.msra.mxu0 0
        %799 = vmatprep.subr.bf16.mxu0 0
        %800 = vmatpush1.bf16.msra.mxu0 0
        %801 = vmatprep.subr.bf16.mxu0 0
        %802 = vmatpush1.bf16.msra.mxu0 0
        %803 = vmatprep.subr.bf16.mxu0 0
        %804 = vmatpush1.bf16.msra.mxu0 0
        %805 = vmatprep.subr.bf16.mxu0 0
        %806 = vmatpush1.bf16.msra.mxu0 0
        %807 = vmatprep.mubr.bf16.mxu0 0
        %808 = vmatmul.mubr.bf16.gmra.mrb[0].mxu0 %v647
        %v809 = vpop.f32.mrb[0].mxu0
        %v810 = vadd.f32 0.0, %v809
        %v811 = vpop.f32.mrb[0].mxu0
        %v812 = vpop.f32.mrb[0].mxu0
        %v813 = vadd.f32 0.0, %v812
        %v814 = vpop.f32.mrb[0].mxu0
        %815 = vmatprep.mubr.bf16.mxu0 0
        %816 = vmatmul.mubr.bf16.gmra.mrb[0].mxu0 %v649
        %v817 = vpop.f32.mrb[0].mxu0
        %v818 = vadd.f32 0.0, %v817
        %v819 = vpop.f32.mrb[0].mxu0
        %v820 = vpop.f32.mrb[0].mxu0
        %v821 = vadd.f32 0.0, %v820
        %v822 = vpop.f32.mrb[0].mxu0
        %823 = vmatprep.mubr.bf16.mxu0 0
        %824 = vmatmul.mubr.bf16.gmra.mrb[0].mxu0 %v651
        %v825 = vpop.f32.mrb[0].mxu0
        %v826 = vadd.f32 0.0, %v825
        %v827 = vpop.f32.mrb[0].mxu0
        %v828 = vpop.f32.mrb[0].mxu0
        %v829 = vadd.f32 0.0, %v828
        %v830 = vpop.f32.mrb[0].mxu0
        %831 = vmatprep.mubr.bf16.mxu0 0
        %832 = vmatmul.mubr.bf16.gmra.mrb[0].mxu0 %v653
        %v833 = vpop.f32.mrb[0].mxu0
        %v834 = vadd.f32 0.0, %v833
        %v835 = vpop.f32.mrb[0].mxu0
        %v836 = vpop.f32.mrb[0].mxu0
        %v837 = vadd.f32 0.0, %v836
        %v838 = vpop.f32.mrb[0].mxu0
        %839 = vmatprep.mubr.bf16.mxu0 0
        %840 = vmatmul.mubr.bf16.gmra.mrb[0].mxu0 %v655
        %v841 = vpop.f32.mrb[0].mxu0
        %v842 = vadd.f32 0.0, %v841
        %v843 = vpop.f32.mrb[0].mxu0
        %v844 = vpop.f32.mrb[0].mxu0
        %v845 = vadd.f32 0.0, %v844
        %v846 = vpop.f32.mrb[0].mxu0
        %847 = vmatprep.mubr.bf16.mxu0 0
        %848 = vmatmul.mubr.bf16.gmra.mrb[0].mxu0 %v657
        %v849 = vpop.f32.mrb[0].mxu0
        %v850 = vadd.f32 0.0, %v849
        %v851 = vpop.f32.mrb[0].mxu0
        %v852 = vpop.f32.mrb[0].mxu0
        %v853 = vadd.f32 0.0, %v852
        %v854 = vpop.f32.mrb[0].mxu0
        %855 = vmatprep.mubr.bf16.mxu0 0
        %856 = vmatmul.mubr.bf16.gmra.mrb[0].mxu0 %v659
        %v857 = vpop.f32.mrb[0].mxu0
        %v858 = vadd.f32 0.0, %v857
        %v859 = vpop.f32.mrb[0].mxu0
        %v860 = vpop.f32.mrb[0].mxu0
        %v861 = vadd.f32 0.0, %v860
        %v862 = vpop.f32.mrb[0].mxu0
        %863 = vmatprep.mubr.bf16.mxu0 0
        %864 = vmatmul.mubr.bf16.gmra.mrb[0].mxu0 %v661
        %v865 = vpop.f32.mrb[0].mxu0
        %v866 = vadd.f32 0.0, %v865
        %v867 = vpop.f32.mrb[0].mxu0
        %v868 = vpop.f32.mrb[0].mxu0
        %v869 = vadd.f32 0.0, %v868
        %v870 = vpop.f32.mrb[0].mxu0
        %871 = vmatprep.mubr.bf16.mxu0 0
        %872 = vmatmul.mubr.bf16.gmra.mrb[0].mxu0 %v663
        %v873 = vpop.f32.mrb[0].mxu0
        %v874 = vadd.f32 0.0, %v873
        %v875 = vpop.f32.mrb[0].mxu0
        %v876 = vpop.f32.mrb[0].mxu0
        %v877 = vadd.f32 0.0, %v876
        %v878 = vpop.f32.mrb[0].mxu0
        %879 = vmatprep.mubr.bf16.mxu0 0
        %880 = vmatmul.mubr.bf16.gmra.mrb[0].mxu0 %v665
        %v881 = vpop.f32.mrb[0].mxu0
        %v882 = vadd.f32 0.0, %v881
        %v883 = vpop.f32.mrb[0].mxu0
        %v884 = vpop.f32.mrb[0].mxu0
        %v885 = vadd.f32 0.0, %v884
        %v886 = vpop.f32.mrb[0].mxu0
        %887 = vmatprep.mubr.bf16.mxu0 0
        %888 = vmatmul.mubr.bf16.gmra.mrb[0].mxu0 %v667
        %v889 = vpop.f32.mrb[0].mxu0
        %v890 = vadd.f32 0.0, %v889
        %v891 = vpop.f32.mrb[0].mxu0
        %v892 = vpop.f32.mrb[0].mxu0
        %v893 = vadd.f32 0.0, %v892
        %v894 = vpop.f32.mrb[0].mxu0
        %895 = vmatprep.mubr.bf16.mxu0 0
        %896 = vmatmul.mubr.bf16.gmra.mrb[0].mxu0 %v669
        %v897 = vpop.f32.mrb[0].mxu0
        %v898 = vadd.f32 0.0, %v897
        %v899 = vpop.f32.mrb[0].mxu0
        %v900 = vpop.f32.mrb[0].mxu0
        %v901 = vadd.f32 0.0, %v900
        %v902 = vpop.f32.mrb[0].mxu0
        %903 = vmatprep.mubr.bf16.mxu0 0
        %904 = vmatmul.mubr.bf16.gmra.mrb[0].mxu0 %v671
        %v905 = vpop.f32.mrb[0].mxu0
        %v906 = vadd.f32 0.0, %v905
        %v907 = vpop.f32.mrb[0].mxu0
        %v908 = vpop.f32.mrb[0].mxu0
        %v909 = vadd.f32 0.0, %v908
        %v910 = vpop.f32.mrb[0].mxu0
        %911 = vmatprep.mubr.bf16.mxu0 0
        %912 = vmatmul.mubr.bf16.gmra.mrb[0].mxu0 %v673
        %v913 = vpop.f32.mrb[0].mxu0
        %v914 = vadd.f32 0.0, %v913
        %v915 = vpop.f32.mrb[0].mxu0
        %v916 = vpop.f32.mrb[0].mxu0
        %v917 = vadd.f32 0.0, %v916
        %v918 = vpop.f32.mrb[0].mxu0
        %919 = vmatprep.mubr.bf16.mxu0 0
        %920 = vmatmul.mubr.bf16.gmra.mrb[0].mxu0 %v675
        %v921 = vpop.f32.mrb[0].mxu0
        %v922 = vadd.f32 0.0, %v921
        %v923 = vpop.f32.mrb[0].mxu0
        %v924 = vpop.f32.mrb[0].mxu0
        %v925 = vadd.f32 0.0, %v924
        %v926 = vpop.f32.mrb[0].mxu0
        %927 = vmatprep.mubr.bf16.mxu0 0
        %928 = vmatmul.mubr.bf16.gmra.mrb[0].mxu0 %v677
        %v929 = vpop.f32.mrb[0].mxu0
        %v930 = vadd.f32 0.0, %v929
        %v931 = vpop.f32.mrb[0].mxu0
        %v932 = vpop.f32.mrb[0].mxu0
        %v933 = vadd.f32 0.0, %v932
        %v934 = vpop.f32.mrb[0].mxu0
        %935 = vmatprep.mubr.bf16.mxu0 0
        %936 = vmatmul.mubr.bf16.gmra.mrb[0].mxu0 %v679
        %v937 = vpop.f32.mrb[0].mxu0
        %v938 = vadd.f32 0.0, %v937
        %v939 = vpop.f32.mrb[0].mxu0
        %v940 = vpop.f32.mrb[0].mxu0
        %v941 = vadd.f32 0.0, %v940
        %v942 = vpop.f32.mrb[0].mxu0
        %943 = vmatprep.mubr.bf16.mxu0 0
        %944 = vmatmul.mubr.bf16.gmra.mrb[0].mxu0 %v681
        %v945 = vpop.f32.mrb[0].mxu0
        %v946 = vadd.f32 0.0, %v945
        %v947 = vpop.f32.mrb[0].mxu0
        %v948 = vpop.f32.mrb[0].mxu0
        %v949 = vadd.f32 0.0, %v948
        %v950 = vpop.f32.mrb[0].mxu0
        %951 = vmatprep.mubr.bf16.mxu0 0
        %952 = vmatmul.mubr.bf16.gmra.mrb[0].mxu0 %v683
        %v953 = vpop.f32.mrb[0].mxu0
        %v954 = vadd.f32 0.0, %v953
        %v955 = vpop.f32.mrb[0].mxu0
        %v956 = vpop.f32.mrb[0].mxu0
        %v957 = vadd.f32 0.0, %v956
        %v958 = vpop.f32.mrb[0].mxu0
        %959 = vmatprep.mubr.bf16.mxu0 0
        %960 = vmatmul.mubr.bf16.gmra.mrb[0].mxu0 %v685
        %v961 = vpop.f32.mrb[0].mxu0
        %v962 = vadd.f32 0.0, %v961
        %v963 = vpop.f32.mrb[0].mxu0
        %v964 = vpop.f32.mrb[0].mxu0
        %v965 = vadd.f32 0.0, %v964
        %v966 = vpop.f32.mrb[0].mxu0
        %967 = vmatprep.mubr.bf16.mxu0 0
        %968 = vmatmul.mubr.bf16.gmra.mrb[0].mxu0 %v687
        %v969 = vpop.f32.mrb[0].mxu0
        %v970 = vadd.f32 0.0, %v969
        %v971 = vpop.f32.mrb[0].mxu0
        %v972 = vpop.f32.mrb[0].mxu0
        %v973 = vadd.f32 0.0, %v972
        %v974 = vpop.f32.mrb[0].mxu0
        %975 = vmatprep.mubr.bf16.mxu0 0
        %976 = vmatmul.mubr.bf16.gmra.mrb[0].mxu0 %v689
        %v977 = vpop.f32.mrb[0].mxu0
        %v978 = vadd.f32 0.0, %v977
        %v979 = vpop.f32.mrb[0].mxu0
        %v980 = vpop.f32.mrb[0].mxu0
        %v981 = vadd.f32 0.0, %v980
        %v982 = vpop.f32.mrb[0].mxu0
        %983 = vmatprep.mubr.bf16.mxu0 0
        %984 = vmatmul.mubr.bf16.gmra.mrb[0].mxu0 %v691
        %v985 = vpop.f32.mrb[0].mxu0
        %v986 = vadd.f32 0.0, %v985
        %v987 = vpop.f32.mrb[0].mxu0
        %v988 = vpop.f32.mrb[0].mxu0
        %v989 = vadd.f32 0.0, %v988
        %v990 = vpop.f32.mrb[0].mxu0
        %991 = vmatprep.mubr.bf16.mxu0 0
        %992 = vmatmul.mubr.bf16.gmra.mrb[0].mxu0 %v693
        %v993 = vpop.f32.mrb[0].mxu0
        %v994 = vadd.f32 0.0, %v993
        %v995 = vpop.f32.mrb[0].mxu0
        %v996 = vpop.f32.mrb[0].mxu0
        %v997 = vadd.f32 0.0, %v996
        %v998 = vpop.f32.mrb[0].mxu0
        %999 = vmatprep.mubr.bf16.mxu0 0
        %1000 = vmatmul.mubr.bf16.gmra.mrb[0].mxu0 %v695
        %v1001 = vpop.f32.mrb[0].mxu0
        %v1002 = vadd.f32 0.0, %v1001
        %v1003 = vpop.f32.mrb[0].mxu0
        %v1004 = vpop.f32.mrb[0].mxu0
        %v1005 = vadd.f32 0.0, %v1004
        %v1006 = vpop.f32.mrb[0].mxu0
        %1007 = vmatprep.mubr.bf16.mxu0 0
        %1008 = vmatmul.mubr.bf16.gmra.mrb[0].mxu0 %v697
        %v1009 = vpop.f32.mrb[0].mxu0
        %v1010 = vadd.f32 0.0, %v1009
        %v1011 = vpop.f32.mrb[0].mxu0
        %v1012 = vpop.f32.mrb[0].mxu0
        %v1013 = vadd.f32 0.0, %v1012
        %v1014 = vpop.f32.mrb[0].mxu0
        %1015 = vmatprep.mubr.bf16.mxu0 0
        %1016 = vmatmul.mubr.bf16.gmra.mrb[0].mxu0 %v699
        %v1017 = vpop.f32.mrb[0].mxu0
        %v1018 = vadd.f32 0.0, %v1017
        %v1019 = vpop.f32.mrb[0].mxu0
        %v1020 = vpop.f32.mrb[0].mxu0
        %v1021 = vadd.f32 0.0, %v1020
        %v1022 = vpop.f32.mrb[0].mxu0
        %1023 = vdwg.mxu0
        %vm1024 = vsmask.f32 4352
        %v1026 = vshrl.u32 %v555, 16
        %v1028 = vrot.slane %v1026, 3
        %v1029 = vshll.u32 %v555, 16
        %v1031 = vrot.slane %v1029, 4
        %v1032 = vor.u32 %v1028, %v1031
        %v1034 = vshrl.u32 %v556, 16
        %v1036 = vrot.slane %v1034, 3
        %v1037 = vshll.u32 %v556, 16
        %v1039 = vrot.slane %v1037, 4
        %v1040 = vor.u32 %v1036, %v1039
        %v1041 = vsel %vm1024, %v1032, %v1040
        %v1043 = vshrl.u32 %v557, 16
        %v1045 = vrot.slane %v1043, 3
        %v1046 = vshll.u32 %v557, 16
        %v1048 = vrot.slane %v1046, 4
        %v1049 = vor.u32 %v1045, %v1048
        %v1050 = vsel %vm1024, %v1040, %v1049
        %v1052 = vshrl.u32 %v558, 16
        %v1054 = vrot.slane %v1052, 3
        %v1055 = vshll.u32 %v558, 16
        %v1057 = vrot.slane %v1055, 4
        %v1058 = vor.u32 %v1054, %v1057
        %v1059 = vsel %vm1024, %v1049, %v1058
        %v1061 = vshrl.u32 %v559, 16
        %v1063 = vrot.slane %v1061, 3
        %v1064 = vshll.u32 %v559, 16
        %v1066 = vrot.slane %v1064, 4
        %v1067 = vor.u32 %v1063, %v1066
        %v1068 = vsel %vm1024, %v1058, %v1067
        %v1070 = vshrl.u32 %v560, 16
        %v1072 = vrot.slane %v1070, 3
        %v1073 = vshll.u32 %v560, 16
        %v1075 = vrot.slane %v1073, 4
        %v1076 = vor.u32 %v1072, %v1075
        %v1077 = vsel %vm1024, %v1067, %v1076
        %v1079 = vshrl.u32 %v561, 16
        %v1081 = vrot.slane %v1079, 3
        %v1082 = vshll.u32 %v561, 16
        %v1084 = vrot.slane %v1082, 4
        %v1085 = vor.u32 %v1081, %v1084
        %v1086 = vsel %vm1024, %v1076, %v1085
        %v1088 = vshrl.u32 %v562, 16
        %v1090 = vrot.slane %v1088, 3
        %v1091 = vshll.u32 %v562, 16
        %v1093 = vrot.slane %v1091, 4
        %v1094 = vor.u32 %v1090, %v1093
        %v1095 = vsel %vm1024, %v1085, %v1094
        %v1097 = vshrl.u32 %v563, 16
        %v1099 = vrot.slane %v1097, 3
        %v1100 = vshll.u32 %v563, 16
        %v1102 = vrot.slane %v1100, 4
        %v1103 = vor.u32 %v1099, %v1102
        %v1104 = vsel %vm1024, %v1094, %v1103
        %v1106 = vshrl.u32 %v564, 16
        %v1108 = vrot.slane %v1106, 3
        %v1109 = vshll.u32 %v564, 16
        %v1111 = vrot.slane %v1109, 4
        %v1112 = vor.u32 %v1108, %v1111
        %v1113 = vsel %vm1024, %v1103, %v1112
        %v1115 = vshrl.u32 %v565, 16
        %v1117 = vrot.slane %v1115, 3
        %v1118 = vshll.u32 %v565, 16
        %v1120 = vrot.slane %v1118, 4
        %v1121 = vor.u32 %v1117, %v1120
        %v1122 = vsel %vm1024, %v1112, %v1121
        %v1124 = vshrl.u32 %v566, 16
        %v1126 = vrot.slane %v1124, 3
        %v1127 = vshll.u32 %v566, 16
        %v1129 = vrot.slane %v1127, 4
        %v1130 = vor.u32 %v1126, %v1129
        %v1131 = vsel %vm1024, %v1121, %v1130
        %v1133 = vshrl.u32 %v567, 16
        %v1135 = vrot.slane %v1133, 3
        %v1136 = vshll.u32 %v567, 16
        %v1138 = vrot.slane %v1136, 4
        %v1139 = vor.u32 %v1135, %v1138
        %v1140 = vsel %vm1024, %v1130, %v1139
        %v1142 = vshrl.u32 %v568, 16
        %v1144 = vrot.slane %v1142, 3
        %v1145 = vshll.u32 %v568, 16
        %v1147 = vrot.slane %v1145, 4
        %v1148 = vor.u32 %v1144, %v1147
        %v1149 = vsel %vm1024, %v1139, %v1148
        %v1151 = vshrl.u32 %v569, 16
        %v1153 = vrot.slane %v1151, 3
        %v1154 = vshll.u32 %v569, 16
        %v1156 = vrot.slane %v1154, 4
        %v1157 = vor.u32 %v1153, %v1156
        %v1158 = vsel %vm1024, %v1148, %v1157
        %v1160 = vshrl.u32 %v570, 16
        %v1162 = vrot.slane %v1160, 3
        %v1163 = vshll.u32 %v570, 16
        %v1165 = vrot.slane %v1163, 4
        %v1166 = vor.u32 %v1162, %v1165
        %v1167 = vsel %vm1024, %v1157, %v1166
        %v1169 = vshrl.u32 %v571, 16
        %v1171 = vrot.slane %v1169, 3
        %v1172 = vshll.u32 %v571, 16
        %v1174 = vrot.slane %v1172, 4
        %v1175 = vor.u32 %v1171, %v1174
        %v1176 = vsel %vm1024, %v1166, %v1175
        %v1178 = vshrl.u32 %v572, 16
        %v1180 = vrot.slane %v1178, 3
        %v1181 = vshll.u32 %v572, 16
        %v1183 = vrot.slane %v1181, 4
        %v1184 = vor.u32 %v1180, %v1183
        %v1185 = vsel %vm1024, %v1175, %v1184
        %v1187 = vshrl.u32 %v573, 16
        %v1189 = vrot.slane %v1187, 3
        %v1190 = vshll.u32 %v573, 16
        %v1192 = vrot.slane %v1190, 4
        %v1193 = vor.u32 %v1189, %v1192
        %v1194 = vsel %vm1024, %v1184, %v1193
        %v1196 = vshrl.u32 %v574, 16
        %v1198 = vrot.slane %v1196, 3
        %v1199 = vshll.u32 %v574, 16
        %v1201 = vrot.slane %v1199, 4
        %v1202 = vor.u32 %v1198, %v1201
        %v1203 = vsel %vm1024, %v1193, %v1202
        %v1205 = vshrl.u32 %v575, 16
        %v1207 = vrot.slane %v1205, 3
        %v1208 = vshll.u32 %v575, 16
        %v1210 = vrot.slane %v1208, 4
        %v1211 = vor.u32 %v1207, %v1210
        %v1212 = vsel %vm1024, %v1202, %v1211
        %v1214 = vshrl.u32 %v576, 16
        %v1216 = vrot.slane %v1214, 3
        %v1217 = vshll.u32 %v576, 16
        %v1219 = vrot.slane %v1217, 4
        %v1220 = vor.u32 %v1216, %v1219
        %v1221 = vsel %vm1024, %v1211, %v1220
        %v1223 = vshrl.u32 %v577, 16
        %v1225 = vrot.slane %v1223, 3
        %v1226 = vshll.u32 %v577, 16
        %v1228 = vrot.slane %v1226, 4
        %v1229 = vor.u32 %v1225, %v1228
        %v1230 = vsel %vm1024, %v1220, %v1229
        %v1232 = vshrl.u32 %v578, 16
        %v1234 = vrot.slane %v1232, 3
        %v1235 = vshll.u32 %v578, 16
        %v1237 = vrot.slane %v1235, 4
        %v1238 = vor.u32 %v1234, %v1237
        %v1239 = vsel %vm1024, %v1229, %v1238
        %v1241 = vshrl.u32 %v579, 16
        %v1243 = vrot.slane %v1241, 3
        %v1244 = vshll.u32 %v579, 16
        %v1246 = vrot.slane %v1244, 4
        %v1247 = vor.u32 %v1243, %v1246
        %v1248 = vsel %vm1024, %v1238, %v1247
        %v1250 = vshrl.u32 %v580, 16
        %v1252 = vrot.slane %v1250, 3
        %v1253 = vshll.u32 %v580, 16
        %v1255 = vrot.slane %v1253, 4
        %v1256 = vor.u32 %v1252, %v1255
        %v1257 = vsel %vm1024, %v1247, %v1256
        %v1259 = vshrl.u32 %v581, 16
        %v1261 = vrot.slane %v1259, 3
        %v1262 = vshll.u32 %v581, 16
        %v1264 = vrot.slane %v1262, 4
        %v1265 = vor.u32 %v1261, %v1264
        %v1266 = vsel %vm1024, %v1256, %v1265
        %v1268 = vshrl.u32 %v582, 16
        %v1270 = vrot.slane %v1268, 3
        %v1271 = vshll.u32 %v582, 16
        %v1273 = vrot.slane %v1271, 4
        %v1274 = vor.u32 %v1270, %v1273
        %v1275 = vsel %vm1024, %v1265, %v1274
        %v1319 = vunpack.c.l.b16 %v583
        %v1320 = vunpack.c.l.b16 %v584
        %v1321 = vunpack.c.l.b16 %v585
        %v1322 = vunpack.c.l.b16 %v586
        %v1323 = vunpack.c.l.b16 %v587
        %v1324 = vunpack.c.l.b16 %v588
        %v1325 = vunpack.c.l.b16 %v589
        %v1326 = vunpack.c.l.b16 %v590
        %v1327 = vunpack.c.l.b16 %v591
        %v1328 = vunpack.c.l.b16 %v592
        %v1329 = vunpack.c.l.b16 %v593
        %v1330 = vunpack.c.l.b16 %v594
        %v1331 = vunpack.c.l.b16 %v595
        %v1332 = vunpack.c.l.b16 %v596
        %v1333 = vunpack.c.l.b16 %v597
        %v1334 = vunpack.c.l.b16 %v598
        %v1335 = vpack.c.b16 %v1320, %v1319
        %v1336 = vpack.c.b16 %v1322, %v1321
        %v1337 = vpack.c.b16 %v1324, %v1323
        %v1338 = vpack.c.b16 %v1326, %v1325
        %v1339 = vpack.c.b16 %v1328, %v1327
        %v1340 = vpack.c.b16 %v1330, %v1329
        %v1341 = vpack.c.b16 %v1332, %v1331
        %v1342 = vpack.c.b16 %v1334, %v1333
        %1351 = vmatprep.subr.bf16.mxu0 0
        %1352 = vmatpush1.bf16.msra.mxu0 %v1335
        %1353 = vmatprep.subr.bf16.mxu0 0
        %1354 = vmatpush1.bf16.msra.mxu0 %v1336
        %1355 = vmatprep.subr.bf16.mxu0 0
        %1356 = vmatpush1.bf16.msra.mxu0 %v1337
        %1357 = vmatprep.subr.bf16.mxu0 0
        %1358 = vmatpush1.bf16.msra.mxu0 %v1338
        %1359 = vmatprep.subr.bf16.mxu0 0
        %1360 = vmatpush1.bf16.msra.mxu0 %v1339
        %1361 = vmatprep.subr.bf16.mxu0 0
        %1362 = vmatpush1.bf16.msra.mxu0 %v1340
        %1363 = vmatprep.subr.bf16.mxu0 0
        %1364 = vmatpush1.bf16.msra.mxu0 %v1341
        %1365 = vmatprep.subr.bf16.mxu0 0
        %1366 = vmatpush1.bf16.msra.mxu0 %v1342
        %1367 = vmatprep.subr.bf16.mxu0 0
        %1368 = vmatpush1.bf16.msra.mxu0 0
        %1369 = vmatprep.subr.bf16.mxu0 0
        %1370 = vmatpush1.bf16.msra.mxu0 0
        %1371 = vmatprep.subr.bf16.mxu0 0
        %1372 = vmatpush1.bf16.msra.mxu0 0
        %1373 = vmatprep.subr.bf16.mxu0 0
        %1374 = vmatpush1.bf16.msra.mxu0 0
        %1375 = vmatprep.subr.bf16.mxu0 0
        %1376 = vmatpush1.bf16.msra.mxu0 0
        %1377 = vmatprep.subr.bf16.mxu0 0
        %1378 = vmatpush1.bf16.msra.mxu0 0
        %1379 = vmatprep.subr.bf16.mxu0 0
        %1380 = vmatpush1.bf16.msra.mxu0 0
        %1381 = vmatprep.subr.bf16.mxu0 0
        %1382 = vmatpush1.bf16.msra.mxu0 0
        %1383 = vmatprep.mubr.bf16.mxu0 0
        %1384 = vmatmul.mubr.bf16.gmra.mrb[0].mxu0 %v1041
        %v1385 = vpop.f32.mrb[0].mxu0
        %v1386 = vadd.f32 %v810, %v1385
        %v1387 = vpop.f32.mrb[0].mxu0
        %v1388 = vpop.f32.mrb[0].mxu0
        %v1389 = vadd.f32 %v813, %v1388
        %v1390 = vpop.f32.mrb[0].mxu0
        %1391 = vmatprep.mubr.bf16.mxu0 0
        %1392 = vmatmul.mubr.bf16.gmra.mrb[0].mxu0 %v1050
        %v1393 = vpop.f32.mrb[0].mxu0
        %v1394 = vadd.f32 %v818, %v1393
        %v1395 = vpop.f32.mrb[0].mxu0
        %v1396 = vpop.f32.mrb[0].mxu0
        %v1397 = vadd.f32 %v821, %v1396
        %v1398 = vpop.f32.mrb[0].mxu0
        %1399 = vmatprep.mubr.bf16.mxu0 0
        %1400 = vmatmul.mubr.bf16.gmra.mrb[0].mxu0 %v1059
        %v1401 = vpop.f32.mrb[0].mxu0
        %v1402 = vadd.f32 %v826, %v1401
        %v1403 = vpop.f32.mrb[0].mxu0
        %v1404 = vpop.f32.mrb[0].mxu0
        %v1405 = vadd.f32 %v829, %v1404
        %v1406 = vpop.f32.mrb[0].mxu0
        %1407 = vmatprep.mubr.bf16.mxu0 0
        %1408 = vmatmul.mubr.bf16.gmra.mrb[0].mxu0 %v1068
        %v1409 = vpop.f32.mrb[0].mxu0
        %v1410 = vadd.f32 %v834, %v1409
        %v1411 = vpop.f32.mrb[0].mxu0
        %v1412 = vpop.f32.mrb[0].mxu0
        %v1413 = vadd.f32 %v837, %v1412
        %v1414 = vpop.f32.mrb[0].mxu0
        %1415 = vmatprep.mubr.bf16.mxu0 0
        %1416 = vmatmul.mubr.bf16.gmra.mrb[0].mxu0 %v1077
        %v1417 = vpop.f32.mrb[0].mxu0
        %v1418 = vadd.f32 %v842, %v1417
        %v1419 = vpop.f32.mrb[0].mxu0
        %v1420 = vpop.f32.mrb[0].mxu0
        %v1421 = vadd.f32 %v845, %v1420
        %v1422 = vpop.f32.mrb[0].mxu0
        %1423 = vmatprep.mubr.bf16.mxu0 0
        %1424 = vmatmul.mubr.bf16.gmra.mrb[0].mxu0 %v1086
        %v1425 = vpop.f32.mrb[0].mxu0
        %v1426 = vadd.f32 %v850, %v1425
        %v1427 = vpop.f32.mrb[0].mxu0
        %v1428 = vpop.f32.mrb[0].mxu0
        %v1429 = vadd.f32 %v853, %v1428
        %v1430 = vpop.f32.mrb[0].mxu0
        %1431 = vmatprep.mubr.bf16.mxu0 0
        %1432 = vmatmul.mubr.bf16.gmra.mrb[0].mxu0 %v1095
        %v1433 = vpop.f32.mrb[0].mxu0
        %v1434 = vadd.f32 %v858, %v1433
        %v1435 = vpop.f32.mrb[0].mxu0
        %v1436 = vpop.f32.mrb[0].mxu0
        %v1437 = vadd.f32 %v861, %v1436
        %v1438 = vpop.f32.mrb[0].mxu0
        %1439 = vmatprep.mubr.bf16.mxu0 0
        %1440 = vmatmul.mubr.bf16.gmra.mrb[0].mxu0 %v1104
        %v1441 = vpop.f32.mrb[0].mxu0
        %v1442 = vadd.f32 %v866, %v1441
        %v1443 = vpop.f32.mrb[0].mxu0
        %v1444 = vpop.f32.mrb[0].mxu0
        %v1445 = vadd.f32 %v869, %v1444
        %v1446 = vpop.f32.mrb[0].mxu0
        %1447 = vmatprep.mubr.bf16.mxu0 0
        %1448 = vmatmul.mubr.bf16.gmra.mrb[0].mxu0 %v1113
        %v1449 = vpop.f32.mrb[0].mxu0
        %v1450 = vadd.f32 %v874, %v1449
        %v1451 = vpop.f32.mrb[0].mxu0
        %v1452 = vpop.f32.mrb[0].mxu0
        %v1453 = vadd.f32 %v877, %v1452
        %v1454 = vpop.f32.mrb[0].mxu0
        %1455 = vmatprep.mubr.bf16.mxu0 0
        %1456 = vmatmul.mubr.bf16.gmra.mrb[0].mxu0 %v1122
        %v1457 = vpop.f32.mrb[0].mxu0
        %v1458 = vadd.f32 %v882, %v1457
        %v1459 = vpop.f32.mrb[0].mxu0
        %v1460 = vpop.f32.mrb[0].mxu0
        %v1461 = vadd.f32 %v885, %v1460
        %v1462 = vpop.f32.mrb[0].mxu0
        %1463 = vmatprep.mubr.bf16.mxu0 0
        %1464 = vmatmul.mubr.bf16.gmra.mrb[0].mxu0 %v1131
        %v1465 = vpop.f32.mrb[0].mxu0
        %v1466 = vadd.f32 %v890, %v1465
        %v1467 = vpop.f32.mrb[0].mxu0
        %v1468 = vpop.f32.mrb[0].mxu0
        %v1469 = vadd.f32 %v893, %v1468
        %v1470 = vpop.f32.mrb[0].mxu0
        %1471 = vmatprep.mubr.bf16.mxu0 0
        %1472 = vmatmul.mubr.bf16.gmra.mrb[0].mxu0 %v1140
        %v1473 = vpop.f32.mrb[0].mxu0
        %v1474 = vadd.f32 %v898, %v1473
        %v1475 = vpop.f32.mrb[0].mxu0
        %v1476 = vpop.f32.mrb[0].mxu0
        %v1477 = vadd.f32 %v901, %v1476
        %v1478 = vpop.f32.mrb[0].mxu0
        %1479 = vmatprep.mubr.bf16.mxu0 0
        %1480 = vmatmul.mubr.bf16.gmra.mrb[0].mxu0 %v1149
        %v1481 = vpop.f32.mrb[0].mxu0
        %v1482 = vadd.f32 %v906, %v1481
        %v1483 = vpop.f32.mrb[0].mxu0
        %v1484 = vpop.f32.mrb[0].mxu0
        %v1485 = vadd.f32 %v909, %v1484
        %v1486 = vpop.f32.mrb[0].mxu0
        %1487 = vmatprep.mubr.bf16.mxu0 0
        %1488 = vmatmul.mubr.bf16.gmra.mrb[0].mxu0 %v1158
        %v1489 = vpop.f32.mrb[0].mxu0
        %v1490 = vadd.f32 %v914, %v1489
        %v1491 = vpop.f32.mrb[0].mxu0
        %v1492 = vpop.f32.mrb[0].mxu0
        %v1493 = vadd.f32 %v917, %v1492
        %v1494 = vpop.f32.mrb[0].mxu0
        %1495 = vmatprep.mubr.bf16.mxu0 0
        %1496 = vmatmul.mubr.bf16.gmra.mrb[0].mxu0 %v1167
        %v1497 = vpop.f32.mrb[0].mxu0
        %v1498 = vadd.f32 %v922, %v1497
        %v1499 = vpop.f32.mrb[0].mxu0
        %v1500 = vpop.f32.mrb[0].mxu0
        %v1501 = vadd.f32 %v925, %v1500
        %v1502 = vpop.f32.mrb[0].mxu0
        %1503 = vmatprep.mubr.bf16.mxu0 0
        %1504 = vmatmul.mubr.bf16.gmra.mrb[0].mxu0 %v1176
        %v1505 = vpop.f32.mrb[0].mxu0
        %v1506 = vadd.f32 %v930, %v1505
        %v1507 = vpop.f32.mrb[0].mxu0
        %v1508 = vpop.f32.mrb[0].mxu0
        %v1509 = vadd.f32 %v933, %v1508
        %v1510 = vpop.f32.mrb[0].mxu0
        %1511 = vmatprep.mubr.bf16.mxu0 0
        %1512 = vmatmul.mubr.bf16.gmra.mrb[0].mxu0 %v1185
        %v1513 = vpop.f32.mrb[0].mxu0
        %v1514 = vadd.f32 %v938, %v1513
        %v1515 = vpop.f32.mrb[0].mxu0
        %v1516 = vpop.f32.mrb[0].mxu0
        %v1517 = vadd.f32 %v941, %v1516
        %v1518 = vpop.f32.mrb[0].mxu0
        %1519 = vmatprep.mubr.bf16.mxu0 0
        %1520 = vmatmul.mubr.bf16.gmra.mrb[0].mxu0 %v1194
        %v1521 = vpop.f32.mrb[0].mxu0
        %v1522 = vadd.f32 %v946, %v1521
        %v1523 = vpop.f32.mrb[0].mxu0
        %v1524 = vpop.f32.mrb[0].mxu0
        %v1525 = vadd.f32 %v949, %v1524
        %v1526 = vpop.f32.mrb[0].mxu0
        %1527 = vmatprep.mubr.bf16.mxu0 0
        %1528 = vmatmul.mubr.bf16.gmra.mrb[0].mxu0 %v1203
        %v1529 = vpop.f32.mrb[0].mxu0
        %v1530 = vadd.f32 %v954, %v1529
        %v1531 = vpop.f32.mrb[0].mxu0
        %v1532 = vpop.f32.mrb[0].mxu0
        %v1533 = vadd.f32 %v957, %v1532
        %v1534 = vpop.f32.mrb[0].mxu0
        %1535 = vmatprep.mubr.bf16.mxu0 0
        %1536 = vmatmul.mubr.bf16.gmra.mrb[0].mxu0 %v1212
        %v1537 = vpop.f32.mrb[0].mxu0
        %v1538 = vadd.f32 %v962, %v1537
        %v1539 = vpop.f32.mrb[0].mxu0
        %v1540 = vpop.f32.mrb[0].mxu0
        %v1541 = vadd.f32 %v965, %v1540
        %v1542 = vpop.f32.mrb[0].mxu0
        %1543 = vmatprep.mubr.bf16.mxu0 0
        %1544 = vmatmul.mubr.bf16.gmra.mrb[0].mxu0 %v1221
        %v1545 = vpop.f32.mrb[0].mxu0
        %v1546 = vadd.f32 %v970, %v1545
        %v1547 = vpop.f32.mrb[0].mxu0
        %v1548 = vpop.f32.mrb[0].mxu0
        %v1549 = vadd.f32 %v973, %v1548
        %v1550 = vpop.f32.mrb[0].mxu0
        %1551 = vmatprep.mubr.bf16.mxu0 0
        %1552 = vmatmul.mubr.bf16.gmra.mrb[0].mxu0 %v1230
        %v1553 = vpop.f32.mrb[0].mxu0
        %v1554 = vadd.f32 %v978, %v1553
        %v1555 = vpop.f32.mrb[0].mxu0
        %v1556 = vpop.f32.mrb[0].mxu0
        %v1557 = vadd.f32 %v981, %v1556
        %v1558 = vpop.f32.mrb[0].mxu0
        %1559 = vmatprep.mubr.bf16.mxu0 0
        %1560 = vmatmul.mubr.bf16.gmra.mrb[0].mxu0 %v1239
        %v1561 = vpop.f32.mrb[0].mxu0
        %v1562 = vadd.f32 %v986, %v1561
        %v1563 = vpop.f32.mrb[0].mxu0
        %v1564 = vpop.f32.mrb[0].mxu0
        %v1565 = vadd.f32 %v989, %v1564
        %v1566 = vpop.f32.mrb[0].mxu0
        %1567 = vmatprep.mubr.bf16.mxu0 0
        %1568 = vmatmul.mubr.bf16.gmra.mrb[0].mxu0 %v1248
        %v1569 = vpop.f32.mrb[0].mxu0
        %v1570 = vadd.f32 %v994, %v1569
        %v1571 = vpop.f32.mrb[0].mxu0
        %v1572 = vpop.f32.mrb[0].mxu0
        %v1573 = vadd.f32 %v997, %v1572
        %v1574 = vpop.f32.mrb[0].mxu0
        %1575 = vmatprep.mubr.bf16.mxu0 0
        %1576 = vmatmul.mubr.bf16.gmra.mrb[0].mxu0 %v1257
        %v1577 = vpop.f32.mrb[0].mxu0
        %v1578 = vadd.f32 %v1002, %v1577
        %v1579 = vpop.f32.mrb[0].mxu0
        %v1580 = vpop.f32.mrb[0].mxu0
        %v1581 = vadd.f32 %v1005, %v1580
        %v1582 = vpop.f32.mrb[0].mxu0
        %1583 = vmatprep.mubr.bf16.mxu0 0
        %1584 = vmatmul.mubr.bf16.gmra.mrb[0].mxu0 %v1266
        %v1585 = vpop.f32.mrb[0].mxu0
        %v1586 = vadd.f32 %v1010, %v1585
        %v1587 = vpop.f32.mrb[0].mxu0
        %v1588 = vpop.f32.mrb[0].mxu0
        %v1589 = vadd.f32 %v1013, %v1588
        %v1590 = vpop.f32.mrb[0].mxu0
        %1591 = vmatprep.mubr.bf16.mxu0 0
        %1592 = vmatmul.mubr.bf16.gmra.mrb[0].mxu0 %v1275
        %v1593 = vpop.f32.mrb[0].mxu0
        %v1594 = vadd.f32 %v1018, %v1593
        %v1595 = vpop.f32.mrb[0].mxu0
        %v1596 = vpop.f32.mrb[0].mxu0
        %v1597 = vadd.f32 %v1021, %v1596
        %v1598 = vpop.f32.mrb[0].mxu0
        %1599 = vdwg.mxu0
        %v1600 = vld [vmem:[#allocation2 + $0xd8] sm:$0x1f]
        %v1601 = vld [vmem:[#allocation7 + $0x80] sm:$0xf]
        %v1602 = vld [vmem:[#allocation7 + $0x84] sm:$0xf]
        %v1603 = vld [vmem:[#allocation7 + $0x88] sm:$0xf]
        %v1604 = vld [vmem:[#allocation7 + $0x8c] sm:$0xf]
        %v1605 = vld [vmem:[#allocation7 + $0x90] sm:$0xf]
        %v1606 = vld [vmem:[#allocation7 + $0x94] sm:$0xf]
        %v1607 = vld [vmem:[#allocation7 + $0x98] sm:$0xf]
        %v1608 = vld [vmem:[#allocation7 + $0x9c] sm:$0xf]
        %v1609 = vld [vmem:[#allocation7 + $0xa0] sm:$0xf]
        %v1610 = vld [vmem:[#allocation7 + $0xa4] sm:$0xf]
        %v1611 = vld [vmem:[#allocation7 + $0xa8] sm:$0xf]
        %v1612 = vld [vmem:[#allocation7 + $0xac] sm:$0xf]
        %v1613 = vld [vmem:[#allocation7 + $0xb0] sm:$0xf]
        %v1614 = vld [vmem:[#allocation7 + $0xb4] sm:$0xf]
        %v1615 = vld [vmem:[#allocation7 + $0xb8] sm:$0xf]
        %v1616 = vld [vmem:[#allocation7 + $0xbc] sm:$0xf]
        %vm1617 = vsmask.f32 3328
        %v1619 = vshrl.u32 %v599, 16
        %v1621 = vrot.slane %v1619, 4
        %v1622 = vshll.u32 %v599, 16
        %v1624 = vrot.slane %v1622, 5
        %v1625 = vor.u32 %v1621, %v1624
        %v1626 = vrot.slane %v1034, 4
        %v1627 = vrot.slane %v1037, 5
        %v1628 = vor.u32 %v1626, %v1627
        %v1629 = vsel %vm1617, %v1625, %v1628
        %v1630 = vrot.slane %v1043, 4
        %v1631 = vrot.slane %v1046, 5
        %v1632 = vor.u32 %v1630, %v1631
        %v1633 = vsel %vm1617, %v1628, %v1632
        %v1634 = vrot.slane %v1052, 4
        %v1635 = vrot.slane %v1055, 5
        %v1636 = vor.u32 %v1634, %v1635
        %v1637 = vsel %vm1617, %v1632, %v1636
        %v1638 = vrot.slane %v1061, 4
        %v1639 = vrot.slane %v1064, 5
        %v1640 = vor.u32 %v1638, %v1639
        %v1641 = vsel %vm1617, %v1636, %v1640
        %v1642 = vrot.slane %v1070, 4
        %v1643 = vrot.slane %v1073, 5
        %v1644 = vor.u32 %v1642, %v1643
        %v1645 = vsel %vm1617, %v1640, %v1644
        %v1646 = vrot.slane %v1079, 4
        %v1647 = vrot.slane %v1082, 5
        %v1648 = vor.u32 %v1646, %v1647
        %v1649 = vsel %vm1617, %v1644, %v1648
        %v1650 = vrot.slane %v1088, 4
        %v1651 = vrot.slane %v1091, 5
        %v1652 = vor.u32 %v1650, %v1651
        %v1653 = vsel %vm1617, %v1648, %v1652
        %v1654 = vrot.slane %v1097, 4
        %v1655 = vrot.slane %v1100, 5
        %v1656 = vor.u32 %v1654, %v1655
        %v1657 = vsel %vm1617, %v1652, %v1656
        %v1658 = vrot.slane %v1106, 4
        %v1659 = vrot.slane %v1109, 5
        %v1660 = vor.u32 %v1658, %v1659
        %v1661 = vsel %vm1617, %v1656, %v1660
        %v1662 = vrot.slane %v1115, 4
        %v1663 = vrot.slane %v1118, 5
        %v1664 = vor.u32 %v1662, %v1663
        %v1665 = vsel %vm1617, %v1660, %v1664
        %v1666 = vrot.slane %v1124, 4
        %v1667 = vrot.slane %v1127, 5
        %v1668 = vor.u32 %v1666, %v1667
        %v1669 = vsel %vm1617, %v1664, %v1668
        %v1670 = vrot.slane %v1133, 4
        %v1671 = vrot.slane %v1136, 5
        %v1672 = vor.u32 %v1670, %v1671
        %v1673 = vsel %vm1617, %v1668, %v1672
        %v1674 = vrot.slane %v1142, 4
        %v1675 = vrot.slane %v1145, 5
        %v1676 = vor.u32 %v1674, %v1675
        %v1677 = vsel %vm1617, %v1672, %v1676
        %v1678 = vrot.slane %v1151, 4
        %v1679 = vrot.slane %v1154, 5
        %v1680 = vor.u32 %v1678, %v1679
        %v1681 = vsel %vm1617, %v1676, %v1680
        %v1682 = vrot.slane %v1160, 4
        %v1683 = vrot.slane %v1163, 5
        %v1684 = vor.u32 %v1682, %v1683
        %v1685 = vsel %vm1617, %v1680, %v1684
        %v1686 = vrot.slane %v1169, 4
        %v1687 = vrot.slane %v1172, 5
        %v1688 = vor.u32 %v1686, %v1687
        %v1689 = vsel %vm1617, %v1684, %v1688
        %v1690 = vrot.slane %v1178, 4
        %v1691 = vrot.slane %v1181, 5
        %v1692 = vor.u32 %v1690, %v1691
        %v1693 = vsel %vm1617, %v1688, %v1692
        %v1694 = vrot.slane %v1187, 4
        %v1695 = vrot.slane %v1190, 5
        %v1696 = vor.u32 %v1694, %v1695
        %v1697 = vsel %vm1617, %v1692, %v1696
        %v1698 = vrot.slane %v1196, 4
        %v1699 = vrot.slane %v1199, 5
        %v1700 = vor.u32 %v1698, %v1699
        %v1701 = vsel %vm1617, %v1696, %v1700
        %v1702 = vrot.slane %v1205, 4
        %v1703 = vrot.slane %v1208, 5
        %v1704 = vor.u32 %v1702, %v1703
        %v1705 = vsel %vm1617, %v1700, %v1704
        %v1706 = vrot.slane %v1214, 4
        %v1707 = vrot.slane %v1217, 5
        %v1708 = vor.u32 %v1706, %v1707
        %v1709 = vsel %vm1617, %v1704, %v1708
        %v1710 = vrot.slane %v1223, 4
        %v1711 = vrot.slane %v1226, 5
        %v1712 = vor.u32 %v1710, %v1711
        %v1713 = vsel %vm1617, %v1708, %v1712
        %v1714 = vrot.slane %v1232, 4
        %v1715 = vrot.slane %v1235, 5
        %v1716 = vor.u32 %v1714, %v1715
        %v1717 = vsel %vm1617, %v1712, %v1716
        %v1718 = vrot.slane %v1241, 4
        %v1719 = vrot.slane %v1244, 5
        %v1720 = vor.u32 %v1718, %v1719
        %v1721 = vsel %vm1617, %v1716, %v1720
        %v1722 = vrot.slane %v1250, 4
        %v1723 = vrot.slane %v1253, 5
        %v1724 = vor.u32 %v1722, %v1723
        %v1725 = vsel %vm1617, %v1720, %v1724
        %v1726 = vrot.slane %v1259, 4
        %v1727 = vrot.slane %v1262, 5
        %v1728 = vor.u32 %v1726, %v1727
        %v1729 = vsel %vm1617, %v1724, %v1728
        %v1731 = vshrl.u32 %v1600, 16
        %v1733 = vrot.slane %v1731, 4
        %v1734 = vshll.u32 %v1600, 16
        %v1736 = vrot.slane %v1734, 5
        %v1737 = vor.u32 %v1733, %v1736
        %v1738 = vsel %vm1617, %v1728, %v1737
        %v1782 = vunpack.c.l.b16 %v1601
        %v1783 = vunpack.c.l.b16 %v1602
        %v1784 = vunpack.c.l.b16 %v1603
        %v1785 = vunpack.c.l.b16 %v1604
        %v1786 = vunpack.c.l.b16 %v1605
        %v1787 = vunpack.c.l.b16 %v1606
        %v1788 = vunpack.c.l.b16 %v1607
        %v1789 = vunpack.c.l.b16 %v1608
        %v1790 = vunpack.c.l.b16 %v1609
        %v1791 = vunpack.c.l.b16 %v1610
        %v1792 = vunpack.c.l.b16 %v1611
        %v1793 = vunpack.c.l.b16 %v1612
        %v1794 = vunpack.c.l.b16 %v1613
        %v1795 = vunpack.c.l.b16 %v1614
        %v1796 = vunpack.c.l.b16 %v1615
        %v1797 = vunpack.c.l.b16 %v1616
        %v1798 = vpack.c.b16 %v1783, %v1782
        %v1799 = vpack.c.b16 %v1785, %v1784
        %v1800 = vpack.c.b16 %v1787, %v1786
        %v1801 = vpack.c.b16 %v1789, %v1788
        %v1802 = vpack.c.b16 %v1791, %v1790
        %v1803 = vpack.c.b16 %v1793, %v1792
        %v1804 = vpack.c.b16 %v1795, %v1794
        %v1805 = vpack.c.b16 %v1797, %v1796
        %1814 = vmatprep.subr.bf16.mxu0 0
        %1815 = vmatpush1.bf16.msra.mxu0 %v1798
        %1816 = vmatprep.subr.bf16.mxu0 0
        %1817 = vmatpush1.bf16.msra.mxu0 %v1799
        %1818 = vmatprep.subr.bf16.mxu0 0
        %1819 = vmatpush1.bf16.msra.mxu0 %v1800
        %1820 = vmatprep.subr.bf16.mxu0 0
        %1821 = vmatpush1.bf16.msra.mxu0 %v1801
        %1822 = vmatprep.subr.bf16.mxu0 0
        %1823 = vmatpush1.bf16.msra.mxu0 %v1802
        %1824 = vmatprep.subr.bf16.mxu0 0
        %1825 = vmatpush1.bf16.msra.mxu0 %v1803
        %1826 = vmatprep.subr.bf16.mxu0 0
        %1827 = vmatpush1.bf16.msra.mxu0 %v1804
        %1828 = vmatprep.subr.bf16.mxu0 0
        %1829 = vmatpush1.bf16.msra.mxu0 %v1805
        %1830 = vmatprep.subr.bf16.mxu0 0
        %1831 = vmatpush1.bf16.msra.mxu0 0
        %1832 = vmatprep.subr.bf16.mxu0 0
        %1833 = vmatpush1.bf16.msra.mxu0 0
        %1834 = vmatprep.subr.bf16.mxu0 0
        %1835 = vmatpush1.bf16.msra.mxu0 0
        %1836 = vmatprep.subr.bf16.mxu0 0
        %1837 = vmatpush1.bf16.msra.mxu0 0
        %1838 = vmatprep.subr.bf16.mxu0 0
        %1839 = vmatpush1.bf16.msra.mxu0 0
        %1840 = vmatprep.subr.bf16.mxu0 0
        %1841 = vmatpush1.bf16.msra.mxu0 0
        %1842 = vmatprep.subr.bf16.mxu0 0
        %1843 = vmatpush1.bf16.msra.mxu0 0
        %1844 = vmatprep.subr.bf16.mxu0 0
        %1845 = vmatpush1.bf16.msra.mxu0 0
        %1846 = vmatprep.mubr.bf16.mxu0 0
        %1847 = vmatmul.mubr.bf16.gmra.mrb[0].mxu0 %v1629
        %v1848 = vpop.f32.mrb[0].mxu0
        %v1849 = vadd.f32 0.0, %v1848
        %v1850 = vpop.f32.mrb[0].mxu0
        %v1851 = vpop.f32.mrb[0].mxu0
        %v1852 = vadd.f32 0.0, %v1851
        %v1853 = vpop.f32.mrb[0].mxu0
        %1854 = vmatprep.mubr.bf16.mxu0 0
        %1855 = vmatmul.mubr.bf16.gmra.mrb[0].mxu0 %v1633
        %v1856 = vpop.f32.mrb[0].mxu0
        %v1857 = vadd.f32 0.0, %v1856
        %v1858 = vpop.f32.mrb[0].mxu0
        %v1859 = vpop.f32.mrb[0].mxu0
        %v1860 = vadd.f32 0.0, %v1859
        %v1861 = vpop.f32.mrb[0].mxu0
        %1862 = vmatprep.mubr.bf16.mxu0 0
        %1863 = vmatmul.mubr.bf16.gmra.mrb[0].mxu0 %v1637
        %v1864 = vpop.f32.mrb[0].mxu0
        %v1865 = vadd.f32 0.0, %v1864
        %v1866 = vpop.f32.mrb[0].mxu0
        %v1867 = vpop.f32.mrb[0].mxu0
        %v1868 = vadd.f32 0.0, %v1867
        %v1869 = vpop.f32.mrb[0].mxu0
        %1870 = vmatprep.mubr.bf16.mxu0 0
        %1871 = vmatmul.mubr.bf16.gmra.mrb[0].mxu0 %v1641
        %v1872 = vpop.f32.mrb[0].mxu0
        %v1873 = vadd.f32 0.0, %v1872
        %v1874 = vpop.f32.mrb[0].mxu0
        %v1875 = vpop.f32.mrb[0].mxu0
        %v1876 = vadd.f32 0.0, %v1875
        %v1877 = vpop.f32.mrb[0].mxu0
        %1878 = vmatprep.mubr.bf16.mxu0 0
        %1879 = vmatmul.mubr.bf16.gmra.mrb[0].mxu0 %v1645
        %v1880 = vpop.f32.mrb[0].mxu0
        %v1881 = vadd.f32 0.0, %v1880
        %v1882 = vpop.f32.mrb[0].mxu0
        %v1883 = vpop.f32.mrb[0].mxu0
        %v1884 = vadd.f32 0.0, %v1883
        %v1885 = vpop.f32.mrb[0].mxu0
        %1886 = vmatprep.mubr.bf16.mxu0 0
        %1887 = vmatmul.mubr.bf16.gmra.mrb[0].mxu0 %v1649
        %v1888 = vpop.f32.mrb[0].mxu0
        %v1889 = vadd.f32 0.0, %v1888
        %v1890 = vpop.f32.mrb[0].mxu0
        %v1891 = vpop.f32.mrb[0].mxu0
        %v1892 = vadd.f32 0.0, %v1891
        %v1893 = vpop.f32.mrb[0].mxu0
        %1894 = vmatprep.mubr.bf16.mxu0 0
        %1895 = vmatmul.mubr.bf16.gmra.mrb[0].mxu0 %v1653
        %v1896 = vpop.f32.mrb[0].mxu0
        %v1897 = vadd.f32 0.0, %v1896
        %v1898 = vpop.f32.mrb[0].mxu0
        %v1899 = vpop.f32.mrb[0].mxu0
        %v1900 = vadd.f32 0.0, %v1899
        %v1901 = vpop.f32.mrb[0].mxu0
        %1902 = vmatprep.mubr.bf16.mxu0 0
        %1903 = vmatmul.mubr.bf16.gmra.mrb[0].mxu0 %v1657
        %v1904 = vpop.f32.mrb[0].mxu0
        %v1905 = vadd.f32 0.0, %v1904
        %v1906 = vpop.f32.mrb[0].mxu0
        %v1907 = vpop.f32.mrb[0].mxu0
        %v1908 = vadd.f32 0.0, %v1907
        %v1909 = vpop.f32.mrb[0].mxu0
        %1910 = vmatprep.mubr.bf16.mxu0 0
        %1911 = vmatmul.mubr.bf16.gmra.mrb[0].mxu0 %v1661
        %v1912 = vpop.f32.mrb[0].mxu0
        %v1913 = vadd.f32 0.0, %v1912
        %v1914 = vpop.f32.mrb[0].mxu0
        %v1915 = vpop.f32.mrb[0].mxu0
        %v1916 = vadd.f32 0.0, %v1915
        %v1917 = vpop.f32.mrb[0].mxu0
        %1918 = vmatprep.mubr.bf16.mxu0 0
        %1919 = vmatmul.mubr.bf16.gmra.mrb[0].mxu0 %v1665
        %v1920 = vpop.f32.mrb[0].mxu0
        %v1921 = vadd.f32 0.0, %v1920
        %v1922 = vpop.f32.mrb[0].mxu0
        %v1923 = vpop.f32.mrb[0].mxu0
        %v1924 = vadd.f32 0.0, %v1923
        %v1925 = vpop.f32.mrb[0].mxu0
        %1926 = vmatprep.mubr.bf16.mxu0 0
        %1927 = vmatmul.mubr.bf16.gmra.mrb[0].mxu0 %v1669
        %v1928 = vpop.f32.mrb[0].mxu0
        %v1929 = vadd.f32 0.0, %v1928
        %v1930 = vpop.f32.mrb[0].mxu0
        %v1931 = vpop.f32.mrb[0].mxu0
        %v1932 = vadd.f32 0.0, %v1931
        %v1933 = vpop.f32.mrb[0].mxu0
        %1934 = vmatprep.mubr.bf16.mxu0 0
        %1935 = vmatmul.mubr.bf16.gmra.mrb[0].mxu0 %v1673
        %v1936 = vpop.f32.mrb[0].mxu0
        %v1937 = vadd.f32 0.0, %v1936
        %v1938 = vpop.f32.mrb[0].mxu0
        %v1939 = vpop.f32.mrb[0].mxu0
        %v1940 = vadd.f32 0.0, %v1939
        %v1941 = vpop.f32.mrb[0].mxu0
        %1942 = vmatprep.mubr.bf16.mxu0 0
        %1943 = vmatmul.mubr.bf16.gmra.mrb[0].mxu0 %v1677
        %v1944 = vpop.f32.mrb[0].mxu0
        %v1945 = vadd.f32 0.0, %v1944
        %v1946 = vpop.f32.mrb[0].mxu0
        %v1947 = vpop.f32.mrb[0].mxu0
        %v1948 = vadd.f32 0.0, %v1947
        %v1949 = vpop.f32.mrb[0].mxu0
        %1950 = vmatprep.mubr.bf16.mxu0 0
        %1951 = vmatmul.mubr.bf16.gmra.mrb[0].mxu0 %v1681
        %v1952 = vpop.f32.mrb[0].mxu0
        %v1953 = vadd.f32 0.0, %v1952
        %v1954 = vpop.f32.mrb[0].mxu0
        %v1955 = vpop.f32.mrb[0].mxu0
        %v1956 = vadd.f32 0.0, %v1955
        %v1957 = vpop.f32.mrb[0].mxu0
        %1958 = vmatprep.mubr.bf16.mxu0 0
        %1959 = vmatmul.mubr.bf16.gmra.mrb[0].mxu0 %v1685
        %v1960 = vpop.f32.mrb[0].mxu0
        %v1961 = vadd.f32 0.0, %v1960
        %v1962 = vpop.f32.mrb[0].mxu0
        %v1963 = vpop.f32.mrb[0].mxu0
        %v1964 = vadd.f32 0.0, %v1963
        %v1965 = vpop.f32.mrb[0].mxu0
        %1966 = vmatprep.mubr.bf16.mxu0 0
        %1967 = vmatmul.mubr.bf16.gmra.mrb[0].mxu0 %v1689
        %v1968 = vpop.f32.mrb[0].mxu0
        %v1969 = vadd.f32 0.0, %v1968
        %v1970 = vpop.f32.mrb[0].mxu0
        %v1971 = vpop.f32.mrb[0].mxu0
        %v1972 = vadd.f32 0.0, %v1971
        %v1973 = vpop.f32.mrb[0].mxu0
        %1974 = vmatprep.mubr.bf16.mxu0 0
        %1975 = vmatmul.mubr.bf16.gmra.mrb[0].mxu0 %v1693
        %v1976 = vpop.f32.mrb[0].mxu0
        %v1977 = vadd.f32 0.0, %v1976
        %v1978 = vpop.f32.mrb[0].mxu0
        %v1979 = vpop.f32.mrb[0].mxu0
        %v1980 = vadd.f32 0.0, %v1979
        %v1981 = vpop.f32.mrb[0].mxu0
        %1982 = vmatprep.mubr.bf16.mxu0 0
        %1983 = vmatmul.mubr.bf16.gmra.mrb[0].mxu0 %v1697
        %v1984 = vpop.f32.mrb[0].mxu0
        %v1985 = vadd.f32 0.0, %v1984
        %v1986 = vpop.f32.mrb[0].mxu0
        %v1987 = vpop.f32.mrb[0].mxu0
        %v1988 = vadd.f32 0.0, %v1987
        %v1989 = vpop.f32.mrb[0].mxu0
        %1990 = vmatprep.mubr.bf16.mxu0 0
        %1991 = vmatmul.mubr.bf16.gmra.mrb[0].mxu0 %v1701
        %v1992 = vpop.f32.mrb[0].mxu0
        %v1993 = vadd.f32 0.0, %v1992
        %v1994 = vpop.f32.mrb[0].mxu0
        %v1995 = vpop.f32.mrb[0].mxu0
        %v1996 = vadd.f32 0.0, %v1995
        %v1997 = vpop.f32.mrb[0].mxu0
        %1998 = vmatprep.mubr.bf16.mxu0 0
        %1999 = vmatmul.mubr.bf16.gmra.mrb[0].mxu0 %v1705
        %v2000 = vpop.f32.mrb[0].mxu0
        %v2001 = vadd.f32 0.0, %v2000
        %v2002 = vpop.f32.mrb[0].mxu0
        %v2003 = vpop.f32.mrb[0].mxu0
        %v2004 = vadd.f32 0.0, %v2003
        %v2005 = vpop.f32.mrb[0].mxu0
        %2006 = vmatprep.mubr.bf16.mxu0 0
        %2007 = vmatmul.mubr.bf16.gmra.mrb[0].mxu0 %v1709
        %v2008 = vpop.f32.mrb[0].mxu0
        %v2009 = vadd.f32 0.0, %v2008
        %v2010 = vpop.f32.mrb[0].mxu0
        %v2011 = vpop.f32.mrb[0].mxu0
        %v2012 = vadd.f32 0.0, %v2011
        %v2013 = vpop.f32.mrb[0].mxu0
        %2014 = vmatprep.mubr.bf16.mxu0 0
        %2015 = vmatmul.mubr.bf16.gmra.mrb[0].mxu0 %v1713
        %v2016 = vpop.f32.mrb[0].mxu0
        %v2017 = vadd.f32 0.0, %v2016
        %v2018 = vpop.f32.mrb[0].mxu0
        %v2019 = vpop.f32.mrb[0].mxu0
        %v2020 = vadd.f32 0.0, %v2019
        %v2021 = vpop.f32.mrb[0].mxu0
        %2022 = vmatprep.mubr.bf16.mxu0 0
        %2023 = vmatmul.mubr.bf16.gmra.mrb[0].mxu0 %v1717
        %v2024 = vpop.f32.mrb[0].mxu0
        %v2025 = vadd.f32 0.0, %v2024
        %v2026 = vpop.f32.mrb[0].mxu0
        %v2027 = vpop.f32.mrb[0].mxu0
        %v2028 = vadd.f32 0.0, %v2027
        %v2029 = vpop.f32.mrb[0].mxu0
        %2030 = vmatprep.mubr.bf16.mxu0 0
        %2031 = vmatmul.mubr.bf16.gmra.mrb[0].mxu0 %v1721
        %v2032 = vpop.f32.mrb[0].mxu0
        %v2033 = vadd.f32 0.0, %v2032
        %v2034 = vpop.f32.mrb[0].mxu0
        %v2035 = vpop.f32.mrb[0].mxu0
        %v2036 = vadd.f32 0.0, %v2035
        %v2037 = vpop.f32.mrb[0].mxu0
        %2038 = vmatprep.mubr.bf16.mxu0 0
        %2039 = vmatmul.mubr.bf16.gmra.mrb[0].mxu0 %v1725
        %v2040 = vpop.f32.mrb[0].mxu0
        %v2041 = vadd.f32 0.0, %v2040
        %v2042 = vpop.f32.mrb[0].mxu0
        %v2043 = vpop.f32.mrb[0].mxu0
        %v2044 = vadd.f32 0.0, %v2043
        %v2045 = vpop.f32.mrb[0].mxu0
        %2046 = vmatprep.mubr.bf16.mxu0 0
        %2047 = vmatmul.mubr.bf16.gmra.mrb[0].mxu0 %v1729
        %v2048 = vpop.f32.mrb[0].mxu0
        %v2049 = vadd.f32 0.0, %v2048
        %v2050 = vpop.f32.mrb[0].mxu0
        %v2051 = vpop.f32.mrb[0].mxu0
        %v2052 = vadd.f32 0.0, %v2051
        %v2053 = vpop.f32.mrb[0].mxu0
        %2054 = vmatprep.mubr.bf16.mxu0 0
        %2055 = vmatmul.mubr.bf16.gmra.mrb[0].mxu0 %v1738
        %v2056 = vpop.f32.mrb[0].mxu0
        %v2057 = vadd.f32 0.0, %v2056
        %v2058 = vpop.f32.mrb[0].mxu0
        %v2059 = vpop.f32.mrb[0].mxu0
        %v2060 = vadd.f32 0.0, %v2059
        %v2061 = vpop.f32.mrb[0].mxu0
        %2062 = vdwg.mxu0
        %v2063 = vadd.f32 %v1386, %v1849
        %v2064 = vadd.f32 %v1389, %v1852
        %v2065 = vadd.f32 %v1394, %v1857
        %v2066 = vadd.f32 %v1397, %v1860
        %v2067 = vadd.f32 %v1402, %v1865
        %v2068 = vadd.f32 %v1405, %v1868
        %v2069 = vadd.f32 %v1410, %v1873
        %v2070 = vadd.f32 %v1413, %v1876
        %v2071 = vadd.f32 %v1418, %v1881
        %v2072 = vadd.f32 %v1421, %v1884
        %v2073 = vadd.f32 %v1426, %v1889
        %v2074 = vadd.f32 %v1429, %v1892
        %v2075 = vadd.f32 %v1434, %v1897
        %v2076 = vadd.f32 %v1437, %v1900
        %v2077 = vadd.f32 %v1442, %v1905
        %v2078 = vadd.f32 %v1445, %v1908
        %v2079 = vadd.f32 %v1450, %v1913
        %v2080 = vadd.f32 %v1453, %v1916
        %v2081 = vadd.f32 %v1458, %v1921
        %v2082 = vadd.f32 %v1461, %v1924
        %v2083 = vadd.f32 %v1466, %v1929
        %v2084 = vadd.f32 %v1469, %v1932
        %v2085 = vadd.f32 %v1474, %v1937
        %v2086 = vadd.f32 %v1477, %v1940
        %v2087 = vadd.f32 %v1482, %v1945
        %v2088 = vadd.f32 %v1485, %v1948
        %v2089 = vadd.f32 %v1490, %v1953
        %v2090 = vadd.f32 %v1493, %v1956
        %v2091 = vadd.f32 %v1498, %v1961
        %v2092 = vadd.f32 %v1501, %v1964
        %v2093 = vadd.f32 %v1506, %v1969
        %v2094 = vadd.f32 %v1509, %v1972
        %v2095 = vadd.f32 %v1514, %v1977
        %v2096 = vadd.f32 %v1517, %v1980
        %v2097 = vadd.f32 %v1522, %v1985
        %v2098 = vadd.f32 %v1525, %v1988
        %v2099 = vadd.f32 %v1530, %v1993
        %v2100 = vadd.f32 %v1533, %v1996
        %v2101 = vadd.f32 %v1538, %v2001
        %v2102 = vadd.f32 %v1541, %v2004
        %v2103 = vadd.f32 %v1546, %v2009
        %v2104 = vadd.f32 %v1549, %v2012
        %v2105 = vadd.f32 %v1554, %v2017
        %v2106 = vadd.f32 %v1557, %v2020
        %v2107 = vadd.f32 %v1562, %v2025
        %v2108 = vadd.f32 %v1565, %v2028
        %v2109 = vadd.f32 %v1570, %v2033
        %v2110 = vadd.f32 %v1573, %v2036
        %v2111 = vadd.f32 %v1578, %v2041
        %v2112 = vadd.f32 %v1581, %v2044
        %v2113 = vadd.f32 %v1586, %v2049
        %v2114 = vadd.f32 %v1589, %v2052
        %v2115 = vadd.f32 %v1594, %v2057
        %v2116 = vadd.f32 %v1597, %v2060
        %v2117 = vld [vmem:[#allocation2 + $0x8] sm:$0x80]
        %v2118 = vld [vmem:[#allocation2 + $0x10] sm:$0xff]
        %v2119 = vld [vmem:[#allocation2 + $0x18] sm:$0xff]
        %v2120 = vld [vmem:[#allocation2 + $0x20] sm:$0xff]
        %v2121 = vld [vmem:[#allocation2 + $0x28] sm:$0xff]
        %v2122 = vld [vmem:[#allocation2 + $0x30] sm:$0xff]
        %v2123 = vld [vmem:[#allocation2 + $0x38] sm:$0xff]
        %v2124 = vld [vmem:[#allocation2 + $0x40] sm:$0xff]
        %v2125 = vld [vmem:[#allocation2 + $0x48] sm:$0xff]
        %v2126 = vld [vmem:[#allocation2 + $0x50] sm:$0xff]
        %v2127 = vld [vmem:[#allocation2 + $0x58] sm:$0xff]
        %v2128 = vld [vmem:[#allocation2 + $0x60] sm:$0xff]
        %v2129 = vld [vmem:[#allocation2 + $0x68] sm:$0xff]
        %v2130 = vld [vmem:[#allocation2 + $0x70] sm:$0xff]
        %v2131 = vld [vmem:[#allocation2 + $0x78] sm:$0xff]
        %v2132 = vld [vmem:[#allocation2 + $0x80] sm:$0xff]
        %v2133 = vld [vmem:[#allocation2 + $0x88] sm:$0xff]
        %v2134 = vld [vmem:[#allocation2 + $0x90] sm:$0xff]
        %v2135 = vld [vmem:[#allocation2 + $0x98] sm:$0xff]
        %v2136 = vld [vmem:[#allocation2 + $0xa0] sm:$0xff]
        %v2137 = vld [vmem:[#allocation2 + $0xa8] sm:$0xff]
        %v2138 = vld [vmem:[#allocation2 + $0xb0] sm:$0xff]
        %v2139 = vld [vmem:[#allocation2 + $0xb8] sm:$0xff]
        %v2140 = vld [vmem:[#allocation2 + $0xc0] sm:$0xff]
        %v2141 = vld [vmem:[#allocation2 + $0xc8] sm:$0xff]
        %v2142 = vld [vmem:[#allocation2 + $0xd0] sm:$0xff]
        %v2143 = vld [vmem:[#allocation2 + $0xd8] sm:$0xff]
        %v2144 = vld [vmem:[#allocation2 + $0xe0] sm:$0xff]
        %v2145 = vld [vmem:[#allocation7 + $0xc0] sm:$0xf]
        %v2146 = vld [vmem:[#allocation7 + $0xc4] sm:$0xf]
        %v2147 = vld [vmem:[#allocation7 + $0xc8] sm:$0xf]
        %v2148 = vld [vmem:[#allocation7 + $0xcc] sm:$0xf]
        %v2149 = vld [vmem:[#allocation7 + $0xd0] sm:$0xf]
        %v2150 = vld [vmem:[#allocation7 + $0xd4] sm:$0xf]
        %v2151 = vld [vmem:[#allocation7 + $0xd8] sm:$0xf]
        %v2152 = vld [vmem:[#allocation7 + $0xdc] sm:$0xf]
        %v2153 = vld [vmem:[#allocation7 + $0xe0] sm:$0xf]
        %v2154 = vld [vmem:[#allocation7 + $0xe4] sm:$0xf]
        %v2155 = vld [vmem:[#allocation7 + $0xe8] sm:$0xf]
        %v2156 = vld [vmem:[#allocation7 + $0xec] sm:$0xf]
        %v2157 = vld [vmem:[#allocation7 + $0xf0] sm:$0xf]
        %v2158 = vld [vmem:[#allocation7 + $0xf4] sm:$0xf]
        %v2159 = vld [vmem:[#allocation7 + $0xf8] sm:$0xf]
        %v2160 = vld [vmem:[#allocation7 + $0xfc] sm:$0xf]
        %vm2161 = vsmask.f32 256
        %v2163 = vshrl.u32 %v2117, 16
        %v2165 = vrot.slane %v2163, 7
        %v2167 = vshrl.u32 %v2118, 16
        %v2169 = vrot.slane %v2167, 7
        %v2170 = vshll.u32 %v2118, 16
        %v2172 = vor.u32 %v2169, %v2170
        %v2173 = vsel %vm2161, %v2165, %v2172
        %v2175 = vshrl.u32 %v2119, 16
        %v2177 = vrot.slane %v2175, 7
        %v2178 = vshll.u32 %v2119, 16
        %v2180 = vor.u32 %v2177, %v2178
        %v2181 = vsel %vm2161, %v2169, %v2180
        %v2183 = vshrl.u32 %v2120, 16
        %v2185 = vrot.slane %v2183, 7
        %v2186 = vshll.u32 %v2120, 16
        %v2188 = vor.u32 %v2185, %v2186
        %v2189 = vsel %vm2161, %v2177, %v2188
        %v2191 = vshrl.u32 %v2121, 16
        %v2193 = vrot.slane %v2191, 7
        %v2194 = vshll.u32 %v2121, 16
        %v2196 = vor.u32 %v2193, %v2194
        %v2197 = vsel %vm2161, %v2185, %v2196
        %v2199 = vshrl.u32 %v2122, 16
        %v2201 = vrot.slane %v2199, 7
        %v2202 = vshll.u32 %v2122, 16
        %v2204 = vor.u32 %v2201, %v2202
        %v2205 = vsel %vm2161, %v2193, %v2204
        %v2207 = vshrl.u32 %v2123, 16
        %v2209 = vrot.slane %v2207, 7
        %v2210 = vshll.u32 %v2123, 16
        %v2212 = vor.u32 %v2209, %v2210
        %v2213 = vsel %vm2161, %v2201, %v2212
        %v2215 = vshrl.u32 %v2124, 16
        %v2217 = vrot.slane %v2215, 7
        %v2218 = vshll.u32 %v2124, 16
        %v2220 = vor.u32 %v2217, %v2218
        %v2221 = vsel %vm2161, %v2209, %v2220
        %v2223 = vshrl.u32 %v2125, 16
        %v2225 = vrot.slane %v2223, 7
        %v2226 = vshll.u32 %v2125, 16
        %v2228 = vor.u32 %v2225, %v2226
        %v2229 = vsel %vm2161, %v2217, %v2228
        %v2231 = vshrl.u32 %v2126, 16
        %v2233 = vrot.slane %v2231, 7
        %v2234 = vshll.u32 %v2126, 16
        %v2236 = vor.u32 %v2233, %v2234
        %v2237 = vsel %vm2161, %v2225, %v2236
        %v2239 = vshrl.u32 %v2127, 16
        %v2241 = vrot.slane %v2239, 7
        %v2242 = vshll.u32 %v2127, 16
        %v2244 = vor.u32 %v2241, %v2242
        %v2245 = vsel %vm2161, %v2233, %v2244
        %v2247 = vshrl.u32 %v2128, 16
        %v2249 = vrot.slane %v2247, 7
        %v2250 = vshll.u32 %v2128, 16
        %v2252 = vor.u32 %v2249, %v2250
        %v2253 = vsel %vm2161, %v2241, %v2252
        %v2255 = vshrl.u32 %v2129, 16
        %v2257 = vrot.slane %v2255, 7
        %v2258 = vshll.u32 %v2129, 16
        %v2260 = vor.u32 %v2257, %v2258
        %v2261 = vsel %vm2161, %v2249, %v2260
        %v2263 = vshrl.u32 %v2130, 16
        %v2265 = vrot.slane %v2263, 7
        %v2266 = vshll.u32 %v2130, 16
        %v2268 = vor.u32 %v2265, %v2266
        %v2269 = vsel %vm2161, %v2257, %v2268
        %v2271 = vshrl.u32 %v2131, 16
        %v2273 = vrot.slane %v2271, 7
        %v2274 = vshll.u32 %v2131, 16
        %v2276 = vor.u32 %v2273, %v2274
        %v2277 = vsel %vm2161, %v2265, %v2276
        %v2279 = vshrl.u32 %v2132, 16
        %v2281 = vrot.slane %v2279, 7
        %v2282 = vshll.u32 %v2132, 16
        %v2284 = vor.u32 %v2281, %v2282
        %v2285 = vsel %vm2161, %v2273, %v2284
        %v2287 = vshrl.u32 %v2133, 16
        %v2289 = vrot.slane %v2287, 7
        %v2290 = vshll.u32 %v2133, 16
        %v2292 = vor.u32 %v2289, %v2290
        %v2293 = vsel %vm2161, %v2281, %v2292
        %v2295 = vshrl.u32 %v2134, 16
        %v2297 = vrot.slane %v2295, 7
        %v2298 = vshll.u32 %v2134, 16
        %v2300 = vor.u32 %v2297, %v2298
        %v2301 = vsel %vm2161, %v2289, %v2300
        %v2303 = vshrl.u32 %v2135, 16
        %v2305 = vrot.slane %v2303, 7
        %v2306 = vshll.u32 %v2135, 16
        %v2308 = vor.u32 %v2305, %v2306
        %v2309 = vsel %vm2161, %v2297, %v2308
        %v2311 = vshrl.u32 %v2136, 16
        %v2313 = vrot.slane %v2311, 7
        %v2314 = vshll.u32 %v2136, 16
        %v2316 = vor.u32 %v2313, %v2314
        %v2317 = vsel %vm2161, %v2305, %v2316
        %v2319 = vshrl.u32 %v2137, 16
        %v2321 = vrot.slane %v2319, 7
        %v2322 = vshll.u32 %v2137, 16
        %v2324 = vor.u32 %v2321, %v2322
        %v2325 = vsel %vm2161, %v2313, %v2324
        %v2327 = vshrl.u32 %v2138, 16
        %v2329 = vrot.slane %v2327, 7
        %v2330 = vshll.u32 %v2138, 16
        %v2332 = vor.u32 %v2329, %v2330
        %v2333 = vsel %vm2161, %v2321, %v2332
        %v2335 = vshrl.u32 %v2139, 16
        %v2337 = vrot.slane %v2335, 7
        %v2338 = vshll.u32 %v2139, 16
        %v2340 = vor.u32 %v2337, %v2338
        %v2341 = vsel %vm2161, %v2329, %v2340
        %v2343 = vshrl.u32 %v2140, 16
        %v2345 = vrot.slane %v2343, 7
        %v2346 = vshll.u32 %v2140, 16
        %v2348 = vor.u32 %v2345, %v2346
        %v2349 = vsel %vm2161, %v2337, %v2348
        %v2351 = vshrl.u32 %v2141, 16
        %v2353 = vrot.slane %v2351, 7
        %v2354 = vshll.u32 %v2141, 16
        %v2356 = vor.u32 %v2353, %v2354
        %v2357 = vsel %vm2161, %v2345, %v2356
        %v2359 = vshrl.u32 %v2142, 16
        %v2361 = vrot.slane %v2359, 7
        %v2362 = vshll.u32 %v2142, 16
        %v2364 = vor.u32 %v2361, %v2362
        %v2365 = vsel %vm2161, %v2353, %v2364
        %v2367 = vshrl.u32 %v2143, 16
        %v2369 = vrot.slane %v2367, 7
        %v2370 = vshll.u32 %v2143, 16
        %v2372 = vor.u32 %v2369, %v2370
        %v2373 = vsel %vm2161, %v2361, %v2372
        %v2375 = vshrl.u32 %v2144, 16
        %v2377 = vrot.slane %v2375, 7
        %v2378 = vshll.u32 %v2144, 16
        %v2380 = vor.u32 %v2377, %v2378
        %v2381 = vsel %vm2161, %v2369, %v2380
        %v2425 = vunpack.c.l.b16 %v2145
        %v2426 = vunpack.c.l.b16 %v2146
        %v2427 = vunpack.c.l.b16 %v2147
        %v2428 = vunpack.c.l.b16 %v2148
        %v2429 = vunpack.c.l.b16 %v2149
        %v2430 = vunpack.c.l.b16 %v2150
        %v2431 = vunpack.c.l.b16 %v2151
        %v2432 = vunpack.c.l.b16 %v2152
        %v2433 = vunpack.c.l.b16 %v2153
        %v2434 = vunpack.c.l.b16 %v2154
        %v2435 = vunpack.c.l.b16 %v2155
        %v2436 = vunpack.c.l.b16 %v2156
        %v2437 = vunpack.c.l.b16 %v2157
        %v2438 = vunpack.c.l.b16 %v2158
        %v2439 = vunpack.c.l.b16 %v2159
        %v2440 = vunpack.c.l.b16 %v2160
        %v2441 = vpack.c.b16 %v2426, %v2425
        %v2442 = vpack.c.b16 %v2428, %v2427
        %v2443 = vpack.c.b16 %v2430, %v2429
        %v2444 = vpack.c.b16 %v2432, %v2431
        %v2445 = vpack.c.b16 %v2434, %v2433
        %v2446 = vpack.c.b16 %v2436, %v2435
        %v2447 = vpack.c.b16 %v2438, %v2437
        %v2448 = vpack.c.b16 %v2440, %v2439
        %2457 = vmatprep.subr.bf16.mxu0 0
        %2458 = vmatpush1.bf16.msra.mxu0 %v2441
        %2459 = vmatprep.subr.bf16.mxu0 0
        %2460 = vmatpush1.bf16.msra.mxu0 %v2442
        %2461 = vmatprep.subr.bf16.mxu0 0
        %2462 = vmatpush1.bf16.msra.mxu0 %v2443
        %2463 = vmatprep.subr.bf16.mxu0 0
        %2464 = vmatpush1.bf16.msra.mxu0 %v2444
        %2465 = vmatprep.subr.bf16.mxu0 0
        %2466 = vmatpush1.bf16.msra.mxu0 %v2445
        %2467 = vmatprep.subr.bf16.mxu0 0
        %2468 = vmatpush1.bf16.msra.mxu0 %v2446
        %2469 = vmatprep.subr.bf16.mxu0 0
        %2470 = vmatpush1.bf16.msra.mxu0 %v2447
        %2471 = vmatprep.subr.bf16.mxu0 0
        %2472 = vmatpush1.bf16.msra.mxu0 %v2448
        %2473 = vmatprep.subr.bf16.mxu0 0
        %2474 = vmatpush1.bf16.msra.mxu0 0
        %2475 = vmatprep.subr.bf16.mxu0 0
        %2476 = vmatpush1.bf16.msra.mxu0 0
        %2477 = vmatprep.subr.bf16.mxu0 0
        %2478 = vmatpush1.bf16.msra.mxu0 0
        %2479 = vmatprep.subr.bf16.mxu0 0
        %2480 = vmatpush1.bf16.msra.mxu0 0
        %2481 = vmatprep.subr.bf16.mxu0 0
        %2482 = vmatpush1.bf16.msra.mxu0 0
        %2483 = vmatprep.subr.bf16.mxu0 0
        %2484 = vmatpush1.bf16.msra.mxu0 0
        %2485 = vmatprep.subr.bf16.mxu0 0
        %2486 = vmatpush1.bf16.msra.mxu0 0
        %2487 = vmatprep.subr.bf16.mxu0 0
        %2488 = vmatpush1.bf16.msra.mxu0 0
        %2489 = vmatprep.mubr.bf16.mxu0 0
        %2490 = vmatmul.mubr.bf16.gmra.mrb[0].mxu0 %v2173
        %v2491 = vpop.f32.mrb[0].mxu0
        %v2492 = vadd.f32 0.0, %v2491
        %v2493 = vpop.f32.mrb[0].mxu0
        %v2494 = vpop.f32.mrb[0].mxu0
        %v2495 = vadd.f32 0.0, %v2494
        %v2496 = vpop.f32.mrb[0].mxu0
        %2497 = vmatprep.mubr.bf16.mxu0 0
        %2498 = vmatmul.mubr.bf16.gmra.mrb[0].mxu0 %v2181
        %v2499 = vpop.f32.mrb[0].mxu0
        %v2500 = vadd.f32 0.0, %v2499
        %v2501 = vpop.f32.mrb[0].mxu0
        %v2502 = vpop.f32.mrb[0].mxu0
        %v2503 = vadd.f32 0.0, %v2502
        %v2504 = vpop.f32.mrb[0].mxu0
        %2505 = vmatprep.mubr.bf16.mxu0 0
        %2506 = vmatmul.mubr.bf16.gmra.mrb[0].mxu0 %v2189
        %v2507 = vpop.f32.mrb[0].mxu0
        %v2508 = vadd.f32 0.0, %v2507
        %v2509 = vpop.f32.mrb[0].mxu0
        %v2510 = vpop.f32.mrb[0].mxu0
        %v2511 = vadd.f32 0.0, %v2510
        %v2512 = vpop.f32.mrb[0].mxu0
        %2513 = vmatprep.mubr.bf16.mxu0 0
        %2514 = vmatmul.mubr.bf16.gmra.mrb[0].mxu0 %v2197
        %v2515 = vpop.f32.mrb[0].mxu0
        %v2516 = vadd.f32 0.0, %v2515
        %v2517 = vpop.f32.mrb[0].mxu0
        %v2518 = vpop.f32.mrb[0].mxu0
        %v2519 = vadd.f32 0.0, %v2518
        %v2520 = vpop.f32.mrb[0].mxu0
        %2521 = vmatprep.mubr.bf16.mxu0 0
        %2522 = vmatmul.mubr.bf16.gmra.mrb[0].mxu0 %v2205
        %v2523 = vpop.f32.mrb[0].mxu0
        %v2524 = vadd.f32 0.0, %v2523
        %v2525 = vpop.f32.mrb[0].mxu0
        %v2526 = vpop.f32.mrb[0].mxu0
        %v2527 = vadd.f32 0.0, %v2526
        %v2528 = vpop.f32.mrb[0].mxu0
        %2529 = vmatprep.mubr.bf16.mxu0 0
        %2530 = vmatmul.mubr.bf16.gmra.mrb[0].mxu0 %v2213
        %v2531 = vpop.f32.mrb[0].mxu0
        %v2532 = vadd.f32 0.0, %v2531
        %v2533 = vpop.f32.mrb[0].mxu0
        %v2534 = vpop.f32.mrb[0].mxu0
        %v2535 = vadd.f32 0.0, %v2534
        %v2536 = vpop.f32.mrb[0].mxu0
        %2537 = vmatprep.mubr.bf16.mxu0 0
        %2538 = vmatmul.mubr.bf16.gmra.mrb[0].mxu0 %v2221
        %v2539 = vpop.f32.mrb[0].mxu0
        %v2540 = vadd.f32 0.0, %v2539
        %v2541 = vpop.f32.mrb[0].mxu0
        %v2542 = vpop.f32.mrb[0].mxu0
        %v2543 = vadd.f32 0.0, %v2542
        %v2544 = vpop.f32.mrb[0].mxu0
        %2545 = vmatprep.mubr.bf16.mxu0 0
        %2546 = vmatmul.mubr.bf16.gmra.mrb[0].mxu0 %v2229
        %v2547 = vpop.f32.mrb[0].mxu0
        %v2548 = vadd.f32 0.0, %v2547
        %v2549 = vpop.f32.mrb[0].mxu0
        %v2550 = vpop.f32.mrb[0].mxu0
        %v2551 = vadd.f32 0.0, %v2550
        %v2552 = vpop.f32.mrb[0].mxu0
        %2553 = vmatprep.mubr.bf16.mxu0 0
        %2554 = vmatmul.mubr.bf16.gmra.mrb[0].mxu0 %v2237
        %v2555 = vpop.f32.mrb[0].mxu0
        %v2556 = vadd.f32 0.0, %v2555
        %v2557 = vpop.f32.mrb[0].mxu0
        %v2558 = vpop.f32.mrb[0].mxu0
        %v2559 = vadd.f32 0.0, %v2558
        %v2560 = vpop.f32.mrb[0].mxu0
        %2561 = vmatprep.mubr.bf16.mxu0 0
        %2562 = vmatmul.mubr.bf16.gmra.mrb[0].mxu0 %v2245
        %v2563 = vpop.f32.mrb[0].mxu0
        %v2564 = vadd.f32 0.0, %v2563
        %v2565 = vpop.f32.mrb[0].mxu0
        %v2566 = vpop.f32.mrb[0].mxu0
        %v2567 = vadd.f32 0.0, %v2566
        %v2568 = vpop.f32.mrb[0].mxu0
        %2569 = vmatprep.mubr.bf16.mxu0 0
        %2570 = vmatmul.mubr.bf16.gmra.mrb[0].mxu0 %v2253
        %v2571 = vpop.f32.mrb[0].mxu0
        %v2572 = vadd.f32 0.0, %v2571
        %v2573 = vpop.f32.mrb[0].mxu0
        %v2574 = vpop.f32.mrb[0].mxu0
        %v2575 = vadd.f32 0.0, %v2574
        %v2576 = vpop.f32.mrb[0].mxu0
        %2577 = vmatprep.mubr.bf16.mxu0 0
        %2578 = vmatmul.mubr.bf16.gmra.mrb[0].mxu0 %v2261
        %v2579 = vpop.f32.mrb[0].mxu0
        %v2580 = vadd.f32 0.0, %v2579
        %v2581 = vpop.f32.mrb[0].mxu0
        %v2582 = vpop.f32.mrb[0].mxu0
        %v2583 = vadd.f32 0.0, %v2582
        %v2584 = vpop.f32.mrb[0].mxu0
        %2585 = vmatprep.mubr.bf16.mxu0 0
        %2586 = vmatmul.mubr.bf16.gmra.mrb[0].mxu0 %v2269
        %v2587 = vpop.f32.mrb[0].mxu0
        %v2588 = vadd.f32 0.0, %v2587
        %v2589 = vpop.f32.mrb[0].mxu0
        %v2590 = vpop.f32.mrb[0].mxu0
        %v2591 = vadd.f32 0.0, %v2590
        %v2592 = vpop.f32.mrb[0].mxu0
        %2593 = vmatprep.mubr.bf16.mxu0 0
        %2594 = vmatmul.mubr.bf16.gmra.mrb[0].mxu0 %v2277
        %v2595 = vpop.f32.mrb[0].mxu0
        %v2596 = vadd.f32 0.0, %v2595
        %v2597 = vpop.f32.mrb[0].mxu0
        %v2598 = vpop.f32.mrb[0].mxu0
        %v2599 = vadd.f32 0.0, %v2598
        %v2600 = vpop.f32.mrb[0].mxu0
        %2601 = vmatprep.mubr.bf16.mxu0 0
        %2602 = vmatmul.mubr.bf16.gmra.mrb[0].mxu0 %v2285
        %v2603 = vpop.f32.mrb[0].mxu0
        %v2604 = vadd.f32 0.0, %v2603
        %v2605 = vpop.f32.mrb[0].mxu0
        %v2606 = vpop.f32.mrb[0].mxu0
        %v2607 = vadd.f32 0.0, %v2606
        %v2608 = vpop.f32.mrb[0].mxu0
        %2609 = vmatprep.mubr.bf16.mxu0 0
        %2610 = vmatmul.mubr.bf16.gmra.mrb[0].mxu0 %v2293
        %v2611 = vpop.f32.mrb[0].mxu0
        %v2612 = vadd.f32 0.0, %v2611
        %v2613 = vpop.f32.mrb[0].mxu0
        %v2614 = vpop.f32.mrb[0].mxu0
        %v2615 = vadd.f32 0.0, %v2614
        %v2616 = vpop.f32.mrb[0].mxu0
        %2617 = vmatprep.mubr.bf16.mxu0 0
        %2618 = vmatmul.mubr.bf16.gmra.mrb[0].mxu0 %v2301
        %v2619 = vpop.f32.mrb[0].mxu0
        %v2620 = vadd.f32 0.0, %v2619
        %v2621 = vpop.f32.mrb[0].mxu0
        %v2622 = vpop.f32.mrb[0].mxu0
        %v2623 = vadd.f32 0.0, %v2622
        %v2624 = vpop.f32.mrb[0].mxu0
        %2625 = vmatprep.mubr.bf16.mxu0 0
        %2626 = vmatmul.mubr.bf16.gmra.mrb[0].mxu0 %v2309
        %v2627 = vpop.f32.mrb[0].mxu0
        %v2628 = vadd.f32 0.0, %v2627
        %v2629 = vpop.f32.mrb[0].mxu0
        %v2630 = vpop.f32.mrb[0].mxu0
        %v2631 = vadd.f32 0.0, %v2630
        %v2632 = vpop.f32.mrb[0].mxu0
        %2633 = vmatprep.mubr.bf16.mxu0 0
        %2634 = vmatmul.mubr.bf16.gmra.mrb[0].mxu0 %v2317
        %v2635 = vpop.f32.mrb[0].mxu0
        %v2636 = vadd.f32 0.0, %v2635
        %v2637 = vpop.f32.mrb[0].mxu0
        %v2638 = vpop.f32.mrb[0].mxu0
        %v2639 = vadd.f32 0.0, %v2638
        %v2640 = vpop.f32.mrb[0].mxu0
        %2641 = vmatprep.mubr.bf16.mxu0 0
        %2642 = vmatmul.mubr.bf16.gmra.mrb[0].mxu0 %v2325
        %v2643 = vpop.f32.mrb[0].mxu0
        %v2644 = vadd.f32 0.0, %v2643
        %v2645 = vpop.f32.mrb[0].mxu0
        %v2646 = vpop.f32.mrb[0].mxu0
        %v2647 = vadd.f32 0.0, %v2646
        %v2648 = vpop.f32.mrb[0].mxu0
        %2649 = vmatprep.mubr.bf16.mxu0 0
        %2650 = vmatmul.mubr.bf16.gmra.mrb[0].mxu0 %v2333
        %v2651 = vpop.f32.mrb[0].mxu0
        %v2652 = vadd.f32 0.0, %v2651
        %v2653 = vpop.f32.mrb[0].mxu0
        %v2654 = vpop.f32.mrb[0].mxu0
        %v2655 = vadd.f32 0.0, %v2654
        %v2656 = vpop.f32.mrb[0].mxu0
        %2657 = vmatprep.mubr.bf16.mxu0 0
        %2658 = vmatmul.mubr.bf16.gmra.mrb[0].mxu0 %v2341
        %v2659 = vpop.f32.mrb[0].mxu0
        %v2660 = vadd.f32 0.0, %v2659
        %v2661 = vpop.f32.mrb[0].mxu0
        %v2662 = vpop.f32.mrb[0].mxu0
        %v2663 = vadd.f32 0.0, %v2662
        %v2664 = vpop.f32.mrb[0].mxu0
        %2665 = vmatprep.mubr.bf16.mxu0 0
        %2666 = vmatmul.mubr.bf16.gmra.mrb[0].mxu0 %v2349
        %v2667 = vpop.f32.mrb[0].mxu0
        %v2668 = vadd.f32 0.0, %v2667
        %v2669 = vpop.f32.mrb[0].mxu0
        %v2670 = vpop.f32.mrb[0].mxu0
        %v2671 = vadd.f32 0.0, %v2670
        %v2672 = vpop.f32.mrb[0].mxu0
        %2673 = vmatprep.mubr.bf16.mxu0 0
        %2674 = vmatmul.mubr.bf16.gmra.mrb[0].mxu0 %v2357
        %v2675 = vpop.f32.mrb[0].mxu0
        %v2676 = vadd.f32 0.0, %v2675
        %v2677 = vpop.f32.mrb[0].mxu0
        %v2678 = vpop.f32.mrb[0].mxu0
        %v2679 = vadd.f32 0.0, %v2678
        %v2680 = vpop.f32.mrb[0].mxu0
        %2681 = vmatprep.mubr.bf16.mxu0 0
        %2682 = vmatmul.mubr.bf16.gmra.mrb[0].mxu0 %v2365
        %v2683 = vpop.f32.mrb[0].mxu0
        %v2684 = vadd.f32 0.0, %v2683
        %v2685 = vpop.f32.mrb[0].mxu0
        %v2686 = vpop.f32.mrb[0].mxu0
        %v2687 = vadd.f32 0.0, %v2686
        %v2688 = vpop.f32.mrb[0].mxu0
        %2689 = vmatprep.mubr.bf16.mxu0 0
        %2690 = vmatmul.mubr.bf16.gmra.mrb[0].mxu0 %v2373
        %v2691 = vpop.f32.mrb[0].mxu0
        %v2692 = vadd.f32 0.0, %v2691
        %v2693 = vpop.f32.mrb[0].mxu0
        %v2694 = vpop.f32.mrb[0].mxu0
        %v2695 = vadd.f32 0.0, %v2694
        %v2696 = vpop.f32.mrb[0].mxu0
        %2697 = vmatprep.mubr.bf16.mxu0 0
        %2698 = vmatmul.mubr.bf16.gmra.mrb[0].mxu0 %v2381
        %v2699 = vpop.f32.mrb[0].mxu0
        %v2700 = vadd.f32 0.0, %v2699
        %v2701 = vpop.f32.mrb[0].mxu0
        %v2702 = vpop.f32.mrb[0].mxu0
        %v2703 = vadd.f32 0.0, %v2702
        %v2704 = vpop.f32.mrb[0].mxu0
        %2705 = vdwg.mxu0
        %v2706 = vadd.f32 %v2063, %v2492
        %v2707 = vadd.f32 %v2064, %v2495
        %v2708 = vadd.f32 %v2065, %v2500
        %v2709 = vadd.f32 %v2066, %v2503
        %v2710 = vadd.f32 %v2067, %v2508
        %v2711 = vadd.f32 %v2068, %v2511
        %v2712 = vadd.f32 %v2069, %v2516
        %v2713 = vadd.f32 %v2070, %v2519
        %v2714 = vadd.f32 %v2071, %v2524
        %v2715 = vadd.f32 %v2072, %v2527
        %v2716 = vadd.f32 %v2073, %v2532
        %v2717 = vadd.f32 %v2074, %v2535
        %v2718 = vadd.f32 %v2075, %v2540
        %v2719 = vadd.f32 %v2076, %v2543
        %v2720 = vadd.f32 %v2077, %v2548
        %v2721 = vadd.f32 %v2078, %v2551
        %v2722 = vadd.f32 %v2079, %v2556
        %v2723 = vadd.f32 %v2080, %v2559
        %v2724 = vadd.f32 %v2081, %v2564
        %v2725 = vadd.f32 %v2082, %v2567
        %v2726 = vadd.f32 %v2083, %v2572
        %v2727 = vadd.f32 %v2084, %v2575
        %v2728 = vadd.f32 %v2085, %v2580
        %v2729 = vadd.f32 %v2086, %v2583
        %v2730 = vadd.f32 %v2087, %v2588
        %v2731 = vadd.f32 %v2088, %v2591
        %v2732 = vadd.f32 %v2089, %v2596
        %v2733 = vadd.f32 %v2090, %v2599
        %v2734 = vadd.f32 %v2091, %v2604
        %v2735 = vadd.f32 %v2092, %v2607
        %v2736 = vadd.f32 %v2093, %v2612
        %v2737 = vadd.f32 %v2094, %v2615
        %v2738 = vadd.f32 %v2095, %v2620
        %v2739 = vadd.f32 %v2096, %v2623
        %v2740 = vadd.f32 %v2097, %v2628
        %v2741 = vadd.f32 %v2098, %v2631
        %v2742 = vadd.f32 %v2099, %v2636
        %v2743 = vadd.f32 %v2100, %v2639
        %v2744 = vadd.f32 %v2101, %v2644
        %v2745 = vadd.f32 %v2102, %v2647
        %v2746 = vadd.f32 %v2103, %v2652
        %v2747 = vadd.f32 %v2104, %v2655
        %v2748 = vadd.f32 %v2105, %v2660
        %v2749 = vadd.f32 %v2106, %v2663
        %v2750 = vadd.f32 %v2107, %v2668
        %v2751 = vadd.f32 %v2108, %v2671
        %v2752 = vadd.f32 %v2109, %v2676
        %v2753 = vadd.f32 %v2110, %v2679
        %v2754 = vadd.f32 %v2111, %v2684
        %v2755 = vadd.f32 %v2112, %v2687
        %v2756 = vadd.f32 %v2113, %v2692
        %v2757 = vadd.f32 %v2114, %v2695
        %v2758 = vadd.f32 %v2115, %v2700
        %v2759 = vadd.f32 %v2116, %v2703
        %v2760 = vld [vmem:[#allocation7 + $0x100] sm:$0xf]
        %v2761 = vld [vmem:[#allocation7 + $0x104] sm:$0xf]
        %v2762 = vld [vmem:[#allocation7 + $0x108] sm:$0xf]
        %v2763 = vld [vmem:[#allocation7 + $0x10c] sm:$0xf]
        %v2764 = vld [vmem:[#allocation7 + $0x110] sm:$0xf]
        %v2765 = vld [vmem:[#allocation7 + $0x114] sm:$0xf]
        %v2766 = vld [vmem:[#allocation7 + $0x118] sm:$0xf]
        %v2767 = vld [vmem:[#allocation7 + $0x11c] sm:$0xf]
        %v2768 = vld [vmem:[#allocation7 + $0x120] sm:$0xf]
        %v2769 = vld [vmem:[#allocation7 + $0x124] sm:$0xf]
        %v2770 = vld [vmem:[#allocation7 + $0x128] sm:$0xf]
        %v2771 = vld [vmem:[#allocation7 + $0x12c] sm:$0xf]
        %v2772 = vld [vmem:[#allocation7 + $0x130] sm:$0xf]
        %v2773 = vld [vmem:[#allocation7 + $0x134] sm:$0xf]
        %v2774 = vld [vmem:[#allocation7 + $0x138] sm:$0xf]
        %v2775 = vld [vmem:[#allocation7 + $0x13c] sm:$0xf]
        %v2792 = vunpack.c.l.b16 %v2760
        %v2793 = vunpack.c.l.b16 %v2761
        %v2794 = vunpack.c.l.b16 %v2762
        %v2795 = vunpack.c.l.b16 %v2763
        %v2796 = vunpack.c.l.b16 %v2764
        %v2797 = vunpack.c.l.b16 %v2765
        %v2798 = vunpack.c.l.b16 %v2766
        %v2799 = vunpack.c.l.b16 %v2767
        %v2800 = vunpack.c.l.b16 %v2768
        %v2801 = vunpack.c.l.b16 %v2769
        %v2802 = vunpack.c.l.b16 %v2770
        %v2803 = vunpack.c.l.b16 %v2771
        %v2804 = vunpack.c.l.b16 %v2772
        %v2805 = vunpack.c.l.b16 %v2773
        %v2806 = vunpack.c.l.b16 %v2774
        %v2807 = vunpack.c.l.b16 %v2775
        %v2808 = vpack.c.b16 %v2793, %v2792
        %v2809 = vpack.c.b16 %v2795, %v2794
        %v2810 = vpack.c.b16 %v2797, %v2796
        %v2811 = vpack.c.b16 %v2799, %v2798
        %v2812 = vpack.c.b16 %v2801, %v2800
        %v2813 = vpack.c.b16 %v2803, %v2802
        %v2814 = vpack.c.b16 %v2805, %v2804
        %v2815 = vpack.c.b16 %v2807, %v2806
        %2824 = vmatprep.subr.bf16.mxu0 0
        %2825 = vmatpush1.bf16.msra.mxu0 %v2808
        %2826 = vmatprep.subr.bf16.mxu0 0
        %2827 = vmatpush1.bf16.msra.mxu0 %v2809
        %2828 = vmatprep.subr.bf16.mxu0 0
        %2829 = vmatpush1.bf16.msra.mxu0 %v2810
        %2830 = vmatprep.subr.bf16.mxu0 0
        %2831 = vmatpush1.bf16.msra.mxu0 %v2811
        %2832 = vmatprep.subr.bf16.mxu0 0
        %2833 = vmatpush1.bf16.msra.mxu0 %v2812
        %2834 = vmatprep.subr.bf16.mxu0 0
        %2835 = vmatpush1.bf16.msra.mxu0 %v2813
        %2836 = vmatprep.subr.bf16.mxu0 0
        %2837 = vmatpush1.bf16.msra.mxu0 %v2814
        %2838 = vmatprep.subr.bf16.mxu0 0
        %2839 = vmatpush1.bf16.msra.mxu0 %v2815
        %2840 = vmatprep.subr.bf16.mxu0 0
        %2841 = vmatpush1.bf16.msra.mxu0 0
        %2842 = vmatprep.subr.bf16.mxu0 0
        %2843 = vmatpush1.bf16.msra.mxu0 0
        %2844 = vmatprep.subr.bf16.mxu0 0
        %2845 = vmatpush1.bf16.msra.mxu0 0
        %2846 = vmatprep.subr.bf16.mxu0 0
        %2847 = vmatpush1.bf16.msra.mxu0 0
        %2848 = vmatprep.subr.bf16.mxu0 0
        %2849 = vmatpush1.bf16.msra.mxu0 0
        %2850 = vmatprep.subr.bf16.mxu0 0
        %2851 = vmatpush1.bf16.msra.mxu0 0
        %2852 = vmatprep.subr.bf16.mxu0 0
        %2853 = vmatpush1.bf16.msra.mxu0 0
        %2854 = vmatprep.subr.bf16.mxu0 0
        %2855 = vmatpush1.bf16.msra.mxu0 0
        %2856 = vmatprep.mubr.bf16.mxu0 0
        %2857 = vmatmul.mubr.bf16.gmra.mrb[0].mxu0 %v2118
        %v2858 = vpop.f32.mrb[0].mxu0
        %v2859 = vadd.f32 0.0, %v2858
        %v2860 = vpop.f32.mrb[0].mxu0
        %v2861 = vpop.f32.mrb[0].mxu0
        %v2862 = vadd.f32 0.0, %v2861
        %v2863 = vpop.f32.mrb[0].mxu0
        %2864 = vmatprep.mubr.bf16.mxu0 0
        %2865 = vmatmul.mubr.bf16.gmra.mrb[0].mxu0 %v2119
        %v2866 = vpop.f32.mrb[0].mxu0
        %v2867 = vadd.f32 0.0, %v2866
        %v2868 = vpop.f32.mrb[0].mxu0
        %v2869 = vpop.f32.mrb[0].mxu0
        %v2870 = vadd.f32 0.0, %v2869
        %v2871 = vpop.f32.mrb[0].mxu0
        %2872 = vmatprep.mubr.bf16.mxu0 0
        %2873 = vmatmul.mubr.bf16.gmra.mrb[0].mxu0 %v2120
        %v2874 = vpop.f32.mrb[0].mxu0
        %v2875 = vadd.f32 0.0, %v2874
        %v2876 = vpop.f32.mrb[0].mxu0
        %v2877 = vpop.f32.mrb[0].mxu0
        %v2878 = vadd.f32 0.0, %v2877
        %v2879 = vpop.f32.mrb[0].mxu0
        %2880 = vmatprep.mubr.bf16.mxu0 0
        %2881 = vmatmul.mubr.bf16.gmra.mrb[0].mxu0 %v2121
        %v2882 = vpop.f32.mrb[0].mxu0
        %v2883 = vadd.f32 0.0, %v2882
        %v2884 = vpop.f32.mrb[0].mxu0
        %v2885 = vpop.f32.mrb[0].mxu0
        %v2886 = vadd.f32 0.0, %v2885
        %v2887 = vpop.f32.mrb[0].mxu0
        %2888 = vmatprep.mubr.bf16.mxu0 0
        %2889 = vmatmul.mubr.bf16.gmra.mrb[0].mxu0 %v2122
        %v2890 = vpop.f32.mrb[0].mxu0
        %v2891 = vadd.f32 0.0, %v2890
        %v2892 = vpop.f32.mrb[0].mxu0
        %v2893 = vpop.f32.mrb[0].mxu0
        %v2894 = vadd.f32 0.0, %v2893
        %v2895 = vpop.f32.mrb[0].mxu0
        %2896 = vmatprep.mubr.bf16.mxu0 0
        %2897 = vmatmul.mubr.bf16.gmra.mrb[0].mxu0 %v2123
        %v2898 = vpop.f32.mrb[0].mxu0
        %v2899 = vadd.f32 0.0, %v2898
        %v2900 = vpop.f32.mrb[0].mxu0
        %v2901 = vpop.f32.mrb[0].mxu0
        %v2902 = vadd.f32 0.0, %v2901
        %v2903 = vpop.f32.mrb[0].mxu0
        %2904 = vmatprep.mubr.bf16.mxu0 0
        %2905 = vmatmul.mubr.bf16.gmra.mrb[0].mxu0 %v2124
        %v2906 = vpop.f32.mrb[0].mxu0
        %v2907 = vadd.f32 0.0, %v2906
        %v2908 = vpop.f32.mrb[0].mxu0
        %v2909 = vpop.f32.mrb[0].mxu0
        %v2910 = vadd.f32 0.0, %v2909
        %v2911 = vpop.f32.mrb[0].mxu0
        %2912 = vmatprep.mubr.bf16.mxu0 0
        %2913 = vmatmul.mubr.bf16.gmra.mrb[0].mxu0 %v2125
        %v2914 = vpop.f32.mrb[0].mxu0
        %v2915 = vadd.f32 0.0, %v2914
        %v2916 = vpop.f32.mrb[0].mxu0
        %v2917 = vpop.f32.mrb[0].mxu0
        %v2918 = vadd.f32 0.0, %v2917
        %v2919 = vpop.f32.mrb[0].mxu0
        %2920 = vmatprep.mubr.bf16.mxu0 0
        %2921 = vmatmul.mubr.bf16.gmra.mrb[0].mxu0 %v2126
        %v2922 = vpop.f32.mrb[0].mxu0
        %v2923 = vadd.f32 0.0, %v2922
        %v2924 = vpop.f32.mrb[0].mxu0
        %v2925 = vpop.f32.mrb[0].mxu0
        %v2926 = vadd.f32 0.0, %v2925
        %v2927 = vpop.f32.mrb[0].mxu0
        %2928 = vmatprep.mubr.bf16.mxu0 0
        %2929 = vmatmul.mubr.bf16.gmra.mrb[0].mxu0 %v2127
        %v2930 = vpop.f32.mrb[0].mxu0
        %v2931 = vadd.f32 0.0, %v2930
        %v2932 = vpop.f32.mrb[0].mxu0
        %v2933 = vpop.f32.mrb[0].mxu0
        %v2934 = vadd.f32 0.0, %v2933
        %v2935 = vpop.f32.mrb[0].mxu0
        %2936 = vmatprep.mubr.bf16.mxu0 0
        %2937 = vmatmul.mubr.bf16.gmra.mrb[0].mxu0 %v2128
        %v2938 = vpop.f32.mrb[0].mxu0
        %v2939 = vadd.f32 0.0, %v2938
        %v2940 = vpop.f32.mrb[0].mxu0
        %v2941 = vpop.f32.mrb[0].mxu0
        %v2942 = vadd.f32 0.0, %v2941
        %v2943 = vpop.f32.mrb[0].mxu0
        %2944 = vmatprep.mubr.bf16.mxu0 0
        %2945 = vmatmul.mubr.bf16.gmra.mrb[0].mxu0 %v2129
        %v2946 = vpop.f32.mrb[0].mxu0
        %v2947 = vadd.f32 0.0, %v2946
        %v2948 = vpop.f32.mrb[0].mxu0
        %v2949 = vpop.f32.mrb[0].mxu0
        %v2950 = vadd.f32 0.0, %v2949
        %v2951 = vpop.f32.mrb[0].mxu0
        %2952 = vmatprep.mubr.bf16.mxu0 0
        %2953 = vmatmul.mubr.bf16.gmra.mrb[0].mxu0 %v2130
        %v2954 = vpop.f32.mrb[0].mxu0
        %v2955 = vadd.f32 0.0, %v2954
        %v2956 = vpop.f32.mrb[0].mxu0
        %v2957 = vpop.f32.mrb[0].mxu0
        %v2958 = vadd.f32 0.0, %v2957
        %v2959 = vpop.f32.mrb[0].mxu0
        %2960 = vmatprep.mubr.bf16.mxu0 0
        %2961 = vmatmul.mubr.bf16.gmra.mrb[0].mxu0 %v2131
        %v2962 = vpop.f32.mrb[0].mxu0
        %v2963 = vadd.f32 0.0, %v2962
        %v2964 = vpop.f32.mrb[0].mxu0
        %v2965 = vpop.f32.mrb[0].mxu0
        %v2966 = vadd.f32 0.0, %v2965
        %v2967 = vpop.f32.mrb[0].mxu0
        %2968 = vmatprep.mubr.bf16.mxu0 0
        %2969 = vmatmul.mubr.bf16.gmra.mrb[0].mxu0 %v2132
        %v2970 = vpop.f32.mrb[0].mxu0
        %v2971 = vadd.f32 0.0, %v2970
        %v2972 = vpop.f32.mrb[0].mxu0
        %v2973 = vpop.f32.mrb[0].mxu0
        %v2974 = vadd.f32 0.0, %v2973
        %v2975 = vpop.f32.mrb[0].mxu0
        %2976 = vmatprep.mubr.bf16.mxu0 0
        %2977 = vmatmul.mubr.bf16.gmra.mrb[0].mxu0 %v2133
        %v2978 = vpop.f32.mrb[0].mxu0
        %v2979 = vadd.f32 0.0, %v2978
        %v2980 = vpop.f32.mrb[0].mxu0
        %v2981 = vpop.f32.mrb[0].mxu0
        %v2982 = vadd.f32 0.0, %v2981
        %v2983 = vpop.f32.mrb[0].mxu0
        %2984 = vmatprep.mubr.bf16.mxu0 0
        %2985 = vmatmul.mubr.bf16.gmra.mrb[0].mxu0 %v2134
        %v2986 = vpop.f32.mrb[0].mxu0
        %v2987 = vadd.f32 0.0, %v2986
        %v2988 = vpop.f32.mrb[0].mxu0
        %v2989 = vpop.f32.mrb[0].mxu0
        %v2990 = vadd.f32 0.0, %v2989
        %v2991 = vpop.f32.mrb[0].mxu0
        %2992 = vmatprep.mubr.bf16.mxu0 0
        %2993 = vmatmul.mubr.bf16.gmra.mrb[0].mxu0 %v2135
        %v2994 = vpop.f32.mrb[0].mxu0
        %v2995 = vadd.f32 0.0, %v2994
        %v2996 = vpop.f32.mrb[0].mxu0
        %v2997 = vpop.f32.mrb[0].mxu0
        %v2998 = vadd.f32 0.0, %v2997
        %v2999 = vpop.f32.mrb[0].mxu0
        %3000 = vmatprep.mubr.bf16.mxu0 0
        %3001 = vmatmul.mubr.bf16.gmra.mrb[0].mxu0 %v2136
        %v3002 = vpop.f32.mrb[0].mxu0
        %v3003 = vadd.f32 0.0, %v3002
        %v3004 = vpop.f32.mrb[0].mxu0
        %v3005 = vpop.f32.mrb[0].mxu0
        %v3006 = vadd.f32 0.0, %v3005
        %v3007 = vpop.f32.mrb[0].mxu0
        %3008 = vmatprep.mubr.bf16.mxu0 0
        %3009 = vmatmul.mubr.bf16.gmra.mrb[0].mxu0 %v2137
        %v3010 = vpop.f32.mrb[0].mxu0
        %v3011 = vadd.f32 0.0, %v3010
        %v3012 = vpop.f32.mrb[0].mxu0
        %v3013 = vpop.f32.mrb[0].mxu0
        %v3014 = vadd.f32 0.0, %v3013
        %v3015 = vpop.f32.mrb[0].mxu0
        %3016 = vmatprep.mubr.bf16.mxu0 0
        %3017 = vmatmul.mubr.bf16.gmra.mrb[0].mxu0 %v2138
        %v3018 = vpop.f32.mrb[0].mxu0
        %v3019 = vadd.f32 0.0, %v3018
        %v3020 = vpop.f32.mrb[0].mxu0
        %v3021 = vpop.f32.mrb[0].mxu0
        %v3022 = vadd.f32 0.0, %v3021
        %v3023 = vpop.f32.mrb[0].mxu0
        %3024 = vmatprep.mubr.bf16.mxu0 0
        %3025 = vmatmul.mubr.bf16.gmra.mrb[0].mxu0 %v2139
        %v3026 = vpop.f32.mrb[0].mxu0
        %v3027 = vadd.f32 0.0, %v3026
        %v3028 = vpop.f32.mrb[0].mxu0
        %v3029 = vpop.f32.mrb[0].mxu0
        %v3030 = vadd.f32 0.0, %v3029
        %v3031 = vpop.f32.mrb[0].mxu0
        %3032 = vmatprep.mubr.bf16.mxu0 0
        %3033 = vmatmul.mubr.bf16.gmra.mrb[0].mxu0 %v2140
        %v3034 = vpop.f32.mrb[0].mxu0
        %v3035 = vadd.f32 0.0, %v3034
        %v3036 = vpop.f32.mrb[0].mxu0
        %v3037 = vpop.f32.mrb[0].mxu0
        %v3038 = vadd.f32 0.0, %v3037
        %v3039 = vpop.f32.mrb[0].mxu0
        %3040 = vmatprep.mubr.bf16.mxu0 0
        %3041 = vmatmul.mubr.bf16.gmra.mrb[0].mxu0 %v2141
        %v3042 = vpop.f32.mrb[0].mxu0
        %v3043 = vadd.f32 0.0, %v3042
        %v3044 = vpop.f32.mrb[0].mxu0
        %v3045 = vpop.f32.mrb[0].mxu0
        %v3046 = vadd.f32 0.0, %v3045
        %v3047 = vpop.f32.mrb[0].mxu0
        %3048 = vmatprep.mubr.bf16.mxu0 0
        %3049 = vmatmul.mubr.bf16.gmra.mrb[0].mxu0 %v2142
        %v3050 = vpop.f32.mrb[0].mxu0
        %v3051 = vadd.f32 0.0, %v3050
        %v3052 = vpop.f32.mrb[0].mxu0
        %v3053 = vpop.f32.mrb[0].mxu0
        %v3054 = vadd.f32 0.0, %v3053
        %v3055 = vpop.f32.mrb[0].mxu0
        %3056 = vmatprep.mubr.bf16.mxu0 0
        %3057 = vmatmul.mubr.bf16.gmra.mrb[0].mxu0 %v2143
        %v3058 = vpop.f32.mrb[0].mxu0
        %v3059 = vadd.f32 0.0, %v3058
        %v3060 = vpop.f32.mrb[0].mxu0
        %v3061 = vpop.f32.mrb[0].mxu0
        %v3062 = vadd.f32 0.0, %v3061
        %v3063 = vpop.f32.mrb[0].mxu0
        %3064 = vmatprep.mubr.bf16.mxu0 0
        %3065 = vmatmul.mubr.bf16.gmra.mrb[0].mxu0 %v2144
        %v3066 = vpop.f32.mrb[0].mxu0
        %v3067 = vadd.f32 0.0, %v3066
        %v3068 = vpop.f32.mrb[0].mxu0
        %v3069 = vpop.f32.mrb[0].mxu0
        %v3070 = vadd.f32 0.0, %v3069
        %v3071 = vpop.f32.mrb[0].mxu0
        %3072 = vdwg.mxu0
        %v3073 = vadd.f32 %v2706, %v2859
        %v3074 = vadd.f32 %v2707, %v2862
        %v3075 = vadd.f32 %v2708, %v2867
        %v3076 = vadd.f32 %v2709, %v2870
        %v3077 = vadd.f32 %v2710, %v2875
        %v3078 = vadd.f32 %v2711, %v2878
        %v3079 = vadd.f32 %v2712, %v2883
        %v3080 = vadd.f32 %v2713, %v2886
        %v3081 = vadd.f32 %v2714, %v2891
        %v3082 = vadd.f32 %v2715, %v2894
        %v3083 = vadd.f32 %v2716, %v2899
        %v3084 = vadd.f32 %v2717, %v2902
        %v3085 = vadd.f32 %v2718, %v2907
        %v3086 = vadd.f32 %v2719, %v2910
        %v3087 = vadd.f32 %v2720, %v2915
        %v3088 = vadd.f32 %v2721, %v2918
        %v3089 = vadd.f32 %v2722, %v2923
        %v3090 = vadd.f32 %v2723, %v2926
        %v3091 = vadd.f32 %v2724, %v2931
        %v3092 = vadd.f32 %v2725, %v2934
        %v3093 = vadd.f32 %v2726, %v2939
        %v3094 = vadd.f32 %v2727, %v2942
        %v3095 = vadd.f32 %v2728, %v2947
        %v3096 = vadd.f32 %v2729, %v2950
        %v3097 = vadd.f32 %v2730, %v2955
        %v3098 = vadd.f32 %v2731, %v2958
        %v3099 = vadd.f32 %v2732, %v2963
        %v3100 = vadd.f32 %v2733, %v2966
        %v3101 = vadd.f32 %v2734, %v2971
        %v3102 = vadd.f32 %v2735, %v2974
        %v3103 = vadd.f32 %v2736, %v2979
        %v3104 = vadd.f32 %v2737, %v2982
        %v3105 = vadd.f32 %v2738, %v2987
        %v3106 = vadd.f32 %v2739, %v2990
        %v3107 = vadd.f32 %v2740, %v2995
        %v3108 = vadd.f32 %v2741, %v2998
        %v3109 = vadd.f32 %v2742, %v3003
        %v3110 = vadd.f32 %v2743, %v3006
        %v3111 = vadd.f32 %v2744, %v3011
        %v3112 = vadd.f32 %v2745, %v3014
        %v3113 = vadd.f32 %v2746, %v3019
        %v3114 = vadd.f32 %v2747, %v3022
        %v3115 = vadd.f32 %v2748, %v3027
        %v3116 = vadd.f32 %v2749, %v3030
        %v3117 = vadd.f32 %v2750, %v3035
        %v3118 = vadd.f32 %v2751, %v3038
        %v3119 = vadd.f32 %v2752, %v3043
        %v3120 = vadd.f32 %v2753, %v3046
        %v3121 = vadd.f32 %v2754, %v3051
        %v3122 = vadd.f32 %v2755, %v3054
        %v3123 = vadd.f32 %v2756, %v3059
        %v3124 = vadd.f32 %v2757, %v3062
        %v3125 = vadd.f32 %v2758, %v3067
        %v3126 = vadd.f32 %v2759, %v3070
        %v3127 = vld [vmem:[#allocation2 + $0x10] sm:$0xff]
        %v3128 = vld [vmem:[#allocation2 + $0x18] sm:$0xff]
        %v3129 = vld [vmem:[#allocation2 + $0x20] sm:$0xff]
        %v3130 = vld [vmem:[#allocation2 + $0x28] sm:$0xff]
        %v3131 = vld [vmem:[#allocation2 + $0x30] sm:$0xff]
        %v3132 = vld [vmem:[#allocation2 + $0x38] sm:$0xff]
        %v3133 = vld [vmem:[#allocation2 + $0x40] sm:$0xff]
        %v3134 = vld [vmem:[#allocation2 + $0x48] sm:$0xff]
        %v3135 = vld [vmem:[#allocation2 + $0x50] sm:$0xff]
        %v3136 = vld [vmem:[#allocation2 + $0x58] sm:$0xff]
        %v3137 = vld [vmem:[#allocation2 + $0x60] sm:$0xff]
        %v3138 = vld [vmem:[#allocation2 + $0x68] sm:$0xff]
        %v3139 = vld [vmem:[#allocation2 + $0x70] sm:$0xff]
        %v3140 = vld [vmem:[#allocation2 + $0x78] sm:$0xff]
        %v3141 = vld [vmem:[#allocation2 + $0x80] sm:$0xff]
        %v3142 = vld [vmem:[#allocation2 + $0x88] sm:$0xff]
        %v3143 = vld [vmem:[#allocation2 + $0x90] sm:$0xff]
        %v3144 = vld [vmem:[#allocation2 + $0x98] sm:$0xff]
        %v3145 = vld [vmem:[#allocation2 + $0xa0] sm:$0xff]
        %v3146 = vld [vmem:[#allocation2 + $0xa8] sm:$0xff]
        %v3147 = vld [vmem:[#allocation2 + $0xb0] sm:$0xff]
        %v3148 = vld [vmem:[#allocation2 + $0xb8] sm:$0xff]
        %v3149 = vld [vmem:[#allocation2 + $0xc0] sm:$0xff]
        %v3150 = vld [vmem:[#allocation2 + $0xc8] sm:$0xff]
        %v3151 = vld [vmem:[#allocation2 + $0xd0] sm:$0xff]
        %v3152 = vld [vmem:[#allocation2 + $0xd8] sm:$0xff]
        %v3153 = vld [vmem:[#allocation2 + $0xe0] sm:$0xff]
        %v3154 = vld [vmem:[#allocation2 + $0xe8] sm:$0x1]
        %v3155 = vld [vmem:[#allocation7 + $0x140] sm:$0xf]
        %v3156 = vld [vmem:[#allocation7 + $0x144] sm:$0xf]
        %v3157 = vld [vmem:[#allocation7 + $0x148] sm:$0xf]
        %v3158 = vld [vmem:[#allocation7 + $0x14c] sm:$0xf]
        %v3159 = vld [vmem:[#allocation7 + $0x150] sm:$0xf]
        %v3160 = vld [vmem:[#allocation7 + $0x154] sm:$0xf]
        %v3161 = vld [vmem:[#allocation7 + $0x158] sm:$0xf]
        %v3162 = vld [vmem:[#allocation7 + $0x15c] sm:$0xf]
        %v3163 = vld [vmem:[#allocation7 + $0x160] sm:$0xf]
        %v3164 = vld [vmem:[#allocation7 + $0x164] sm:$0xf]
        %v3165 = vld [vmem:[#allocation7 + $0x168] sm:$0xf]
        %v3166 = vld [vmem:[#allocation7 + $0x16c] sm:$0xf]
        %v3167 = vld [vmem:[#allocation7 + $0x170] sm:$0xf]
        %v3168 = vld [vmem:[#allocation7 + $0x174] sm:$0xf]
        %v3169 = vld [vmem:[#allocation7 + $0x178] sm:$0xf]
        %v3170 = vld [vmem:[#allocation7 + $0x17c] sm:$0xf]
        %vm3171 = vsmask.f32 7424
        %v3173 = vshrl.u32 %v3127, 16
        %v3175 = vshll.u32 %v3127, 16
        %v3177 = vrot.slane %v3175, 1
        %v3178 = vor.u32 %v3173, %v3177
        %v3180 = vshll.u32 %v3128, 16
        %v3182 = vrot.slane %v3180, 1
        %v3183 = vsel %vm3171, %v3178, %v3182
        %v3184 = vshrl.u32 %v3128, 16
        %v3186 = vor.u32 %v3184, %v3182
        %v3188 = vshll.u32 %v3129, 16
        %v3190 = vrot.slane %v3188, 1
        %v3191 = vsel %vm3171, %v3186, %v3190
        %v3192 = vshrl.u32 %v3129, 16
        %v3194 = vor.u32 %v3192, %v3190
        %v3196 = vshll.u32 %v3130, 16
        %v3198 = vrot.slane %v3196, 1
        %v3199 = vsel %vm3171, %v3194, %v3198
        %v3200 = vshrl.u32 %v3130, 16
        %v3202 = vor.u32 %v3200, %v3198
        %v3204 = vshll.u32 %v3131, 16
        %v3206 = vrot.slane %v3204, 1
        %v3207 = vsel %vm3171, %v3202, %v3206
        %v3208 = vshrl.u32 %v3131, 16
        %v3210 = vor.u32 %v3208, %v3206
        %v3212 = vshll.u32 %v3132, 16
        %v3214 = vrot.slane %v3212, 1
        %v3215 = vsel %vm3171, %v3210, %v3214
        %v3216 = vshrl.u32 %v3132, 16
        %v3218 = vor.u32 %v3216, %v3214
        %v3220 = vshll.u32 %v3133, 16
        %v3222 = vrot.slane %v3220, 1
        %v3223 = vsel %vm3171, %v3218, %v3222
        %v3224 = vshrl.u32 %v3133, 16
        %v3226 = vor.u32 %v3224, %v3222
        %v3228 = vshll.u32 %v3134, 16
        %v3230 = vrot.slane %v3228, 1
        %v3231 = vsel %vm3171, %v3226, %v3230
        %v3232 = vshrl.u32 %v3134, 16
        %v3234 = vor.u32 %v3232, %v3230
        %v3236 = vshll.u32 %v3135, 16
        %v3238 = vrot.slane %v3236, 1
        %v3239 = vsel %vm3171, %v3234, %v3238
        %v3240 = vshrl.u32 %v3135, 16
        %v3242 = vor.u32 %v3240, %v3238
        %v3244 = vshll.u32 %v3136, 16
        %v3246 = vrot.slane %v3244, 1
        %v3247 = vsel %vm3171, %v3242, %v3246
        %v3248 = vshrl.u32 %v3136, 16
        %v3250 = vor.u32 %v3248, %v3246
        %v3252 = vshll.u32 %v3137, 16
        %v3254 = vrot.slane %v3252, 1
        %v3255 = vsel %vm3171, %v3250, %v3254
        %v3256 = vshrl.u32 %v3137, 16
        %v3258 = vor.u32 %v3256, %v3254
        %v3260 = vshll.u32 %v3138, 16
        %v3262 = vrot.slane %v3260, 1
        %v3263 = vsel %vm3171, %v3258, %v3262
        %v3264 = vshrl.u32 %v3138, 16
        %v3266 = vor.u32 %v3264, %v3262
        %v3268 = vshll.u32 %v3139, 16
        %v3270 = vrot.slane %v3268, 1
        %v3271 = vsel %vm3171, %v3266, %v3270
        %v3272 = vshrl.u32 %v3139, 16
        %v3274 = vor.u32 %v3272, %v3270
        %v3276 = vshll.u32 %v3140, 16
        %v3278 = vrot.slane %v3276, 1
        %v3279 = vsel %vm3171, %v3274, %v3278
        %v3280 = vshrl.u32 %v3140, 16
        %v3282 = vor.u32 %v3280, %v3278
        %v3284 = vshll.u32 %v3141, 16
        %v3286 = vrot.slane %v3284, 1
        %v3287 = vsel %vm3171, %v3282, %v3286
        %v3288 = vshrl.u32 %v3141, 16
        %v3290 = vor.u32 %v3288, %v3286
        %v3292 = vshll.u32 %v3142, 16
        %v3294 = vrot.slane %v3292, 1
        %v3295 = vsel %vm3171, %v3290, %v3294
        %v3296 = vshrl.u32 %v3142, 16
        %v3298 = vor.u32 %v3296, %v3294
        %v3300 = vshll.u32 %v3143, 16
        %v3302 = vrot.slane %v3300, 1
        %v3303 = vsel %vm3171, %v3298, %v3302
        %v3304 = vshrl.u32 %v3143, 16
        %v3306 = vor.u32 %v3304, %v3302
        %v3308 = vshll.u32 %v3144, 16
        %v3310 = vrot.slane %v3308, 1
        %v3311 = vsel %vm3171, %v3306, %v3310
        %v3312 = vshrl.u32 %v3144, 16
        %v3314 = vor.u32 %v3312, %v3310
        %v3316 = vshll.u32 %v3145, 16
        %v3318 = vrot.slane %v3316, 1
        %v3319 = vsel %vm3171, %v3314, %v3318
        %v3320 = vshrl.u32 %v3145, 16
        %v3322 = vor.u32 %v3320, %v3318
        %v3324 = vshll.u32 %v3146, 16
        %v3326 = vrot.slane %v3324, 1
        %v3327 = vsel %vm3171, %v3322, %v3326
        %v3328 = vshrl.u32 %v3146, 16
        %v3330 = vor.u32 %v3328, %v3326
        %v3332 = vshll.u32 %v3147, 16
        %v3334 = vrot.slane %v3332, 1
        %v3335 = vsel %vm3171, %v3330, %v3334
        %v3336 = vshrl.u32 %v3147, 16
        %v3338 = vor.u32 %v3336, %v3334
        %v3340 = vshll.u32 %v3148, 16
        %v3342 = vrot.slane %v3340, 1
        %v3343 = vsel %vm3171, %v3338, %v3342
        %v3344 = vshrl.u32 %v3148, 16
        %v3346 = vor.u32 %v3344, %v3342
        %v3348 = vshll.u32 %v3149, 16
        %v3350 = vrot.slane %v3348, 1
        %v3351 = vsel %vm3171, %v3346, %v3350
        %v3352 = vshrl.u32 %v3149, 16
        %v3354 = vor.u32 %v3352, %v3350
        %v3356 = vshll.u32 %v3150, 16
        %v3358 = vrot.slane %v3356, 1
        %v3359 = vsel %vm3171, %v3354, %v3358
        %v3360 = vshrl.u32 %v3150, 16
        %v3362 = vor.u32 %v3360, %v3358
        %v3364 = vshll.u32 %v3151, 16
        %v3366 = vrot.slane %v3364, 1
        %v3367 = vsel %vm3171, %v3362, %v3366
        %v3368 = vshrl.u32 %v3151, 16
        %v3370 = vor.u32 %v3368, %v3366
        %v3372 = vshll.u32 %v3152, 16
        %v3374 = vrot.slane %v3372, 1
        %v3375 = vsel %vm3171, %v3370, %v3374
        %v3376 = vshrl.u32 %v3152, 16
        %v3378 = vor.u32 %v3376, %v3374
        %v3380 = vshll.u32 %v3153, 16
        %v3382 = vrot.slane %v3380, 1
        %v3383 = vsel %vm3171, %v3378, %v3382
        %v3384 = vshrl.u32 %v3153, 16
        %v3386 = vor.u32 %v3384, %v3382
        %v3388 = vshll.u32 %v3154, 16
        %v3390 = vrot.slane %v3388, 1
        %v3391 = vsel %vm3171, %v3386, %v3390
        %v3435 = vunpack.c.l.b16 %v3155
        %v3436 = vunpack.c.l.b16 %v3156
        %v3437 = vunpack.c.l.b16 %v3157
        %v3438 = vunpack.c.l.b16 %v3158
        %v3439 = vunpack.c.l.b16 %v3159
        %v3440 = vunpack.c.l.b16 %v3160
        %v3441 = vunpack.c.l.b16 %v3161
        %v3442 = vunpack.c.l.b16 %v3162
        %v3443 = vunpack.c.l.b16 %v3163
        %v3444 = vunpack.c.l.b16 %v3164
        %v3445 = vunpack.c.l.b16 %v3165
        %v3446 = vunpack.c.l.b16 %v3166
        %v3447 = vunpack.c.l.b16 %v3167
        %v3448 = vunpack.c.l.b16 %v3168
        %v3449 = vunpack.c.l.b16 %v3169
        %v3450 = vunpack.c.l.b16 %v3170
        %v3451 = vpack.c.b16 %v3436, %v3435
        %v3452 = vpack.c.b16 %v3438, %v3437
        %v3453 = vpack.c.b16 %v3440, %v3439
        %v3454 = vpack.c.b16 %v3442, %v3441
        %v3455 = vpack.c.b16 %v3444, %v3443
        %v3456 = vpack.c.b16 %v3446, %v3445
        %v3457 = vpack.c.b16 %v3448, %v3447
        %v3458 = vpack.c.b16 %v3450, %v3449
        %3467 = vmatprep.subr.bf16.mxu0 0
        %3468 = vmatpush1.bf16.msra.mxu0 %v3451
        %3469 = vmatprep.subr.bf16.mxu0 0
        %3470 = vmatpush1.bf16.msra.mxu0 %v3452
        %3471 = vmatprep.subr.bf16.mxu0 0
        %3472 = vmatpush1.bf16.msra.mxu0 %v3453
        %3473 = vmatprep.subr.bf16.mxu0 0
        %3474 = vmatpush1.bf16.msra.mxu0 %v3454
        %3475 = vmatprep.subr.bf16.mxu0 0
        %3476 = vmatpush1.bf16.msra.mxu0 %v3455
        %3477 = vmatprep.subr.bf16.mxu0 0
        %3478 = vmatpush1.bf16.msra.mxu0 %v3456
        %3479 = vmatprep.subr.bf16.mxu0 0
        %3480 = vmatpush1.bf16.msra.mxu0 %v3457
        %3481 = vmatprep.subr.bf16.mxu0 0
        %3482 = vmatpush1.bf16.msra.mxu0 %v3458
        %3483 = vmatprep.subr.bf16.mxu0 0
        %3484 = vmatpush1.bf16.msra.mxu0 0
        %3485 = vmatprep.subr.bf16.mxu0 0
        %3486 = vmatpush1.bf16.msra.mxu0 0
        %3487 = vmatprep.subr.bf16.mxu0 0
        %3488 = vmatpush1.bf16.msra.mxu0 0
        %3489 = vmatprep.subr.bf16.mxu0 0
        %3490 = vmatpush1.bf16.msra.mxu0 0
        %3491 = vmatprep.subr.bf16.mxu0 0
        %3492 = vmatpush1.bf16.msra.mxu0 0
        %3493 = vmatprep.subr.bf16.mxu0 0
        %3494 = vmatpush1.bf16.msra.mxu0 0
        %3495 = vmatprep.subr.bf16.mxu0 0
        %3496 = vmatpush1.bf16.msra.mxu0 0
        %3497 = vmatprep.subr.bf16.mxu0 0
        %3498 = vmatpush1.bf16.msra.mxu0 0
        %3499 = vmatprep.mubr.bf16.mxu0 0
        %3500 = vmatmul.mubr.bf16.gmra.mrb[0].mxu0 %v3183
        %v3501 = vpop.f32.mrb[0].mxu0
        %v3502 = vadd.f32 0.0, %v3501
        %v3503 = vpop.f32.mrb[0].mxu0
        %v3504 = vpop.f32.mrb[0].mxu0
        %v3505 = vadd.f32 0.0, %v3504
        %v3506 = vpop.f32.mrb[0].mxu0
        %3507 = vmatprep.mubr.bf16.mxu0 0
        %3508 = vmatmul.mubr.bf16.gmra.mrb[0].mxu0 %v3191
        %v3509 = vpop.f32.mrb[0].mxu0
        %v3510 = vadd.f32 0.0, %v3509
        %v3511 = vpop.f32.mrb[0].mxu0
        %v3512 = vpop.f32.mrb[0].mxu0
        %v3513 = vadd.f32 0.0, %v3512
        %v3514 = vpop.f32.mrb[0].mxu0
        %3515 = vmatprep.mubr.bf16.mxu0 0
        %3516 = vmatmul.mubr.bf16.gmra.mrb[0].mxu0 %v3199
        %v3517 = vpop.f32.mrb[0].mxu0
        %v3518 = vadd.f32 0.0, %v3517
        %v3519 = vpop.f32.mrb[0].mxu0
        %v3520 = vpop.f32.mrb[0].mxu0
        %v3521 = vadd.f32 0.0, %v3520
        %v3522 = vpop.f32.mrb[0].mxu0
        %3523 = vmatprep.mubr.bf16.mxu0 0
        %3524 = vmatmul.mubr.bf16.gmra.mrb[0].mxu0 %v3207
        %v3525 = vpop.f32.mrb[0].mxu0
        %v3526 = vadd.f32 0.0, %v3525
        %v3527 = vpop.f32.mrb[0].mxu0
        %v3528 = vpop.f32.mrb[0].mxu0
        %v3529 = vadd.f32 0.0, %v3528
        %v3530 = vpop.f32.mrb[0].mxu0
        %3531 = vmatprep.mubr.bf16.mxu0 0
        %3532 = vmatmul.mubr.bf16.gmra.mrb[0].mxu0 %v3215
        %v3533 = vpop.f32.mrb[0].mxu0
        %v3534 = vadd.f32 0.0, %v3533
        %v3535 = vpop.f32.mrb[0].mxu0
        %v3536 = vpop.f32.mrb[0].mxu0
        %v3537 = vadd.f32 0.0, %v3536
        %v3538 = vpop.f32.mrb[0].mxu0
        %3539 = vmatprep.mubr.bf16.mxu0 0
        %3540 = vmatmul.mubr.bf16.gmra.mrb[0].mxu0 %v3223
        %v3541 = vpop.f32.mrb[0].mxu0
        %v3542 = vadd.f32 0.0, %v3541
        %v3543 = vpop.f32.mrb[0].mxu0
        %v3544 = vpop.f32.mrb[0].mxu0
        %v3545 = vadd.f32 0.0, %v3544
        %v3546 = vpop.f32.mrb[0].mxu0
        %3547 = vmatprep.mubr.bf16.mxu0 0
        %3548 = vmatmul.mubr.bf16.gmra.mrb[0].mxu0 %v3231
        %v3549 = vpop.f32.mrb[0].mxu0
        %v3550 = vadd.f32 0.0, %v3549
        %v3551 = vpop.f32.mrb[0].mxu0
        %v3552 = vpop.f32.mrb[0].mxu0
        %v3553 = vadd.f32 0.0, %v3552
        %v3554 = vpop.f32.mrb[0].mxu0
        %3555 = vmatprep.mubr.bf16.mxu0 0
        %3556 = vmatmul.mubr.bf16.gmra.mrb[0].mxu0 %v3239
        %v3557 = vpop.f32.mrb[0].mxu0
        %v3558 = vadd.f32 0.0, %v3557
        %v3559 = vpop.f32.mrb[0].mxu0
        %v3560 = vpop.f32.mrb[0].mxu0
        %v3561 = vadd.f32 0.0, %v3560
        %v3562 = vpop.f32.mrb[0].mxu0
        %3563 = vmatprep.mubr.bf16.mxu0 0
        %3564 = vmatmul.mubr.bf16.gmra.mrb[0].mxu0 %v3247
        %v3565 = vpop.f32.mrb[0].mxu0
        %v3566 = vadd.f32 0.0, %v3565
        %v3567 = vpop.f32.mrb[0].mxu0
        %v3568 = vpop.f32.mrb[0].mxu0
        %v3569 = vadd.f32 0.0, %v3568
        %v3570 = vpop.f32.mrb[0].mxu0
        %3571 = vmatprep.mubr.bf16.mxu0 0
        %3572 = vmatmul.mubr.bf16.gmra.mrb[0].mxu0 %v3255
        %v3573 = vpop.f32.mrb[0].mxu0
        %v3574 = vadd.f32 0.0, %v3573
        %v3575 = vpop.f32.mrb[0].mxu0
        %v3576 = vpop.f32.mrb[0].mxu0
        %v3577 = vadd.f32 0.0, %v3576
        %v3578 = vpop.f32.mrb[0].mxu0
        %3579 = vmatprep.mubr.bf16.mxu0 0
        %3580 = vmatmul.mubr.bf16.gmra.mrb[0].mxu0 %v3263
        %v3581 = vpop.f32.mrb[0].mxu0
        %v3582 = vadd.f32 0.0, %v3581
        %v3583 = vpop.f32.mrb[0].mxu0
        %v3584 = vpop.f32.mrb[0].mxu0
        %v3585 = vadd.f32 0.0, %v3584
        %v3586 = vpop.f32.mrb[0].mxu0
        %3587 = vmatprep.mubr.bf16.mxu0 0
        %3588 = vmatmul.mubr.bf16.gmra.mrb[0].mxu0 %v3271
        %v3589 = vpop.f32.mrb[0].mxu0
        %v3590 = vadd.f32 0.0, %v3589
        %v3591 = vpop.f32.mrb[0].mxu0
        %v3592 = vpop.f32.mrb[0].mxu0
        %v3593 = vadd.f32 0.0, %v3592
        %v3594 = vpop.f32.mrb[0].mxu0
        %3595 = vmatprep.mubr.bf16.mxu0 0
        %3596 = vmatmul.mubr.bf16.gmra.mrb[0].mxu0 %v3279
        %v3597 = vpop.f32.mrb[0].mxu0
        %v3598 = vadd.f32 0.0, %v3597
        %v3599 = vpop.f32.mrb[0].mxu0
        %v3600 = vpop.f32.mrb[0].mxu0
        %v3601 = vadd.f32 0.0, %v3600
        %v3602 = vpop.f32.mrb[0].mxu0
        %3603 = vmatprep.mubr.bf16.mxu0 0
        %3604 = vmatmul.mubr.bf16.gmra.mrb[0].mxu0 %v3287
        %v3605 = vpop.f32.mrb[0].mxu0
        %v3606 = vadd.f32 0.0, %v3605
        %v3607 = vpop.f32.mrb[0].mxu0
        %v3608 = vpop.f32.mrb[0].mxu0
        %v3609 = vadd.f32 0.0, %v3608
        %v3610 = vpop.f32.mrb[0].mxu0
        %3611 = vmatprep.mubr.bf16.mxu0 0
        %3612 = vmatmul.mubr.bf16.gmra.mrb[0].mxu0 %v3295
        %v3613 = vpop.f32.mrb[0].mxu0
        %v3614 = vadd.f32 0.0, %v3613
        %v3615 = vpop.f32.mrb[0].mxu0
        %v3616 = vpop.f32.mrb[0].mxu0
        %v3617 = vadd.f32 0.0, %v3616
        %v3618 = vpop.f32.mrb[0].mxu0
        %3619 = vmatprep.mubr.bf16.mxu0 0
        %3620 = vmatmul.mubr.bf16.gmra.mrb[0].mxu0 %v3303
        %v3621 = vpop.f32.mrb[0].mxu0
        %v3622 = vadd.f32 0.0, %v3621
        %v3623 = vpop.f32.mrb[0].mxu0
        %v3624 = vpop.f32.mrb[0].mxu0
        %v3625 = vadd.f32 0.0, %v3624
        %v3626 = vpop.f32.mrb[0].mxu0
        %3627 = vmatprep.mubr.bf16.mxu0 0
        %3628 = vmatmul.mubr.bf16.gmra.mrb[0].mxu0 %v3311
        %v3629 = vpop.f32.mrb[0].mxu0
        %v3630 = vadd.f32 0.0, %v3629
        %v3631 = vpop.f32.mrb[0].mxu0
        %v3632 = vpop.f32.mrb[0].mxu0
        %v3633 = vadd.f32 0.0, %v3632
        %v3634 = vpop.f32.mrb[0].mxu0
        %3635 = vmatprep.mubr.bf16.mxu0 0
        %3636 = vmatmul.mubr.bf16.gmra.mrb[0].mxu0 %v3319
        %v3637 = vpop.f32.mrb[0].mxu0
        %v3638 = vadd.f32 0.0, %v3637
        %v3639 = vpop.f32.mrb[0].mxu0
        %v3640 = vpop.f32.mrb[0].mxu0
        %v3641 = vadd.f32 0.0, %v3640
        %v3642 = vpop.f32.mrb[0].mxu0
        %3643 = vmatprep.mubr.bf16.mxu0 0
        %3644 = vmatmul.mubr.bf16.gmra.mrb[0].mxu0 %v3327
        %v3645 = vpop.f32.mrb[0].mxu0
        %v3646 = vadd.f32 0.0, %v3645
        %v3647 = vpop.f32.mrb[0].mxu0
        %v3648 = vpop.f32.mrb[0].mxu0
        %v3649 = vadd.f32 0.0, %v3648
        %v3650 = vpop.f32.mrb[0].mxu0
        %3651 = vmatprep.mubr.bf16.mxu0 0
        %3652 = vmatmul.mubr.bf16.gmra.mrb[0].mxu0 %v3335
        %v3653 = vpop.f32.mrb[0].mxu0
        %v3654 = vadd.f32 0.0, %v3653
        %v3655 = vpop.f32.mrb[0].mxu0
        %v3656 = vpop.f32.mrb[0].mxu0
        %v3657 = vadd.f32 0.0, %v3656
        %v3658 = vpop.f32.mrb[0].mxu0
        %3659 = vmatprep.mubr.bf16.mxu0 0
        %3660 = vmatmul.mubr.bf16.gmra.mrb[0].mxu0 %v3343
        %v3661 = vpop.f32.mrb[0].mxu0
        %v3662 = vadd.f32 0.0, %v3661
        %v3663 = vpop.f32.mrb[0].mxu0
        %v3664 = vpop.f32.mrb[0].mxu0
        %v3665 = vadd.f32 0.0, %v3664
        %v3666 = vpop.f32.mrb[0].mxu0
        %3667 = vmatprep.mubr.bf16.mxu0 0
        %3668 = vmatmul.mubr.bf16.gmra.mrb[0].mxu0 %v3351
        %v3669 = vpop.f32.mrb[0].mxu0
        %v3670 = vadd.f32 0.0, %v3669
        %v3671 = vpop.f32.mrb[0].mxu0
        %v3672 = vpop.f32.mrb[0].mxu0
        %v3673 = vadd.f32 0.0, %v3672
        %v3674 = vpop.f32.mrb[0].mxu0
        %3675 = vmatprep.mubr.bf16.mxu0 0
        %3676 = vmatmul.mubr.bf16.gmra.mrb[0].mxu0 %v3359
        %v3677 = vpop.f32.mrb[0].mxu0
        %v3678 = vadd.f32 0.0, %v3677
        %v3679 = vpop.f32.mrb[0].mxu0
        %v3680 = vpop.f32.mrb[0].mxu0
        %v3681 = vadd.f32 0.0, %v3680
        %v3682 = vpop.f32.mrb[0].mxu0
        %3683 = vmatprep.mubr.bf16.mxu0 0
        %3684 = vmatmul.mubr.bf16.gmra.mrb[0].mxu0 %v3367
        %v3685 = vpop.f32.mrb[0].mxu0
        %v3686 = vadd.f32 0.0, %v3685
        %v3687 = vpop.f32.mrb[0].mxu0
        %v3688 = vpop.f32.mrb[0].mxu0
        %v3689 = vadd.f32 0.0, %v3688
        %v3690 = vpop.f32.mrb[0].mxu0
        %3691 = vmatprep.mubr.bf16.mxu0 0
        %3692 = vmatmul.mubr.bf16.gmra.mrb[0].mxu0 %v3375
        %v3693 = vpop.f32.mrb[0].mxu0
        %v3694 = vadd.f32 0.0, %v3693
        %v3695 = vpop.f32.mrb[0].mxu0
        %v3696 = vpop.f32.mrb[0].mxu0
        %v3697 = vadd.f32 0.0, %v3696
        %v3698 = vpop.f32.mrb[0].mxu0
        %3699 = vmatprep.mubr.bf16.mxu0 0
        %3700 = vmatmul.mubr.bf16.gmra.mrb[0].mxu0 %v3383
        %v3701 = vpop.f32.mrb[0].mxu0
        %v3702 = vadd.f32 0.0, %v3701
        %v3703 = vpop.f32.mrb[0].mxu0
        %v3704 = vpop.f32.mrb[0].mxu0
        %v3705 = vadd.f32 0.0, %v3704
        %v3706 = vpop.f32.mrb[0].mxu0
        %3707 = vmatprep.mubr.bf16.mxu0 0
        %3708 = vmatmul.mubr.bf16.gmra.mrb[0].mxu0 %v3391
        %v3709 = vpop.f32.mrb[0].mxu0
        %v3710 = vadd.f32 0.0, %v3709
        %v3711 = vpop.f32.mrb[0].mxu0
        %v3712 = vpop.f32.mrb[0].mxu0
        %v3713 = vadd.f32 0.0, %v3712
        %v3714 = vpop.f32.mrb[0].mxu0
        %3715 = vdwg.mxu0
        %v3716 = vadd.f32 %v3073, %v3502
        %v3717 = vadd.f32 %v3074, %v3505
        %v3718 = vadd.f32 %v3075, %v3510
        %v3719 = vadd.f32 %v3076, %v3513
        %v3720 = vadd.f32 %v3077, %v3518
        %v3721 = vadd.f32 %v3078, %v3521
        %v3722 = vadd.f32 %v3079, %v3526
        %v3723 = vadd.f32 %v3080, %v3529
        %v3724 = vadd.f32 %v3081, %v3534
        %v3725 = vadd.f32 %v3082, %v3537
        %v3726 = vadd.f32 %v3083, %v3542
        %v3727 = vadd.f32 %v3084, %v3545
        %v3728 = vadd.f32 %v3085, %v3550
        %v3729 = vadd.f32 %v3086, %v3553
        %v3730 = vadd.f32 %v3087, %v3558
        %v3731 = vadd.f32 %v3088, %v3561
        %v3732 = vadd.f32 %v3089, %v3566
        %v3733 = vadd.f32 %v3090, %v3569
        %v3734 = vadd.f32 %v3091, %v3574
        %v3735 = vadd.f32 %v3092, %v3577
        %v3736 = vadd.f32 %v3093, %v3582
        %v3737 = vadd.f32 %v3094, %v3585
        %v3738 = vadd.f32 %v3095, %v3590
        %v3739 = vadd.f32 %v3096, %v3593
        %v3740 = vadd.f32 %v3097, %v3598
        %v3741 = vadd.f32 %v3098, %v3601
        %v3742 = vadd.f32 %v3099, %v3606
        %v3743 = vadd.f32 %v3100, %v3609
        %v3744 = vadd.f32 %v3101, %v3614
        %v3745 = vadd.f32 %v3102, %v3617
        %v3746 = vadd.f32 %v3103, %v3622
        %v3747 = vadd.f32 %v3104, %v3625
        %v3748 = vadd.f32 %v3105, %v3630
        %v3749 = vadd.f32 %v3106, %v3633
        %v3750 = vadd.f32 %v3107, %v3638
        %v3751 = vadd.f32 %v3108, %v3641
        %v3752 = vadd.f32 %v3109, %v3646
        %v3753 = vadd.f32 %v3110, %v3649
        %v3754 = vadd.f32 %v3111, %v3654
        %v3755 = vadd.f32 %v3112, %v3657
        %v3756 = vadd.f32 %v3113, %v3662
        %v3757 = vadd.f32 %v3114, %v3665
        %v3758 = vadd.f32 %v3115, %v3670
        %v3759 = vadd.f32 %v3116, %v3673
        %v3760 = vadd.f32 %v3117, %v3678
        %v3761 = vadd.f32 %v3118, %v3681
        %v3762 = vadd.f32 %v3119, %v3686
        %v3763 = vadd.f32 %v3120, %v3689
        %v3764 = vadd.f32 %v3121, %v3694
        %v3765 = vadd.f32 %v3122, %v3697
        %v3766 = vadd.f32 %v3123, %v3702
        %v3767 = vadd.f32 %v3124, %v3705
        %v3768 = vadd.f32 %v3125, %v3710
        %v3769 = vadd.f32 %v3126, %v3713
        %v3770 = vld [vmem:[#allocation2 + $0x18] sm:$0xf8]
        %v3771 = vld [vmem:[#allocation2 + $0x20] sm:$0xff]
        %v3772 = vld [vmem:[#allocation2 + $0x28] sm:$0xff]
        %v3773 = vld [vmem:[#allocation2 + $0x30] sm:$0xff]
        %v3774 = vld [vmem:[#allocation2 + $0x38] sm:$0xff]
        %v3775 = vld [vmem:[#allocation2 + $0x40] sm:$0xff]
        %v3776 = vld [vmem:[#allocation2 + $0x48] sm:$0xff]
        %v3777 = vld [vmem:[#allocation2 + $0x50] sm:$0xff]
        %v3778 = vld [vmem:[#allocation2 + $0x58] sm:$0xff]
        %v3779 = vld [vmem:[#allocation2 + $0x60] sm:$0xff]
        %v3780 = vld [vmem:[#allocation2 + $0x68] sm:$0xff]
        %v3781 = vld [vmem:[#allocation2 + $0x70] sm:$0xff]
        %v3782 = vld [vmem:[#allocation2 + $0x78] sm:$0xff]
        %v3783 = vld [vmem:[#allocation2 + $0x80] sm:$0xff]
        %v3784 = vld [vmem:[#allocation2 + $0x88] sm:$0xff]
        %v3785 = vld [vmem:[#allocation2 + $0x90] sm:$0xff]
        %v3786 = vld [vmem:[#allocation2 + $0x98] sm:$0xff]
        %v3787 = vld [vmem:[#allocation2 + $0xa0] sm:$0xff]
        %v3788 = vld [vmem:[#allocation2 + $0xa8] sm:$0xff]
        %v3789 = vld [vmem:[#allocation2 + $0xb0] sm:$0xff]
        %v3790 = vld [vmem:[#allocation2 + $0xb8] sm:$0xff]
        %v3791 = vld [vmem:[#allocation2 + $0xc0] sm:$0xff]
        %v3792 = vld [vmem:[#allocation2 + $0xc8] sm:$0xff]
        %v3793 = vld [vmem:[#allocation2 + $0xd0] sm:$0xff]
        %v3794 = vld [vmem:[#allocation2 + $0xd8] sm:$0xff]
        %v3795 = vld [vmem:[#allocation2 + $0xe0] sm:$0xff]
        %v3796 = vld [vmem:[#allocation2 + $0xe8] sm:$0xff]
        %v3797 = vld [vmem:[#allocation2 + $0xf0] sm:$0xf]
        %v3798 = vld [vmem:[#allocation7 + $0x180] sm:$0xf]
        %v3799 = vld [vmem:[#allocation7 + $0x184] sm:$0xf]
        %v3800 = vld [vmem:[#allocation7 + $0x188] sm:$0xf]
        %v3801 = vld [vmem:[#allocation7 + $0x18c] sm:$0xf]
        %v3802 = vld [vmem:[#allocation7 + $0x190] sm:$0xf]
        %v3803 = vld [vmem:[#allocation7 + $0x194] sm:$0xf]
        %v3804 = vld [vmem:[#allocation7 + $0x198] sm:$0xf]
        %v3805 = vld [vmem:[#allocation7 + $0x19c] sm:$0xf]
        %v3806 = vld [vmem:[#allocation7 + $0x1a0] sm:$0xf]
        %v3807 = vld [vmem:[#allocation7 + $0x1a4] sm:$0xf]
        %v3808 = vld [vmem:[#allocation7 + $0x1a8] sm:$0xf]
        %v3809 = vld [vmem:[#allocation7 + $0x1ac] sm:$0xf]
        %v3810 = vld [vmem:[#allocation7 + $0x1b0] sm:$0xf]
        %v3811 = vld [vmem:[#allocation7 + $0x1b4] sm:$0xf]
        %v3812 = vld [vmem:[#allocation7 + $0x1b8] sm:$0xf]
        %v3813 = vld [vmem:[#allocation7 + $0x1bc] sm:$0xf]
        %v3815 = vshrl.u32 %v3770, 16
        %v3817 = vrot.slane %v3815, 3
        %v3818 = vshll.u32 %v3770, 16
        %v3820 = vrot.slane %v3818, 4
        %v3821 = vor.u32 %v3817, %v3820
        %v3823 = vshrl.u32 %v3771, 16
        %v3825 = vrot.slane %v3823, 3
        %v3826 = vshll.u32 %v3771, 16
        %v3828 = vrot.slane %v3826, 4
        %v3829 = vor.u32 %v3825, %v3828
        %v3830 = vsel %vm1024, %v3821, %v3829
        %v3832 = vshrl.u32 %v3772, 16
        %v3834 = vrot.slane %v3832, 3
        %v3835 = vshll.u32 %v3772, 16
        %v3837 = vrot.slane %v3835, 4
        %v3838 = vor.u32 %v3834, %v3837
        %v3839 = vsel %vm1024, %v3829, %v3838
        %v3841 = vshrl.u32 %v3773, 16
        %v3843 = vrot.slane %v3841, 3
        %v3844 = vshll.u32 %v3773, 16
        %v3846 = vrot.slane %v3844, 4
        %v3847 = vor.u32 %v3843, %v3846
        %v3848 = vsel %vm1024, %v3838, %v3847
        %v3850 = vshrl.u32 %v3774, 16
        %v3852 = vrot.slane %v3850, 3
        %v3853 = vshll.u32 %v3774, 16
        %v3855 = vrot.slane %v3853, 4
        %v3856 = vor.u32 %v3852, %v3855
        %v3857 = vsel %vm1024, %v3847, %v3856
        %v3859 = vshrl.u32 %v3775, 16
        %v3861 = vrot.slane %v3859, 3
        %v3862 = vshll.u32 %v3775, 16
        %v3864 = vrot.slane %v3862, 4
        %v3865 = vor.u32 %v3861, %v3864
        %v3866 = vsel %vm1024, %v3856, %v3865
        %v3868 = vshrl.u32 %v3776, 16
        %v3870 = vrot.slane %v3868, 3
        %v3871 = vshll.u32 %v3776, 16
        %v3873 = vrot.slane %v3871, 4
        %v3874 = vor.u32 %v3870, %v3873
        %v3875 = vsel %vm1024, %v3865, %v3874
        %v3877 = vshrl.u32 %v3777, 16
        %v3879 = vrot.slane %v3877, 3
        %v3880 = vshll.u32 %v3777, 16
        %v3882 = vrot.slane %v3880, 4
        %v3883 = vor.u32 %v3879, %v3882
        %v3884 = vsel %vm1024, %v3874, %v3883
        %v3886 = vshrl.u32 %v3778, 16
        %v3888 = vrot.slane %v3886, 3
        %v3889 = vshll.u32 %v3778, 16
        %v3891 = vrot.slane %v3889, 4
        %v3892 = vor.u32 %v3888, %v3891
        %v3893 = vsel %vm1024, %v3883, %v3892
        %v3895 = vshrl.u32 %v3779, 16
        %v3897 = vrot.slane %v3895, 3
        %v3898 = vshll.u32 %v3779, 16
        %v3900 = vrot.slane %v3898, 4
        %v3901 = vor.u32 %v3897, %v3900
        %v3902 = vsel %vm1024, %v3892, %v3901
        %v3904 = vshrl.u32 %v3780, 16
        %v3906 = vrot.slane %v3904, 3
        %v3907 = vshll.u32 %v3780, 16
        %v3909 = vrot.slane %v3907, 4
        %v3910 = vor.u32 %v3906, %v3909
        %v3911 = vsel %vm1024, %v3901, %v3910
        %v3913 = vshrl.u32 %v3781, 16
        %v3915 = vrot.slane %v3913, 3
        %v3916 = vshll.u32 %v3781, 16
        %v3918 = vrot.slane %v3916, 4
        %v3919 = vor.u32 %v3915, %v3918
        %v3920 = vsel %vm1024, %v3910, %v3919
        %v3922 = vshrl.u32 %v3782, 16
        %v3924 = vrot.slane %v3922, 3
        %v3925 = vshll.u32 %v3782, 16
        %v3927 = vrot.slane %v3925, 4
        %v3928 = vor.u32 %v3924, %v3927
        %v3929 = vsel %vm1024, %v3919, %v3928
        %v3931 = vshrl.u32 %v3783, 16
        %v3933 = vrot.slane %v3931, 3
        %v3934 = vshll.u32 %v3783, 16
        %v3936 = vrot.slane %v3934, 4
        %v3937 = vor.u32 %v3933, %v3936
        %v3938 = vsel %vm1024, %v3928, %v3937
        %v3940 = vshrl.u32 %v3784, 16
        %v3942 = vrot.slane %v3940, 3
        %v3943 = vshll.u32 %v3784, 16
        %v3945 = vrot.slane %v3943, 4
        %v3946 = vor.u32 %v3942, %v3945
        %v3947 = vsel %vm1024, %v3937, %v3946
        %v3949 = vshrl.u32 %v3785, 16
        %v3951 = vrot.slane %v3949, 3
        %v3952 = vshll.u32 %v3785, 16
        %v3954 = vrot.slane %v3952, 4
        %v3955 = vor.u32 %v3951, %v3954
        %v3956 = vsel %vm1024, %v3946, %v3955
        %v3958 = vshrl.u32 %v3786, 16
        %v3960 = vrot.slane %v3958, 3
        %v3961 = vshll.u32 %v3786, 16
        %v3963 = vrot.slane %v3961, 4
        %v3964 = vor.u32 %v3960, %v3963
        %v3965 = vsel %vm1024, %v3955, %v3964
        %v3967 = vshrl.u32 %v3787, 16
        %v3969 = vrot.slane %v3967, 3
        %v3970 = vshll.u32 %v3787, 16
        %v3972 = vrot.slane %v3970, 4
        %v3973 = vor.u32 %v3969, %v3972
        %v3974 = vsel %vm1024, %v3964, %v3973
        %v3976 = vshrl.u32 %v3788, 16
        %v3978 = vrot.slane %v3976, 3
        %v3979 = vshll.u32 %v3788, 16
        %v3981 = vrot.slane %v3979, 4
        %v3982 = vor.u32 %v3978, %v3981
        %v3983 = vsel %vm1024, %v3973, %v3982
        %v3985 = vshrl.u32 %v3789, 16
        %v3987 = vrot.slane %v3985, 3
        %v3988 = vshll.u32 %v3789, 16
        %v3990 = vrot.slane %v3988, 4
        %v3991 = vor.u32 %v3987, %v3990
        %v3992 = vsel %vm1024, %v3982, %v3991
        %v3994 = vshrl.u32 %v3790, 16
        %v3996 = vrot.slane %v3994, 3
        %v3997 = vshll.u32 %v3790, 16
        %v3999 = vrot.slane %v3997, 4
        %v4000 = vor.u32 %v3996, %v3999
        %v4001 = vsel %vm1024, %v3991, %v4000
        %v4003 = vshrl.u32 %v3791, 16
        %v4005 = vrot.slane %v4003, 3
        %v4006 = vshll.u32 %v3791, 16
        %v4008 = vrot.slane %v4006, 4
        %v4009 = vor.u32 %v4005, %v4008
        %v4010 = vsel %vm1024, %v4000, %v4009
        %v4012 = vshrl.u32 %v3792, 16
        %v4014 = vrot.slane %v4012, 3
        %v4015 = vshll.u32 %v3792, 16
        %v4017 = vrot.slane %v4015, 4
        %v4018 = vor.u32 %v4014, %v4017
        %v4019 = vsel %vm1024, %v4009, %v4018
        %v4021 = vshrl.u32 %v3793, 16
        %v4023 = vrot.slane %v4021, 3
        %v4024 = vshll.u32 %v3793, 16
        %v4026 = vrot.slane %v4024, 4
        %v4027 = vor.u32 %v4023, %v4026
        %v4028 = vsel %vm1024, %v4018, %v4027
        %v4030 = vshrl.u32 %v3794, 16
        %v4032 = vrot.slane %v4030, 3
        %v4033 = vshll.u32 %v3794, 16
        %v4035 = vrot.slane %v4033, 4
        %v4036 = vor.u32 %v4032, %v4035
        %v4037 = vsel %vm1024, %v4027, %v4036
        %v4039 = vshrl.u32 %v3795, 16
        %v4041 = vrot.slane %v4039, 3
        %v4042 = vshll.u32 %v3795, 16
        %v4044 = vrot.slane %v4042, 4
        %v4045 = vor.u32 %v4041, %v4044
        %v4046 = vsel %vm1024, %v4036, %v4045
        %v4048 = vshrl.u32 %v3796, 16
        %v4050 = vrot.slane %v4048, 3
        %v4051 = vshll.u32 %v3796, 16
        %v4053 = vrot.slane %v4051, 4
        %v4054 = vor.u32 %v4050, %v4053
        %v4055 = vsel %vm1024, %v4045, %v4054
        %v4057 = vshrl.u32 %v3797, 16
        %v4059 = vrot.slane %v4057, 3
        %v4060 = vshll.u32 %v3797, 16
        %v4062 = vrot.slane %v4060, 4
        %v4063 = vor.u32 %v4059, %v4062
        %v4064 = vsel %vm1024, %v4054, %v4063
        %v4108 = vunpack.c.l.b16 %v3798
        %v4109 = vunpack.c.l.b16 %v3799
        %v4110 = vunpack.c.l.b16 %v3800
        %v4111 = vunpack.c.l.b16 %v3801
        %v4112 = vunpack.c.l.b16 %v3802
        %v4113 = vunpack.c.l.b16 %v3803
        %v4114 = vunpack.c.l.b16 %v3804
        %v4115 = vunpack.c.l.b16 %v3805
        %v4116 = vunpack.c.l.b16 %v3806
        %v4117 = vunpack.c.l.b16 %v3807
        %v4118 = vunpack.c.l.b16 %v3808
        %v4119 = vunpack.c.l.b16 %v3809
        %v4120 = vunpack.c.l.b16 %v3810
        %v4121 = vunpack.c.l.b16 %v3811
        %v4122 = vunpack.c.l.b16 %v3812
        %v4123 = vunpack.c.l.b16 %v3813
        %v4124 = vpack.c.b16 %v4109, %v4108
        %v4125 = vpack.c.b16 %v4111, %v4110
        %v4126 = vpack.c.b16 %v4113, %v4112
        %v4127 = vpack.c.b16 %v4115, %v4114
        %v4128 = vpack.c.b16 %v4117, %v4116
        %v4129 = vpack.c.b16 %v4119, %v4118
        %v4130 = vpack.c.b16 %v4121, %v4120
        %v4131 = vpack.c.b16 %v4123, %v4122
        %4140 = vmatprep.subr.bf16.mxu0 0
        %4141 = vmatpush1.bf16.msra.mxu0 %v4124
        %4142 = vmatprep.subr.bf16.mxu0 0
        %4143 = vmatpush1.bf16.msra.mxu0 %v4125
        %4144 = vmatprep.subr.bf16.mxu0 0
        %4145 = vmatpush1.bf16.msra.mxu0 %v4126
        %4146 = vmatprep.subr.bf16.mxu0 0
        %4147 = vmatpush1.bf16.msra.mxu0 %v4127
        %4148 = vmatprep.subr.bf16.mxu0 0
        %4149 = vmatpush1.bf16.msra.mxu0 %v4128
        %4150 = vmatprep.subr.bf16.mxu0 0
        %4151 = vmatpush1.bf16.msra.mxu0 %v4129
        %4152 = vmatprep.subr.bf16.mxu0 0
        %4153 = vmatpush1.bf16.msra.mxu0 %v4130
        %4154 = vmatprep.subr.bf16.mxu0 0
        %4155 = vmatpush1.bf16.msra.mxu0 %v4131
        %4156 = vmatprep.subr.bf16.mxu0 0
        %4157 = vmatpush1.bf16.msra.mxu0 0
        %4158 = vmatprep.subr.bf16.mxu0 0
        %4159 = vmatpush1.bf16.msra.mxu0 0
        %4160 = vmatprep.subr.bf16.mxu0 0
        %4161 = vmatpush1.bf16.msra.mxu0 0
        %4162 = vmatprep.subr.bf16.mxu0 0
        %4163 = vmatpush1.bf16.msra.mxu0 0
        %4164 = vmatprep.subr.bf16.mxu0 0
        %4165 = vmatpush1.bf16.msra.mxu0 0
        %4166 = vmatprep.subr.bf16.mxu0 0
        %4167 = vmatpush1.bf16.msra.mxu0 0
        %4168 = vmatprep.subr.bf16.mxu0 0
        %4169 = vmatpush1.bf16.msra.mxu0 0
        %4170 = vmatprep.subr.bf16.mxu0 0
        %4171 = vmatpush1.bf16.msra.mxu0 0
        %4172 = vmatprep.mubr.bf16.mxu0 0
        %4173 = vmatmul.mubr.bf16.gmra.mrb[0].mxu0 %v3830
        %v4174 = vpop.f32.mrb[0].mxu0
        %v4175 = vadd.f32 0.0, %v4174
        %v4176 = vpop.f32.mrb[0].mxu0
        %v4177 = vpop.f32.mrb[0].mxu0
        %v4178 = vadd.f32 0.0, %v4177
        %v4179 = vpop.f32.mrb[0].mxu0
        %4180 = vmatprep.mubr.bf16.mxu0 0
        %4181 = vmatmul.mubr.bf16.gmra.mrb[0].mxu0 %v3839
        %v4182 = vpop.f32.mrb[0].mxu0
        %v4183 = vadd.f32 0.0, %v4182
        %v4184 = vpop.f32.mrb[0].mxu0
        %v4185 = vpop.f32.mrb[0].mxu0
        %v4186 = vadd.f32 0.0, %v4185
        %v4187 = vpop.f32.mrb[0].mxu0
        %4188 = vmatprep.mubr.bf16.mxu0 0
        %4189 = vmatmul.mubr.bf16.gmra.mrb[0].mxu0 %v3848
        %v4190 = vpop.f32.mrb[0].mxu0
        %v4191 = vadd.f32 0.0, %v4190
        %v4192 = vpop.f32.mrb[0].mxu0
        %v4193 = vpop.f32.mrb[0].mxu0
        %v4194 = vadd.f32 0.0, %v4193
        %v4195 = vpop.f32.mrb[0].mxu0
        %4196 = vmatprep.mubr.bf16.mxu0 0
        %4197 = vmatmul.mubr.bf16.gmra.mrb[0].mxu0 %v3857
        %v4198 = vpop.f32.mrb[0].mxu0
        %v4199 = vadd.f32 0.0, %v4198
        %v4200 = vpop.f32.mrb[0].mxu0
        %v4201 = vpop.f32.mrb[0].mxu0
        %v4202 = vadd.f32 0.0, %v4201
        %v4203 = vpop.f32.mrb[0].mxu0
        %4204 = vmatprep.mubr.bf16.mxu0 0
        %4205 = vmatmul.mubr.bf16.gmra.mrb[0].mxu0 %v3866
        %v4206 = vpop.f32.mrb[0].mxu0
        %v4207 = vadd.f32 0.0, %v4206
        %v4208 = vpop.f32.mrb[0].mxu0
        %v4209 = vpop.f32.mrb[0].mxu0
        %v4210 = vadd.f32 0.0, %v4209
        %v4211 = vpop.f32.mrb[0].mxu0
        %4212 = vmatprep.mubr.bf16.mxu0 0
        %4213 = vmatmul.mubr.bf16.gmra.mrb[0].mxu0 %v3875
        %v4214 = vpop.f32.mrb[0].mxu0
        %v4215 = vadd.f32 0.0, %v4214
        %v4216 = vpop.f32.mrb[0].mxu0
        %v4217 = vpop.f32.mrb[0].mxu0
        %v4218 = vadd.f32 0.0, %v4217
        %v4219 = vpop.f32.mrb[0].mxu0
        %4220 = vmatprep.mubr.bf16.mxu0 0
        %4221 = vmatmul.mubr.bf16.gmra.mrb[0].mxu0 %v3884
        %v4222 = vpop.f32.mrb[0].mxu0
        %v4223 = vadd.f32 0.0, %v4222
        %v4224 = vpop.f32.mrb[0].mxu0
        %v4225 = vpop.f32.mrb[0].mxu0
        %v4226 = vadd.f32 0.0, %v4225
        %v4227 = vpop.f32.mrb[0].mxu0
        %4228 = vmatprep.mubr.bf16.mxu0 0
        %4229 = vmatmul.mubr.bf16.gmra.mrb[0].mxu0 %v3893
        %v4230 = vpop.f32.mrb[0].mxu0
        %v4231 = vadd.f32 0.0, %v4230
        %v4232 = vpop.f32.mrb[0].mxu0
        %v4233 = vpop.f32.mrb[0].mxu0
        %v4234 = vadd.f32 0.0, %v4233
        %v4235 = vpop.f32.mrb[0].mxu0
        %4236 = vmatprep.mubr.bf16.mxu0 0
        %4237 = vmatmul.mubr.bf16.gmra.mrb[0].mxu0 %v3902
        %v4238 = vpop.f32.mrb[0].mxu0
        %v4239 = vadd.f32 0.0, %v4238
        %v4240 = vpop.f32.mrb[0].mxu0
        %v4241 = vpop.f32.mrb[0].mxu0
        %v4242 = vadd.f32 0.0, %v4241
        %v4243 = vpop.f32.mrb[0].mxu0
        %4244 = vmatprep.mubr.bf16.mxu0 0
        %4245 = vmatmul.mubr.bf16.gmra.mrb[0].mxu0 %v3911
        %v4246 = vpop.f32.mrb[0].mxu0
        %v4247 = vadd.f32 0.0, %v4246
        %v4248 = vpop.f32.mrb[0].mxu0
        %v4249 = vpop.f32.mrb[0].mxu0
        %v4250 = vadd.f32 0.0, %v4249
        %v4251 = vpop.f32.mrb[0].mxu0
        %4252 = vmatprep.mubr.bf16.mxu0 0
        %4253 = vmatmul.mubr.bf16.gmra.mrb[0].mxu0 %v3920
        %v4254 = vpop.f32.mrb[0].mxu0
        %v4255 = vadd.f32 0.0, %v4254
        %v4256 = vpop.f32.mrb[0].mxu0
        %v4257 = vpop.f32.mrb[0].mxu0
        %v4258 = vadd.f32 0.0, %v4257
        %v4259 = vpop.f32.mrb[0].mxu0
        %4260 = vmatprep.mubr.bf16.mxu0 0
        %4261 = vmatmul.mubr.bf16.gmra.mrb[0].mxu0 %v3929
        %v4262 = vpop.f32.mrb[0].mxu0
        %v4263 = vadd.f32 0.0, %v4262
        %v4264 = vpop.f32.mrb[0].mxu0
        %v4265 = vpop.f32.mrb[0].mxu0
        %v4266 = vadd.f32 0.0, %v4265
        %v4267 = vpop.f32.mrb[0].mxu0
        %4268 = vmatprep.mubr.bf16.mxu0 0
        %4269 = vmatmul.mubr.bf16.gmra.mrb[0].mxu0 %v3938
        %v4270 = vpop.f32.mrb[0].mxu0
        %v4271 = vadd.f32 0.0, %v4270
        %v4272 = vpop.f32.mrb[0].mxu0
        %v4273 = vpop.f32.mrb[0].mxu0
        %v4274 = vadd.f32 0.0, %v4273
        %v4275 = vpop.f32.mrb[0].mxu0
        %4276 = vmatprep.mubr.bf16.mxu0 0
        %4277 = vmatmul.mubr.bf16.gmra.mrb[0].mxu0 %v3947
        %v4278 = vpop.f32.mrb[0].mxu0
        %v4279 = vadd.f32 0.0, %v4278
        %v4280 = vpop.f32.mrb[0].mxu0
        %v4281 = vpop.f32.mrb[0].mxu0
        %v4282 = vadd.f32 0.0, %v4281
        %v4283 = vpop.f32.mrb[0].mxu0
        %4284 = vmatprep.mubr.bf16.mxu0 0
        %4285 = vmatmul.mubr.bf16.gmra.mrb[0].mxu0 %v3956
        %v4286 = vpop.f32.mrb[0].mxu0
        %v4287 = vadd.f32 0.0, %v4286
        %v4288 = vpop.f32.mrb[0].mxu0
        %v4289 = vpop.f32.mrb[0].mxu0
        %v4290 = vadd.f32 0.0, %v4289
        %v4291 = vpop.f32.mrb[0].mxu0
        %4292 = vmatprep.mubr.bf16.mxu0 0
        %4293 = vmatmul.mubr.bf16.gmra.mrb[0].mxu0 %v3965
        %v4294 = vpop.f32.mrb[0].mxu0
        %v4295 = vadd.f32 0.0, %v4294
        %v4296 = vpop.f32.mrb[0].mxu0
        %v4297 = vpop.f32.mrb[0].mxu0
        %v4298 = vadd.f32 0.0, %v4297
        %v4299 = vpop.f32.mrb[0].mxu0
        %4300 = vmatprep.mubr.bf16.mxu0 0
        %4301 = vmatmul.mubr.bf16.gmra.mrb[0].mxu0 %v3974
        %v4302 = vpop.f32.mrb[0].mxu0
        %v4303 = vadd.f32 0.0, %v4302
        %v4304 = vpop.f32.mrb[0].mxu0
        %v4305 = vpop.f32.mrb[0].mxu0
        %v4306 = vadd.f32 0.0, %v4305
        %v4307 = vpop.f32.mrb[0].mxu0
        %4308 = vmatprep.mubr.bf16.mxu0 0
        %4309 = vmatmul.mubr.bf16.gmra.mrb[0].mxu0 %v3983
        %v4310 = vpop.f32.mrb[0].mxu0
        %v4311 = vadd.f32 0.0, %v4310
        %v4312 = vpop.f32.mrb[0].mxu0
        %v4313 = vpop.f32.mrb[0].mxu0
        %v4314 = vadd.f32 0.0, %v4313
        %v4315 = vpop.f32.mrb[0].mxu0
        %4316 = vmatprep.mubr.bf16.mxu0 0
        %4317 = vmatmul.mubr.bf16.gmra.mrb[0].mxu0 %v3992
        %v4318 = vpop.f32.mrb[0].mxu0
        %v4319 = vadd.f32 0.0, %v4318
        %v4320 = vpop.f32.mrb[0].mxu0
        %v4321 = vpop.f32.mrb[0].mxu0
        %v4322 = vadd.f32 0.0, %v4321
        %v4323 = vpop.f32.mrb[0].mxu0
        %4324 = vmatprep.mubr.bf16.mxu0 0
        %4325 = vmatmul.mubr.bf16.gmra.mrb[0].mxu0 %v4001
        %v4326 = vpop.f32.mrb[0].mxu0
        %v4327 = vadd.f32 0.0, %v4326
        %v4328 = vpop.f32.mrb[0].mxu0
        %v4329 = vpop.f32.mrb[0].mxu0
        %v4330 = vadd.f32 0.0, %v4329
        %v4331 = vpop.f32.mrb[0].mxu0
        %4332 = vmatprep.mubr.bf16.mxu0 0
        %4333 = vmatmul.mubr.bf16.gmra.mrb[0].mxu0 %v4010
        %v4334 = vpop.f32.mrb[0].mxu0
        %v4335 = vadd.f32 0.0, %v4334
        %v4336 = vpop.f32.mrb[0].mxu0
        %v4337 = vpop.f32.mrb[0].mxu0
        %v4338 = vadd.f32 0.0, %v4337
        %v4339 = vpop.f32.mrb[0].mxu0
        %4340 = vmatprep.mubr.bf16.mxu0 0
        %4341 = vmatmul.mubr.bf16.gmra.mrb[0].mxu0 %v4019
        %v4342 = vpop.f32.mrb[0].mxu0
        %v4343 = vadd.f32 0.0, %v4342
        %v4344 = vpop.f32.mrb[0].mxu0
        %v4345 = vpop.f32.mrb[0].mxu0
        %v4346 = vadd.f32 0.0, %v4345
        %v4347 = vpop.f32.mrb[0].mxu0
        %4348 = vmatprep.mubr.bf16.mxu0 0
        %4349 = vmatmul.mubr.bf16.gmra.mrb[0].mxu0 %v4028
        %v4350 = vpop.f32.mrb[0].mxu0
        %v4351 = vadd.f32 0.0, %v4350
        %v4352 = vpop.f32.mrb[0].mxu0
        %v4353 = vpop.f32.mrb[0].mxu0
        %v4354 = vadd.f32 0.0, %v4353
        %v4355 = vpop.f32.mrb[0].mxu0
        %4356 = vmatprep.mubr.bf16.mxu0 0
        %4357 = vmatmul.mubr.bf16.gmra.mrb[0].mxu0 %v4037
        %v4358 = vpop.f32.mrb[0].mxu0
        %v4359 = vadd.f32 0.0, %v4358
        %v4360 = vpop.f32.mrb[0].mxu0
        %v4361 = vpop.f32.mrb[0].mxu0
        %v4362 = vadd.f32 0.0, %v4361
        %v4363 = vpop.f32.mrb[0].mxu0
        %4364 = vmatprep.mubr.bf16.mxu0 0
        %4365 = vmatmul.mubr.bf16.gmra.mrb[0].mxu0 %v4046
        %v4366 = vpop.f32.mrb[0].mxu0
        %v4367 = vadd.f32 0.0, %v4366
        %v4368 = vpop.f32.mrb[0].mxu0
        %v4369 = vpop.f32.mrb[0].mxu0
        %v4370 = vadd.f32 0.0, %v4369
        %v4371 = vpop.f32.mrb[0].mxu0
        %4372 = vmatprep.mubr.bf16.mxu0 0
        %4373 = vmatmul.mubr.bf16.gmra.mrb[0].mxu0 %v4055
        %v4374 = vpop.f32.mrb[0].mxu0
        %v4375 = vadd.f32 0.0, %v4374
        %v4376 = vpop.f32.mrb[0].mxu0
        %v4377 = vpop.f32.mrb[0].mxu0
        %v4378 = vadd.f32 0.0, %v4377
        %v4379 = vpop.f32.mrb[0].mxu0
        %4380 = vmatprep.mubr.bf16.mxu0 0
        %4381 = vmatmul.mubr.bf16.gmra.mrb[0].mxu0 %v4064
        %v4382 = vpop.f32.mrb[0].mxu0
        %v4383 = vadd.f32 0.0, %v4382
        %v4384 = vpop.f32.mrb[0].mxu0
        %v4385 = vpop.f32.mrb[0].mxu0
        %v4386 = vadd.f32 0.0, %v4385
        %v4387 = vpop.f32.mrb[0].mxu0
        %4388 = vdwg.mxu0
        %v4389 = vadd.f32 %v3716, %v4175
        %v4390 = vadd.f32 %v3717, %v4178
        %v4391 = vadd.f32 %v3718, %v4183
        %v4392 = vadd.f32 %v3719, %v4186
        %v4393 = vadd.f32 %v3720, %v4191
        %v4394 = vadd.f32 %v3721, %v4194
        %v4395 = vadd.f32 %v3722, %v4199
        %v4396 = vadd.f32 %v3723, %v4202
        %v4397 = vadd.f32 %v3724, %v4207
        %v4398 = vadd.f32 %v3725, %v4210
        %v4399 = vadd.f32 %v3726, %v4215
        %v4400 = vadd.f32 %v3727, %v4218
        %v4401 = vadd.f32 %v3728, %v4223
        %v4402 = vadd.f32 %v3729, %v4226
        %v4403 = vadd.f32 %v3730, %v4231
        %v4404 = vadd.f32 %v3731, %v4234
        %v4405 = vadd.f32 %v3732, %v4239
        %v4406 = vadd.f32 %v3733, %v4242
        %v4407 = vadd.f32 %v3734, %v4247
        %v4408 = vadd.f32 %v3735, %v4250
        %v4409 = vadd.f32 %v3736, %v4255
        %v4410 = vadd.f32 %v3737, %v4258
        %v4411 = vadd.f32 %v3738, %v4263
        %v4412 = vadd.f32 %v3739, %v4266
        %v4413 = vadd.f32 %v3740, %v4271
        %v4414 = vadd.f32 %v3741, %v4274
        %v4415 = vadd.f32 %v3742, %v4279
        %v4416 = vadd.f32 %v3743, %v4282
        %v4417 = vadd.f32 %v3744, %v4287
        %v4418 = vadd.f32 %v3745, %v4290
        %v4419 = vadd.f32 %v3746, %v4295
        %v4420 = vadd.f32 %v3747, %v4298
        %v4421 = vadd.f32 %v3748, %v4303
        %v4422 = vadd.f32 %v3749, %v4306
        %v4423 = vadd.f32 %v3750, %v4311
        %v4424 = vadd.f32 %v3751, %v4314
        %v4425 = vadd.f32 %v3752, %v4319
        %v4426 = vadd.f32 %v3753, %v4322
        %v4427 = vadd.f32 %v3754, %v4327
        %v4428 = vadd.f32 %v3755, %v4330
        %v4429 = vadd.f32 %v3756, %v4335
        %v4430 = vadd.f32 %v3757, %v4338
        %v4431 = vadd.f32 %v3758, %v4343
        %v4432 = vadd.f32 %v3759, %v4346
        %v4433 = vadd.f32 %v3760, %v4351
        %v4434 = vadd.f32 %v3761, %v4354
        %v4435 = vadd.f32 %v3762, %v4359
        %v4436 = vadd.f32 %v3763, %v4362
        %v4437 = vadd.f32 %v3764, %v4367
        %v4438 = vadd.f32 %v3765, %v4370
        %v4439 = vadd.f32 %v3766, %v4375
        %v4440 = vadd.f32 %v3767, %v4378
        %v4441 = vadd.f32 %v3768, %v4383
        %v4442 = vadd.f32 %v3769, %v4386
        %v4443 = vld [vmem:[#allocation2 + $0x18] sm:$0xf0]
        %v4444 = vld [vmem:[#allocation7 + $0x1c0] sm:$0xf]
        %v4445 = vld [vmem:[#allocation7 + $0x1c4] sm:$0xf]
        %v4446 = vld [vmem:[#allocation7 + $0x1c8] sm:$0xf]
        %v4447 = vld [vmem:[#allocation7 + $0x1cc] sm:$0xf]
        %v4448 = vld [vmem:[#allocation7 + $0x1d0] sm:$0xf]
        %v4449 = vld [vmem:[#allocation7 + $0x1d4] sm:$0xf]
        %v4450 = vld [vmem:[#allocation7 + $0x1d8] sm:$0xf]
        %v4451 = vld [vmem:[#allocation7 + $0x1dc] sm:$0xf]
        %v4452 = vld [vmem:[#allocation7 + $0x1e0] sm:$0xf]
        %v4453 = vld [vmem:[#allocation7 + $0x1e4] sm:$0xf]
        %v4454 = vld [vmem:[#allocation7 + $0x1e8] sm:$0xf]
        %v4455 = vld [vmem:[#allocation7 + $0x1ec] sm:$0xf]
        %v4456 = vld [vmem:[#allocation7 + $0x1f0] sm:$0xf]
        %v4457 = vld [vmem:[#allocation7 + $0x1f4] sm:$0xf]
        %v4458 = vld [vmem:[#allocation7 + $0x1f8] sm:$0xf]
        %v4459 = vld [vmem:[#allocation7 + $0x1fc] sm:$0xf]
        %v4488 = vrot.slane %v4443, 4
        %v4489 = vrot.slane %v3771, 4
        %v4490 = vsel %vm644, %v4488, %v4489
        %v4491 = vrot.slane %v3772, 4
        %v4492 = vsel %vm644, %v4489, %v4491
        %v4493 = vrot.slane %v3773, 4
        %v4494 = vsel %vm644, %v4491, %v4493
        %v4495 = vrot.slane %v3774, 4
        %v4496 = vsel %vm644, %v4493, %v4495
        %v4497 = vrot.slane %v3775, 4
        %v4498 = vsel %vm644, %v4495, %v4497
        %v4499 = vrot.slane %v3776, 4
        %v4500 = vsel %vm644, %v4497, %v4499
        %v4501 = vrot.slane %v3777, 4
        %v4502 = vsel %vm644, %v4499, %v4501
        %v4503 = vrot.slane %v3778, 4
        %v4504 = vsel %vm644, %v4501, %v4503
        %v4505 = vrot.slane %v3779, 4
        %v4506 = vsel %vm644, %v4503, %v4505
        %v4507 = vrot.slane %v3780, 4
        %v4508 = vsel %vm644, %v4505, %v4507
        %v4509 = vrot.slane %v3781, 4
        %v4510 = vsel %vm644, %v4507, %v4509
        %v4511 = vrot.slane %v3782, 4
        %v4512 = vsel %vm644, %v4509, %v4511
        %v4513 = vrot.slane %v3783, 4
        %v4514 = vsel %vm644, %v4511, %v4513
        %v4515 = vrot.slane %v3784, 4
        %v4516 = vsel %vm644, %v4513, %v4515
        %v4517 = vrot.slane %v3785, 4
        %v4518 = vsel %vm644, %v4515, %v4517
        %v4519 = vrot.slane %v3786, 4
        %v4520 = vsel %vm644, %v4517, %v4519
        %v4521 = vrot.slane %v3787, 4
        %v4522 = vsel %vm644, %v4519, %v4521
        %v4523 = vrot.slane %v3788, 4
        %v4524 = vsel %vm644, %v4521, %v4523
        %v4525 = vrot.slane %v3789, 4
        %v4526 = vsel %vm644, %v4523, %v4525
        %v4527 = vrot.slane %v3790, 4
        %v4528 = vsel %vm644, %v4525, %v4527
        %v4529 = vrot.slane %v3791, 4
        %v4530 = vsel %vm644, %v4527, %v4529
        %v4531 = vrot.slane %v3792, 4
        %v4532 = vsel %vm644, %v4529, %v4531
        %v4533 = vrot.slane %v3793, 4
        %v4534 = vsel %vm644, %v4531, %v4533
        %v4535 = vrot.slane %v3794, 4
        %v4536 = vsel %vm644, %v4533, %v4535
        %v4537 = vrot.slane %v3795, 4
        %v4538 = vsel %vm644, %v4535, %v4537
        %v4539 = vrot.slane %v3796, 4
        %v4540 = vsel %vm644, %v4537, %v4539
        %v4541 = vrot.slane %v3797, 4
        %v4542 = vsel %vm644, %v4539, %v4541
        %v4586 = vunpack.c.l.b16 %v4444
        %v4587 = vunpack.c.l.b16 %v4445
        %v4588 = vunpack.c.l.b16 %v4446
        %v4589 = vunpack.c.l.b16 %v4447
        %v4590 = vunpack.c.l.b16 %v4448
        %v4591 = vunpack.c.l.b16 %v4449
        %v4592 = vunpack.c.l.b16 %v4450
        %v4593 = vunpack.c.l.b16 %v4451
        %v4594 = vunpack.c.l.b16 %v4452
        %v4595 = vunpack.c.l.b16 %v4453
        %v4596 = vunpack.c.l.b16 %v4454
        %v4597 = vunpack.c.l.b16 %v4455
        %v4598 = vunpack.c.l.b16 %v4456
        %v4599 = vunpack.c.l.b16 %v4457
        %v4600 = vunpack.c.l.b16 %v4458
        %v4601 = vunpack.c.l.b16 %v4459
        %v4602 = vpack.c.b16 %v4587, %v4586
        %v4603 = vpack.c.b16 %v4589, %v4588
        %v4604 = vpack.c.b16 %v4591, %v4590
        %v4605 = vpack.c.b16 %v4593, %v4592
        %v4606 = vpack.c.b16 %v4595, %v4594
        %v4607 = vpack.c.b16 %v4597, %v4596
        %v4608 = vpack.c.b16 %v4599, %v4598
        %v4609 = vpack.c.b16 %v4601, %v4600
        %4618 = vmatprep.subr.bf16.mxu0 0
        %4619 = vmatpush1.bf16.msra.mxu0 %v4602
        %4620 = vmatprep.subr.bf16.mxu0 0
        %4621 = vmatpush1.bf16.msra.mxu0 %v4603
        %4622 = vmatprep.subr.bf16.mxu0 0
        %4623 = vmatpush1.bf16.msra.mxu0 %v4604
        %4624 = vmatprep.subr.bf16.mxu0 0
        %4625 = vmatpush1.bf16.msra.mxu0 %v4605
        %4626 = vmatprep.subr.bf16.mxu0 0
        %4627 = vmatpush1.bf16.msra.mxu0 %v4606
        %4628 = vmatprep.subr.bf16.mxu0 0
        %4629 = vmatpush1.bf16.msra.mxu0 %v4607
        %4630 = vmatprep.subr.bf16.mxu0 0
        %4631 = vmatpush1.bf16.msra.mxu0 %v4608
        %4632 = vmatprep.subr.bf16.mxu0 0
        %4633 = vmatpush1.bf16.msra.mxu0 %v4609
        %4634 = vmatprep.subr.bf16.mxu0 0
        %4635 = vmatpush1.bf16.msra.mxu0 0
        %4636 = vmatprep.subr.bf16.mxu0 0
        %4637 = vmatpush1.bf16.msra.mxu0 0
        %4638 = vmatprep.subr.bf16.mxu0 0
        %4639 = vmatpush1.bf16.msra.mxu0 0
        %4640 = vmatprep.subr.bf16.mxu0 0
        %4641 = vmatpush1.bf16.msra.mxu0 0
        %4642 = vmatprep.subr.bf16.mxu0 0
        %4643 = vmatpush1.bf16.msra.mxu0 0
        %4644 = vmatprep.subr.bf16.mxu0 0
        %4645 = vmatpush1.bf16.msra.mxu0 0
        %4646 = vmatprep.subr.bf16.mxu0 0
        %4647 = vmatpush1.bf16.msra.mxu0 0
        %4648 = vmatprep.subr.bf16.mxu0 0
        %4649 = vmatpush1.bf16.msra.mxu0 0
        %4650 = vmatprep.mubr.bf16.mxu0 0
        %4651 = vmatmul.mubr.bf16.gmra.mrb[0].mxu0 %v4490
        %v4652 = vpop.f32.mrb[0].mxu0
        %v4653 = vadd.f32 0.0, %v4652
        %v4654 = vpop.f32.mrb[0].mxu0
        %v4655 = vpop.f32.mrb[0].mxu0
        %v4656 = vadd.f32 0.0, %v4655
        %v4657 = vpop.f32.mrb[0].mxu0
        %4658 = vmatprep.mubr.bf16.mxu0 0
        %4659 = vmatmul.mubr.bf16.gmra.mrb[0].mxu0 %v4492
        %v4660 = vpop.f32.mrb[0].mxu0
        %v4661 = vadd.f32 0.0, %v4660
        %v4662 = vpop.f32.mrb[0].mxu0
        %v4663 = vpop.f32.mrb[0].mxu0
        %v4664 = vadd.f32 0.0, %v4663
        %v4665 = vpop.f32.mrb[0].mxu0
        %4666 = vmatprep.mubr.bf16.mxu0 0
        %4667 = vmatmul.mubr.bf16.gmra.mrb[0].mxu0 %v4494
        %v4668 = vpop.f32.mrb[0].mxu0
        %v4669 = vadd.f32 0.0, %v4668
        %v4670 = vpop.f32.mrb[0].mxu0
        %v4671 = vpop.f32.mrb[0].mxu0
        %v4672 = vadd.f32 0.0, %v4671
        %v4673 = vpop.f32.mrb[0].mxu0
        %4674 = vmatprep.mubr.bf16.mxu0 0
        %4675 = vmatmul.mubr.bf16.gmra.mrb[0].mxu0 %v4496
        %v4676 = vpop.f32.mrb[0].mxu0
        %v4677 = vadd.f32 0.0, %v4676
        %v4678 = vpop.f32.mrb[0].mxu0
        %v4679 = vpop.f32.mrb[0].mxu0
        %v4680 = vadd.f32 0.0, %v4679
        %v4681 = vpop.f32.mrb[0].mxu0
        %4682 = vmatprep.mubr.bf16.mxu0 0
        %4683 = vmatmul.mubr.bf16.gmra.mrb[0].mxu0 %v4498
        %v4684 = vpop.f32.mrb[0].mxu0
        %v4685 = vadd.f32 0.0, %v4684
        %v4686 = vpop.f32.mrb[0].mxu0
        %v4687 = vpop.f32.mrb[0].mxu0
        %v4688 = vadd.f32 0.0, %v4687
        %v4689 = vpop.f32.mrb[0].mxu0
        %4690 = vmatprep.mubr.bf16.mxu0 0
        %4691 = vmatmul.mubr.bf16.gmra.mrb[0].mxu0 %v4500
        %v4692 = vpop.f32.mrb[0].mxu0
        %v4693 = vadd.f32 0.0, %v4692
        %v4694 = vpop.f32.mrb[0].mxu0
        %v4695 = vpop.f32.mrb[0].mxu0
        %v4696 = vadd.f32 0.0, %v4695
        %v4697 = vpop.f32.mrb[0].mxu0
        %4698 = vmatprep.mubr.bf16.mxu0 0
        %4699 = vmatmul.mubr.bf16.gmra.mrb[0].mxu0 %v4502
        %v4700 = vpop.f32.mrb[0].mxu0
        %v4701 = vadd.f32 0.0, %v4700
        %v4702 = vpop.f32.mrb[0].mxu0
        %v4703 = vpop.f32.mrb[0].mxu0
        %v4704 = vadd.f32 0.0, %v4703
        %v4705 = vpop.f32.mrb[0].mxu0
        %4706 = vmatprep.mubr.bf16.mxu0 0
        %4707 = vmatmul.mubr.bf16.gmra.mrb[0].mxu0 %v4504
        %v4708 = vpop.f32.mrb[0].mxu0
        %v4709 = vadd.f32 0.0, %v4708
        %v4710 = vpop.f32.mrb[0].mxu0
        %v4711 = vpop.f32.mrb[0].mxu0
        %v4712 = vadd.f32 0.0, %v4711
        %v4713 = vpop.f32.mrb[0].mxu0
        %4714 = vmatprep.mubr.bf16.mxu0 0
        %4715 = vmatmul.mubr.bf16.gmra.mrb[0].mxu0 %v4506
        %v4716 = vpop.f32.mrb[0].mxu0
        %v4717 = vadd.f32 0.0, %v4716
        %v4718 = vpop.f32.mrb[0].mxu0
        %v4719 = vpop.f32.mrb[0].mxu0
        %v4720 = vadd.f32 0.0, %v4719
        %v4721 = vpop.f32.mrb[0].mxu0
        %4722 = vmatprep.mubr.bf16.mxu0 0
        %4723 = vmatmul.mubr.bf16.gmra.mrb[0].mxu0 %v4508
        %v4724 = vpop.f32.mrb[0].mxu0
        %v4725 = vadd.f32 0.0, %v4724
        %v4726 = vpop.f32.mrb[0].mxu0
        %v4727 = vpop.f32.mrb[0].mxu0
        %v4728 = vadd.f32 0.0, %v4727
        %v4729 = vpop.f32.mrb[0].mxu0
        %4730 = vmatprep.mubr.bf16.mxu0 0
        %4731 = vmatmul.mubr.bf16.gmra.mrb[0].mxu0 %v4510
        %v4732 = vpop.f32.mrb[0].mxu0
        %v4733 = vadd.f32 0.0, %v4732
        %v4734 = vpop.f32.mrb[0].mxu0
        %v4735 = vpop.f32.mrb[0].mxu0
        %v4736 = vadd.f32 0.0, %v4735
        %v4737 = vpop.f32.mrb[0].mxu0
        %4738 = vmatprep.mubr.bf16.mxu0 0
        %4739 = vmatmul.mubr.bf16.gmra.mrb[0].mxu0 %v4512
        %v4740 = vpop.f32.mrb[0].mxu0
        %v4741 = vadd.f32 0.0, %v4740
        %v4742 = vpop.f32.mrb[0].mxu0
        %v4743 = vpop.f32.mrb[0].mxu0
        %v4744 = vadd.f32 0.0, %v4743
        %v4745 = vpop.f32.mrb[0].mxu0
        %4746 = vmatprep.mubr.bf16.mxu0 0
        %4747 = vmatmul.mubr.bf16.gmra.mrb[0].mxu0 %v4514
        %v4748 = vpop.f32.mrb[0].mxu0
        %v4749 = vadd.f32 0.0, %v4748
        %v4750 = vpop.f32.mrb[0].mxu0
        %v4751 = vpop.f32.mrb[0].mxu0
        %v4752 = vadd.f32 0.0, %v4751
        %v4753 = vpop.f32.mrb[0].mxu0
        %4754 = vmatprep.mubr.bf16.mxu0 0
        %4755 = vmatmul.mubr.bf16.gmra.mrb[0].mxu0 %v4516
        %v4756 = vpop.f32.mrb[0].mxu0
        %v4757 = vadd.f32 0.0, %v4756
        %v4758 = vpop.f32.mrb[0].mxu0
        %v4759 = vpop.f32.mrb[0].mxu0
        %v4760 = vadd.f32 0.0, %v4759
        %v4761 = vpop.f32.mrb[0].mxu0
        %4762 = vmatprep.mubr.bf16.mxu0 0
        %4763 = vmatmul.mubr.bf16.gmra.mrb[0].mxu0 %v4518
        %v4764 = vpop.f32.mrb[0].mxu0
        %v4765 = vadd.f32 0.0, %v4764
        %v4766 = vpop.f32.mrb[0].mxu0
        %v4767 = vpop.f32.mrb[0].mxu0
        %v4768 = vadd.f32 0.0, %v4767
        %v4769 = vpop.f32.mrb[0].mxu0
        %4770 = vmatprep.mubr.bf16.mxu0 0
        %4771 = vmatmul.mubr.bf16.gmra.mrb[0].mxu0 %v4520
        %v4772 = vpop.f32.mrb[0].mxu0
        %v4773 = vadd.f32 0.0, %v4772
        %v4774 = vpop.f32.mrb[0].mxu0
        %v4775 = vpop.f32.mrb[0].mxu0
        %v4776 = vadd.f32 0.0, %v4775
        %v4777 = vpop.f32.mrb[0].mxu0
        %4778 = vmatprep.mubr.bf16.mxu0 0
        %4779 = vmatmul.mubr.bf16.gmra.mrb[0].mxu0 %v4522
        %v4780 = vpop.f32.mrb[0].mxu0
        %v4781 = vadd.f32 0.0, %v4780
        %v4782 = vpop.f32.mrb[0].mxu0
        %v4783 = vpop.f32.mrb[0].mxu0
        %v4784 = vadd.f32 0.0, %v4783
        %v4785 = vpop.f32.mrb[0].mxu0
        %4786 = vmatprep.mubr.bf16.mxu0 0
        %4787 = vmatmul.mubr.bf16.gmra.mrb[0].mxu0 %v4524
        %v4788 = vpop.f32.mrb[0].mxu0
        %v4789 = vadd.f32 0.0, %v4788
        %v4790 = vpop.f32.mrb[0].mxu0
        %v4791 = vpop.f32.mrb[0].mxu0
        %v4792 = vadd.f32 0.0, %v4791
        %v4793 = vpop.f32.mrb[0].mxu0
        %4794 = vmatprep.mubr.bf16.mxu0 0
        %4795 = vmatmul.mubr.bf16.gmra.mrb[0].mxu0 %v4526
        %v4796 = vpop.f32.mrb[0].mxu0
        %v4797 = vadd.f32 0.0, %v4796
        %v4798 = vpop.f32.mrb[0].mxu0
        %v4799 = vpop.f32.mrb[0].mxu0
        %v4800 = vadd.f32 0.0, %v4799
        %v4801 = vpop.f32.mrb[0].mxu0
        %4802 = vmatprep.mubr.bf16.mxu0 0
        %4803 = vmatmul.mubr.bf16.gmra.mrb[0].mxu0 %v4528
        %v4804 = vpop.f32.mrb[0].mxu0
        %v4805 = vadd.f32 0.0, %v4804
        %v4806 = vpop.f32.mrb[0].mxu0
        %v4807 = vpop.f32.mrb[0].mxu0
        %v4808 = vadd.f32 0.0, %v4807
        %v4809 = vpop.f32.mrb[0].mxu0
        %4810 = vmatprep.mubr.bf16.mxu0 0
        %4811 = vmatmul.mubr.bf16.gmra.mrb[0].mxu0 %v4530
        %v4812 = vpop.f32.mrb[0].mxu0
        %v4813 = vadd.f32 0.0, %v4812
        %v4814 = vpop.f32.mrb[0].mxu0
        %v4815 = vpop.f32.mrb[0].mxu0
        %v4816 = vadd.f32 0.0, %v4815
        %v4817 = vpop.f32.mrb[0].mxu0
        %4818 = vmatprep.mubr.bf16.mxu0 0
        %4819 = vmatmul.mubr.bf16.gmra.mrb[0].mxu0 %v4532
        %v4820 = vpop.f32.mrb[0].mxu0
        %v4821 = vadd.f32 0.0, %v4820
        %v4822 = vpop.f32.mrb[0].mxu0
        %v4823 = vpop.f32.mrb[0].mxu0
        %v4824 = vadd.f32 0.0, %v4823
        %v4825 = vpop.f32.mrb[0].mxu0
        %4826 = vmatprep.mubr.bf16.mxu0 0
        %4827 = vmatmul.mubr.bf16.gmra.mrb[0].mxu0 %v4534
        %v4828 = vpop.f32.mrb[0].mxu0
        %v4829 = vadd.f32 0.0, %v4828
        %v4830 = vpop.f32.mrb[0].mxu0
        %v4831 = vpop.f32.mrb[0].mxu0
        %v4832 = vadd.f32 0.0, %v4831
        %v4833 = vpop.f32.mrb[0].mxu0
        %4834 = vmatprep.mubr.bf16.mxu0 0
        %4835 = vmatmul.mubr.bf16.gmra.mrb[0].mxu0 %v4536
        %v4836 = vpop.f32.mrb[0].mxu0
        %v4837 = vadd.f32 0.0, %v4836
        %v4838 = vpop.f32.mrb[0].mxu0
        %v4839 = vpop.f32.mrb[0].mxu0
        %v4840 = vadd.f32 0.0, %v4839
        %v4841 = vpop.f32.mrb[0].mxu0
        %4842 = vmatprep.mubr.bf16.mxu0 0
        %4843 = vmatmul.mubr.bf16.gmra.mrb[0].mxu0 %v4538
        %v4844 = vpop.f32.mrb[0].mxu0
        %v4845 = vadd.f32 0.0, %v4844
        %v4846 = vpop.f32.mrb[0].mxu0
        %v4847 = vpop.f32.mrb[0].mxu0
        %v4848 = vadd.f32 0.0, %v4847
        %v4849 = vpop.f32.mrb[0].mxu0
        %4850 = vmatprep.mubr.bf16.mxu0 0
        %4851 = vmatmul.mubr.bf16.gmra.mrb[0].mxu0 %v4540
        %v4852 = vpop.f32.mrb[0].mxu0
        %v4853 = vadd.f32 0.0, %v4852
        %v4854 = vpop.f32.mrb[0].mxu0
        %v4855 = vpop.f32.mrb[0].mxu0
        %v4856 = vadd.f32 0.0, %v4855
        %v4857 = vpop.f32.mrb[0].mxu0
        %4858 = vmatprep.mubr.bf16.mxu0 0
        %4859 = vmatmul.mubr.bf16.gmra.mrb[0].mxu0 %v4542
        %v4860 = vpop.f32.mrb[0].mxu0
        %v4861 = vadd.f32 0.0, %v4860
        %v4862 = vpop.f32.mrb[0].mxu0
        %v4863 = vpop.f32.mrb[0].mxu0
        %v4864 = vadd.f32 0.0, %v4863
        %v4865 = vpop.f32.mrb[0].mxu0
        %4866 = vdwg.mxu0
        %v4867 = vadd.f32 %v4389, %v4653
        %v4868 = vadd.f32 %v4390, %v4656
        %v4869 = vadd.f32 %v4391, %v4661
        %v4870 = vadd.f32 %v4392, %v4664
        %v4871 = vadd.f32 %v4393, %v4669
        %v4872 = vadd.f32 %v4394, %v4672
        %v4873 = vadd.f32 %v4395, %v4677
        %v4874 = vadd.f32 %v4396, %v4680
        %v4875 = vadd.f32 %v4397, %v4685
        %v4876 = vadd.f32 %v4398, %v4688
        %v4877 = vadd.f32 %v4399, %v4693
        %v4878 = vadd.f32 %v4400, %v4696
        %v4879 = vadd.f32 %v4401, %v4701
        %v4880 = vadd.f32 %v4402, %v4704
        %v4881 = vadd.f32 %v4403, %v4709
        %v4882 = vadd.f32 %v4404, %v4712
        %v4883 = vadd.f32 %v4405, %v4717
        %v4884 = vadd.f32 %v4406, %v4720
        %v4885 = vadd.f32 %v4407, %v4725
        %v4886 = vadd.f32 %v4408, %v4728
        %v4887 = vadd.f32 %v4409, %v4733
        %v4888 = vadd.f32 %v4410, %v4736
        %v4889 = vadd.f32 %v4411, %v4741
        %v4890 = vadd.f32 %v4412, %v4744
        %v4891 = vadd.f32 %v4413, %v4749
        %v4892 = vadd.f32 %v4414, %v4752
        %v4893 = vadd.f32 %v4415, %v4757
        %v4894 = vadd.f32 %v4416, %v4760
        %v4895 = vadd.f32 %v4417, %v4765
        %v4896 = vadd.f32 %v4418, %v4768
        %v4897 = vadd.f32 %v4419, %v4773
        %v4898 = vadd.f32 %v4420, %v4776
        %v4899 = vadd.f32 %v4421, %v4781
        %v4900 = vadd.f32 %v4422, %v4784
        %v4901 = vadd.f32 %v4423, %v4789
        %v4902 = vadd.f32 %v4424, %v4792
        %v4903 = vadd.f32 %v4425, %v4797
        %v4904 = vadd.f32 %v4426, %v4800
        %v4905 = vadd.f32 %v4427, %v4805
        %v4906 = vadd.f32 %v4428, %v4808
        %v4907 = vadd.f32 %v4429, %v4813
        %v4908 = vadd.f32 %v4430, %v4816
        %v4909 = vadd.f32 %v4431, %v4821
        %v4910 = vadd.f32 %v4432, %v4824
        %v4911 = vadd.f32 %v4433, %v4829
        %v4912 = vadd.f32 %v4434, %v4832
        %v4913 = vadd.f32 %v4435, %v4837
        %v4914 = vadd.f32 %v4436, %v4840
        %v4915 = vadd.f32 %v4437, %v4845
        %v4916 = vadd.f32 %v4438, %v4848
        %v4917 = vadd.f32 %v4439, %v4853
        %v4918 = vadd.f32 %v4440, %v4856
        %v4919 = vadd.f32 %v4441, %v4861
        %v4920 = vadd.f32 %v4442, %v4864
        %v4921 = vld [vmem:[#allocation2 + $0xf0] sm:$0x1f]
        %v4922 = vld [vmem:[#allocation7 + $0x200] sm:$0xf]
        %v4923 = vld [vmem:[#allocation7 + $0x204] sm:$0xf]
        %v4924 = vld [vmem:[#allocation7 + $0x208] sm:$0xf]
        %v4925 = vld [vmem:[#allocation7 + $0x20c] sm:$0xf]
        %v4926 = vld [vmem:[#allocation7 + $0x210] sm:$0xf]
        %v4927 = vld [vmem:[#allocation7 + $0x214] sm:$0xf]
        %v4928 = vld [vmem:[#allocation7 + $0x218] sm:$0xf]
        %v4929 = vld [vmem:[#allocation7 + $0x21c] sm:$0xf]
        %v4930 = vld [vmem:[#allocation7 + $0x220] sm:$0xf]
        %v4931 = vld [vmem:[#allocation7 + $0x224] sm:$0xf]
        %v4932 = vld [vmem:[#allocation7 + $0x228] sm:$0xf]
        %v4933 = vld [vmem:[#allocation7 + $0x22c] sm:$0xf]
        %v4934 = vld [vmem:[#allocation7 + $0x230] sm:$0xf]
        %v4935 = vld [vmem:[#allocation7 + $0x234] sm:$0xf]
        %v4936 = vld [vmem:[#allocation7 + $0x238] sm:$0xf]
        %v4937 = vld [vmem:[#allocation7 + $0x23c] sm:$0xf]
        %v4939 = vshrl.u32 %v4443, 16
        %v4941 = vrot.slane %v4939, 4
        %v4942 = vshll.u32 %v4443, 16
        %v4944 = vrot.slane %v4942, 5
        %v4945 = vor.u32 %v4941, %v4944
        %v4946 = vrot.slane %v3823, 4
        %v4947 = vrot.slane %v3826, 5
        %v4948 = vor.u32 %v4946, %v4947
        %v4949 = vsel %vm1617, %v4945, %v4948
        %v4950 = vrot.slane %v3832, 4
        %v4951 = vrot.slane %v3835, 5
        %v4952 = vor.u32 %v4950, %v4951
        %v4953 = vsel %vm1617, %v4948, %v4952
        %v4954 = vrot.slane %v3841, 4
        %v4955 = vrot.slane %v3844, 5
        %v4956 = vor.u32 %v4954, %v4955
        %v4957 = vsel %vm1617, %v4952, %v4956
        %v4958 = vrot.slane %v3850, 4
        %v4959 = vrot.slane %v3853, 5
        %v4960 = vor.u32 %v4958, %v4959
        %v4961 = vsel %vm1617, %v4956, %v4960
        %v4962 = vrot.slane %v3859, 4
        %v4963 = vrot.slane %v3862, 5
        %v4964 = vor.u32 %v4962, %v4963
        %v4965 = vsel %vm1617, %v4960, %v4964
        %v4966 = vrot.slane %v3868, 4
        %v4967 = vrot.slane %v3871, 5
        %v4968 = vor.u32 %v4966, %v4967
        %v4969 = vsel %vm1617, %v4964, %v4968
        %v4970 = vrot.slane %v3877, 4
        %v4971 = vrot.slane %v3880, 5
        %v4972 = vor.u32 %v4970, %v4971
        %v4973 = vsel %vm1617, %v4968, %v4972
        %v4974 = vrot.slane %v3886, 4
        %v4975 = vrot.slane %v3889, 5
        %v4976 = vor.u32 %v4974, %v4975
        %v4977 = vsel %vm1617, %v4972, %v4976
        %v4978 = vrot.slane %v3895, 4
        %v4979 = vrot.slane %v3898, 5
        %v4980 = vor.u32 %v4978, %v4979
        %v4981 = vsel %vm1617, %v4976, %v4980
        %v4982 = vrot.slane %v3904, 4
        %v4983 = vrot.slane %v3907, 5
        %v4984 = vor.u32 %v4982, %v4983
        %v4985 = vsel %vm1617, %v4980, %v4984
        %v4986 = vrot.slane %v3913, 4
        %v4987 = vrot.slane %v3916, 5
        %v4988 = vor.u32 %v4986, %v4987
        %v4989 = vsel %vm1617, %v4984, %v4988
        %v4990 = vrot.slane %v3922, 4
        %v4991 = vrot.slane %v3925, 5
        %v4992 = vor.u32 %v4990, %v4991
        %v4993 = vsel %vm1617, %v4988, %v4992
        %v4994 = vrot.slane %v3931, 4
        %v4995 = vrot.slane %v3934, 5
        %v4996 = vor.u32 %v4994, %v4995
        %v4997 = vsel %vm1617, %v4992, %v4996
        %v4998 = vrot.slane %v3940, 4
        %v4999 = vrot.slane %v3943, 5
        %v5000 = vor.u32 %v4998, %v4999
        %v5001 = vsel %vm1617, %v4996, %v5000
        %v5002 = vrot.slane %v3949, 4
        %v5003 = vrot.slane %v3952, 5
        %v5004 = vor.u32 %v5002, %v5003
        %v5005 = vsel %vm1617, %v5000, %v5004
        %v5006 = vrot.slane %v3958, 4
        %v5007 = vrot.slane %v3961, 5
        %v5008 = vor.u32 %v5006, %v5007
        %v5009 = vsel %vm1617, %v5004, %v5008
        %v5010 = vrot.slane %v3967, 4
        %v5011 = vrot.slane %v3970, 5
        %v5012 = vor.u32 %v5010, %v5011
        %v5013 = vsel %vm1617, %v5008, %v5012
        %v5014 = vrot.slane %v3976, 4
        %v5015 = vrot.slane %v3979, 5
        %v5016 = vor.u32 %v5014, %v5015
        %v5017 = vsel %vm1617, %v5012, %v5016
        %v5018 = vrot.slane %v3985, 4
        %v5019 = vrot.slane %v3988, 5
        %v5020 = vor.u32 %v5018, %v5019
        %v5021 = vsel %vm1617, %v5016, %v5020
        %v5022 = vrot.slane %v3994, 4
        %v5023 = vrot.slane %v3997, 5
        %v5024 = vor.u32 %v5022, %v5023
        %v5025 = vsel %vm1617, %v5020, %v5024
        %v5026 = vrot.slane %v4003, 4
        %v5027 = vrot.slane %v4006, 5
        %v5028 = vor.u32 %v5026, %v5027
        %v5029 = vsel %vm1617, %v5024, %v5028
        %v5030 = vrot.slane %v4012, 4
        %v5031 = vrot.slane %v4015, 5
        %v5032 = vor.u32 %v5030, %v5031
        %v5033 = vsel %vm1617, %v5028, %v5032
        %v5034 = vrot.slane %v4021, 4
        %v5035 = vrot.slane %v4024, 5
        %v5036 = vor.u32 %v5034, %v5035
        %v5037 = vsel %vm1617, %v5032, %v5036
        %v5038 = vrot.slane %v4030, 4
        %v5039 = vrot.slane %v4033, 5
        %v5040 = vor.u32 %v5038, %v5039
        %v5041 = vsel %vm1617, %v5036, %v5040
        %v5042 = vrot.slane %v4039, 4
        %v5043 = vrot.slane %v4042, 5
        %v5044 = vor.u32 %v5042, %v5043
        %v5045 = vsel %vm1617, %v5040, %v5044
        %v5046 = vrot.slane %v4048, 4
        %v5047 = vrot.slane %v4051, 5
        %v5048 = vor.u32 %v5046, %v5047
        %v5049 = vsel %vm1617, %v5044, %v5048
        %v5051 = vshrl.u32 %v4921, 16
        %v5053 = vrot.slane %v5051, 4
        %v5054 = vshll.u32 %v4921, 16
        %v5056 = vrot.slane %v5054, 5
        %v5057 = vor.u32 %v5053, %v5056
        %v5058 = vsel %vm1617, %v5048, %v5057
        %v5102 = vunpack.c.l.b16 %v4922
        %v5103 = vunpack.c.l.b16 %v4923
        %v5104 = vunpack.c.l.b16 %v4924
        %v5105 = vunpack.c.l.b16 %v4925
        %v5106 = vunpack.c.l.b16 %v4926
        %v5107 = vunpack.c.l.b16 %v4927
        %v5108 = vunpack.c.l.b16 %v4928
        %v5109 = vunpack.c.l.b16 %v4929
        %v5110 = vunpack.c.l.b16 %v4930
        %v5111 = vunpack.c.l.b16 %v4931
        %v5112 = vunpack.c.l.b16 %v4932
        %v5113 = vunpack.c.l.b16 %v4933
        %v5114 = vunpack.c.l.b16 %v4934
        %v5115 = vunpack.c.l.b16 %v4935
        %v5116 = vunpack.c.l.b16 %v4936
        %v5117 = vunpack.c.l.b16 %v4937
        %v5118 = vpack.c.b16 %v5103, %v5102
        %v5119 = vpack.c.b16 %v5105, %v5104
        %v5120 = vpack.c.b16 %v5107, %v5106
        %v5121 = vpack.c.b16 %v5109, %v5108
        %v5122 = vpack.c.b16 %v5111, %v5110
        %v5123 = vpack.c.b16 %v5113, %v5112
        %v5124 = vpack.c.b16 %v5115, %v5114
        %v5125 = vpack.c.b16 %v5117, %v5116
        %5134 = vmatprep.subr.bf16.mxu0 0
        %5135 = vmatpush1.bf16.msra.mxu0 %v5118
        %5136 = vmatprep.subr.bf16.mxu0 0
        %5137 = vmatpush1.bf16.msra.mxu0 %v5119
        %5138 = vmatprep.subr.bf16.mxu0 0
        %5139 = vmatpush1.bf16.msra.mxu0 %v5120
        %5140 = vmatprep.subr.bf16.mxu0 0
        %5141 = vmatpush1.bf16.msra.mxu0 %v5121
        %5142 = vmatprep.subr.bf16.mxu0 0
        %5143 = vmatpush1.bf16.msra.mxu0 %v5122
        %5144 = vmatprep.subr.bf16.mxu0 0
        %5145 = vmatpush1.bf16.msra.mxu0 %v5123
        %5146 = vmatprep.subr.bf16.mxu0 0
        %5147 = vmatpush1.bf16.msra.mxu0 %v5124
        %5148 = vmatprep.subr.bf16.mxu0 0
        %5149 = vmatpush1.bf16.msra.mxu0 %v5125
        %5150 = vmatprep.subr.bf16.mxu0 0
        %5151 = vmatpush1.bf16.msra.mxu0 0
        %5152 = vmatprep.subr.bf16.mxu0 0
        %5153 = vmatpush1.bf16.msra.mxu0 0
        %5154 = vmatprep.subr.bf16.mxu0 0
        %5155 = vmatpush1.bf16.msra.mxu0 0
        %5156 = vmatprep.subr.bf16.mxu0 0
        %5157 = vmatpush1.bf16.msra.mxu0 0
        %5158 = vmatprep.subr.bf16.mxu0 0
        %5159 = vmatpush1.bf16.msra.mxu0 0
        %5160 = vmatprep.subr.bf16.mxu0 0
        %5161 = vmatpush1.bf16.msra.mxu0 0
        %5162 = vmatprep.subr.bf16.mxu0 0
        %5163 = vmatpush1.bf16.msra.mxu0 0
        %5164 = vmatprep.subr.bf16.mxu0 0
        %5165 = vmatpush1.bf16.msra.mxu0 0
        %5166 = vmatprep.mubr.bf16.mxu0 0
        %5167 = vmatmul.mubr.bf16.gmra.mrb[0].mxu0 %v4949
        %v5168 = vpop.f32.mrb[0].mxu0
        %v5169 = vadd.f32 0.0, %v5168
        %v5170 = vpop.f32.mrb[0].mxu0
        %v5171 = vpop.f32.mrb[0].mxu0
        %v5172 = vadd.f32 0.0, %v5171
        %v5173 = vpop.f32.mrb[0].mxu0
        %5174 = vmatprep.mubr.bf16.mxu0 0
        %5175 = vmatmul.mubr.bf16.gmra.mrb[0].mxu0 %v4953
        %v5176 = vpop.f32.mrb[0].mxu0
        %v5177 = vadd.f32 0.0, %v5176
        %v5178 = vpop.f32.mrb[0].mxu0
        %v5179 = vpop.f32.mrb[0].mxu0
        %v5180 = vadd.f32 0.0, %v5179
        %v5181 = vpop.f32.mrb[0].mxu0
        %5182 = vmatprep.mubr.bf16.mxu0 0
        %5183 = vmatmul.mubr.bf16.gmra.mrb[0].mxu0 %v4957
        %v5184 = vpop.f32.mrb[0].mxu0
        %v5185 = vadd.f32 0.0, %v5184
        %v5186 = vpop.f32.mrb[0].mxu0
        %v5187 = vpop.f32.mrb[0].mxu0
        %v5188 = vadd.f32 0.0, %v5187
        %v5189 = vpop.f32.mrb[0].mxu0
        %5190 = vmatprep.mubr.bf16.mxu0 0
        %5191 = vmatmul.mubr.bf16.gmra.mrb[0].mxu0 %v4961
        %v5192 = vpop.f32.mrb[0].mxu0
        %v5193 = vadd.f32 0.0, %v5192
        %v5194 = vpop.f32.mrb[0].mxu0
        %v5195 = vpop.f32.mrb[0].mxu0
        %v5196 = vadd.f32 0.0, %v5195
        %v5197 = vpop.f32.mrb[0].mxu0
        %5198 = vmatprep.mubr.bf16.mxu0 0
        %5199 = vmatmul.mubr.bf16.gmra.mrb[0].mxu0 %v4965
        %v5200 = vpop.f32.mrb[0].mxu0
        %v5201 = vadd.f32 0.0, %v5200
        %v5202 = vpop.f32.mrb[0].mxu0
        %v5203 = vpop.f32.mrb[0].mxu0
        %v5204 = vadd.f32 0.0, %v5203
        %v5205 = vpop.f32.mrb[0].mxu0
        %5206 = vmatprep.mubr.bf16.mxu0 0
        %5207 = vmatmul.mubr.bf16.gmra.mrb[0].mxu0 %v4969
        %v5208 = vpop.f32.mrb[0].mxu0
        %v5209 = vadd.f32 0.0, %v5208
        %v5210 = vpop.f32.mrb[0].mxu0
        %v5211 = vpop.f32.mrb[0].mxu0
        %v5212 = vadd.f32 0.0, %v5211
        %v5213 = vpop.f32.mrb[0].mxu0
        %5214 = vmatprep.mubr.bf16.mxu0 0
        %5215 = vmatmul.mubr.bf16.gmra.mrb[0].mxu0 %v4973
        %v5216 = vpop.f32.mrb[0].mxu0
        %v5217 = vadd.f32 0.0, %v5216
        %v5218 = vpop.f32.mrb[0].mxu0
        %v5219 = vpop.f32.mrb[0].mxu0
        %v5220 = vadd.f32 0.0, %v5219
        %v5221 = vpop.f32.mrb[0].mxu0
        %5222 = vmatprep.mubr.bf16.mxu0 0
        %5223 = vmatmul.mubr.bf16.gmra.mrb[0].mxu0 %v4977
        %v5224 = vpop.f32.mrb[0].mxu0
        %v5225 = vadd.f32 0.0, %v5224
        %v5226 = vpop.f32.mrb[0].mxu0
        %v5227 = vpop.f32.mrb[0].mxu0
        %v5228 = vadd.f32 0.0, %v5227
        %v5229 = vpop.f32.mrb[0].mxu0
        %5230 = vmatprep.mubr.bf16.mxu0 0
        %5231 = vmatmul.mubr.bf16.gmra.mrb[0].mxu0 %v4981
        %v5232 = vpop.f32.mrb[0].mxu0
        %v5233 = vadd.f32 0.0, %v5232
        %v5234 = vpop.f32.mrb[0].mxu0
        %v5235 = vpop.f32.mrb[0].mxu0
        %v5236 = vadd.f32 0.0, %v5235
        %v5237 = vpop.f32.mrb[0].mxu0
        %5238 = vmatprep.mubr.bf16.mxu0 0
        %5239 = vmatmul.mubr.bf16.gmra.mrb[0].mxu0 %v4985
        %v5240 = vpop.f32.mrb[0].mxu0
        %v5241 = vadd.f32 0.0, %v5240
        %v5242 = vpop.f32.mrb[0].mxu0
        %v5243 = vpop.f32.mrb[0].mxu0
        %v5244 = vadd.f32 0.0, %v5243
        %v5245 = vpop.f32.mrb[0].mxu0
        %5246 = vmatprep.mubr.bf16.mxu0 0
        %5247 = vmatmul.mubr.bf16.gmra.mrb[0].mxu0 %v4989
        %v5248 = vpop.f32.mrb[0].mxu0
        %v5249 = vadd.f32 0.0, %v5248
        %v5250 = vpop.f32.mrb[0].mxu0
        %v5251 = vpop.f32.mrb[0].mxu0
        %v5252 = vadd.f32 0.0, %v5251
        %v5253 = vpop.f32.mrb[0].mxu0
        %5254 = vmatprep.mubr.bf16.mxu0 0
        %5255 = vmatmul.mubr.bf16.gmra.mrb[0].mxu0 %v4993
        %v5256 = vpop.f32.mrb[0].mxu0
        %v5257 = vadd.f32 0.0, %v5256
        %v5258 = vpop.f32.mrb[0].mxu0
        %v5259 = vpop.f32.mrb[0].mxu0
        %v5260 = vadd.f32 0.0, %v5259
        %v5261 = vpop.f32.mrb[0].mxu0
        %5262 = vmatprep.mubr.bf16.mxu0 0
        %5263 = vmatmul.mubr.bf16.gmra.mrb[0].mxu0 %v4997
        %v5264 = vpop.f32.mrb[0].mxu0
        %v5265 = vadd.f32 0.0, %v5264
        %v5266 = vpop.f32.mrb[0].mxu0
        %v5267 = vpop.f32.mrb[0].mxu0
        %v5268 = vadd.f32 0.0, %v5267
        %v5269 = vpop.f32.mrb[0].mxu0
        %5270 = vmatprep.mubr.bf16.mxu0 0
        %5271 = vmatmul.mubr.bf16.gmra.mrb[0].mxu0 %v5001
        %v5272 = vpop.f32.mrb[0].mxu0
        %v5273 = vadd.f32 0.0, %v5272
        %v5274 = vpop.f32.mrb[0].mxu0
        %v5275 = vpop.f32.mrb[0].mxu0
        %v5276 = vadd.f32 0.0, %v5275
        %v5277 = vpop.f32.mrb[0].mxu0
        %5278 = vmatprep.mubr.bf16.mxu0 0
        %5279 = vmatmul.mubr.bf16.gmra.mrb[0].mxu0 %v5005
        %v5280 = vpop.f32.mrb[0].mxu0
        %v5281 = vadd.f32 0.0, %v5280
        %v5282 = vpop.f32.mrb[0].mxu0
        %v5283 = vpop.f32.mrb[0].mxu0
        %v5284 = vadd.f32 0.0, %v5283
        %v5285 = vpop.f32.mrb[0].mxu0
        %5286 = vmatprep.mubr.bf16.mxu0 0
        %5287 = vmatmul.mubr.bf16.gmra.mrb[0].mxu0 %v5009
        %v5288 = vpop.f32.mrb[0].mxu0
        %v5289 = vadd.f32 0.0, %v5288
        %v5290 = vpop.f32.mrb[0].mxu0
        %v5291 = vpop.f32.mrb[0].mxu0
        %v5292 = vadd.f32 0.0, %v5291
        %v5293 = vpop.f32.mrb[0].mxu0
        %5294 = vmatprep.mubr.bf16.mxu0 0
        %5295 = vmatmul.mubr.bf16.gmra.mrb[0].mxu0 %v5013
        %v5296 = vpop.f32.mrb[0].mxu0
        %v5297 = vadd.f32 0.0, %v5296
        %v5298 = vpop.f32.mrb[0].mxu0
        %v5299 = vpop.f32.mrb[0].mxu0
        %v5300 = vadd.f32 0.0, %v5299
        %v5301 = vpop.f32.mrb[0].mxu0
        %5302 = vmatprep.mubr.bf16.mxu0 0
        %5303 = vmatmul.mubr.bf16.gmra.mrb[0].mxu0 %v5017
        %v5304 = vpop.f32.mrb[0].mxu0
        %v5305 = vadd.f32 0.0, %v5304
        %v5306 = vpop.f32.mrb[0].mxu0
        %v5307 = vpop.f32.mrb[0].mxu0
        %v5308 = vadd.f32 0.0, %v5307
        %v5309 = vpop.f32.mrb[0].mxu0
        %5310 = vmatprep.mubr.bf16.mxu0 0
        %5311 = vmatmul.mubr.bf16.gmra.mrb[0].mxu0 %v5021
        %v5312 = vpop.f32.mrb[0].mxu0
        %v5313 = vadd.f32 0.0, %v5312
        %v5314 = vpop.f32.mrb[0].mxu0
        %v5315 = vpop.f32.mrb[0].mxu0
        %v5316 = vadd.f32 0.0, %v5315
        %v5317 = vpop.f32.mrb[0].mxu0
        %5318 = vmatprep.mubr.bf16.mxu0 0
        %5319 = vmatmul.mubr.bf16.gmra.mrb[0].mxu0 %v5025
        %v5320 = vpop.f32.mrb[0].mxu0
        %v5321 = vadd.f32 0.0, %v5320
        %v5322 = vpop.f32.mrb[0].mxu0
        %v5323 = vpop.f32.mrb[0].mxu0
        %v5324 = vadd.f32 0.0, %v5323
        %v5325 = vpop.f32.mrb[0].mxu0
        %5326 = vmatprep.mubr.bf16.mxu0 0
        %5327 = vmatmul.mubr.bf16.gmra.mrb[0].mxu0 %v5029
        %v5328 = vpop.f32.mrb[0].mxu0
        %v5329 = vadd.f32 0.0, %v5328
        %v5330 = vpop.f32.mrb[0].mxu0
        %v5331 = vpop.f32.mrb[0].mxu0
        %v5332 = vadd.f32 0.0, %v5331
        %v5333 = vpop.f32.mrb[0].mxu0
        %5334 = vmatprep.mubr.bf16.mxu0 0
        %5335 = vmatmul.mubr.bf16.gmra.mrb[0].mxu0 %v5033
        %v5336 = vpop.f32.mrb[0].mxu0
        %v5337 = vadd.f32 0.0, %v5336
        %v5338 = vpop.f32.mrb[0].mxu0
        %v5339 = vpop.f32.mrb[0].mxu0
        %v5340 = vadd.f32 0.0, %v5339
        %v5341 = vpop.f32.mrb[0].mxu0
        %5342 = vmatprep.mubr.bf16.mxu0 0
        %5343 = vmatmul.mubr.bf16.gmra.mrb[0].mxu0 %v5037
        %v5344 = vpop.f32.mrb[0].mxu0
        %v5345 = vadd.f32 0.0, %v5344
        %v5346 = vpop.f32.mrb[0].mxu0
        %v5347 = vpop.f32.mrb[0].mxu0
        %v5348 = vadd.f32 0.0, %v5347
        %v5349 = vpop.f32.mrb[0].mxu0
        %5350 = vmatprep.mubr.bf16.mxu0 0
        %5351 = vmatmul.mubr.bf16.gmra.mrb[0].mxu0 %v5041
        %v5352 = vpop.f32.mrb[0].mxu0
        %v5353 = vadd.f32 0.0, %v5352
        %v5354 = vpop.f32.mrb[0].mxu0
        %v5355 = vpop.f32.mrb[0].mxu0
        %v5356 = vadd.f32 0.0, %v5355
        %v5357 = vpop.f32.mrb[0].mxu0
        %5358 = vmatprep.mubr.bf16.mxu0 0
        %5359 = vmatmul.mubr.bf16.gmra.mrb[0].mxu0 %v5045
        %v5360 = vpop.f32.mrb[0].mxu0
        %v5361 = vadd.f32 0.0, %v5360
        %v5362 = vpop.f32.mrb[0].mxu0
        %v5363 = vpop.f32.mrb[0].mxu0
        %v5364 = vadd.f32 0.0, %v5363
        %v5365 = vpop.f32.mrb[0].mxu0
        %5366 = vmatprep.mubr.bf16.mxu0 0
        %5367 = vmatmul.mubr.bf16.gmra.mrb[0].mxu0 %v5049
        %v5368 = vpop.f32.mrb[0].mxu0
        %v5369 = vadd.f32 0.0, %v5368
        %v5370 = vpop.f32.mrb[0].mxu0
        %v5371 = vpop.f32.mrb[0].mxu0
        %v5372 = vadd.f32 0.0, %v5371
        %v5373 = vpop.f32.mrb[0].mxu0
        %5374 = vmatprep.mubr.bf16.mxu0 0
        %5375 = vmatmul.mubr.bf16.gmra.mrb[0].mxu0 %v5058
        %v5376 = vpop.f32.mrb[0].mxu0
        %v5377 = vadd.f32 0.0, %v5376
        %v5378 = vpop.f32.mrb[0].mxu0
        %v5379 = vpop.f32.mrb[0].mxu0
        %v5380 = vadd.f32 0.0, %v5379
        %v5381 = vpop.f32.mrb[0].mxu0
        %5382 = vdwg.mxu0
        %v5383 = vadd.f32 %v4867, %v5169
        %v5384 = vadd.f32 %v4868, %v5172
        %v5385 = vadd.f32 %v4869, %v5177
        %v5386 = vadd.f32 %v4870, %v5180
        %v5387 = vadd.f32 %v4871, %v5185
        %v5388 = vadd.f32 %v4872, %v5188
        %v5389 = vadd.f32 %v4873, %v5193
        %v5390 = vadd.f32 %v4874, %v5196
        %v5391 = vadd.f32 %v4875, %v5201
        %v5392 = vadd.f32 %v4876, %v5204
        %v5393 = vadd.f32 %v4877, %v5209
        %v5394 = vadd.f32 %v4878, %v5212
        %v5395 = vadd.f32 %v4879, %v5217
        %v5396 = vadd.f32 %v4880, %v5220
        %v5397 = vadd.f32 %v4881, %v5225
        %v5398 = vadd.f32 %v4882, %v5228
        %v5399 = vadd.f32 %v4883, %v5233
        %v5400 = vadd.f32 %v4884, %v5236
        %v5401 = vadd.f32 %v4885, %v5241
        %v5402 = vadd.f32 %v4886, %v5244
        %v5403 = vadd.f32 %v4887, %v5249
        %v5404 = vadd.f32 %v4888, %v5252
        %v5405 = vadd.f32 %v4889, %v5257
        %v5406 = vadd.f32 %v4890, %v5260
        %v5407 = vadd.f32 %v4891, %v5265
        %v5408 = vadd.f32 %v4892, %v5268
        %v5409 = vadd.f32 %v4893, %v5273
        %v5410 = vadd.f32 %v4894, %v5276
        %v5411 = vadd.f32 %v4895, %v5281
        %v5412 = vadd.f32 %v4896, %v5284
        %v5413 = vadd.f32 %v4897, %v5289
        %v5414 = vadd.f32 %v4898, %v5292
        %v5415 = vadd.f32 %v4899, %v5297
        %v5416 = vadd.f32 %v4900, %v5300
        %v5417 = vadd.f32 %v4901, %v5305
        %v5418 = vadd.f32 %v4902, %v5308
        %v5419 = vadd.f32 %v4903, %v5313
        %v5420 = vadd.f32 %v4904, %v5316
        %v5421 = vadd.f32 %v4905, %v5321
        %v5422 = vadd.f32 %v4906, %v5324
        %v5423 = vadd.f32 %v4907, %v5329
        %v5424 = vadd.f32 %v4908, %v5332
        %v5425 = vadd.f32 %v4909, %v5337
        %v5426 = vadd.f32 %v4910, %v5340
        %v5427 = vadd.f32 %v4911, %v5345
        %v5428 = vadd.f32 %v4912, %v5348
        %v5429 = vadd.f32 %v4913, %v5353
        %v5430 = vadd.f32 %v4914, %v5356
        %v5431 = vadd.f32 %v4915, %v5361
        %v5432 = vadd.f32 %v4916, %v5364
        %v5433 = vadd.f32 %v4917, %v5369
        %v5434 = vadd.f32 %v4918, %v5372
        %v5435 = vadd.f32 %v4919, %v5377
        %v5436 = vadd.f32 %v4920, %v5380
        %v5437 = vld [vmem:[#allocation10] sm:$0xff]
        %v5438 = vld [vmem:[#allocation10 + $0x8] sm:$0xff]
        %v5439 = vld [vmem:[#allocation10 + $0x10] sm:$0xff]
        %v5440 = vadd.f32 %v5383, %v5437
        %v5441 = vadd.f32 %v5384, %v5438
        %v5442 = vadd.f32 %v5385, %v5439
        %v5443 = vadd.f32 %v5386, %v5437
        %v5444 = vadd.f32 %v5387, %v5438
        %v5445 = vadd.f32 %v5388, %v5439
        %v5446 = vadd.f32 %v5389, %v5437
        %v5447 = vadd.f32 %v5390, %v5438
        %v5448 = vadd.f32 %v5391, %v5439
        %v5449 = vadd.f32 %v5392, %v5437
        %v5450 = vadd.f32 %v5393, %v5438
        %v5451 = vadd.f32 %v5394, %v5439
        %v5452 = vadd.f32 %v5395, %v5437
        %v5453 = vadd.f32 %v5396, %v5438
        %v5454 = vadd.f32 %v5397, %v5439
        %v5455 = vadd.f32 %v5398, %v5437
        %v5456 = vadd.f32 %v5399, %v5438
        %v5457 = vadd.f32 %v5400, %v5439
        %v5458 = vadd.f32 %v5401, %v5437
        %v5459 = vadd.f32 %v5402, %v5438
        %v5460 = vadd.f32 %v5403, %v5439
        %v5461 = vadd.f32 %v5404, %v5437
        %v5462 = vadd.f32 %v5405, %v5438
        %v5463 = vadd.f32 %v5406, %v5439
        %v5464 = vadd.f32 %v5407, %v5437
        %v5465 = vadd.f32 %v5408, %v5438
        %v5466 = vadd.f32 %v5409, %v5439
        %v5467 = vadd.f32 %v5410, %v5437
        %v5468 = vadd.f32 %v5411, %v5438
        %v5469 = vadd.f32 %v5412, %v5439
        %v5470 = vadd.f32 %v5413, %v5437
        %v5471 = vadd.f32 %v5414, %v5438
        %v5472 = vadd.f32 %v5415, %v5439
        %v5473 = vadd.f32 %v5416, %v5437
        %v5474 = vadd.f32 %v5417, %v5438
        %v5475 = vadd.f32 %v5418, %v5439
        %v5476 = vadd.f32 %v5419, %v5437
        %v5477 = vadd.f32 %v5420, %v5438
        %v5478 = vadd.f32 %v5421, %v5439
        %v5479 = vadd.f32 %v5422, %v5437
        %v5480 = vadd.f32 %v5423, %v5438
        %v5481 = vadd.f32 %v5424, %v5439
        %v5482 = vadd.f32 %v5425, %v5437
        %v5483 = vadd.f32 %v5426, %v5438
        %v5484 = vadd.f32 %v5427, %v5439
        %v5485 = vadd.f32 %v5428, %v5437
        %v5486 = vadd.f32 %v5429, %v5438
        %v5487 = vadd.f32 %v5430, %v5439
        %v5488 = vadd.f32 %v5431, %v5437
        %v5489 = vadd.f32 %v5432, %v5438
        %v5490 = vadd.f32 %v5433, %v5439
        %v5491 = vadd.f32 %v5434, %v5437
        %v5492 = vadd.f32 %v5435, %v5438
        %v5493 = vadd.f32 %v5436, %v5439
        %v5494 = vmax.f32 %v5440, 0.0
        %v5495 = vmax.f32 %v5441, 0.0
        %v5496 = vmax.f32 %v5442, 0.0
        %v5497 = vmax.f32 %v5443, 0.0
        %v5498 = vmax.f32 %v5444, 0.0
        %v5499 = vmax.f32 %v5445, 0.0
        %v5500 = vmax.f32 %v5446, 0.0
        %v5501 = vmax.f32 %v5447, 0.0
        %v5502 = vmax.f32 %v5448, 0.0
        %v5503 = vmax.f32 %v5449, 0.0
        %v5504 = vmax.f32 %v5450, 0.0
        %v5505 = vmax.f32 %v5451, 0.0
        %v5506 = vmax.f32 %v5452, 0.0
        %v5507 = vmax.f32 %v5453, 0.0
        %v5508 = vmax.f32 %v5454, 0.0
        %v5509 = vmax.f32 %v5455, 0.0
        %v5510 = vmax.f32 %v5456, 0.0
        %v5511 = vmax.f32 %v5457, 0.0
        %v5512 = vmax.f32 %v5458, 0.0
        %v5513 = vmax.f32 %v5459, 0.0
        %v5514 = vmax.f32 %v5460, 0.0
        %v5515 = vmax.f32 %v5461, 0.0
        %v5516 = vmax.f32 %v5462, 0.0
        %v5517 = vmax.f32 %v5463, 0.0
        %v5518 = vmax.f32 %v5464, 0.0
        %v5519 = vmax.f32 %v5465, 0.0
        %v5520 = vmax.f32 %v5466, 0.0
        %v5521 = vmax.f32 %v5467, 0.0
        %v5522 = vmax.f32 %v5468, 0.0
        %v5523 = vmax.f32 %v5469, 0.0
        %v5524 = vmax.f32 %v5470, 0.0
        %v5525 = vmax.f32 %v5471, 0.0
        %v5526 = vmax.f32 %v5472, 0.0
        %v5527 = vmax.f32 %v5473, 0.0
        %v5528 = vmax.f32 %v5474, 0.0
        %v5529 = vmax.f32 %v5475, 0.0
        %v5530 = vmax.f32 %v5476, 0.0
        %v5531 = vmax.f32 %v5477, 0.0
        %v5532 = vmax.f32 %v5478, 0.0
        %v5533 = vmax.f32 %v5479, 0.0
        %v5534 = vmax.f32 %v5480, 0.0
        %v5535 = vmax.f32 %v5481, 0.0
        %v5536 = vmax.f32 %v5482, 0.0
        %v5537 = vmax.f32 %v5483, 0.0
        %v5538 = vmax.f32 %v5484, 0.0
        %v5539 = vmax.f32 %v5485, 0.0
        %v5540 = vmax.f32 %v5486, 0.0
        %v5541 = vmax.f32 %v5487, 0.0
        %v5542 = vmax.f32 %v5488, 0.0
        %v5543 = vmax.f32 %v5489, 0.0
        %v5544 = vmax.f32 %v5490, 0.0
        %v5545 = vmax.f32 %v5491, 0.0
        %v5546 = vmax.f32 %v5492, 0.0
        %v5547 = vmax.f32 %v5493, 0.0
        %5548 = vst [vmem:[#allocation3] sm:$0xf] 0
        %5549 = vst [vmem:[#allocation3 + $0xd8] sm:$0xf0] 0
        %v5550 = vpack.c.bf16 %v5495, %v5494
        %v5551 = vpack.c.bf16 %v5496, %v5496
        %v5552 = vpack.c.bf16 %v5498, %v5497
        %v5553 = vpack.c.bf16 %v5499, %v5499
        %v5554 = vpack.c.bf16 %v5501, %v5500
        %v5555 = vpack.c.bf16 %v5502, %v5502
        %v5556 = vpack.c.bf16 %v5504, %v5503
        %v5557 = vpack.c.bf16 %v5505, %v5505
        %v5558 = vpack.c.bf16 %v5507, %v5506
        %v5559 = vpack.c.bf16 %v5508, %v5508
        %v5560 = vpack.c.bf16 %v5510, %v5509
        %v5561 = vpack.c.bf16 %v5511, %v5511
        %v5562 = vpack.c.bf16 %v5513, %v5512
        %v5563 = vpack.c.bf16 %v5514, %v5514
        %v5564 = vpack.c.bf16 %v5516, %v5515
        %v5565 = vpack.c.bf16 %v5517, %v5517
        %v5566 = vpack.c.bf16 %v5519, %v5518
        %v5567 = vpack.c.bf16 %v5520, %v5520
        %v5568 = vpack.c.bf16 %v5522, %v5521
        %v5569 = vpack.c.bf16 %v5523, %v5523
        %v5570 = vpack.c.bf16 %v5525, %v5524
        %v5571 = vpack.c.bf16 %v5526, %v5526
        %v5572 = vpack.c.bf16 %v5528, %v5527
        %v5573 = vpack.c.bf16 %v5529, %v5529
        %v5574 = vpack.c.bf16 %v5531, %v5530
        %v5575 = vpack.c.bf16 %v5532, %v5532
        %v5576 = vpack.c.bf16 %v5534, %v5533
        %v5577 = vpack.c.bf16 %v5535, %v5535
        %v5578 = vpack.c.bf16 %v5537, %v5536
        %v5579 = vpack.c.bf16 %v5538, %v5538
        %v5580 = vpack.c.bf16 %v5540, %v5539
        %v5581 = vpack.c.bf16 %v5541, %v5541
        %v5582 = vpack.c.bf16 %v5543, %v5542
        %v5583 = vpack.c.bf16 %v5544, %v5544
        %v5584 = vpack.c.bf16 %v5546, %v5545
        %v5585 = vpack.c.bf16 %v5547, %v5547
        %v5622 = vunpack.c.l.b16 %v5550
        %v5623 = vunpack.c.h.b16 %v5550
        %v5624 = vunpack.c.l.b16 %v5551
        %v5625 = vunpack.c.l.b16 %v5552
        %v5626 = vunpack.c.h.b16 %v5552
        %v5627 = vunpack.c.l.b16 %v5553
        %v5628 = vunpack.c.l.b16 %v5554
        %v5629 = vunpack.c.h.b16 %v5554
        %v5630 = vunpack.c.l.b16 %v5555
        %v5631 = vunpack.c.l.b16 %v5556
        %v5632 = vunpack.c.h.b16 %v5556
        %v5633 = vunpack.c.l.b16 %v5557
        %v5634 = vunpack.c.l.b16 %v5558
        %v5635 = vunpack.c.h.b16 %v5558
        %v5636 = vunpack.c.l.b16 %v5559
        %v5637 = vunpack.c.l.b16 %v5560
        %v5638 = vunpack.c.h.b16 %v5560
        %v5639 = vunpack.c.l.b16 %v5561
        %v5640 = vunpack.c.l.b16 %v5562
        %v5641 = vunpack.c.h.b16 %v5562
        %v5642 = vunpack.c.l.b16 %v5563
        %v5643 = vunpack.c.l.b16 %v5564
        %v5644 = vunpack.c.h.b16 %v5564
        %v5645 = vunpack.c.l.b16 %v5565
        %v5646 = vunpack.c.l.b16 %v5566
        %v5647 = vunpack.c.h.b16 %v5566
        %v5648 = vunpack.c.l.b16 %v5567
        %v5649 = vunpack.c.l.b16 %v5568
        %v5650 = vunpack.c.h.b16 %v5568
        %v5651 = vunpack.c.l.b16 %v5569
        %v5652 = vunpack.c.l.b16 %v5570
        %v5653 = vunpack.c.h.b16 %v5570
        %v5654 = vunpack.c.l.b16 %v5571
        %v5655 = vunpack.c.l.b16 %v5572
        %v5656 = vunpack.c.h.b16 %v5572
        %v5657 = vunpack.c.l.b16 %v5573
        %v5658 = vunpack.c.l.b16 %v5574
        %v5659 = vunpack.c.h.b16 %v5574
        %v5660 = vunpack.c.l.b16 %v5575
        %v5661 = vunpack.c.l.b16 %v5576
        %v5662 = vunpack.c.h.b16 %v5576
        %v5663 = vunpack.c.l.b16 %v5577
        %v5664 = vunpack.c.l.b16 %v5578
        %v5665 = vunpack.c.h.b16 %v5578
        %v5666 = vunpack.c.l.b16 %v5579
        %v5667 = vunpack.c.l.b16 %v5580
        %v5668 = vunpack.c.h.b16 %v5580
        %v5669 = vunpack.c.l.b16 %v5581
        %v5670 = vunpack.c.l.b16 %v5582
        %v5671 = vunpack.c.h.b16 %v5582
        %v5672 = vunpack.c.l.b16 %v5583
        %v5673 = vunpack.c.l.b16 %v5584
        %v5674 = vunpack.c.h.b16 %v5584
        %v5675 = vunpack.c.l.b16 %v5585
        %v5676 = vpack.c.b16 %v5622, %v5622
        %v5677 = vpack.c.b16 %v5624, %v5623
        %v5678 = vpack.c.b16 %v5626, %v5625
        %v5679 = vpack.c.b16 %v5628, %v5627
        %v5680 = vpack.c.b16 %v5630, %v5629
        %v5681 = vpack.c.b16 %v5632, %v5631
        %v5682 = vpack.c.b16 %v5634, %v5633
        %v5683 = vpack.c.b16 %v5636, %v5635
        %v5684 = vpack.c.b16 %v5638, %v5637
        %v5685 = vpack.c.b16 %v5640, %v5639
        %v5686 = vpack.c.b16 %v5642, %v5641
        %v5687 = vpack.c.b16 %v5644, %v5643
        %v5688 = vpack.c.b16 %v5646, %v5645
        %v5689 = vpack.c.b16 %v5648, %v5647
        %v5690 = vpack.c.b16 %v5650, %v5649
        %v5691 = vpack.c.b16 %v5652, %v5651
        %v5692 = vpack.c.b16 %v5654, %v5653
        %v5693 = vpack.c.b16 %v5656, %v5655
        %v5694 = vpack.c.b16 %v5658, %v5657
        %v5695 = vpack.c.b16 %v5660, %v5659
        %v5696 = vpack.c.b16 %v5662, %v5661
        %v5697 = vpack.c.b16 %v5664, %v5663
        %v5698 = vpack.c.b16 %v5666, %v5665
        %v5699 = vpack.c.b16 %v5668, %v5667
        %v5700 = vpack.c.b16 %v5670, %v5669
        %v5701 = vpack.c.b16 %v5672, %v5671
        %v5702 = vpack.c.b16 %v5674, %v5673
        %v5703 = vpack.c.b16 %v5675, %v5675
        %5732 = vst [vmem:[#allocation3] sm:$0xf0] %v5676
        %5733 = vst [vmem:[#allocation3 + $0x8] sm:$0xff] %v5677
        %5734 = vst [vmem:[#allocation3 + $0x10] sm:$0xff] %v5678
        %5735 = vst [vmem:[#allocation3 + $0x18] sm:$0xff] %v5679
        %5736 = vst [vmem:[#allocation3 + $0x20] sm:$0xff] %v5680
        %5737 = vst [vmem:[#allocation3 + $0x28] sm:$0xff] %v5681
        %5738 = vst [vmem:[#allocation3 + $0x30] sm:$0xff] %v5682
        %5739 = vst [vmem:[#allocation3 + $0x38] sm:$0xff] %v5683
        %5740 = vst [vmem:[#allocation3 + $0x40] sm:$0xff] %v5684
        %5741 = vst [vmem:[#allocation3 + $0x48] sm:$0xff] %v5685
        %5742 = vst [vmem:[#allocation3 + $0x50] sm:$0xff] %v5686
        %5743 = vst [vmem:[#allocation3 + $0x58] sm:$0xff] %v5687
        %5744 = vst [vmem:[#allocation3 + $0x60] sm:$0xff] %v5688
        %5745 = vst [vmem:[#allocation3 + $0x68] sm:$0xff] %v5689
        %5746 = vst [vmem:[#allocation3 + $0x70] sm:$0xff] %v5690
        %5747 = vst [vmem:[#allocation3 + $0x78] sm:$0xff] %v5691
        %5748 = vst [vmem:[#allocation3 + $0x80] sm:$0xff] %v5692
        %5749 = vst [vmem:[#allocation3 + $0x88] sm:$0xff] %v5693
        %5750 = vst [vmem:[#allocation3 + $0x90] sm:$0xff] %v5694
        %5751 = vst [vmem:[#allocation3 + $0x98] sm:$0xff] %v5695
        %5752 = vst [vmem:[#allocation3 + $0xa0] sm:$0xff] %v5696
        %5753 = vst [vmem:[#allocation3 + $0xa8] sm:$0xff] %v5697
        %5754 = vst [vmem:[#allocation3 + $0xb0] sm:$0xff] %v5698
        %5755 = vst [vmem:[#allocation3 + $0xb8] sm:$0xff] %v5699
        %5756 = vst [vmem:[#allocation3 + $0xc0] sm:$0xff] %v5700
        %5757 = vst [vmem:[#allocation3 + $0xc8] sm:$0xff] %v5701
        %5758 = vst [vmem:[#allocation3 + $0xd0] sm:$0xff] %v5702
        %5759 = vst [vmem:[#allocation3 + $0xd8] sm:$0xf] %v5703
        %p5760 = scmp.eq.s32.totalorder %s28, 0
        // Predicated region
        $region53: #{tpu_custom_call.1} parent=35 // pred_check
          %p5761 = pneg %p5760
        $region54: #{tpu_custom_call.1} parent=35 // pred_check_branch
          %5763 = sbr.rel (%p5761) target = $region56
        $region55: #{tpu_custom_call.1} parent=35 // pred_region
          %5764 = vst [vmem:[#allocation3] sm:$0xf0] 0
          %5765 = vst [vmem:[#allocation3 + $0x8] sm:$0xff] 0
          %5766 = vst [vmem:[#allocation3 + $0xd0] sm:$0xff] 0
          %5767 = vst [vmem:[#allocation3 + $0xd8] sm:$0xf] 0
        $region56: #{tpu_custom_call.1} parent=35 // pred_fallthru
          _
        %v5768 = vld [vmem:[#allocation3] sm:$0xf8]
        %v5769 = vld [vmem:[#allocation3 + $0x8] sm:$0xff]
        %v5770 = vld [vmem:[#allocation3 + $0x10] sm:$0xff]
        %v5771 = vld [vmem:[#allocation3 + $0x18] sm:$0xff]
        %v5772 = vld [vmem:[#allocation3 + $0x20] sm:$0xff]
        %v5773 = vld [vmem:[#allocation3 + $0x28] sm:$0xff]
        %v5774 = vld [vmem:[#allocation3 + $0x30] sm:$0xff]
        %v5775 = vld [vmem:[#allocation3 + $0x38] sm:$0xff]
        %v5776 = vld [vmem:[#allocation3 + $0x40] sm:$0xff]
        %v5777 = vld [vmem:[#allocation3 + $0x48] sm:$0xff]
        %v5778 = vld [vmem:[#allocation3 + $0x50] sm:$0xff]
        %v5779 = vld [vmem:[#allocation3 + $0x58] sm:$0xff]
        %v5780 = vld [vmem:[#allocation3 + $0x60] sm:$0xff]
        %v5781 = vld [vmem:[#allocation3 + $0x68] sm:$0xff]
        %v5782 = vld [vmem:[#allocation3 + $0x70] sm:$0xff]
        %v5783 = vld [vmem:[#allocation3 + $0x78] sm:$0xff]
        %v5784 = vld [vmem:[#allocation3 + $0x80] sm:$0xff]
        %v5785 = vld [vmem:[#allocation3 + $0x88] sm:$0xff]
        %v5786 = vld [vmem:[#allocation3 + $0x90] sm:$0xff]
        %v5787 = vld [vmem:[#allocation3 + $0x98] sm:$0xff]
        %v5788 = vld [vmem:[#allocation3 + $0xa0] sm:$0xff]
        %v5789 = vld [vmem:[#allocation3 + $0xa8] sm:$0xff]
        %v5790 = vld [vmem:[#allocation3 + $0xb0] sm:$0xff]
        %v5791 = vld [vmem:[#allocation3 + $0xb8] sm:$0xff]
        %v5792 = vld [vmem:[#allocation3 + $0xc0] sm:$0xf]
        %v5793 = vld [vmem:[#allocation9] sm:$0xf]
        %v5794 = vld [vmem:[#allocation9 + $0x4] sm:$0xf]
        %v5795 = vld [vmem:[#allocation9 + $0x8] sm:$0xf]
        %v5796 = vld [vmem:[#allocation9 + $0xc] sm:$0xf]
        %v5797 = vld [vmem:[#allocation9 + $0x10] sm:$0xf]
        %v5798 = vld [vmem:[#allocation9 + $0x14] sm:$0xf]
        %v5799 = vld [vmem:[#allocation9 + $0x18] sm:$0xf]
        %v5800 = vld [vmem:[#allocation9 + $0x1c] sm:$0xf]
        %v5801 = vld [vmem:[#allocation9 + $0x20] sm:$0xf]
        %v5802 = vld [vmem:[#allocation9 + $0x24] sm:$0xf]
        %v5803 = vld [vmem:[#allocation9 + $0x28] sm:$0xf]
        %v5804 = vld [vmem:[#allocation9 + $0x2c] sm:$0xf]
        %v5805 = vld [vmem:[#allocation9 + $0x30] sm:$0xf]
        %v5806 = vld [vmem:[#allocation9 + $0x34] sm:$0xf]
        %v5807 = vld [vmem:[#allocation9 + $0x38] sm:$0xf]
        %v5808 = vld [vmem:[#allocation9 + $0x3c] sm:$0xf]
        %v5809 = vld [vmem:[#allocation3] sm:$0xf0]
        %v5810 = vld [vmem:[#allocation9 + $0x40] sm:$0xf]
        %v5811 = vld [vmem:[#allocation9 + $0x44] sm:$0xf]
        %v5812 = vld [vmem:[#allocation9 + $0x48] sm:$0xf]
        %v5813 = vld [vmem:[#allocation9 + $0x4c] sm:$0xf]
        %v5814 = vld [vmem:[#allocation9 + $0x50] sm:$0xf]
        %v5815 = vld [vmem:[#allocation9 + $0x54] sm:$0xf]
        %v5816 = vld [vmem:[#allocation9 + $0x58] sm:$0xf]
        %v5817 = vld [vmem:[#allocation9 + $0x5c] sm:$0xf]
        %v5818 = vld [vmem:[#allocation9 + $0x60] sm:$0xf]
        %v5819 = vld [vmem:[#allocation9 + $0x64] sm:$0xf]
        %v5820 = vld [vmem:[#allocation9 + $0x68] sm:$0xf]
        %v5821 = vld [vmem:[#allocation9 + $0x6c] sm:$0xf]
        %v5822 = vld [vmem:[#allocation9 + $0x70] sm:$0xf]
        %v5823 = vld [vmem:[#allocation9 + $0x74] sm:$0xf]
        %v5824 = vld [vmem:[#allocation9 + $0x78] sm:$0xf]
        %v5825 = vld [vmem:[#allocation9 + $0x7c] sm:$0xf]
        %v5851 = vrot.slane %v5809, 4
        %v5852 = vrot.slane %v5769, 4
        %v5853 = vsel %vm644, %v5851, %v5852
        %v5854 = vrot.slane %v5770, 4
        %v5855 = vsel %vm644, %v5852, %v5854
        %v5856 = vrot.slane %v5771, 4
        %v5857 = vsel %vm644, %v5854, %v5856
        %v5858 = vrot.slane %v5772, 4
        %v5859 = vsel %vm644, %v5856, %v5858
        %v5860 = vrot.slane %v5773, 4
        %v5861 = vsel %vm644, %v5858, %v5860
        %v5862 = vrot.slane %v5774, 4
        %v5863 = vsel %vm644, %v5860, %v5862
        %v5864 = vrot.slane %v5775, 4
        %v5865 = vsel %vm644, %v5862, %v5864
        %v5866 = vrot.slane %v5776, 4
        %v5867 = vsel %vm644, %v5864, %v5866
        %v5868 = vrot.slane %v5777, 4
        %v5869 = vsel %vm644, %v5866, %v5868
        %v5870 = vrot.slane %v5778, 4
        %v5871 = vsel %vm644, %v5868, %v5870
        %v5872 = vrot.slane %v5779, 4
        %v5873 = vsel %vm644, %v5870, %v5872
        %v5874 = vrot.slane %v5780, 4
        %v5875 = vsel %vm644, %v5872, %v5874
        %v5876 = vrot.slane %v5781, 4
        %v5877 = vsel %vm644, %v5874, %v5876
        %v5878 = vrot.slane %v5782, 4
        %v5879 = vsel %vm644, %v5876, %v5878
        %v5880 = vrot.slane %v5783, 4
        %v5881 = vsel %vm644, %v5878, %v5880
        %v5882 = vrot.slane %v5784, 4
        %v5883 = vsel %vm644, %v5880, %v5882
        %v5884 = vrot.slane %v5785, 4
        %v5885 = vsel %vm644, %v5882, %v5884
        %v5886 = vrot.slane %v5786, 4
        %v5887 = vsel %vm644, %v5884, %v5886
        %v5888 = vrot.slane %v5787, 4
        %v5889 = vsel %vm644, %v5886, %v5888
        %v5890 = vrot.slane %v5788, 4
        %v5891 = vsel %vm644, %v5888, %v5890
        %v5892 = vrot.slane %v5789, 4
        %v5893 = vsel %vm644, %v5890, %v5892
        %v5894 = vrot.slane %v5790, 4
        %v5895 = vsel %vm644, %v5892, %v5894
        %v5896 = vrot.slane %v5791, 4
        %v5897 = vsel %vm644, %v5894, %v5896
        %v5898 = vrot.slane %v5792, 4
        %v5899 = vsel %vm644, %v5896, %v5898
        %v5940 = vunpack.c.l.b16 %v5810
        %v5941 = vunpack.c.l.b16 %v5811
        %v5942 = vunpack.c.l.b16 %v5812
        %v5943 = vunpack.c.l.b16 %v5813
        %v5944 = vunpack.c.l.b16 %v5814
        %v5945 = vunpack.c.l.b16 %v5815
        %v5946 = vunpack.c.l.b16 %v5816
        %v5947 = vunpack.c.l.b16 %v5817
        %v5948 = vunpack.c.l.b16 %v5818
        %v5949 = vunpack.c.l.b16 %v5819
        %v5950 = vunpack.c.l.b16 %v5820
        %v5951 = vunpack.c.l.b16 %v5821
        %v5952 = vunpack.c.l.b16 %v5822
        %v5953 = vunpack.c.l.b16 %v5823
        %v5954 = vunpack.c.l.b16 %v5824
        %v5955 = vunpack.c.l.b16 %v5825
        %v5956 = vpack.c.b16 %v5941, %v5940
        %v5957 = vpack.c.b16 %v5943, %v5942
        %v5958 = vpack.c.b16 %v5945, %v5944
        %v5959 = vpack.c.b16 %v5947, %v5946
        %v5960 = vpack.c.b16 %v5949, %v5948
        %v5961 = vpack.c.b16 %v5951, %v5950
        %v5962 = vpack.c.b16 %v5953, %v5952
        %v5963 = vpack.c.b16 %v5955, %v5954
        %5972 = vmatprep.subr.bf16.mxu0 0
        %5973 = vmatpush1.bf16.msra.mxu0 %v5956
        %5974 = vmatprep.subr.bf16.mxu0 0
        %5975 = vmatpush1.bf16.msra.mxu0 %v5957
        %5976 = vmatprep.subr.bf16.mxu0 0
        %5977 = vmatpush1.bf16.msra.mxu0 %v5958
        %5978 = vmatprep.subr.bf16.mxu0 0
        %5979 = vmatpush1.bf16.msra.mxu0 %v5959
        %5980 = vmatprep.subr.bf16.mxu0 0
        %5981 = vmatpush1.bf16.msra.mxu0 %v5960
        %5982 = vmatprep.subr.bf16.mxu0 0
        %5983 = vmatpush1.bf16.msra.mxu0 %v5961
        %5984 = vmatprep.subr.bf16.mxu0 0
        %5985 = vmatpush1.bf16.msra.mxu0 %v5962
        %5986 = vmatprep.subr.bf16.mxu0 0
        %5987 = vmatpush1.bf16.msra.mxu0 %v5963
        %5988 = vmatprep.subr.bf16.mxu0 0
        %5989 = vmatpush1.bf16.msra.mxu0 0
        %5990 = vmatprep.subr.bf16.mxu0 0
        %5991 = vmatpush1.bf16.msra.mxu0 0
        %5992 = vmatprep.subr.bf16.mxu0 0
        %5993 = vmatpush1.bf16.msra.mxu0 0
        %5994 = vmatprep.subr.bf16.mxu0 0
        %5995 = vmatpush1.bf16.msra.mxu0 0
        %5996 = vmatprep.subr.bf16.mxu0 0
        %5997 = vmatpush1.bf16.msra.mxu0 0
        %5998 = vmatprep.subr.bf16.mxu0 0
        %5999 = vmatpush1.bf16.msra.mxu0 0
        %6000 = vmatprep.subr.bf16.mxu0 0
        %6001 = vmatpush1.bf16.msra.mxu0 0
        %6002 = vmatprep.subr.bf16.mxu0 0
        %6003 = vmatpush1.bf16.msra.mxu0 0
        %6004 = vmatprep.mubr.bf16.mxu0 0
        %6005 = vmatmul.mubr.bf16.gmra.mrb[0].mxu0 %v5853
        %v6006 = vpop.f32.mrb[0].mxu0
        %v6007 = vadd.f32 0.0, %v6006
        %v6008 = vpop.f32.mrb[0].mxu0
        %v6009 = vpop.f32.mrb[0].mxu0
        %v6010 = vadd.f32 0.0, %v6009
        %v6011 = vpop.f32.mrb[0].mxu0
        %6012 = vmatprep.mubr.bf16.mxu0 0
        %6013 = vmatmul.mubr.bf16.gmra.mrb[0].mxu0 %v5855
        %v6014 = vpop.f32.mrb[0].mxu0
        %v6015 = vadd.f32 0.0, %v6014
        %v6016 = vpop.f32.mrb[0].mxu0
        %v6017 = vpop.f32.mrb[0].mxu0
        %v6018 = vadd.f32 0.0, %v6017
        %v6019 = vpop.f32.mrb[0].mxu0
        %6020 = vmatprep.mubr.bf16.mxu0 0
        %6021 = vmatmul.mubr.bf16.gmra.mrb[0].mxu0 %v5857
        %v6022 = vpop.f32.mrb[0].mxu0
        %v6023 = vadd.f32 0.0, %v6022
        %v6024 = vpop.f32.mrb[0].mxu0
        %v6025 = vpop.f32.mrb[0].mxu0
        %v6026 = vadd.f32 0.0, %v6025
        %v6027 = vpop.f32.mrb[0].mxu0
        %6028 = vmatprep.mubr.bf16.mxu0 0
        %6029 = vmatmul.mubr.bf16.gmra.mrb[0].mxu0 %v5859
        %v6030 = vpop.f32.mrb[0].mxu0
        %v6031 = vadd.f32 0.0, %v6030
        %v6032 = vpop.f32.mrb[0].mxu0
        %v6033 = vpop.f32.mrb[0].mxu0
        %v6034 = vadd.f32 0.0, %v6033
        %v6035 = vpop.f32.mrb[0].mxu0
        %6036 = vmatprep.mubr.bf16.mxu0 0
        %6037 = vmatmul.mubr.bf16.gmra.mrb[0].mxu0 %v5861
        %v6038 = vpop.f32.mrb[0].mxu0
        %v6039 = vadd.f32 0.0, %v6038
        %v6040 = vpop.f32.mrb[0].mxu0
        %v6041 = vpop.f32.mrb[0].mxu0
        %v6042 = vadd.f32 0.0, %v6041
        %v6043 = vpop.f32.mrb[0].mxu0
        %6044 = vmatprep.mubr.bf16.mxu0 0
        %6045 = vmatmul.mubr.bf16.gmra.mrb[0].mxu0 %v5863
        %v6046 = vpop.f32.mrb[0].mxu0
        %v6047 = vadd.f32 0.0, %v6046
        %v6048 = vpop.f32.mrb[0].mxu0
        %v6049 = vpop.f32.mrb[0].mxu0
        %v6050 = vadd.f32 0.0, %v6049
        %v6051 = vpop.f32.mrb[0].mxu0
        %6052 = vmatprep.mubr.bf16.mxu0 0
        %6053 = vmatmul.mubr.bf16.gmra.mrb[0].mxu0 %v5865
        %v6054 = vpop.f32.mrb[0].mxu0
        %v6055 = vadd.f32 0.0, %v6054
        %v6056 = vpop.f32.mrb[0].mxu0
        %v6057 = vpop.f32.mrb[0].mxu0
        %v6058 = vadd.f32 0.0, %v6057
        %v6059 = vpop.f32.mrb[0].mxu0
        %6060 = vmatprep.mubr.bf16.mxu0 0
        %6061 = vmatmul.mubr.bf16.gmra.mrb[0].mxu0 %v5867
        %v6062 = vpop.f32.mrb[0].mxu0
        %v6063 = vadd.f32 0.0, %v6062
        %v6064 = vpop.f32.mrb[0].mxu0
        %v6065 = vpop.f32.mrb[0].mxu0
        %v6066 = vadd.f32 0.0, %v6065
        %v6067 = vpop.f32.mrb[0].mxu0
        %6068 = vmatprep.mubr.bf16.mxu0 0
        %6069 = vmatmul.mubr.bf16.gmra.mrb[0].mxu0 %v5869
        %v6070 = vpop.f32.mrb[0].mxu0
        %v6071 = vadd.f32 0.0, %v6070
        %v6072 = vpop.f32.mrb[0].mxu0
        %v6073 = vpop.f32.mrb[0].mxu0
        %v6074 = vadd.f32 0.0, %v6073
        %v6075 = vpop.f32.mrb[0].mxu0
        %6076 = vmatprep.mubr.bf16.mxu0 0
        %6077 = vmatmul.mubr.bf16.gmra.mrb[0].mxu0 %v5871
        %v6078 = vpop.f32.mrb[0].mxu0
        %v6079 = vadd.f32 0.0, %v6078
        %v6080 = vpop.f32.mrb[0].mxu0
        %v6081 = vpop.f32.mrb[0].mxu0
        %v6082 = vadd.f32 0.0, %v6081
        %v6083 = vpop.f32.mrb[0].mxu0
        %6084 = vmatprep.mubr.bf16.mxu0 0
        %6085 = vmatmul.mubr.bf16.gmra.mrb[0].mxu0 %v5873
        %v6086 = vpop.f32.mrb[0].mxu0
        %v6087 = vadd.f32 0.0, %v6086
        %v6088 = vpop.f32.mrb[0].mxu0
        %v6089 = vpop.f32.mrb[0].mxu0
        %v6090 = vadd.f32 0.0, %v6089
        %v6091 = vpop.f32.mrb[0].mxu0
        %6092 = vmatprep.mubr.bf16.mxu0 0
        %6093 = vmatmul.mubr.bf16.gmra.mrb[0].mxu0 %v5875
        %v6094 = vpop.f32.mrb[0].mxu0
        %v6095 = vadd.f32 0.0, %v6094
        %v6096 = vpop.f32.mrb[0].mxu0
        %v6097 = vpop.f32.mrb[0].mxu0
        %v6098 = vadd.f32 0.0, %v6097
        %v6099 = vpop.f32.mrb[0].mxu0
        %6100 = vmatprep.mubr.bf16.mxu0 0
        %6101 = vmatmul.mubr.bf16.gmra.mrb[0].mxu0 %v5877
        %v6102 = vpop.f32.mrb[0].mxu0
        %v6103 = vadd.f32 0.0, %v6102
        %v6104 = vpop.f32.mrb[0].mxu0
        %v6105 = vpop.f32.mrb[0].mxu0
        %v6106 = vadd.f32 0.0, %v6105
        %v6107 = vpop.f32.mrb[0].mxu0
        %6108 = vmatprep.mubr.bf16.mxu0 0
        %6109 = vmatmul.mubr.bf16.gmra.mrb[0].mxu0 %v5879
        %v6110 = vpop.f32.mrb[0].mxu0
        %v6111 = vadd.f32 0.0, %v6110
        %v6112 = vpop.f32.mrb[0].mxu0
        %v6113 = vpop.f32.mrb[0].mxu0
        %v6114 = vadd.f32 0.0, %v6113
        %v6115 = vpop.f32.mrb[0].mxu0
        %6116 = vmatprep.mubr.bf16.mxu0 0
        %6117 = vmatmul.mubr.bf16.gmra.mrb[0].mxu0 %v5881
        %v6118 = vpop.f32.mrb[0].mxu0
        %v6119 = vadd.f32 0.0, %v6118
        %v6120 = vpop.f32.mrb[0].mxu0
        %v6121 = vpop.f32.mrb[0].mxu0
        %v6122 = vadd.f32 0.0, %v6121
        %v6123 = vpop.f32.mrb[0].mxu0
        %6124 = vmatprep.mubr.bf16.mxu0 0
        %6125 = vmatmul.mubr.bf16.gmra.mrb[0].mxu0 %v5883
        %v6126 = vpop.f32.mrb[0].mxu0
        %v6127 = vadd.f32 0.0, %v6126
        %v6128 = vpop.f32.mrb[0].mxu0
        %v6129 = vpop.f32.mrb[0].mxu0
        %v6130 = vadd.f32 0.0, %v6129
        %v6131 = vpop.f32.mrb[0].mxu0
        %6132 = vmatprep.mubr.bf16.mxu0 0
        %6133 = vmatmul.mubr.bf16.gmra.mrb[0].mxu0 %v5885
        %v6134 = vpop.f32.mrb[0].mxu0
        %v6135 = vadd.f32 0.0, %v6134
        %v6136 = vpop.f32.mrb[0].mxu0
        %v6137 = vpop.f32.mrb[0].mxu0
        %v6138 = vadd.f32 0.0, %v6137
        %v6139 = vpop.f32.mrb[0].mxu0
        %6140 = vmatprep.mubr.bf16.mxu0 0
        %6141 = vmatmul.mubr.bf16.gmra.mrb[0].mxu0 %v5887
        %v6142 = vpop.f32.mrb[0].mxu0
        %v6143 = vadd.f32 0.0, %v6142
        %v6144 = vpop.f32.mrb[0].mxu0
        %v6145 = vpop.f32.mrb[0].mxu0
        %v6146 = vadd.f32 0.0, %v6145
        %v6147 = vpop.f32.mrb[0].mxu0
        %6148 = vmatprep.mubr.bf16.mxu0 0
        %6149 = vmatmul.mubr.bf16.gmra.mrb[0].mxu0 %v5889
        %v6150 = vpop.f32.mrb[0].mxu0
        %v6151 = vadd.f32 0.0, %v6150
        %v6152 = vpop.f32.mrb[0].mxu0
        %v6153 = vpop.f32.mrb[0].mxu0
        %v6154 = vadd.f32 0.0, %v6153
        %v6155 = vpop.f32.mrb[0].mxu0
        %6156 = vmatprep.mubr.bf16.mxu0 0
        %6157 = vmatmul.mubr.bf16.gmra.mrb[0].mxu0 %v5891
        %v6158 = vpop.f32.mrb[0].mxu0
        %v6159 = vadd.f32 0.0, %v6158
        %v6160 = vpop.f32.mrb[0].mxu0
        %v6161 = vpop.f32.mrb[0].mxu0
        %v6162 = vadd.f32 0.0, %v6161
        %v6163 = vpop.f32.mrb[0].mxu0
        %6164 = vmatprep.mubr.bf16.mxu0 0
        %6165 = vmatmul.mubr.bf16.gmra.mrb[0].mxu0 %v5893
        %v6166 = vpop.f32.mrb[0].mxu0
        %v6167 = vadd.f32 0.0, %v6166
        %v6168 = vpop.f32.mrb[0].mxu0
        %v6169 = vpop.f32.mrb[0].mxu0
        %v6170 = vadd.f32 0.0, %v6169
        %v6171 = vpop.f32.mrb[0].mxu0
        %6172 = vmatprep.mubr.bf16.mxu0 0
        %6173 = vmatmul.mubr.bf16.gmra.mrb[0].mxu0 %v5895
        %v6174 = vpop.f32.mrb[0].mxu0
        %v6175 = vadd.f32 0.0, %v6174
        %v6176 = vpop.f32.mrb[0].mxu0
        %v6177 = vpop.f32.mrb[0].mxu0
        %v6178 = vadd.f32 0.0, %v6177
        %v6179 = vpop.f32.mrb[0].mxu0
        %6180 = vmatprep.mubr.bf16.mxu0 0
        %6181 = vmatmul.mubr.bf16.gmra.mrb[0].mxu0 %v5897
        %v6182 = vpop.f32.mrb[0].mxu0
        %v6183 = vadd.f32 0.0, %v6182
        %v6184 = vpop.f32.mrb[0].mxu0
        %v6185 = vpop.f32.mrb[0].mxu0
        %v6186 = vadd.f32 0.0, %v6185
        %v6187 = vpop.f32.mrb[0].mxu0
        %6188 = vmatprep.mubr.bf16.mxu0 0
        %6189 = vmatmul.mubr.bf16.gmra.mrb[0].mxu0 %v5899
        %v6190 = vpop.f32.mrb[0].mxu0
        %v6191 = vadd.f32 0.0, %v6190
        %v6192 = vpop.f32.mrb[0].mxu0
        %v6193 = vpop.f32.mrb[0].mxu0
        %v6194 = vadd.f32 0.0, %v6193
        %v6195 = vpop.f32.mrb[0].mxu0
        %6196 = vdwg.mxu0
        %v6198 = vshrl.u32 %v5768, 16
        %v6200 = vrot.slane %v6198, 3
        %v6201 = vshll.u32 %v5768, 16
        %v6203 = vrot.slane %v6201, 4
        %v6204 = vor.u32 %v6200, %v6203
        %v6206 = vshrl.u32 %v5769, 16
        %v6208 = vrot.slane %v6206, 3
        %v6209 = vshll.u32 %v5769, 16
        %v6211 = vrot.slane %v6209, 4
        %v6212 = vor.u32 %v6208, %v6211
        %v6213 = vsel %vm1024, %v6204, %v6212
        %v6215 = vshrl.u32 %v5770, 16
        %v6217 = vrot.slane %v6215, 3
        %v6218 = vshll.u32 %v5770, 16
        %v6220 = vrot.slane %v6218, 4
        %v6221 = vor.u32 %v6217, %v6220
        %v6222 = vsel %vm1024, %v6212, %v6221
        %v6224 = vshrl.u32 %v5771, 16
        %v6226 = vrot.slane %v6224, 3
        %v6227 = vshll.u32 %v5771, 16
        %v6229 = vrot.slane %v6227, 4
        %v6230 = vor.u32 %v6226, %v6229
        %v6231 = vsel %vm1024, %v6221, %v6230
        %v6233 = vshrl.u32 %v5772, 16
        %v6235 = vrot.slane %v6233, 3
        %v6236 = vshll.u32 %v5772, 16
        %v6238 = vrot.slane %v6236, 4
        %v6239 = vor.u32 %v6235, %v6238
        %v6240 = vsel %vm1024, %v6230, %v6239
        %v6242 = vshrl.u32 %v5773, 16
        %v6244 = vrot.slane %v6242, 3
        %v6245 = vshll.u32 %v5773, 16
        %v6247 = vrot.slane %v6245, 4
        %v6248 = vor.u32 %v6244, %v6247
        %v6249 = vsel %vm1024, %v6239, %v6248
        %v6251 = vshrl.u32 %v5774, 16
        %v6253 = vrot.slane %v6251, 3
        %v6254 = vshll.u32 %v5774, 16
        %v6256 = vrot.slane %v6254, 4
        %v6257 = vor.u32 %v6253, %v6256
        %v6258 = vsel %vm1024, %v6248, %v6257
        %v6260 = vshrl.u32 %v5775, 16
        %v6262 = vrot.slane %v6260, 3
        %v6263 = vshll.u32 %v5775, 16
        %v6265 = vrot.slane %v6263, 4
        %v6266 = vor.u32 %v6262, %v6265
        %v6267 = vsel %vm1024, %v6257, %v6266
        %v6269 = vshrl.u32 %v5776, 16
        %v6271 = vrot.slane %v6269, 3
        %v6272 = vshll.u32 %v5776, 16
        %v6274 = vrot.slane %v6272, 4
        %v6275 = vor.u32 %v6271, %v6274
        %v6276 = vsel %vm1024, %v6266, %v6275
        %v6278 = vshrl.u32 %v5777, 16
        %v6280 = vrot.slane %v6278, 3
        %v6281 = vshll.u32 %v5777, 16
        %v6283 = vrot.slane %v6281, 4
        %v6284 = vor.u32 %v6280, %v6283
        %v6285 = vsel %vm1024, %v6275, %v6284
        %v6287 = vshrl.u32 %v5778, 16
        %v6289 = vrot.slane %v6287, 3
        %v6290 = vshll.u32 %v5778, 16
        %v6292 = vrot.slane %v6290, 4
        %v6293 = vor.u32 %v6289, %v6292
        %v6294 = vsel %vm1024, %v6284, %v6293
        %v6296 = vshrl.u32 %v5779, 16
        %v6298 = vrot.slane %v6296, 3
        %v6299 = vshll.u32 %v5779, 16
        %v6301 = vrot.slane %v6299, 4
        %v6302 = vor.u32 %v6298, %v6301
        %v6303 = vsel %vm1024, %v6293, %v6302
        %v6305 = vshrl.u32 %v5780, 16
        %v6307 = vrot.slane %v6305, 3
        %v6308 = vshll.u32 %v5780, 16
        %v6310 = vrot.slane %v6308, 4
        %v6311 = vor.u32 %v6307, %v6310
        %v6312 = vsel %vm1024, %v6302, %v6311
        %v6314 = vshrl.u32 %v5781, 16
        %v6316 = vrot.slane %v6314, 3
        %v6317 = vshll.u32 %v5781, 16
        %v6319 = vrot.slane %v6317, 4
        %v6320 = vor.u32 %v6316, %v6319
        %v6321 = vsel %vm1024, %v6311, %v6320
        %v6323 = vshrl.u32 %v5782, 16
        %v6325 = vrot.slane %v6323, 3
        %v6326 = vshll.u32 %v5782, 16
        %v6328 = vrot.slane %v6326, 4
        %v6329 = vor.u32 %v6325, %v6328
        %v6330 = vsel %vm1024, %v6320, %v6329
        %v6332 = vshrl.u32 %v5783, 16
        %v6334 = vrot.slane %v6332, 3
        %v6335 = vshll.u32 %v5783, 16
        %v6337 = vrot.slane %v6335, 4
        %v6338 = vor.u32 %v6334, %v6337
        %v6339 = vsel %vm1024, %v6329, %v6338
        %v6341 = vshrl.u32 %v5784, 16
        %v6343 = vrot.slane %v6341, 3
        %v6344 = vshll.u32 %v5784, 16
        %v6346 = vrot.slane %v6344, 4
        %v6347 = vor.u32 %v6343, %v6346
        %v6348 = vsel %vm1024, %v6338, %v6347
        %v6350 = vshrl.u32 %v5785, 16
        %v6352 = vrot.slane %v6350, 3
        %v6353 = vshll.u32 %v5785, 16
        %v6355 = vrot.slane %v6353, 4
        %v6356 = vor.u32 %v6352, %v6355
        %v6357 = vsel %vm1024, %v6347, %v6356
        %v6359 = vshrl.u32 %v5786, 16
        %v6361 = vrot.slane %v6359, 3
        %v6362 = vshll.u32 %v5786, 16
        %v6364 = vrot.slane %v6362, 4
        %v6365 = vor.u32 %v6361, %v6364
        %v6366 = vsel %vm1024, %v6356, %v6365
        %v6368 = vshrl.u32 %v5787, 16
        %v6370 = vrot.slane %v6368, 3
        %v6371 = vshll.u32 %v5787, 16
        %v6373 = vrot.slane %v6371, 4
        %v6374 = vor.u32 %v6370, %v6373
        %v6375 = vsel %vm1024, %v6365, %v6374
        %v6377 = vshrl.u32 %v5788, 16
        %v6379 = vrot.slane %v6377, 3
        %v6380 = vshll.u32 %v5788, 16
        %v6382 = vrot.slane %v6380, 4
        %v6383 = vor.u32 %v6379, %v6382
        %v6384 = vsel %vm1024, %v6374, %v6383
        %v6386 = vshrl.u32 %v5789, 16
        %v6388 = vrot.slane %v6386, 3
        %v6389 = vshll.u32 %v5789, 16
        %v6391 = vrot.slane %v6389, 4
        %v6392 = vor.u32 %v6388, %v6391
        %v6393 = vsel %vm1024, %v6383, %v6392
        %v6395 = vshrl.u32 %v5790, 16
        %v6397 = vrot.slane %v6395, 3
        %v6398 = vshll.u32 %v5790, 16
        %v6400 = vrot.slane %v6398, 4
        %v6401 = vor.u32 %v6397, %v6400
        %v6402 = vsel %vm1024, %v6392, %v6401
        %v6404 = vshrl.u32 %v5791, 16
        %v6406 = vrot.slane %v6404, 3
        %v6407 = vshll.u32 %v5791, 16
        %v6409 = vrot.slane %v6407, 4
        %v6410 = vor.u32 %v6406, %v6409
        %v6411 = vsel %vm1024, %v6401, %v6410
        %v6413 = vshrl.u32 %v5792, 16
        %v6415 = vrot.slane %v6413, 3
        %v6416 = vshll.u32 %v5792, 16
        %v6418 = vrot.slane %v6416, 4
        %v6419 = vor.u32 %v6415, %v6418
        %v6420 = vsel %vm1024, %v6410, %v6419
        %v6461 = vunpack.c.l.b16 %v5793
        %v6462 = vunpack.c.l.b16 %v5794
        %v6463 = vunpack.c.l.b16 %v5795
        %v6464 = vunpack.c.l.b16 %v5796
        %v6465 = vunpack.c.l.b16 %v5797
        %v6466 = vunpack.c.l.b16 %v5798
        %v6467 = vunpack.c.l.b16 %v5799
        %v6468 = vunpack.c.l.b16 %v5800
        %v6469 = vunpack.c.l.b16 %v5801
        %v6470 = vunpack.c.l.b16 %v5802
        %v6471 = vunpack.c.l.b16 %v5803
        %v6472 = vunpack.c.l.b16 %v5804
        %v6473 = vunpack.c.l.b16 %v5805
        %v6474 = vunpack.c.l.b16 %v5806
        %v6475 = vunpack.c.l.b16 %v5807
        %v6476 = vunpack.c.l.b16 %v5808
        %v6477 = vpack.c.b16 %v6462, %v6461
        %v6478 = vpack.c.b16 %v6464, %v6463
        %v6479 = vpack.c.b16 %v6466, %v6465
        %v6480 = vpack.c.b16 %v6468, %v6467
        %v6481 = vpack.c.b16 %v6470, %v6469
        %v6482 = vpack.c.b16 %v6472, %v6471
        %v6483 = vpack.c.b16 %v6474, %v6473
        %v6484 = vpack.c.b16 %v6476, %v6475
        %6493 = vmatprep.subr.bf16.mxu0 0
        %6494 = vmatpush1.bf16.msra.mxu0 %v6477
        %6495 = vmatprep.subr.bf16.mxu0 0
        %6496 = vmatpush1.bf16.msra.mxu0 %v6478
        %6497 = vmatprep.subr.bf16.mxu0 0
        %6498 = vmatpush1.bf16.msra.mxu0 %v6479
        %6499 = vmatprep.subr.bf16.mxu0 0
        %6500 = vmatpush1.bf16.msra.mxu0 %v6480
        %6501 = vmatprep.subr.bf16.mxu0 0
        %6502 = vmatpush1.bf16.msra.mxu0 %v6481
        %6503 = vmatprep.subr.bf16.mxu0 0
        %6504 = vmatpush1.bf16.msra.mxu0 %v6482
        %6505 = vmatprep.subr.bf16.mxu0 0
        %6506 = vmatpush1.bf16.msra.mxu0 %v6483
        %6507 = vmatprep.subr.bf16.mxu0 0
        %6508 = vmatpush1.bf16.msra.mxu0 %v6484
        %6509 = vmatprep.subr.bf16.mxu0 0
        %6510 = vmatpush1.bf16.msra.mxu0 0
        %6511 = vmatprep.subr.bf16.mxu0 0
        %6512 = vmatpush1.bf16.msra.mxu0 0
        %6513 = vmatprep.subr.bf16.mxu0 0
        %6514 = vmatpush1.bf16.msra.mxu0 0
        %6515 = vmatprep.subr.bf16.mxu0 0
        %6516 = vmatpush1.bf16.msra.mxu0 0
        %6517 = vmatprep.subr.bf16.mxu0 0
        %6518 = vmatpush1.bf16.msra.mxu0 0
        %6519 = vmatprep.subr.bf16.mxu0 0
        %6520 = vmatpush1.bf16.msra.mxu0 0
        %6521 = vmatprep.subr.bf16.mxu0 0
        %6522 = vmatpush1.bf16.msra.mxu0 0
        %6523 = vmatprep.subr.bf16.mxu0 0
        %6524 = vmatpush1.bf16.msra.mxu0 0
        %6525 = vmatprep.mubr.bf16.mxu0 0
        %6526 = vmatmul.mubr.bf16.gmra.mrb[0].mxu0 %v6213
        %v6527 = vpop.f32.mrb[0].mxu0
        %v6528 = vadd.f32 %v6007, %v6527
        %v6529 = vpop.f32.mrb[0].mxu0
        %v6530 = vpop.f32.mrb[0].mxu0
        %v6531 = vadd.f32 %v6010, %v6530
        %v6532 = vpop.f32.mrb[0].mxu0
        %6533 = vmatprep.mubr.bf16.mxu0 0
        %6534 = vmatmul.mubr.bf16.gmra.mrb[0].mxu0 %v6222
        %v6535 = vpop.f32.mrb[0].mxu0
        %v6536 = vadd.f32 %v6015, %v6535
        %v6537 = vpop.f32.mrb[0].mxu0
        %v6538 = vpop.f32.mrb[0].mxu0
        %v6539 = vadd.f32 %v6018, %v6538
        %v6540 = vpop.f32.mrb[0].mxu0
        %6541 = vmatprep.mubr.bf16.mxu0 0
        %6542 = vmatmul.mubr.bf16.gmra.mrb[0].mxu0 %v6231
        %v6543 = vpop.f32.mrb[0].mxu0
        %v6544 = vadd.f32 %v6023, %v6543
        %v6545 = vpop.f32.mrb[0].mxu0
        %v6546 = vpop.f32.mrb[0].mxu0
        %v6547 = vadd.f32 %v6026, %v6546
        %v6548 = vpop.f32.mrb[0].mxu0
        %6549 = vmatprep.mubr.bf16.mxu0 0
        %6550 = vmatmul.mubr.bf16.gmra.mrb[0].mxu0 %v6240
        %v6551 = vpop.f32.mrb[0].mxu0
        %v6552 = vadd.f32 %v6031, %v6551
        %v6553 = vpop.f32.mrb[0].mxu0
        %v6554 = vpop.f32.mrb[0].mxu0
        %v6555 = vadd.f32 %v6034, %v6554
        %v6556 = vpop.f32.mrb[0].mxu0
        %6557 = vmatprep.mubr.bf16.mxu0 0
        %6558 = vmatmul.mubr.bf16.gmra.mrb[0].mxu0 %v6249
        %v6559 = vpop.f32.mrb[0].mxu0
        %v6560 = vadd.f32 %v6039, %v6559
        %v6561 = vpop.f32.mrb[0].mxu0
        %v6562 = vpop.f32.mrb[0].mxu0
        %v6563 = vadd.f32 %v6042, %v6562
        %v6564 = vpop.f32.mrb[0].mxu0
        %6565 = vmatprep.mubr.bf16.mxu0 0
        %6566 = vmatmul.mubr.bf16.gmra.mrb[0].mxu0 %v6258
        %v6567 = vpop.f32.mrb[0].mxu0
        %v6568 = vadd.f32 %v6047, %v6567
        %v6569 = vpop.f32.mrb[0].mxu0
        %v6570 = vpop.f32.mrb[0].mxu0
        %v6571 = vadd.f32 %v6050, %v6570
        %v6572 = vpop.f32.mrb[0].mxu0
        %6573 = vmatprep.mubr.bf16.mxu0 0
        %6574 = vmatmul.mubr.bf16.gmra.mrb[0].mxu0 %v6267
        %v6575 = vpop.f32.mrb[0].mxu0
        %v6576 = vadd.f32 %v6055, %v6575
        %v6577 = vpop.f32.mrb[0].mxu0
        %v6578 = vpop.f32.mrb[0].mxu0
        %v6579 = vadd.f32 %v6058, %v6578
        %v6580 = vpop.f32.mrb[0].mxu0
        %6581 = vmatprep.mubr.bf16.mxu0 0
        %6582 = vmatmul.mubr.bf16.gmra.mrb[0].mxu0 %v6276
        %v6583 = vpop.f32.mrb[0].mxu0
        %v6584 = vadd.f32 %v6063, %v6583
        %v6585 = vpop.f32.mrb[0].mxu0
        %v6586 = vpop.f32.mrb[0].mxu0
        %v6587 = vadd.f32 %v6066, %v6586
        %v6588 = vpop.f32.mrb[0].mxu0
        %6589 = vmatprep.mubr.bf16.mxu0 0
        %6590 = vmatmul.mubr.bf16.gmra.mrb[0].mxu0 %v6285
        %v6591 = vpop.f32.mrb[0].mxu0
        %v6592 = vadd.f32 %v6071, %v6591
        %v6593 = vpop.f32.mrb[0].mxu0
        %v6594 = vpop.f32.mrb[0].mxu0
        %v6595 = vadd.f32 %v6074, %v6594
        %v6596 = vpop.f32.mrb[0].mxu0
        %6597 = vmatprep.mubr.bf16.mxu0 0
        %6598 = vmatmul.mubr.bf16.gmra.mrb[0].mxu0 %v6294
        %v6599 = vpop.f32.mrb[0].mxu0
        %v6600 = vadd.f32 %v6079, %v6599
        %v6601 = vpop.f32.mrb[0].mxu0
        %v6602 = vpop.f32.mrb[0].mxu0
        %v6603 = vadd.f32 %v6082, %v6602
        %v6604 = vpop.f32.mrb[0].mxu0
        %6605 = vmatprep.mubr.bf16.mxu0 0
        %6606 = vmatmul.mubr.bf16.gmra.mrb[0].mxu0 %v6303
        %v6607 = vpop.f32.mrb[0].mxu0
        %v6608 = vadd.f32 %v6087, %v6607
        %v6609 = vpop.f32.mrb[0].mxu0
        %v6610 = vpop.f32.mrb[0].mxu0
        %v6611 = vadd.f32 %v6090, %v6610
        %v6612 = vpop.f32.mrb[0].mxu0
        %6613 = vmatprep.mubr.bf16.mxu0 0
        %6614 = vmatmul.mubr.bf16.gmra.mrb[0].mxu0 %v6312
        %v6615 = vpop.f32.mrb[0].mxu0
        %v6616 = vadd.f32 %v6095, %v6615
        %v6617 = vpop.f32.mrb[0].mxu0
        %v6618 = vpop.f32.mrb[0].mxu0
        %v6619 = vadd.f32 %v6098, %v6618
        %v6620 = vpop.f32.mrb[0].mxu0
        %6621 = vmatprep.mubr.bf16.mxu0 0
        %6622 = vmatmul.mubr.bf16.gmra.mrb[0].mxu0 %v6321
        %v6623 = vpop.f32.mrb[0].mxu0
        %v6624 = vadd.f32 %v6103, %v6623
        %v6625 = vpop.f32.mrb[0].mxu0
        %v6626 = vpop.f32.mrb[0].mxu0
        %v6627 = vadd.f32 %v6106, %v6626
        %v6628 = vpop.f32.mrb[0].mxu0
        %6629 = vmatprep.mubr.bf16.mxu0 0
        %6630 = vmatmul.mubr.bf16.gmra.mrb[0].mxu0 %v6330
        %v6631 = vpop.f32.mrb[0].mxu0
        %v6632 = vadd.f32 %v6111, %v6631
        %v6633 = vpop.f32.mrb[0].mxu0
        %v6634 = vpop.f32.mrb[0].mxu0
        %v6635 = vadd.f32 %v6114, %v6634
        %v6636 = vpop.f32.mrb[0].mxu0
        %6637 = vmatprep.mubr.bf16.mxu0 0
        %6638 = vmatmul.mubr.bf16.gmra.mrb[0].mxu0 %v6339
        %v6639 = vpop.f32.mrb[0].mxu0
        %v6640 = vadd.f32 %v6119, %v6639
        %v6641 = vpop.f32.mrb[0].mxu0
        %v6642 = vpop.f32.mrb[0].mxu0
        %v6643 = vadd.f32 %v6122, %v6642
        %v6644 = vpop.f32.mrb[0].mxu0
        %6645 = vmatprep.mubr.bf16.mxu0 0
        %6646 = vmatmul.mubr.bf16.gmra.mrb[0].mxu0 %v6348
        %v6647 = vpop.f32.mrb[0].mxu0
        %v6648 = vadd.f32 %v6127, %v6647
        %v6649 = vpop.f32.mrb[0].mxu0
        %v6650 = vpop.f32.mrb[0].mxu0
        %v6651 = vadd.f32 %v6130, %v6650
        %v6652 = vpop.f32.mrb[0].mxu0
        %6653 = vmatprep.mubr.bf16.mxu0 0
        %6654 = vmatmul.mubr.bf16.gmra.mrb[0].mxu0 %v6357
        %v6655 = vpop.f32.mrb[0].mxu0
        %v6656 = vadd.f32 %v6135, %v6655
        %v6657 = vpop.f32.mrb[0].mxu0
        %v6658 = vpop.f32.mrb[0].mxu0
        %v6659 = vadd.f32 %v6138, %v6658
        %v6660 = vpop.f32.mrb[0].mxu0
        %6661 = vmatprep.mubr.bf16.mxu0 0
        %6662 = vmatmul.mubr.bf16.gmra.mrb[0].mxu0 %v6366
        %v6663 = vpop.f32.mrb[0].mxu0
        %v6664 = vadd.f32 %v6143, %v6663
        %v6665 = vpop.f32.mrb[0].mxu0
        %v6666 = vpop.f32.mrb[0].mxu0
        %v6667 = vadd.f32 %v6146, %v6666
        %v6668 = vpop.f32.mrb[0].mxu0
        %6669 = vmatprep.mubr.bf16.mxu0 0
        %6670 = vmatmul.mubr.bf16.gmra.mrb[0].mxu0 %v6375
        %v6671 = vpop.f32.mrb[0].mxu0
        %v6672 = vadd.f32 %v6151, %v6671
        %v6673 = vpop.f32.mrb[0].mxu0
        %v6674 = vpop.f32.mrb[0].mxu0
        %v6675 = vadd.f32 %v6154, %v6674
        %v6676 = vpop.f32.mrb[0].mxu0
        %6677 = vmatprep.mubr.bf16.mxu0 0
        %6678 = vmatmul.mubr.bf16.gmra.mrb[0].mxu0 %v6384
        %v6679 = vpop.f32.mrb[0].mxu0
        %v6680 = vadd.f32 %v6159, %v6679
        %v6681 = vpop.f32.mrb[0].mxu0
        %v6682 = vpop.f32.mrb[0].mxu0
        %v6683 = vadd.f32 %v6162, %v6682
        %v6684 = vpop.f32.mrb[0].mxu0
        %6685 = vmatprep.mubr.bf16.mxu0 0
        %6686 = vmatmul.mubr.bf16.gmra.mrb[0].mxu0 %v6393
        %v6687 = vpop.f32.mrb[0].mxu0
        %v6688 = vadd.f32 %v6167, %v6687
        %v6689 = vpop.f32.mrb[0].mxu0
        %v6690 = vpop.f32.mrb[0].mxu0
        %v6691 = vadd.f32 %v6170, %v6690
        %v6692 = vpop.f32.mrb[0].mxu0
        %6693 = vmatprep.mubr.bf16.mxu0 0
        %6694 = vmatmul.mubr.bf16.gmra.mrb[0].mxu0 %v6402
        %v6695 = vpop.f32.mrb[0].mxu0
        %v6696 = vadd.f32 %v6175, %v6695
        %v6697 = vpop.f32.mrb[0].mxu0
        %v6698 = vpop.f32.mrb[0].mxu0
        %v6699 = vadd.f32 %v6178, %v6698
        %v6700 = vpop.f32.mrb[0].mxu0
        %6701 = vmatprep.mubr.bf16.mxu0 0
        %6702 = vmatmul.mubr.bf16.gmra.mrb[0].mxu0 %v6411
        %v6703 = vpop.f32.mrb[0].mxu0
        %v6704 = vadd.f32 %v6183, %v6703
        %v6705 = vpop.f32.mrb[0].mxu0
        %v6706 = vpop.f32.mrb[0].mxu0
        %v6707 = vadd.f32 %v6186, %v6706
        %v6708 = vpop.f32.mrb[0].mxu0
        %6709 = vmatprep.mubr.bf16.mxu0 0
        %6710 = vmatmul.mubr.bf16.gmra.mrb[0].mxu0 %v6420
        %v6711 = vpop.f32.mrb[0].mxu0
        %v6712 = vadd.f32 %v6191, %v6711
        %v6713 = vpop.f32.mrb[0].mxu0
        %v6714 = vpop.f32.mrb[0].mxu0
        %v6715 = vadd.f32 %v6194, %v6714
        %v6716 = vpop.f32.mrb[0].mxu0
        %6717 = vdwg.mxu0
        %v6718 = vld [vmem:[#allocation3 + $0xc0] sm:$0x1f]
        %v6719 = vld [vmem:[#allocation9 + $0x80] sm:$0xf]
        %v6720 = vld [vmem:[#allocation9 + $0x84] sm:$0xf]
        %v6721 = vld [vmem:[#allocation9 + $0x88] sm:$0xf]
        %v6722 = vld [vmem:[#allocation9 + $0x8c] sm:$0xf]
        %v6723 = vld [vmem:[#allocation9 + $0x90] sm:$0xf]
        %v6724 = vld [vmem:[#allocation9 + $0x94] sm:$0xf]
        %v6725 = vld [vmem:[#allocation9 + $0x98] sm:$0xf]
        %v6726 = vld [vmem:[#allocation9 + $0x9c] sm:$0xf]
        %v6727 = vld [vmem:[#allocation9 + $0xa0] sm:$0xf]
        %v6728 = vld [vmem:[#allocation9 + $0xa4] sm:$0xf]
        %v6729 = vld [vmem:[#allocation9 + $0xa8] sm:$0xf]
        %v6730 = vld [vmem:[#allocation9 + $0xac] sm:$0xf]
        %v6731 = vld [vmem:[#allocation9 + $0xb0] sm:$0xf]
        %v6732 = vld [vmem:[#allocation9 + $0xb4] sm:$0xf]
        %v6733 = vld [vmem:[#allocation9 + $0xb8] sm:$0xf]
        %v6734 = vld [vmem:[#allocation9 + $0xbc] sm:$0xf]
        %v6736 = vshrl.u32 %v5809, 16
        %v6738 = vrot.slane %v6736, 4
        %v6739 = vshll.u32 %v5809, 16
        %v6741 = vrot.slane %v6739, 5
        %v6742 = vor.u32 %v6738, %v6741
        %v6743 = vrot.slane %v6206, 4
        %v6744 = vrot.slane %v6209, 5
        %v6745 = vor.u32 %v6743, %v6744
        %v6746 = vsel %vm1617, %v6742, %v6745
        %v6747 = vrot.slane %v6215, 4
        %v6748 = vrot.slane %v6218, 5
        %v6749 = vor.u32 %v6747, %v6748
        %v6750 = vsel %vm1617, %v6745, %v6749
        %v6751 = vrot.slane %v6224, 4
        %v6752 = vrot.slane %v6227, 5
        %v6753 = vor.u32 %v6751, %v6752
        %v6754 = vsel %vm1617, %v6749, %v6753
        %v6755 = vrot.slane %v6233, 4
        %v6756 = vrot.slane %v6236, 5
        %v6757 = vor.u32 %v6755, %v6756
        %v6758 = vsel %vm1617, %v6753, %v6757
        %v6759 = vrot.slane %v6242, 4
        %v6760 = vrot.slane %v6245, 5
        %v6761 = vor.u32 %v6759, %v6760
        %v6762 = vsel %vm1617, %v6757, %v6761
        %v6763 = vrot.slane %v6251, 4
        %v6764 = vrot.slane %v6254, 5
        %v6765 = vor.u32 %v6763, %v6764
        %v6766 = vsel %vm1617, %v6761, %v6765
        %v6767 = vrot.slane %v6260, 4
        %v6768 = vrot.slane %v6263, 5
        %v6769 = vor.u32 %v6767, %v6768
        %v6770 = vsel %vm1617, %v6765, %v6769
        %v6771 = vrot.slane %v6269, 4
        %v6772 = vrot.slane %v6272, 5
        %v6773 = vor.u32 %v6771, %v6772
        %v6774 = vsel %vm1617, %v6769, %v6773
        %v6775 = vrot.slane %v6278, 4
        %v6776 = vrot.slane %v6281, 5
        %v6777 = vor.u32 %v6775, %v6776
        %v6778 = vsel %vm1617, %v6773, %v6777
        %v6779 = vrot.slane %v6287, 4
        %v6780 = vrot.slane %v6290, 5
        %v6781 = vor.u32 %v6779, %v6780
        %v6782 = vsel %vm1617, %v6777, %v6781
        %v6783 = vrot.slane %v6296, 4
        %v6784 = vrot.slane %v6299, 5
        %v6785 = vor.u32 %v6783, %v6784
        %v6786 = vsel %vm1617, %v6781, %v6785
        %v6787 = vrot.slane %v6305, 4
        %v6788 = vrot.slane %v6308, 5
        %v6789 = vor.u32 %v6787, %v6788
        %v6790 = vsel %vm1617, %v6785, %v6789
        %v6791 = vrot.slane %v6314, 4
        %v6792 = vrot.slane %v6317, 5
        %v6793 = vor.u32 %v6791, %v6792
        %v6794 = vsel %vm1617, %v6789, %v6793
        %v6795 = vrot.slane %v6323, 4
        %v6796 = vrot.slane %v6326, 5
        %v6797 = vor.u32 %v6795, %v6796
        %v6798 = vsel %vm1617, %v6793, %v6797
        %v6799 = vrot.slane %v6332, 4
        %v6800 = vrot.slane %v6335, 5
        %v6801 = vor.u32 %v6799, %v6800
        %v6802 = vsel %vm1617, %v6797, %v6801
        %v6803 = vrot.slane %v6341, 4
        %v6804 = vrot.slane %v6344, 5
        %v6805 = vor.u32 %v6803, %v6804
        %v6806 = vsel %vm1617, %v6801, %v6805
        %v6807 = vrot.slane %v6350, 4
        %v6808 = vrot.slane %v6353, 5
        %v6809 = vor.u32 %v6807, %v6808
        %v6810 = vsel %vm1617, %v6805, %v6809
        %v6811 = vrot.slane %v6359, 4
        %v6812 = vrot.slane %v6362, 5
        %v6813 = vor.u32 %v6811, %v6812
        %v6814 = vsel %vm1617, %v6809, %v6813
        %v6815 = vrot.slane %v6368, 4
        %v6816 = vrot.slane %v6371, 5
        %v6817 = vor.u32 %v6815, %v6816
        %v6818 = vsel %vm1617, %v6813, %v6817
        %v6819 = vrot.slane %v6377, 4
        %v6820 = vrot.slane %v6380, 5
        %v6821 = vor.u32 %v6819, %v6820
        %v6822 = vsel %vm1617, %v6817, %v6821
        %v6823 = vrot.slane %v6386, 4
        %v6824 = vrot.slane %v6389, 5
        %v6825 = vor.u32 %v6823, %v6824
        %v6826 = vsel %vm1617, %v6821, %v6825
        %v6827 = vrot.slane %v6395, 4
        %v6828 = vrot.slane %v6398, 5
        %v6829 = vor.u32 %v6827, %v6828
        %v6830 = vsel %vm1617, %v6825, %v6829
        %v6831 = vrot.slane %v6404, 4
        %v6832 = vrot.slane %v6407, 5
        %v6833 = vor.u32 %v6831, %v6832
        %v6834 = vsel %vm1617, %v6829, %v6833
        %v6836 = vshrl.u32 %v6718, 16
        %v6838 = vrot.slane %v6836, 4
        %v6839 = vshll.u32 %v6718, 16
        %v6841 = vrot.slane %v6839, 5
        %v6842 = vor.u32 %v6838, %v6841
        %v6843 = vsel %vm1617, %v6833, %v6842
        %v6884 = vunpack.c.l.b16 %v6719
        %v6885 = vunpack.c.l.b16 %v6720
        %v6886 = vunpack.c.l.b16 %v6721
        %v6887 = vunpack.c.l.b16 %v6722
        %v6888 = vunpack.c.l.b16 %v6723
        %v6889 = vunpack.c.l.b16 %v6724
        %v6890 = vunpack.c.l.b16 %v6725
        %v6891 = vunpack.c.l.b16 %v6726
        %v6892 = vunpack.c.l.b16 %v6727
        %v6893 = vunpack.c.l.b16 %v6728
        %v6894 = vunpack.c.l.b16 %v6729
        %v6895 = vunpack.c.l.b16 %v6730
        %v6896 = vunpack.c.l.b16 %v6731
        %v6897 = vunpack.c.l.b16 %v6732
        %v6898 = vunpack.c.l.b16 %v6733
        %v6899 = vunpack.c.l.b16 %v6734
        %v6900 = vpack.c.b16 %v6885, %v6884
        %v6901 = vpack.c.b16 %v6887, %v6886
        %v6902 = vpack.c.b16 %v6889, %v6888
        %v6903 = vpack.c.b16 %v6891, %v6890
        %v6904 = vpack.c.b16 %v6893, %v6892
        %v6905 = vpack.c.b16 %v6895, %v6894
        %v6906 = vpack.c.b16 %v6897, %v6896
        %v6907 = vpack.c.b16 %v6899, %v6898
        %6916 = vmatprep.subr.bf16.mxu0 0
        %6917 = vmatpush1.bf16.msra.mxu0 %v6900
        %6918 = vmatprep.subr.bf16.mxu0 0
        %6919 = vmatpush1.bf16.msra.mxu0 %v6901
        %6920 = vmatprep.subr.bf16.mxu0 0
        %6921 = vmatpush1.bf16.msra.mxu0 %v6902
        %6922 = vmatprep.subr.bf16.mxu0 0
        %6923 = vmatpush1.bf16.msra.mxu0 %v6903
        %6924 = vmatprep.subr.bf16.mxu0 0
        %6925 = vmatpush1.bf16.msra.mxu0 %v6904
        %6926 = vmatprep.subr.bf16.mxu0 0
        %6927 = vmatpush1.bf16.msra.mxu0 %v6905
        %6928 = vmatprep.subr.bf16.mxu0 0
        %6929 = vmatpush1.bf16.msra.mxu0 %v6906
        %6930 = vmatprep.subr.bf16.mxu0 0
        %6931 = vmatpush1.bf16.msra.mxu0 %v6907
        %6932 = vmatprep.subr.bf16.mxu0 0
        %6933 = vmatpush1.bf16.msra.mxu0 0
        %6934 = vmatprep.subr.bf16.mxu0 0
        %6935 = vmatpush1.bf16.msra.mxu0 0
        %6936 = vmatprep.subr.bf16.mxu0 0
        %6937 = vmatpush1.bf16.msra.mxu0 0
        %6938 = vmatprep.subr.bf16.mxu0 0
        %6939 = vmatpush1.bf16.msra.mxu0 0
        %6940 = vmatprep.subr.bf16.mxu0 0
        %6941 = vmatpush1.bf16.msra.mxu0 0
        %6942 = vmatprep.subr.bf16.mxu0 0
        %6943 = vmatpush1.bf16.msra.mxu0 0
        %6944 = vmatprep.subr.bf16.mxu0 0
        %6945 = vmatpush1.bf16.msra.mxu0 0
        %6946 = vmatprep.subr.bf16.mxu0 0
        %6947 = vmatpush1.bf16.msra.mxu0 0
        %6948 = vmatprep.mubr.bf16.mxu0 0
        %6949 = vmatmul.mubr.bf16.gmra.mrb[0].mxu0 %v6746
        %v6950 = vpop.f32.mrb[0].mxu0
        %v6951 = vadd.f32 0.0, %v6950
        %v6952 = vpop.f32.mrb[0].mxu0
        %v6953 = vpop.f32.mrb[0].mxu0
        %v6954 = vadd.f32 0.0, %v6953
        %v6955 = vpop.f32.mrb[0].mxu0
        %6956 = vmatprep.mubr.bf16.mxu0 0
        %6957 = vmatmul.mubr.bf16.gmra.mrb[0].mxu0 %v6750
        %v6958 = vpop.f32.mrb[0].mxu0
        %v6959 = vadd.f32 0.0, %v6958
        %v6960 = vpop.f32.mrb[0].mxu0
        %v6961 = vpop.f32.mrb[0].mxu0
        %v6962 = vadd.f32 0.0, %v6961
        %v6963 = vpop.f32.mrb[0].mxu0
        %6964 = vmatprep.mubr.bf16.mxu0 0
        %6965 = vmatmul.mubr.bf16.gmra.mrb[0].mxu0 %v6754
        %v6966 = vpop.f32.mrb[0].mxu0
        %v6967 = vadd.f32 0.0, %v6966
        %v6968 = vpop.f32.mrb[0].mxu0
        %v6969 = vpop.f32.mrb[0].mxu0
        %v6970 = vadd.f32 0.0, %v6969
        %v6971 = vpop.f32.mrb[0].mxu0
        %6972 = vmatprep.mubr.bf16.mxu0 0
        %6973 = vmatmul.mubr.bf16.gmra.mrb[0].mxu0 %v6758
        %v6974 = vpop.f32.mrb[0].mxu0
        %v6975 = vadd.f32 0.0, %v6974
        %v6976 = vpop.f32.mrb[0].mxu0
        %v6977 = vpop.f32.mrb[0].mxu0
        %v6978 = vadd.f32 0.0, %v6977
        %v6979 = vpop.f32.mrb[0].mxu0
        %6980 = vmatprep.mubr.bf16.mxu0 0
        %6981 = vmatmul.mubr.bf16.gmra.mrb[0].mxu0 %v6762
        %v6982 = vpop.f32.mrb[0].mxu0
        %v6983 = vadd.f32 0.0, %v6982
        %v6984 = vpop.f32.mrb[0].mxu0
        %v6985 = vpop.f32.mrb[0].mxu0
        %v6986 = vadd.f32 0.0, %v6985
        %v6987 = vpop.f32.mrb[0].mxu0
        %6988 = vmatprep.mubr.bf16.mxu0 0
        %6989 = vmatmul.mubr.bf16.gmra.mrb[0].mxu0 %v6766
        %v6990 = vpop.f32.mrb[0].mxu0
        %v6991 = vadd.f32 0.0, %v6990
        %v6992 = vpop.f32.mrb[0].mxu0
        %v6993 = vpop.f32.mrb[0].mxu0
        %v6994 = vadd.f32 0.0, %v6993
        %v6995 = vpop.f32.mrb[0].mxu0
        %6996 = vmatprep.mubr.bf16.mxu0 0
        %6997 = vmatmul.mubr.bf16.gmra.mrb[0].mxu0 %v6770
        %v6998 = vpop.f32.mrb[0].mxu0
        %v6999 = vadd.f32 0.0, %v6998
        %v7000 = vpop.f32.mrb[0].mxu0
        %v7001 = vpop.f32.mrb[0].mxu0
        %v7002 = vadd.f32 0.0, %v7001
        %v7003 = vpop.f32.mrb[0].mxu0
        %7004 = vmatprep.mubr.bf16.mxu0 0
        %7005 = vmatmul.mubr.bf16.gmra.mrb[0].mxu0 %v6774
        %v7006 = vpop.f32.mrb[0].mxu0
        %v7007 = vadd.f32 0.0, %v7006
        %v7008 = vpop.f32.mrb[0].mxu0
        %v7009 = vpop.f32.mrb[0].mxu0
        %v7010 = vadd.f32 0.0, %v7009
        %v7011 = vpop.f32.mrb[0].mxu0
        %7012 = vmatprep.mubr.bf16.mxu0 0
        %7013 = vmatmul.mubr.bf16.gmra.mrb[0].mxu0 %v6778
        %v7014 = vpop.f32.mrb[0].mxu0
        %v7015 = vadd.f32 0.0, %v7014
        %v7016 = vpop.f32.mrb[0].mxu0
        %v7017 = vpop.f32.mrb[0].mxu0
        %v7018 = vadd.f32 0.0, %v7017
        %v7019 = vpop.f32.mrb[0].mxu0
        %7020 = vmatprep.mubr.bf16.mxu0 0
        %7021 = vmatmul.mubr.bf16.gmra.mrb[0].mxu0 %v6782
        %v7022 = vpop.f32.mrb[0].mxu0
        %v7023 = vadd.f32 0.0, %v7022
        %v7024 = vpop.f32.mrb[0].mxu0
        %v7025 = vpop.f32.mrb[0].mxu0
        %v7026 = vadd.f32 0.0, %v7025
        %v7027 = vpop.f32.mrb[0].mxu0
        %7028 = vmatprep.mubr.bf16.mxu0 0
        %7029 = vmatmul.mubr.bf16.gmra.mrb[0].mxu0 %v6786
        %v7030 = vpop.f32.mrb[0].mxu0
        %v7031 = vadd.f32 0.0, %v7030
        %v7032 = vpop.f32.mrb[0].mxu0
        %v7033 = vpop.f32.mrb[0].mxu0
        %v7034 = vadd.f32 0.0, %v7033
        %v7035 = vpop.f32.mrb[0].mxu0
        %7036 = vmatprep.mubr.bf16.mxu0 0
        %7037 = vmatmul.mubr.bf16.gmra.mrb[0].mxu0 %v6790
        %v7038 = vpop.f32.mrb[0].mxu0
        %v7039 = vadd.f32 0.0, %v7038
        %v7040 = vpop.f32.mrb[0].mxu0
        %v7041 = vpop.f32.mrb[0].mxu0
        %v7042 = vadd.f32 0.0, %v7041
        %v7043 = vpop.f32.mrb[0].mxu0
        %7044 = vmatprep.mubr.bf16.mxu0 0
        %7045 = vmatmul.mubr.bf16.gmra.mrb[0].mxu0 %v6794
        %v7046 = vpop.f32.mrb[0].mxu0
        %v7047 = vadd.f32 0.0, %v7046
        %v7048 = vpop.f32.mrb[0].mxu0
        %v7049 = vpop.f32.mrb[0].mxu0
        %v7050 = vadd.f32 0.0, %v7049
        %v7051 = vpop.f32.mrb[0].mxu0
        %7052 = vmatprep.mubr.bf16.mxu0 0
        %7053 = vmatmul.mubr.bf16.gmra.mrb[0].mxu0 %v6798
        %v7054 = vpop.f32.mrb[0].mxu0
        %v7055 = vadd.f32 0.0, %v7054
        %v7056 = vpop.f32.mrb[0].mxu0
        %v7057 = vpop.f32.mrb[0].mxu0
        %v7058 = vadd.f32 0.0, %v7057
        %v7059 = vpop.f32.mrb[0].mxu0
        %7060 = vmatprep.mubr.bf16.mxu0 0
        %7061 = vmatmul.mubr.bf16.gmra.mrb[0].mxu0 %v6802
        %v7062 = vpop.f32.mrb[0].mxu0
        %v7063 = vadd.f32 0.0, %v7062
        %v7064 = vpop.f32.mrb[0].mxu0
        %v7065 = vpop.f32.mrb[0].mxu0
        %v7066 = vadd.f32 0.0, %v7065
        %v7067 = vpop.f32.mrb[0].mxu0
        %7068 = vmatprep.mubr.bf16.mxu0 0
        %7069 = vmatmul.mubr.bf16.gmra.mrb[0].mxu0 %v6806
        %v7070 = vpop.f32.mrb[0].mxu0
        %v7071 = vadd.f32 0.0, %v7070
        %v7072 = vpop.f32.mrb[0].mxu0
        %v7073 = vpop.f32.mrb[0].mxu0
        %v7074 = vadd.f32 0.0, %v7073
        %v7075 = vpop.f32.mrb[0].mxu0
        %7076 = vmatprep.mubr.bf16.mxu0 0
        %7077 = vmatmul.mubr.bf16.gmra.mrb[0].mxu0 %v6810
        %v7078 = vpop.f32.mrb[0].mxu0
        %v7079 = vadd.f32 0.0, %v7078
        %v7080 = vpop.f32.mrb[0].mxu0
        %v7081 = vpop.f32.mrb[0].mxu0
        %v7082 = vadd.f32 0.0, %v7081
        %v7083 = vpop.f32.mrb[0].mxu0
        %7084 = vmatprep.mubr.bf16.mxu0 0
        %7085 = vmatmul.mubr.bf16.gmra.mrb[0].mxu0 %v6814
        %v7086 = vpop.f32.mrb[0].mxu0
        %v7087 = vadd.f32 0.0, %v7086
        %v7088 = vpop.f32.mrb[0].mxu0
        %v7089 = vpop.f32.mrb[0].mxu0
        %v7090 = vadd.f32 0.0, %v7089
        %v7091 = vpop.f32.mrb[0].mxu0
        %7092 = vmatprep.mubr.bf16.mxu0 0
        %7093 = vmatmul.mubr.bf16.gmra.mrb[0].mxu0 %v6818
        %v7094 = vpop.f32.mrb[0].mxu0
        %v7095 = vadd.f32 0.0, %v7094
        %v7096 = vpop.f32.mrb[0].mxu0
        %v7097 = vpop.f32.mrb[0].mxu0
        %v7098 = vadd.f32 0.0, %v7097
        %v7099 = vpop.f32.mrb[0].mxu0
        %7100 = vmatprep.mubr.bf16.mxu0 0
        %7101 = vmatmul.mubr.bf16.gmra.mrb[0].mxu0 %v6822
        %v7102 = vpop.f32.mrb[0].mxu0
        %v7103 = vadd.f32 0.0, %v7102
        %v7104 = vpop.f32.mrb[0].mxu0
        %v7105 = vpop.f32.mrb[0].mxu0
        %v7106 = vadd.f32 0.0, %v7105
        %v7107 = vpop.f32.mrb[0].mxu0
        %7108 = vmatprep.mubr.bf16.mxu0 0
        %7109 = vmatmul.mubr.bf16.gmra.mrb[0].mxu0 %v6826
        %v7110 = vpop.f32.mrb[0].mxu0
        %v7111 = vadd.f32 0.0, %v7110
        %v7112 = vpop.f32.mrb[0].mxu0
        %v7113 = vpop.f32.mrb[0].mxu0
        %v7114 = vadd.f32 0.0, %v7113
        %v7115 = vpop.f32.mrb[0].mxu0
        %7116 = vmatprep.mubr.bf16.mxu0 0
        %7117 = vmatmul.mubr.bf16.gmra.mrb[0].mxu0 %v6830
        %v7118 = vpop.f32.mrb[0].mxu0
        %v7119 = vadd.f32 0.0, %v7118
        %v7120 = vpop.f32.mrb[0].mxu0
        %v7121 = vpop.f32.mrb[0].mxu0
        %v7122 = vadd.f32 0.0, %v7121
        %v7123 = vpop.f32.mrb[0].mxu0
        %7124 = vmatprep.mubr.bf16.mxu0 0
        %7125 = vmatmul.mubr.bf16.gmra.mrb[0].mxu0 %v6834
        %v7126 = vpop.f32.mrb[0].mxu0
        %v7127 = vadd.f32 0.0, %v7126
        %v7128 = vpop.f32.mrb[0].mxu0
        %v7129 = vpop.f32.mrb[0].mxu0
        %v7130 = vadd.f32 0.0, %v7129
        %v7131 = vpop.f32.mrb[0].mxu0
        %7132 = vmatprep.mubr.bf16.mxu0 0
        %7133 = vmatmul.mubr.bf16.gmra.mrb[0].mxu0 %v6843
        %v7134 = vpop.f32.mrb[0].mxu0
        %v7135 = vadd.f32 0.0, %v7134
        %v7136 = vpop.f32.mrb[0].mxu0
        %v7137 = vpop.f32.mrb[0].mxu0
        %v7138 = vadd.f32 0.0, %v7137
        %v7139 = vpop.f32.mrb[0].mxu0
        %7140 = vdwg.mxu0
        %v7141 = vadd.f32 %v6528, %v6951
        %v7142 = vadd.f32 %v6531, %v6954
        %v7143 = vadd.f32 %v6536, %v6959
        %v7144 = vadd.f32 %v6539, %v6962
        %v7145 = vadd.f32 %v6544, %v6967
        %v7146 = vadd.f32 %v6547, %v6970
        %v7147 = vadd.f32 %v6552, %v6975
        %v7148 = vadd.f32 %v6555, %v6978
        %v7149 = vadd.f32 %v6560, %v6983
        %v7150 = vadd.f32 %v6563, %v6986
        %v7151 = vadd.f32 %v6568, %v6991
        %v7152 = vadd.f32 %v6571, %v6994
        %v7153 = vadd.f32 %v6576, %v6999
        %v7154 = vadd.f32 %v6579, %v7002
        %v7155 = vadd.f32 %v6584, %v7007
        %v7156 = vadd.f32 %v6587, %v7010
        %v7157 = vadd.f32 %v6592, %v7015
        %v7158 = vadd.f32 %v6595, %v7018
        %v7159 = vadd.f32 %v6600, %v7023
        %v7160 = vadd.f32 %v6603, %v7026
        %v7161 = vadd.f32 %v6608, %v7031
        %v7162 = vadd.f32 %v6611, %v7034
        %v7163 = vadd.f32 %v6616, %v7039
        %v7164 = vadd.f32 %v6619, %v7042
        %v7165 = vadd.f32 %v6624, %v7047
        %v7166 = vadd.f32 %v6627, %v7050
        %v7167 = vadd.f32 %v6632, %v7055
        %v7168 = vadd.f32 %v6635, %v7058
        %v7169 = vadd.f32 %v6640, %v7063
        %v7170 = vadd.f32 %v6643, %v7066
        %v7171 = vadd.f32 %v6648, %v7071
        %v7172 = vadd.f32 %v6651, %v7074
        %v7173 = vadd.f32 %v6656, %v7079
        %v7174 = vadd.f32 %v6659, %v7082
        %v7175 = vadd.f32 %v6664, %v7087
        %v7176 = vadd.f32 %v6667, %v7090
        %v7177 = vadd.f32 %v6672, %v7095
        %v7178 = vadd.f32 %v6675, %v7098
        %v7179 = vadd.f32 %v6680, %v7103
        %v7180 = vadd.f32 %v6683, %v7106
        %v7181 = vadd.f32 %v6688, %v7111
        %v7182 = vadd.f32 %v6691, %v7114
        %v7183 = vadd.f32 %v6696, %v7119
        %v7184 = vadd.f32 %v6699, %v7122
        %v7185 = vadd.f32 %v6704, %v7127
        %v7186 = vadd.f32 %v6707, %v7130
        %v7187 = vadd.f32 %v6712, %v7135
        %v7188 = vadd.f32 %v6715, %v7138
        %v7189 = vld [vmem:[#allocation3 + $0x8] sm:$0x80]
        %v7190 = vld [vmem:[#allocation3 + $0x10] sm:$0xff]
        %v7191 = vld [vmem:[#allocation3 + $0x18] sm:$0xff]
        %v7192 = vld [vmem:[#allocation3 + $0x20] sm:$0xff]
        %v7193 = vld [vmem:[#allocation3 + $0x28] sm:$0xff]
        %v7194 = vld [vmem:[#allocation3 + $0x30] sm:$0xff]
        %v7195 = vld [vmem:[#allocation3 + $0x38] sm:$0xff]
        %v7196 = vld [vmem:[#allocation3 + $0x40] sm:$0xff]
        %v7197 = vld [vmem:[#allocation3 + $0x48] sm:$0xff]
        %v7198 = vld [vmem:[#allocation3 + $0x50] sm:$0xff]
        %v7199 = vld [vmem:[#allocation3 + $0x58] sm:$0xff]
        %v7200 = vld [vmem:[#allocation3 + $0x60] sm:$0xff]
        %v7201 = vld [vmem:[#allocation3 + $0x68] sm:$0xff]
        %v7202 = vld [vmem:[#allocation3 + $0x70] sm:$0xff]
        %v7203 = vld [vmem:[#allocation3 + $0x78] sm:$0xff]
        %v7204 = vld [vmem:[#allocation3 + $0x80] sm:$0xff]
        %v7205 = vld [vmem:[#allocation3 + $0x88] sm:$0xff]
        %v7206 = vld [vmem:[#allocation3 + $0x90] sm:$0xff]
        %v7207 = vld [vmem:[#allocation3 + $0x98] sm:$0xff]
        %v7208 = vld [vmem:[#allocation3 + $0xa0] sm:$0xff]
        %v7209 = vld [vmem:[#allocation3 + $0xa8] sm:$0xff]
        %v7210 = vld [vmem:[#allocation3 + $0xb0] sm:$0xff]
        %v7211 = vld [vmem:[#allocation3 + $0xb8] sm:$0xff]
        %v7212 = vld [vmem:[#allocation3 + $0xc0] sm:$0xff]
        %v7213 = vld [vmem:[#allocation3 + $0xc8] sm:$0xff]
        %v7214 = vld [vmem:[#allocation9 + $0xc0] sm:$0xf]
        %v7215 = vld [vmem:[#allocation9 + $0xc4] sm:$0xf]
        %v7216 = vld [vmem:[#allocation9 + $0xc8] sm:$0xf]
        %v7217 = vld [vmem:[#allocation9 + $0xcc] sm:$0xf]
        %v7218 = vld [vmem:[#allocation9 + $0xd0] sm:$0xf]
        %v7219 = vld [vmem:[#allocation9 + $0xd4] sm:$0xf]
        %v7220 = vld [vmem:[#allocation9 + $0xd8] sm:$0xf]
        %v7221 = vld [vmem:[#allocation9 + $0xdc] sm:$0xf]
        %v7222 = vld [vmem:[#allocation9 + $0xe0] sm:$0xf]
        %v7223 = vld [vmem:[#allocation9 + $0xe4] sm:$0xf]
        %v7224 = vld [vmem:[#allocation9 + $0xe8] sm:$0xf]
        %v7225 = vld [vmem:[#allocation9 + $0xec] sm:$0xf]
        %v7226 = vld [vmem:[#allocation9 + $0xf0] sm:$0xf]
        %v7227 = vld [vmem:[#allocation9 + $0xf4] sm:$0xf]
        %v7228 = vld [vmem:[#allocation9 + $0xf8] sm:$0xf]
        %v7229 = vld [vmem:[#allocation9 + $0xfc] sm:$0xf]
        %v7231 = vshrl.u32 %v7189, 16
        %v7233 = vrot.slane %v7231, 7
        %v7235 = vshrl.u32 %v7190, 16
        %v7237 = vrot.slane %v7235, 7
        %v7238 = vshll.u32 %v7190, 16
        %v7240 = vor.u32 %v7237, %v7238
        %v7241 = vsel %vm2161, %v7233, %v7240
        %v7243 = vshrl.u32 %v7191, 16
        %v7245 = vrot.slane %v7243, 7
        %v7246 = vshll.u32 %v7191, 16
        %v7248 = vor.u32 %v7245, %v7246
        %v7249 = vsel %vm2161, %v7237, %v7248
        %v7251 = vshrl.u32 %v7192, 16
        %v7253 = vrot.slane %v7251, 7
        %v7254 = vshll.u32 %v7192, 16
        %v7256 = vor.u32 %v7253, %v7254
        %v7257 = vsel %vm2161, %v7245, %v7256
        %v7259 = vshrl.u32 %v7193, 16
        %v7261 = vrot.slane %v7259, 7
        %v7262 = vshll.u32 %v7193, 16
        %v7264 = vor.u32 %v7261, %v7262
        %v7265 = vsel %vm2161, %v7253, %v7264
        %v7267 = vshrl.u32 %v7194, 16
        %v7269 = vrot.slane %v7267, 7
        %v7270 = vshll.u32 %v7194, 16
        %v7272 = vor.u32 %v7269, %v7270
        %v7273 = vsel %vm2161, %v7261, %v7272
        %v7275 = vshrl.u32 %v7195, 16
        %v7277 = vrot.slane %v7275, 7
        %v7278 = vshll.u32 %v7195, 16
        %v7280 = vor.u32 %v7277, %v7278
        %v7281 = vsel %vm2161, %v7269, %v7280
        %v7283 = vshrl.u32 %v7196, 16
        %v7285 = vrot.slane %v7283, 7
        %v7286 = vshll.u32 %v7196, 16
        %v7288 = vor.u32 %v7285, %v7286
        %v7289 = vsel %vm2161, %v7277, %v7288
        %v7291 = vshrl.u32 %v7197, 16
        %v7293 = vrot.slane %v7291, 7
        %v7294 = vshll.u32 %v7197, 16
        %v7296 = vor.u32 %v7293, %v7294
        %v7297 = vsel %vm2161, %v7285, %v7296
        %v7299 = vshrl.u32 %v7198, 16
        %v7301 = vrot.slane %v7299, 7
        %v7302 = vshll.u32 %v7198, 16
        %v7304 = vor.u32 %v7301, %v7302
        %v7305 = vsel %vm2161, %v7293, %v7304
        %v7307 = vshrl.u32 %v7199, 16
        %v7309 = vrot.slane %v7307, 7
        %v7310 = vshll.u32 %v7199, 16
        %v7312 = vor.u32 %v7309, %v7310
        %v7313 = vsel %vm2161, %v7301, %v7312
        %v7315 = vshrl.u32 %v7200, 16
        %v7317 = vrot.slane %v7315, 7
        %v7318 = vshll.u32 %v7200, 16
        %v7320 = vor.u32 %v7317, %v7318
        %v7321 = vsel %vm2161, %v7309, %v7320
        %v7323 = vshrl.u32 %v7201, 16
        %v7325 = vrot.slane %v7323, 7
        %v7326 = vshll.u32 %v7201, 16
        %v7328 = vor.u32 %v7325, %v7326
        %v7329 = vsel %vm2161, %v7317, %v7328
        %v7331 = vshrl.u32 %v7202, 16
        %v7333 = vrot.slane %v7331, 7
        %v7334 = vshll.u32 %v7202, 16
        %v7336 = vor.u32 %v7333, %v7334
        %v7337 = vsel %vm2161, %v7325, %v7336
        %v7339 = vshrl.u32 %v7203, 16
        %v7341 = vrot.slane %v7339, 7
        %v7342 = vshll.u32 %v7203, 16
        %v7344 = vor.u32 %v7341, %v7342
        %v7345 = vsel %vm2161, %v7333, %v7344
        %v7347 = vshrl.u32 %v7204, 16
        %v7349 = vrot.slane %v7347, 7
        %v7350 = vshll.u32 %v7204, 16
        %v7352 = vor.u32 %v7349, %v7350
        %v7353 = vsel %vm2161, %v7341, %v7352
        %v7355 = vshrl.u32 %v7205, 16
        %v7357 = vrot.slane %v7355, 7
        %v7358 = vshll.u32 %v7205, 16
        %v7360 = vor.u32 %v7357, %v7358
        %v7361 = vsel %vm2161, %v7349, %v7360
        %v7363 = vshrl.u32 %v7206, 16
        %v7365 = vrot.slane %v7363, 7
        %v7366 = vshll.u32 %v7206, 16
        %v7368 = vor.u32 %v7365, %v7366
        %v7369 = vsel %vm2161, %v7357, %v7368
        %v7371 = vshrl.u32 %v7207, 16
        %v7373 = vrot.slane %v7371, 7
        %v7374 = vshll.u32 %v7207, 16
        %v7376 = vor.u32 %v7373, %v7374
        %v7377 = vsel %vm2161, %v7365, %v7376
        %v7379 = vshrl.u32 %v7208, 16
        %v7381 = vrot.slane %v7379, 7
        %v7382 = vshll.u32 %v7208, 16
        %v7384 = vor.u32 %v7381, %v7382
        %v7385 = vsel %vm2161, %v7373, %v7384
        %v7387 = vshrl.u32 %v7209, 16
        %v7389 = vrot.slane %v7387, 7
        %v7390 = vshll.u32 %v7209, 16
        %v7392 = vor.u32 %v7389, %v7390
        %v7393 = vsel %vm2161, %v7381, %v7392
        %v7395 = vshrl.u32 %v7210, 16
        %v7397 = vrot.slane %v7395, 7
        %v7398 = vshll.u32 %v7210, 16
        %v7400 = vor.u32 %v7397, %v7398
        %v7401 = vsel %vm2161, %v7389, %v7400
        %v7403 = vshrl.u32 %v7211, 16
        %v7405 = vrot.slane %v7403, 7
        %v7406 = vshll.u32 %v7211, 16
        %v7408 = vor.u32 %v7405, %v7406
        %v7409 = vsel %vm2161, %v7397, %v7408
        %v7411 = vshrl.u32 %v7212, 16
        %v7413 = vrot.slane %v7411, 7
        %v7414 = vshll.u32 %v7212, 16
        %v7416 = vor.u32 %v7413, %v7414
        %v7417 = vsel %vm2161, %v7405, %v7416
        %v7419 = vshrl.u32 %v7213, 16
        %v7421 = vrot.slane %v7419, 7
        %v7422 = vshll.u32 %v7213, 16
        %v7424 = vor.u32 %v7421, %v7422
        %v7425 = vsel %vm2161, %v7413, %v7424
        %v7466 = vunpack.c.l.b16 %v7214
        %v7467 = vunpack.c.l.b16 %v7215
        %v7468 = vunpack.c.l.b16 %v7216
        %v7469 = vunpack.c.l.b16 %v7217
        %v7470 = vunpack.c.l.b16 %v7218
        %v7471 = vunpack.c.l.b16 %v7219
        %v7472 = vunpack.c.l.b16 %v7220
        %v7473 = vunpack.c.l.b16 %v7221
        %v7474 = vunpack.c.l.b16 %v7222
        %v7475 = vunpack.c.l.b16 %v7223
        %v7476 = vunpack.c.l.b16 %v7224
        %v7477 = vunpack.c.l.b16 %v7225
        %v7478 = vunpack.c.l.b16 %v7226
        %v7479 = vunpack.c.l.b16 %v7227
        %v7480 = vunpack.c.l.b16 %v7228
        %v7481 = vunpack.c.l.b16 %v7229
        %v7482 = vpack.c.b16 %v7467, %v7466
        %v7483 = vpack.c.b16 %v7469, %v7468
        %v7484 = vpack.c.b16 %v7471, %v7470
        %v7485 = vpack.c.b16 %v7473, %v7472
        %v7486 = vpack.c.b16 %v7475, %v7474
        %v7487 = vpack.c.b16 %v7477, %v7476
        %v7488 = vpack.c.b16 %v7479, %v7478
        %v7489 = vpack.c.b16 %v7481, %v7480
        %7498 = vmatprep.subr.bf16.mxu0 0
        %7499 = vmatpush1.bf16.msra.mxu0 %v7482
        %7500 = vmatprep.subr.bf16.mxu0 0
        %7501 = vmatpush1.bf16.msra.mxu0 %v7483
        %7502 = vmatprep.subr.bf16.mxu0 0
        %7503 = vmatpush1.bf16.msra.mxu0 %v7484
        %7504 = vmatprep.subr.bf16.mxu0 0
        %7505 = vmatpush1.bf16.msra.mxu0 %v7485
        %7506 = vmatprep.subr.bf16.mxu0 0
        %7507 = vmatpush1.bf16.msra.mxu0 %v7486
        %7508 = vmatprep.subr.bf16.mxu0 0
        %7509 = vmatpush1.bf16.msra.mxu0 %v7487
        %7510 = vmatprep.subr.bf16.mxu0 0
        %7511 = vmatpush1.bf16.msra.mxu0 %v7488
        %7512 = vmatprep.subr.bf16.mxu0 0
        %7513 = vmatpush1.bf16.msra.mxu0 %v7489
        %7514 = vmatprep.subr.bf16.mxu0 0
        %7515 = vmatpush1.bf16.msra.mxu0 0
        %7516 = vmatprep.subr.bf16.mxu0 0
        %7517 = vmatpush1.bf16.msra.mxu0 0
        %7518 = vmatprep.subr.bf16.mxu0 0
        %7519 = vmatpush1.bf16.msra.mxu0 0
        %7520 = vmatprep.subr.bf16.mxu0 0
        %7521 = vmatpush1.bf16.msra.mxu0 0
        %7522 = vmatprep.subr.bf16.mxu0 0
        %7523 = vmatpush1.bf16.msra.mxu0 0
        %7524 = vmatprep.subr.bf16.mxu0 0
        %7525 = vmatpush1.bf16.msra.mxu0 0
        %7526 = vmatprep.subr.bf16.mxu0 0
        %7527 = vmatpush1.bf16.msra.mxu0 0
        %7528 = vmatprep.subr.bf16.mxu0 0
        %7529 = vmatpush1.bf16.msra.mxu0 0
        %7530 = vmatprep.mubr.bf16.mxu0 0
        %7531 = vmatmul.mubr.bf16.gmra.mrb[0].mxu0 %v7241
        %v7532 = vpop.f32.mrb[0].mxu0
        %v7533 = vadd.f32 0.0, %v7532
        %v7534 = vpop.f32.mrb[0].mxu0
        %v7535 = vpop.f32.mrb[0].mxu0
        %v7536 = vadd.f32 0.0, %v7535
        %v7537 = vpop.f32.mrb[0].mxu0
        %7538 = vmatprep.mubr.bf16.mxu0 0
        %7539 = vmatmul.mubr.bf16.gmra.mrb[0].mxu0 %v7249
        %v7540 = vpop.f32.mrb[0].mxu0
        %v7541 = vadd.f32 0.0, %v7540
        %v7542 = vpop.f32.mrb[0].mxu0
        %v7543 = vpop.f32.mrb[0].mxu0
        %v7544 = vadd.f32 0.0, %v7543
        %v7545 = vpop.f32.mrb[0].mxu0
        %7546 = vmatprep.mubr.bf16.mxu0 0
        %7547 = vmatmul.mubr.bf16.gmra.mrb[0].mxu0 %v7257
        %v7548 = vpop.f32.mrb[0].mxu0
        %v7549 = vadd.f32 0.0, %v7548
        %v7550 = vpop.f32.mrb[0].mxu0
        %v7551 = vpop.f32.mrb[0].mxu0
        %v7552 = vadd.f32 0.0, %v7551
        %v7553 = vpop.f32.mrb[0].mxu0
        %7554 = vmatprep.mubr.bf16.mxu0 0
        %7555 = vmatmul.mubr.bf16.gmra.mrb[0].mxu0 %v7265
        %v7556 = vpop.f32.mrb[0].mxu0
        %v7557 = vadd.f32 0.0, %v7556
        %v7558 = vpop.f32.mrb[0].mxu0
        %v7559 = vpop.f32.mrb[0].mxu0
        %v7560 = vadd.f32 0.0, %v7559
        %v7561 = vpop.f32.mrb[0].mxu0
        %7562 = vmatprep.mubr.bf16.mxu0 0
        %7563 = vmatmul.mubr.bf16.gmra.mrb[0].mxu0 %v7273
        %v7564 = vpop.f32.mrb[0].mxu0
        %v7565 = vadd.f32 0.0, %v7564
        %v7566 = vpop.f32.mrb[0].mxu0
        %v7567 = vpop.f32.mrb[0].mxu0
        %v7568 = vadd.f32 0.0, %v7567
        %v7569 = vpop.f32.mrb[0].mxu0
        %7570 = vmatprep.mubr.bf16.mxu0 0
        %7571 = vmatmul.mubr.bf16.gmra.mrb[0].mxu0 %v7281
        %v7572 = vpop.f32.mrb[0].mxu0
        %v7573 = vadd.f32 0.0, %v7572
        %v7574 = vpop.f32.mrb[0].mxu0
        %v7575 = vpop.f32.mrb[0].mxu0
        %v7576 = vadd.f32 0.0, %v7575
        %v7577 = vpop.f32.mrb[0].mxu0
        %7578 = vmatprep.mubr.bf16.mxu0 0
        %7579 = vmatmul.mubr.bf16.gmra.mrb[0].mxu0 %v7289
        %v7580 = vpop.f32.mrb[0].mxu0
        %v7581 = vadd.f32 0.0, %v7580
        %v7582 = vpop.f32.mrb[0].mxu0
        %v7583 = vpop.f32.mrb[0].mxu0
        %v7584 = vadd.f32 0.0, %v7583
        %v7585 = vpop.f32.mrb[0].mxu0
        %7586 = vmatprep.mubr.bf16.mxu0 0
        %7587 = vmatmul.mubr.bf16.gmra.mrb[0].mxu0 %v7297
        %v7588 = vpop.f32.mrb[0].mxu0
        %v7589 = vadd.f32 0.0, %v7588
        %v7590 = vpop.f32.mrb[0].mxu0
        %v7591 = vpop.f32.mrb[0].mxu0
        %v7592 = vadd.f32 0.0, %v7591
        %v7593 = vpop.f32.mrb[0].mxu0
        %7594 = vmatprep.mubr.bf16.mxu0 0
        %7595 = vmatmul.mubr.bf16.gmra.mrb[0].mxu0 %v7305
        %v7596 = vpop.f32.mrb[0].mxu0
        %v7597 = vadd.f32 0.0, %v7596
        %v7598 = vpop.f32.mrb[0].mxu0
        %v7599 = vpop.f32.mrb[0].mxu0
        %v7600 = vadd.f32 0.0, %v7599
        %v7601 = vpop.f32.mrb[0].mxu0
        %7602 = vmatprep.mubr.bf16.mxu0 0
        %7603 = vmatmul.mubr.bf16.gmra.mrb[0].mxu0 %v7313
        %v7604 = vpop.f32.mrb[0].mxu0
        %v7605 = vadd.f32 0.0, %v7604
        %v7606 = vpop.f32.mrb[0].mxu0
        %v7607 = vpop.f32.mrb[0].mxu0
        %v7608 = vadd.f32 0.0, %v7607
        %v7609 = vpop.f32.mrb[0].mxu0
        %7610 = vmatprep.mubr.bf16.mxu0 0
        %7611 = vmatmul.mubr.bf16.gmra.mrb[0].mxu0 %v7321
        %v7612 = vpop.f32.mrb[0].mxu0
        %v7613 = vadd.f32 0.0, %v7612
        %v7614 = vpop.f32.mrb[0].mxu0
        %v7615 = vpop.f32.mrb[0].mxu0
        %v7616 = vadd.f32 0.0, %v7615
        %v7617 = vpop.f32.mrb[0].mxu0
        %7618 = vmatprep.mubr.bf16.mxu0 0
        %7619 = vmatmul.mubr.bf16.gmra.mrb[0].mxu0 %v7329
        %v7620 = vpop.f32.mrb[0].mxu0
        %v7621 = vadd.f32 0.0, %v7620
        %v7622 = vpop.f32.mrb[0].mxu0
        %v7623 = vpop.f32.mrb[0].mxu0
        %v7624 = vadd.f32 0.0, %v7623
        %v7625 = vpop.f32.mrb[0].mxu0
        %7626 = vmatprep.mubr.bf16.mxu0 0
        %7627 = vmatmul.mubr.bf16.gmra.mrb[0].mxu0 %v7337
        %v7628 = vpop.f32.mrb[0].mxu0
        %v7629 = vadd.f32 0.0, %v7628
        %v7630 = vpop.f32.mrb[0].mxu0
        %v7631 = vpop.f32.mrb[0].mxu0
        %v7632 = vadd.f32 0.0, %v7631
        %v7633 = vpop.f32.mrb[0].mxu0
        %7634 = vmatprep.mubr.bf16.mxu0 0
        %7635 = vmatmul.mubr.bf16.gmra.mrb[0].mxu0 %v7345
        %v7636 = vpop.f32.mrb[0].mxu0
        %v7637 = vadd.f32 0.0, %v7636
        %v7638 = vpop.f32.mrb[0].mxu0
        %v7639 = vpop.f32.mrb[0].mxu0
        %v7640 = vadd.f32 0.0, %v7639
        %v7641 = vpop.f32.mrb[0].mxu0
        %7642 = vmatprep.mubr.bf16.mxu0 0
        %7643 = vmatmul.mubr.bf16.gmra.mrb[0].mxu0 %v7353
        %v7644 = vpop.f32.mrb[0].mxu0
        %v7645 = vadd.f32 0.0, %v7644
        %v7646 = vpop.f32.mrb[0].mxu0
        %v7647 = vpop.f32.mrb[0].mxu0
        %v7648 = vadd.f32 0.0, %v7647
        %v7649 = vpop.f32.mrb[0].mxu0
        %7650 = vmatprep.mubr.bf16.mxu0 0
        %7651 = vmatmul.mubr.bf16.gmra.mrb[0].mxu0 %v7361
        %v7652 = vpop.f32.mrb[0].mxu0
        %v7653 = vadd.f32 0.0, %v7652
        %v7654 = vpop.f32.mrb[0].mxu0
        %v7655 = vpop.f32.mrb[0].mxu0
        %v7656 = vadd.f32 0.0, %v7655
        %v7657 = vpop.f32.mrb[0].mxu0
        %7658 = vmatprep.mubr.bf16.mxu0 0
        %7659 = vmatmul.mubr.bf16.gmra.mrb[0].mxu0 %v7369
        %v7660 = vpop.f32.mrb[0].mxu0
        %v7661 = vadd.f32 0.0, %v7660
        %v7662 = vpop.f32.mrb[0].mxu0
        %v7663 = vpop.f32.mrb[0].mxu0
        %v7664 = vadd.f32 0.0, %v7663
        %v7665 = vpop.f32.mrb[0].mxu0
        %7666 = vmatprep.mubr.bf16.mxu0 0
        %7667 = vmatmul.mubr.bf16.gmra.mrb[0].mxu0 %v7377
        %v7668 = vpop.f32.mrb[0].mxu0
        %v7669 = vadd.f32 0.0, %v7668
        %v7670 = vpop.f32.mrb[0].mxu0
        %v7671 = vpop.f32.mrb[0].mxu0
        %v7672 = vadd.f32 0.0, %v7671
        %v7673 = vpop.f32.mrb[0].mxu0
        %7674 = vmatprep.mubr.bf16.mxu0 0
        %7675 = vmatmul.mubr.bf16.gmra.mrb[0].mxu0 %v7385
        %v7676 = vpop.f32.mrb[0].mxu0
        %v7677 = vadd.f32 0.0, %v7676
        %v7678 = vpop.f32.mrb[0].mxu0
        %v7679 = vpop.f32.mrb[0].mxu0
        %v7680 = vadd.f32 0.0, %v7679
        %v7681 = vpop.f32.mrb[0].mxu0
        %7682 = vmatprep.mubr.bf16.mxu0 0
        %7683 = vmatmul.mubr.bf16.gmra.mrb[0].mxu0 %v7393
        %v7684 = vpop.f32.mrb[0].mxu0
        %v7685 = vadd.f32 0.0, %v7684
        %v7686 = vpop.f32.mrb[0].mxu0
        %v7687 = vpop.f32.mrb[0].mxu0
        %v7688 = vadd.f32 0.0, %v7687
        %v7689 = vpop.f32.mrb[0].mxu0
        %7690 = vmatprep.mubr.bf16.mxu0 0
        %7691 = vmatmul.mubr.bf16.gmra.mrb[0].mxu0 %v7401
        %v7692 = vpop.f32.mrb[0].mxu0
        %v7693 = vadd.f32 0.0, %v7692
        %v7694 = vpop.f32.mrb[0].mxu0
        %v7695 = vpop.f32.mrb[0].mxu0
        %v7696 = vadd.f32 0.0, %v7695
        %v7697 = vpop.f32.mrb[0].mxu0
        %7698 = vmatprep.mubr.bf16.mxu0 0
        %7699 = vmatmul.mubr.bf16.gmra.mrb[0].mxu0 %v7409
        %v7700 = vpop.f32.mrb[0].mxu0
        %v7701 = vadd.f32 0.0, %v7700
        %v7702 = vpop.f32.mrb[0].mxu0
        %v7703 = vpop.f32.mrb[0].mxu0
        %v7704 = vadd.f32 0.0, %v7703
        %v7705 = vpop.f32.mrb[0].mxu0
        %7706 = vmatprep.mubr.bf16.mxu0 0
        %7707 = vmatmul.mubr.bf16.gmra.mrb[0].mxu0 %v7417
        %v7708 = vpop.f32.mrb[0].mxu0
        %v7709 = vadd.f32 0.0, %v7708
        %v7710 = vpop.f32.mrb[0].mxu0
        %v7711 = vpop.f32.mrb[0].mxu0
        %v7712 = vadd.f32 0.0, %v7711
        %v7713 = vpop.f32.mrb[0].mxu0
        %7714 = vmatprep.mubr.bf16.mxu0 0
        %7715 = vmatmul.mubr.bf16.gmra.mrb[0].mxu0 %v7425
        %v7716 = vpop.f32.mrb[0].mxu0
        %v7717 = vadd.f32 0.0, %v7716
        %v7718 = vpop.f32.mrb[0].mxu0
        %v7719 = vpop.f32.mrb[0].mxu0
        %v7720 = vadd.f32 0.0, %v7719
        %v7721 = vpop.f32.mrb[0].mxu0
        %7722 = vdwg.mxu0
        %v7723 = vadd.f32 %v7141, %v7533
        %v7724 = vadd.f32 %v7142, %v7536
        %v7725 = vadd.f32 %v7143, %v7541
        %v7726 = vadd.f32 %v7144, %v7544
        %v7727 = vadd.f32 %v7145, %v7549
        %v7728 = vadd.f32 %v7146, %v7552
        %v7729 = vadd.f32 %v7147, %v7557
        %v7730 = vadd.f32 %v7148, %v7560
        %v7731 = vadd.f32 %v7149, %v7565
        %v7732 = vadd.f32 %v7150, %v7568
        %v7733 = vadd.f32 %v7151, %v7573
        %v7734 = vadd.f32 %v7152, %v7576
        %v7735 = vadd.f32 %v7153, %v7581
        %v7736 = vadd.f32 %v7154, %v7584
        %v7737 = vadd.f32 %v7155, %v7589
        %v7738 = vadd.f32 %v7156, %v7592
        %v7739 = vadd.f32 %v7157, %v7597
        %v7740 = vadd.f32 %v7158, %v7600
        %v7741 = vadd.f32 %v7159, %v7605
        %v7742 = vadd.f32 %v7160, %v7608
        %v7743 = vadd.f32 %v7161, %v7613
        %v7744 = vadd.f32 %v7162, %v7616
        %v7745 = vadd.f32 %v7163, %v7621
        %v7746 = vadd.f32 %v7164, %v7624
        %v7747 = vadd.f32 %v7165, %v7629
        %v7748 = vadd.f32 %v7166, %v7632
        %v7749 = vadd.f32 %v7167, %v7637
        %v7750 = vadd.f32 %v7168, %v7640
        %v7751 = vadd.f32 %v7169, %v7645
        %v7752 = vadd.f32 %v7170, %v7648
        %v7753 = vadd.f32 %v7171, %v7653
        %v7754 = vadd.f32 %v7172, %v7656
        %v7755 = vadd.f32 %v7173, %v7661
        %v7756 = vadd.f32 %v7174, %v7664
        %v7757 = vadd.f32 %v7175, %v7669
        %v7758 = vadd.f32 %v7176, %v7672
        %v7759 = vadd.f32 %v7177, %v7677
        %v7760 = vadd.f32 %v7178, %v7680
        %v7761 = vadd.f32 %v7179, %v7685
        %v7762 = vadd.f32 %v7180, %v7688
        %v7763 = vadd.f32 %v7181, %v7693
        %v7764 = vadd.f32 %v7182, %v7696
        %v7765 = vadd.f32 %v7183, %v7701
        %v7766 = vadd.f32 %v7184, %v7704
        %v7767 = vadd.f32 %v7185, %v7709
        %v7768 = vadd.f32 %v7186, %v7712
        %v7769 = vadd.f32 %v7187, %v7717
        %v7770 = vadd.f32 %v7188, %v7720
        %v7771 = vld [vmem:[#allocation9 + $0x100] sm:$0xf]
        %v7772 = vld [vmem:[#allocation9 + $0x104] sm:$0xf]
        %v7773 = vld [vmem:[#allocation9 + $0x108] sm:$0xf]
        %v7774 = vld [vmem:[#allocation9 + $0x10c] sm:$0xf]
        %v7775 = vld [vmem:[#allocation9 + $0x110] sm:$0xf]
        %v7776 = vld [vmem:[#allocation9 + $0x114] sm:$0xf]
        %v7777 = vld [vmem:[#allocation9 + $0x118] sm:$0xf]
        %v7778 = vld [vmem:[#allocation9 + $0x11c] sm:$0xf]
        %v7779 = vld [vmem:[#allocation9 + $0x120] sm:$0xf]
        %v7780 = vld [vmem:[#allocation9 + $0x124] sm:$0xf]
        %v7781 = vld [vmem:[#allocation9 + $0x128] sm:$0xf]
        %v7782 = vld [vmem:[#allocation9 + $0x12c] sm:$0xf]
        %v7783 = vld [vmem:[#allocation9 + $0x130] sm:$0xf]
        %v7784 = vld [vmem:[#allocation9 + $0x134] sm:$0xf]
        %v7785 = vld [vmem:[#allocation9 + $0x138] sm:$0xf]
        %v7786 = vld [vmem:[#allocation9 + $0x13c] sm:$0xf]
        %v7803 = vunpack.c.l.b16 %v7771
        %v7804 = vunpack.c.l.b16 %v7772
        %v7805 = vunpack.c.l.b16 %v7773
        %v7806 = vunpack.c.l.b16 %v7774
        %v7807 = vunpack.c.l.b16 %v7775
        %v7808 = vunpack.c.l.b16 %v7776
        %v7809 = vunpack.c.l.b16 %v7777
        %v7810 = vunpack.c.l.b16 %v7778
        %v7811 = vunpack.c.l.b16 %v7779
        %v7812 = vunpack.c.l.b16 %v7780
        %v7813 = vunpack.c.l.b16 %v7781
        %v7814 = vunpack.c.l.b16 %v7782
        %v7815 = vunpack.c.l.b16 %v7783
        %v7816 = vunpack.c.l.b16 %v7784
        %v7817 = vunpack.c.l.b16 %v7785
        %v7818 = vunpack.c.l.b16 %v7786
        %v7819 = vpack.c.b16 %v7804, %v7803
        %v7820 = vpack.c.b16 %v7806, %v7805
        %v7821 = vpack.c.b16 %v7808, %v7807
        %v7822 = vpack.c.b16 %v7810, %v7809
        %v7823 = vpack.c.b16 %v7812, %v7811
        %v7824 = vpack.c.b16 %v7814, %v7813
        %v7825 = vpack.c.b16 %v7816, %v7815
        %v7826 = vpack.c.b16 %v7818, %v7817
        %7835 = vmatprep.subr.bf16.mxu0 0
        %7836 = vmatpush1.bf16.msra.mxu0 %v7819
        %7837 = vmatprep.subr.bf16.mxu0 0
        %7838 = vmatpush1.bf16.msra.mxu0 %v7820
        %7839 = vmatprep.subr.bf16.mxu0 0
        %7840 = vmatpush1.bf16.msra.mxu0 %v7821
        %7841 = vmatprep.subr.bf16.mxu0 0
        %7842 = vmatpush1.bf16.msra.mxu0 %v7822
        %7843 = vmatprep.subr.bf16.mxu0 0
        %7844 = vmatpush1.bf16.msra.mxu0 %v7823
        %7845 = vmatprep.subr.bf16.mxu0 0
        %7846 = vmatpush1.bf16.msra.mxu0 %v7824
        %7847 = vmatprep.subr.bf16.mxu0 0
        %7848 = vmatpush1.bf16.msra.mxu0 %v7825
        %7849 = vmatprep.subr.bf16.mxu0 0
        %7850 = vmatpush1.bf16.msra.mxu0 %v7826
        %7851 = vmatprep.subr.bf16.mxu0 0
        %7852 = vmatpush1.bf16.msra.mxu0 0
        %7853 = vmatprep.subr.bf16.mxu0 0
        %7854 = vmatpush1.bf16.msra.mxu0 0
        %7855 = vmatprep.subr.bf16.mxu0 0
        %7856 = vmatpush1.bf16.msra.mxu0 0
        %7857 = vmatprep.subr.bf16.mxu0 0
        %7858 = vmatpush1.bf16.msra.mxu0 0
        %7859 = vmatprep.subr.bf16.mxu0 0
        %7860 = vmatpush1.bf16.msra.mxu0 0
        %7861 = vmatprep.subr.bf16.mxu0 0
        %7862 = vmatpush1.bf16.msra.mxu0 0
        %7863 = vmatprep.subr.bf16.mxu0 0
        %7864 = vmatpush1.bf16.msra.mxu0 0
        %7865 = vmatprep.subr.bf16.mxu0 0
        %7866 = vmatpush1.bf16.msra.mxu0 0
        %7867 = vmatprep.mubr.bf16.mxu0 0
        %7868 = vmatmul.mubr.bf16.gmra.mrb[0].mxu0 %v7190
        %v7869 = vpop.f32.mrb[0].mxu0
        %v7870 = vadd.f32 0.0, %v7869
        %v7871 = vpop.f32.mrb[0].mxu0
        %v7872 = vpop.f32.mrb[0].mxu0
        %v7873 = vadd.f32 0.0, %v7872
        %v7874 = vpop.f32.mrb[0].mxu0
        %7875 = vmatprep.mubr.bf16.mxu0 0
        %7876 = vmatmul.mubr.bf16.gmra.mrb[0].mxu0 %v7191
        %v7877 = vpop.f32.mrb[0].mxu0
        %v7878 = vadd.f32 0.0, %v7877
        %v7879 = vpop.f32.mrb[0].mxu0
        %v7880 = vpop.f32.mrb[0].mxu0
        %v7881 = vadd.f32 0.0, %v7880
        %v7882 = vpop.f32.mrb[0].mxu0
        %7883 = vmatprep.mubr.bf16.mxu0 0
        %7884 = vmatmul.mubr.bf16.gmra.mrb[0].mxu0 %v7192
        %v7885 = vpop.f32.mrb[0].mxu0
        %v7886 = vadd.f32 0.0, %v7885
        %v7887 = vpop.f32.mrb[0].mxu0
        %v7888 = vpop.f32.mrb[0].mxu0
        %v7889 = vadd.f32 0.0, %v7888
        %v7890 = vpop.f32.mrb[0].mxu0
        %7891 = vmatprep.mubr.bf16.mxu0 0
        %7892 = vmatmul.mubr.bf16.gmra.mrb[0].mxu0 %v7193
        %v7893 = vpop.f32.mrb[0].mxu0
        %v7894 = vadd.f32 0.0, %v7893
        %v7895 = vpop.f32.mrb[0].mxu0
        %v7896 = vpop.f32.mrb[0].mxu0
        %v7897 = vadd.f32 0.0, %v7896
        %v7898 = vpop.f32.mrb[0].mxu0
        %7899 = vmatprep.mubr.bf16.mxu0 0
        %7900 = vmatmul.mubr.bf16.gmra.mrb[0].mxu0 %v7194
        %v7901 = vpop.f32.mrb[0].mxu0
        %v7902 = vadd.f32 0.0, %v7901
        %v7903 = vpop.f32.mrb[0].mxu0
        %v7904 = vpop.f32.mrb[0].mxu0
        %v7905 = vadd.f32 0.0, %v7904
        %v7906 = vpop.f32.mrb[0].mxu0
        %7907 = vmatprep.mubr.bf16.mxu0 0
        %7908 = vmatmul.mubr.bf16.gmra.mrb[0].mxu0 %v7195
        %v7909 = vpop.f32.mrb[0].mxu0
        %v7910 = vadd.f32 0.0, %v7909
        %v7911 = vpop.f32.mrb[0].mxu0
        %v7912 = vpop.f32.mrb[0].mxu0
        %v7913 = vadd.f32 0.0, %v7912
        %v7914 = vpop.f32.mrb[0].mxu0
        %7915 = vmatprep.mubr.bf16.mxu0 0
        %7916 = vmatmul.mubr.bf16.gmra.mrb[0].mxu0 %v7196
        %v7917 = vpop.f32.mrb[0].mxu0
        %v7918 = vadd.f32 0.0, %v7917
        %v7919 = vpop.f32.mrb[0].mxu0
        %v7920 = vpop.f32.mrb[0].mxu0
        %v7921 = vadd.f32 0.0, %v7920
        %v7922 = vpop.f32.mrb[0].mxu0
        %7923 = vmatprep.mubr.bf16.mxu0 0
        %7924 = vmatmul.mubr.bf16.gmra.mrb[0].mxu0 %v7197
        %v7925 = vpop.f32.mrb[0].mxu0
        %v7926 = vadd.f32 0.0, %v7925
        %v7927 = vpop.f32.mrb[0].mxu0
        %v7928 = vpop.f32.mrb[0].mxu0
        %v7929 = vadd.f32 0.0, %v7928
        %v7930 = vpop.f32.mrb[0].mxu0
        %7931 = vmatprep.mubr.bf16.mxu0 0
        %7932 = vmatmul.mubr.bf16.gmra.mrb[0].mxu0 %v7198
        %v7933 = vpop.f32.mrb[0].mxu0
        %v7934 = vadd.f32 0.0, %v7933
        %v7935 = vpop.f32.mrb[0].mxu0
        %v7936 = vpop.f32.mrb[0].mxu0
        %v7937 = vadd.f32 0.0, %v7936
        %v7938 = vpop.f32.mrb[0].mxu0
        %7939 = vmatprep.mubr.bf16.mxu0 0
        %7940 = vmatmul.mubr.bf16.gmra.mrb[0].mxu0 %v7199
        %v7941 = vpop.f32.mrb[0].mxu0
        %v7942 = vadd.f32 0.0, %v7941
        %v7943 = vpop.f32.mrb[0].mxu0
        %v7944 = vpop.f32.mrb[0].mxu0
        %v7945 = vadd.f32 0.0, %v7944
        %v7946 = vpop.f32.mrb[0].mxu0
        %7947 = vmatprep.mubr.bf16.mxu0 0
        %7948 = vmatmul.mubr.bf16.gmra.mrb[0].mxu0 %v7200
        %v7949 = vpop.f32.mrb[0].mxu0
        %v7950 = vadd.f32 0.0, %v7949
        %v7951 = vpop.f32.mrb[0].mxu0
        %v7952 = vpop.f32.mrb[0].mxu0
        %v7953 = vadd.f32 0.0, %v7952
        %v7954 = vpop.f32.mrb[0].mxu0
        %7955 = vmatprep.mubr.bf16.mxu0 0
        %7956 = vmatmul.mubr.bf16.gmra.mrb[0].mxu0 %v7201
        %v7957 = vpop.f32.mrb[0].mxu0
        %v7958 = vadd.f32 0.0, %v7957
        %v7959 = vpop.f32.mrb[0].mxu0
        %v7960 = vpop.f32.mrb[0].mxu0
        %v7961 = vadd.f32 0.0, %v7960
        %v7962 = vpop.f32.mrb[0].mxu0
        %7963 = vmatprep.mubr.bf16.mxu0 0
        %7964 = vmatmul.mubr.bf16.gmra.mrb[0].mxu0 %v7202
        %v7965 = vpop.f32.mrb[0].mxu0
        %v7966 = vadd.f32 0.0, %v7965
        %v7967 = vpop.f32.mrb[0].mxu0
        %v7968 = vpop.f32.mrb[0].mxu0
        %v7969 = vadd.f32 0.0, %v7968
        %v7970 = vpop.f32.mrb[0].mxu0
        %7971 = vmatprep.mubr.bf16.mxu0 0
        %7972 = vmatmul.mubr.bf16.gmra.mrb[0].mxu0 %v7203
        %v7973 = vpop.f32.mrb[0].mxu0
        %v7974 = vadd.f32 0.0, %v7973
        %v7975 = vpop.f32.mrb[0].mxu0
        %v7976 = vpop.f32.mrb[0].mxu0
        %v7977 = vadd.f32 0.0, %v7976
        %v7978 = vpop.f32.mrb[0].mxu0
        %7979 = vmatprep.mubr.bf16.mxu0 0
        %7980 = vmatmul.mubr.bf16.gmra.mrb[0].mxu0 %v7204
        %v7981 = vpop.f32.mrb[0].mxu0
        %v7982 = vadd.f32 0.0, %v7981
        %v7983 = vpop.f32.mrb[0].mxu0
        %v7984 = vpop.f32.mrb[0].mxu0
        %v7985 = vadd.f32 0.0, %v7984
        %v7986 = vpop.f32.mrb[0].mxu0
        %7987 = vmatprep.mubr.bf16.mxu0 0
        %7988 = vmatmul.mubr.bf16.gmra.mrb[0].mxu0 %v7205
        %v7989 = vpop.f32.mrb[0].mxu0
        %v7990 = vadd.f32 0.0, %v7989
        %v7991 = vpop.f32.mrb[0].mxu0
        %v7992 = vpop.f32.mrb[0].mxu0
        %v7993 = vadd.f32 0.0, %v7992
        %v7994 = vpop.f32.mrb[0].mxu0
        %7995 = vmatprep.mubr.bf16.mxu0 0
        %7996 = vmatmul.mubr.bf16.gmra.mrb[0].mxu0 %v7206
        %v7997 = vpop.f32.mrb[0].mxu0
        %v7998 = vadd.f32 0.0, %v7997
        %v7999 = vpop.f32.mrb[0].mxu0
        %v8000 = vpop.f32.mrb[0].mxu0
        %v8001 = vadd.f32 0.0, %v8000
        %v8002 = vpop.f32.mrb[0].mxu0
        %8003 = vmatprep.mubr.bf16.mxu0 0
        %8004 = vmatmul.mubr.bf16.gmra.mrb[0].mxu0 %v7207
        %v8005 = vpop.f32.mrb[0].mxu0
        %v8006 = vadd.f32 0.0, %v8005
        %v8007 = vpop.f32.mrb[0].mxu0
        %v8008 = vpop.f32.mrb[0].mxu0
        %v8009 = vadd.f32 0.0, %v8008
        %v8010 = vpop.f32.mrb[0].mxu0
        %8011 = vmatprep.mubr.bf16.mxu0 0
        %8012 = vmatmul.mubr.bf16.gmra.mrb[0].mxu0 %v7208
        %v8013 = vpop.f32.mrb[0].mxu0
        %v8014 = vadd.f32 0.0, %v8013
        %v8015 = vpop.f32.mrb[0].mxu0
        %v8016 = vpop.f32.mrb[0].mxu0
        %v8017 = vadd.f32 0.0, %v8016
        %v8018 = vpop.f32.mrb[0].mxu0
        %8019 = vmatprep.mubr.bf16.mxu0 0
        %8020 = vmatmul.mubr.bf16.gmra.mrb[0].mxu0 %v7209
        %v8021 = vpop.f32.mrb[0].mxu0
        %v8022 = vadd.f32 0.0, %v8021
        %v8023 = vpop.f32.mrb[0].mxu0
        %v8024 = vpop.f32.mrb[0].mxu0
        %v8025 = vadd.f32 0.0, %v8024
        %v8026 = vpop.f32.mrb[0].mxu0
        %8027 = vmatprep.mubr.bf16.mxu0 0
        %8028 = vmatmul.mubr.bf16.gmra.mrb[0].mxu0 %v7210
        %v8029 = vpop.f32.mrb[0].mxu0
        %v8030 = vadd.f32 0.0, %v8029
        %v8031 = vpop.f32.mrb[0].mxu0
        %v8032 = vpop.f32.mrb[0].mxu0
        %v8033 = vadd.f32 0.0, %v8032
        %v8034 = vpop.f32.mrb[0].mxu0
        %8035 = vmatprep.mubr.bf16.mxu0 0
        %8036 = vmatmul.mubr.bf16.gmra.mrb[0].mxu0 %v7211
        %v8037 = vpop.f32.mrb[0].mxu0
        %v8038 = vadd.f32 0.0, %v8037
        %v8039 = vpop.f32.mrb[0].mxu0
        %v8040 = vpop.f32.mrb[0].mxu0
        %v8041 = vadd.f32 0.0, %v8040
        %v8042 = vpop.f32.mrb[0].mxu0
        %8043 = vmatprep.mubr.bf16.mxu0 0
        %8044 = vmatmul.mubr.bf16.gmra.mrb[0].mxu0 %v7212
        %v8045 = vpop.f32.mrb[0].mxu0
        %v8046 = vadd.f32 0.0, %v8045
        %v8047 = vpop.f32.mrb[0].mxu0
        %v8048 = vpop.f32.mrb[0].mxu0
        %v8049 = vadd.f32 0.0, %v8048
        %v8050 = vpop.f32.mrb[0].mxu0
        %8051 = vmatprep.mubr.bf16.mxu0 0
        %8052 = vmatmul.mubr.bf16.gmra.mrb[0].mxu0 %v7213
        %v8053 = vpop.f32.mrb[0].mxu0
        %v8054 = vadd.f32 0.0, %v8053
        %v8055 = vpop.f32.mrb[0].mxu0
        %v8056 = vpop.f32.mrb[0].mxu0
        %v8057 = vadd.f32 0.0, %v8056
        %v8058 = vpop.f32.mrb[0].mxu0
        %8059 = vdwg.mxu0
        %v8060 = vadd.f32 %v7723, %v7870
        %v8061 = vadd.f32 %v7724, %v7873
        %v8062 = vadd.f32 %v7725, %v7878
        %v8063 = vadd.f32 %v7726, %v7881
        %v8064 = vadd.f32 %v7727, %v7886
        %v8065 = vadd.f32 %v7728, %v7889
        %v8066 = vadd.f32 %v7729, %v7894
        %v8067 = vadd.f32 %v7730, %v7897
        %v8068 = vadd.f32 %v7731, %v7902
        %v8069 = vadd.f32 %v7732, %v7905
        %v8070 = vadd.f32 %v7733, %v7910
        %v8071 = vadd.f32 %v7734, %v7913
        %v8072 = vadd.f32 %v7735, %v7918
        %v8073 = vadd.f32 %v7736, %v7921
        %v8074 = vadd.f32 %v7737, %v7926
        %v8075 = vadd.f32 %v7738, %v7929
        %v8076 = vadd.f32 %v7739, %v7934
        %v8077 = vadd.f32 %v7740, %v7937
        %v8078 = vadd.f32 %v7741, %v7942
        %v8079 = vadd.f32 %v7742, %v7945
        %v8080 = vadd.f32 %v7743, %v7950
        %v8081 = vadd.f32 %v7744, %v7953
        %v8082 = vadd.f32 %v7745, %v7958
        %v8083 = vadd.f32 %v7746, %v7961
        %v8084 = vadd.f32 %v7747, %v7966
        %v8085 = vadd.f32 %v7748, %v7969
        %v8086 = vadd.f32 %v7749, %v7974
        %v8087 = vadd.f32 %v7750, %v7977
        %v8088 = vadd.f32 %v7751, %v7982
        %v8089 = vadd.f32 %v7752, %v7985
        %v8090 = vadd.f32 %v7753, %v7990
        %v8091 = vadd.f32 %v7754, %v7993
        %v8092 = vadd.f32 %v7755, %v7998
        %v8093 = vadd.f32 %v7756, %v8001
        %v8094 = vadd.f32 %v7757, %v8006
        %v8095 = vadd.f32 %v7758, %v8009
        %v8096 = vadd.f32 %v7759, %v8014
        %v8097 = vadd.f32 %v7760, %v8017
        %v8098 = vadd.f32 %v7761, %v8022
        %v8099 = vadd.f32 %v7762, %v8025
        %v8100 = vadd.f32 %v7763, %v8030
        %v8101 = vadd.f32 %v7764, %v8033
        %v8102 = vadd.f32 %v7765, %v8038
        %v8103 = vadd.f32 %v7766, %v8041
        %v8104 = vadd.f32 %v7767, %v8046
        %v8105 = vadd.f32 %v7768, %v8049
        %v8106 = vadd.f32 %v7769, %v8054
        %v8107 = vadd.f32 %v7770, %v8057
        %v8108 = vld [vmem:[#allocation3 + $0x10] sm:$0xff]
        %v8109 = vld [vmem:[#allocation3 + $0x18] sm:$0xff]
        %v8110 = vld [vmem:[#allocation3 + $0x20] sm:$0xff]
        %v8111 = vld [vmem:[#allocation3 + $0x28] sm:$0xff]
        %v8112 = vld [vmem:[#allocation3 + $0x30] sm:$0xff]
        %v8113 = vld [vmem:[#allocation3 + $0x38] sm:$0xff]
        %v8114 = vld [vmem:[#allocation3 + $0x40] sm:$0xff]
        %v8115 = vld [vmem:[#allocation3 + $0x48] sm:$0xff]
        %v8116 = vld [vmem:[#allocation3 + $0x50] sm:$0xff]
        %v8117 = vld [vmem:[#allocation3 + $0x58] sm:$0xff]
        %v8118 = vld [vmem:[#allocation3 + $0x60] sm:$0xff]
        %v8119 = vld [vmem:[#allocation3 + $0x68] sm:$0xff]
        %v8120 = vld [vmem:[#allocation3 + $0x70] sm:$0xff]
        %v8121 = vld [vmem:[#allocation3 + $0x78] sm:$0xff]
        %v8122 = vld [vmem:[#allocation3 + $0x80] sm:$0xff]
        %v8123 = vld [vmem:[#allocation3 + $0x88] sm:$0xff]
        %v8124 = vld [vmem:[#allocation3 + $0x90] sm:$0xff]
        %v8125 = vld [vmem:[#allocation3 + $0x98] sm:$0xff]
        %v8126 = vld [vmem:[#allocation3 + $0xa0] sm:$0xff]
        %v8127 = vld [vmem:[#allocation3 + $0xa8] sm:$0xff]
        %v8128 = vld [vmem:[#allocation3 + $0xb0] sm:$0xff]
        %v8129 = vld [vmem:[#allocation3 + $0xb8] sm:$0xff]
        %v8130 = vld [vmem:[#allocation3 + $0xc0] sm:$0xff]
        %v8131 = vld [vmem:[#allocation3 + $0xc8] sm:$0xff]
        %v8132 = vld [vmem:[#allocation3 + $0xd0] sm:$0x1]
        %v8133 = vld [vmem:[#allocation9 + $0x140] sm:$0xf]
        %v8134 = vld [vmem:[#allocation9 + $0x144] sm:$0xf]
        %v8135 = vld [vmem:[#allocation9 + $0x148] sm:$0xf]
        %v8136 = vld [vmem:[#allocation9 + $0x14c] sm:$0xf]
        %v8137 = vld [vmem:[#allocation9 + $0x150] sm:$0xf]
        %v8138 = vld [vmem:[#allocation9 + $0x154] sm:$0xf]
        %v8139 = vld [vmem:[#allocation9 + $0x158] sm:$0xf]
        %v8140 = vld [vmem:[#allocation9 + $0x15c] sm:$0xf]
        %v8141 = vld [vmem:[#allocation9 + $0x160] sm:$0xf]
        %v8142 = vld [vmem:[#allocation9 + $0x164] sm:$0xf]
        %v8143 = vld [vmem:[#allocation9 + $0x168] sm:$0xf]
        %v8144 = vld [vmem:[#allocation9 + $0x16c] sm:$0xf]
        %v8145 = vld [vmem:[#allocation9 + $0x170] sm:$0xf]
        %v8146 = vld [vmem:[#allocation9 + $0x174] sm:$0xf]
        %v8147 = vld [vmem:[#allocation9 + $0x178] sm:$0xf]
        %v8148 = vld [vmem:[#allocation9 + $0x17c] sm:$0xf]
        %v8150 = vshrl.u32 %v8108, 16
        %v8152 = vshll.u32 %v8108, 16
        %v8154 = vrot.slane %v8152, 1
        %v8155 = vor.u32 %v8150, %v8154
        %v8157 = vshll.u32 %v8109, 16
        %v8159 = vrot.slane %v8157, 1
        %v8160 = vsel %vm3171, %v8155, %v8159
        %v8161 = vshrl.u32 %v8109, 16
        %v8163 = vor.u32 %v8161, %v8159
        %v8165 = vshll.u32 %v8110, 16
        %v8167 = vrot.slane %v8165, 1
        %v8168 = vsel %vm3171, %v8163, %v8167
        %v8169 = vshrl.u32 %v8110, 16
        %v8171 = vor.u32 %v8169, %v8167
        %v8173 = vshll.u32 %v8111, 16
        %v8175 = vrot.slane %v8173, 1
        %v8176 = vsel %vm3171, %v8171, %v8175
        %v8177 = vshrl.u32 %v8111, 16
        %v8179 = vor.u32 %v8177, %v8175
        %v8181 = vshll.u32 %v8112, 16
        %v8183 = vrot.slane %v8181, 1
        %v8184 = vsel %vm3171, %v8179, %v8183
        %v8185 = vshrl.u32 %v8112, 16
        %v8187 = vor.u32 %v8185, %v8183
        %v8189 = vshll.u32 %v8113, 16
        %v8191 = vrot.slane %v8189, 1
        %v8192 = vsel %vm3171, %v8187, %v8191
        %v8193 = vshrl.u32 %v8113, 16
        %v8195 = vor.u32 %v8193, %v8191
        %v8197 = vshll.u32 %v8114, 16
        %v8199 = vrot.slane %v8197, 1
        %v8200 = vsel %vm3171, %v8195, %v8199
        %v8201 = vshrl.u32 %v8114, 16
        %v8203 = vor.u32 %v8201, %v8199
        %v8205 = vshll.u32 %v8115, 16
        %v8207 = vrot.slane %v8205, 1
        %v8208 = vsel %vm3171, %v8203, %v8207
        %v8209 = vshrl.u32 %v8115, 16
        %v8211 = vor.u32 %v8209, %v8207
        %v8213 = vshll.u32 %v8116, 16
        %v8215 = vrot.slane %v8213, 1
        %v8216 = vsel %vm3171, %v8211, %v8215
        %v8217 = vshrl.u32 %v8116, 16
        %v8219 = vor.u32 %v8217, %v8215
        %v8221 = vshll.u32 %v8117, 16
        %v8223 = vrot.slane %v8221, 1
        %v8224 = vsel %vm3171, %v8219, %v8223
        %v8225 = vshrl.u32 %v8117, 16
        %v8227 = vor.u32 %v8225, %v8223
        %v8229 = vshll.u32 %v8118, 16
        %v8231 = vrot.slane %v8229, 1
        %v8232 = vsel %vm3171, %v8227, %v8231
        %v8233 = vshrl.u32 %v8118, 16
        %v8235 = vor.u32 %v8233, %v8231
        %v8237 = vshll.u32 %v8119, 16
        %v8239 = vrot.slane %v8237, 1
        %v8240 = vsel %vm3171, %v8235, %v8239
        %v8241 = vshrl.u32 %v8119, 16
        %v8243 = vor.u32 %v8241, %v8239
        %v8245 = vshll.u32 %v8120, 16
        %v8247 = vrot.slane %v8245, 1
        %v8248 = vsel %vm3171, %v8243, %v8247
        %v8249 = vshrl.u32 %v8120, 16
        %v8251 = vor.u32 %v8249, %v8247
        %v8253 = vshll.u32 %v8121, 16
        %v8255 = vrot.slane %v8253, 1
        %v8256 = vsel %vm3171, %v8251, %v8255
        %v8257 = vshrl.u32 %v8121, 16
        %v8259 = vor.u32 %v8257, %v8255
        %v8261 = vshll.u32 %v8122, 16
        %v8263 = vrot.slane %v8261, 1
        %v8264 = vsel %vm3171, %v8259, %v8263
        %v8265 = vshrl.u32 %v8122, 16
        %v8267 = vor.u32 %v8265, %v8263
        %v8269 = vshll.u32 %v8123, 16
        %v8271 = vrot.slane %v8269, 1
        %v8272 = vsel %vm3171, %v8267, %v8271
        %v8273 = vshrl.u32 %v8123, 16
        %v8275 = vor.u32 %v8273, %v8271
        %v8277 = vshll.u32 %v8124, 16
        %v8279 = vrot.slane %v8277, 1
        %v8280 = vsel %vm3171, %v8275, %v8279
        %v8281 = vshrl.u32 %v8124, 16
        %v8283 = vor.u32 %v8281, %v8279
        %v8285 = vshll.u32 %v8125, 16
        %v8287 = vrot.slane %v8285, 1
        %v8288 = vsel %vm3171, %v8283, %v8287
        %v8289 = vshrl.u32 %v8125, 16
        %v8291 = vor.u32 %v8289, %v8287
        %v8293 = vshll.u32 %v8126, 16
        %v8295 = vrot.slane %v8293, 1
        %v8296 = vsel %vm3171, %v8291, %v8295
        %v8297 = vshrl.u32 %v8126, 16
        %v8299 = vor.u32 %v8297, %v8295
        %v8301 = vshll.u32 %v8127, 16
        %v8303 = vrot.slane %v8301, 1
        %v8304 = vsel %vm3171, %v8299, %v8303
        %v8305 = vshrl.u32 %v8127, 16
        %v8307 = vor.u32 %v8305, %v8303
        %v8309 = vshll.u32 %v8128, 16
        %v8311 = vrot.slane %v8309, 1
        %v8312 = vsel %vm3171, %v8307, %v8311
        %v8313 = vshrl.u32 %v8128, 16
        %v8315 = vor.u32 %v8313, %v8311
        %v8317 = vshll.u32 %v8129, 16
        %v8319 = vrot.slane %v8317, 1
        %v8320 = vsel %vm3171, %v8315, %v8319
        %v8321 = vshrl.u32 %v8129, 16
        %v8323 = vor.u32 %v8321, %v8319
        %v8325 = vshll.u32 %v8130, 16
        %v8327 = vrot.slane %v8325, 1
        %v8328 = vsel %vm3171, %v8323, %v8327
        %v8329 = vshrl.u32 %v8130, 16
        %v8331 = vor.u32 %v8329, %v8327
        %v8333 = vshll.u32 %v8131, 16
        %v8335 = vrot.slane %v8333, 1
        %v8336 = vsel %vm3171, %v8331, %v8335
        %v8337 = vshrl.u32 %v8131, 16
        %v8339 = vor.u32 %v8337, %v8335
        %v8341 = vshll.u32 %v8132, 16
        %v8343 = vrot.slane %v8341, 1
        %v8344 = vsel %vm3171, %v8339, %v8343
        %v8385 = vunpack.c.l.b16 %v8133
        %v8386 = vunpack.c.l.b16 %v8134
        %v8387 = vunpack.c.l.b16 %v8135
        %v8388 = vunpack.c.l.b16 %v8136
        %v8389 = vunpack.c.l.b16 %v8137
        %v8390 = vunpack.c.l.b16 %v8138
        %v8391 = vunpack.c.l.b16 %v8139
        %v8392 = vunpack.c.l.b16 %v8140
        %v8393 = vunpack.c.l.b16 %v8141
        %v8394 = vunpack.c.l.b16 %v8142
        %v8395 = vunpack.c.l.b16 %v8143
        %v8396 = vunpack.c.l.b16 %v8144
        %v8397 = vunpack.c.l.b16 %v8145
        %v8398 = vunpack.c.l.b16 %v8146
        %v8399 = vunpack.c.l.b16 %v8147
        %v8400 = vunpack.c.l.b16 %v8148
        %v8401 = vpack.c.b16 %v8386, %v8385
        %v8402 = vpack.c.b16 %v8388, %v8387
        %v8403 = vpack.c.b16 %v8390, %v8389
        %v8404 = vpack.c.b16 %v8392, %v8391
        %v8405 = vpack.c.b16 %v8394, %v8393
        %v8406 = vpack.c.b16 %v8396, %v8395
        %v8407 = vpack.c.b16 %v8398, %v8397
        %v8408 = vpack.c.b16 %v8400, %v8399
        %8417 = vmatprep.subr.bf16.mxu0 0
        %8418 = vmatpush1.bf16.msra.mxu0 %v8401
        %8419 = vmatprep.subr.bf16.mxu0 0
        %8420 = vmatpush1.bf16.msra.mxu0 %v8402
        %8421 = vmatprep.subr.bf16.mxu0 0
        %8422 = vmatpush1.bf16.msra.mxu0 %v8403
        %8423 = vmatprep.subr.bf16.mxu0 0
        %8424 = vmatpush1.bf16.msra.mxu0 %v8404
        %8425 = vmatprep.subr.bf16.mxu0 0
        %8426 = vmatpush1.bf16.msra.mxu0 %v8405
        %8427 = vmatprep.subr.bf16.mxu0 0
        %8428 = vmatpush1.bf16.msra.mxu0 %v8406
        %8429 = vmatprep.subr.bf16.mxu0 0
        %8430 = vmatpush1.bf16.msra.mxu0 %v8407
        %8431 = vmatprep.subr.bf16.mxu0 0
        %8432 = vmatpush1.bf16.msra.mxu0 %v8408
        %8433 = vmatprep.subr.bf16.mxu0 0
        %8434 = vmatpush1.bf16.msra.mxu0 0
        %8435 = vmatprep.subr.bf16.mxu0 0
        %8436 = vmatpush1.bf16.msra.mxu0 0
        %8437 = vmatprep.subr.bf16.mxu0 0
        %8438 = vmatpush1.bf16.msra.mxu0 0
        %8439 = vmatprep.subr.bf16.mxu0 0
        %8440 = vmatpush1.bf16.msra.mxu0 0
        %8441 = vmatprep.subr.bf16.mxu0 0
        %8442 = vmatpush1.bf16.msra.mxu0 0
        %8443 = vmatprep.subr.bf16.mxu0 0
        %8444 = vmatpush1.bf16.msra.mxu0 0
        %8445 = vmatprep.subr.bf16.mxu0 0
        %8446 = vmatpush1.bf16.msra.mxu0 0
        %8447 = vmatprep.subr.bf16.mxu0 0
        %8448 = vmatpush1.bf16.msra.mxu0 0
        %8449 = vmatprep.mubr.bf16.mxu0 0
        %8450 = vmatmul.mubr.bf16.gmra.mrb[0].mxu0 %v8160
        %v8451 = vpop.f32.mrb[0].mxu0
        %v8452 = vadd.f32 0.0, %v8451
        %v8453 = vpop.f32.mrb[0].mxu0
        %v8454 = vpop.f32.mrb[0].mxu0
        %v8455 = vadd.f32 0.0, %v8454
        %v8456 = vpop.f32.mrb[0].mxu0
        %8457 = vmatprep.mubr.bf16.mxu0 0
        %8458 = vmatmul.mubr.bf16.gmra.mrb[0].mxu0 %v8168
        %v8459 = vpop.f32.mrb[0].mxu0
        %v8460 = vadd.f32 0.0, %v8459
        %v8461 = vpop.f32.mrb[0].mxu0
        %v8462 = vpop.f32.mrb[0].mxu0
        %v8463 = vadd.f32 0.0, %v8462
        %v8464 = vpop.f32.mrb[0].mxu0
        %8465 = vmatprep.mubr.bf16.mxu0 0
        %8466 = vmatmul.mubr.bf16.gmra.mrb[0].mxu0 %v8176
        %v8467 = vpop.f32.mrb[0].mxu0
        %v8468 = vadd.f32 0.0, %v8467
        %v8469 = vpop.f32.mrb[0].mxu0
        %v8470 = vpop.f32.mrb[0].mxu0
        %v8471 = vadd.f32 0.0, %v8470
        %v8472 = vpop.f32.mrb[0].mxu0
        %8473 = vmatprep.mubr.bf16.mxu0 0
        %8474 = vmatmul.mubr.bf16.gmra.mrb[0].mxu0 %v8184
        %v8475 = vpop.f32.mrb[0].mxu0
        %v8476 = vadd.f32 0.0, %v8475
        %v8477 = vpop.f32.mrb[0].mxu0
        %v8478 = vpop.f32.mrb[0].mxu0
        %v8479 = vadd.f32 0.0, %v8478
        %v8480 = vpop.f32.mrb[0].mxu0
        %8481 = vmatprep.mubr.bf16.mxu0 0
        %8482 = vmatmul.mubr.bf16.gmra.mrb[0].mxu0 %v8192
        %v8483 = vpop.f32.mrb[0].mxu0
        %v8484 = vadd.f32 0.0, %v8483
        %v8485 = vpop.f32.mrb[0].mxu0
        %v8486 = vpop.f32.mrb[0].mxu0
        %v8487 = vadd.f32 0.0, %v8486
        %v8488 = vpop.f32.mrb[0].mxu0
        %8489 = vmatprep.mubr.bf16.mxu0 0
        %8490 = vmatmul.mubr.bf16.gmra.mrb[0].mxu0 %v8200
        %v8491 = vpop.f32.mrb[0].mxu0
        %v8492 = vadd.f32 0.0, %v8491
        %v8493 = vpop.f32.mrb[0].mxu0
        %v8494 = vpop.f32.mrb[0].mxu0
        %v8495 = vadd.f32 0.0, %v8494
        %v8496 = vpop.f32.mrb[0].mxu0
        %8497 = vmatprep.mubr.bf16.mxu0 0
        %8498 = vmatmul.mubr.bf16.gmra.mrb[0].mxu0 %v8208
        %v8499 = vpop.f32.mrb[0].mxu0
        %v8500 = vadd.f32 0.0, %v8499
        %v8501 = vpop.f32.mrb[0].mxu0
        %v8502 = vpop.f32.mrb[0].mxu0
        %v8503 = vadd.f32 0.0, %v8502
        %v8504 = vpop.f32.mrb[0].mxu0
        %8505 = vmatprep.mubr.bf16.mxu0 0
        %8506 = vmatmul.mubr.bf16.gmra.mrb[0].mxu0 %v8216
        %v8507 = vpop.f32.mrb[0].mxu0
        %v8508 = vadd.f32 0.0, %v8507
        %v8509 = vpop.f32.mrb[0].mxu0
        %v8510 = vpop.f32.mrb[0].mxu0
        %v8511 = vadd.f32 0.0, %v8510
        %v8512 = vpop.f32.mrb[0].mxu0
        %8513 = vmatprep.mubr.bf16.mxu0 0
        %8514 = vmatmul.mubr.bf16.gmra.mrb[0].mxu0 %v8224
        %v8515 = vpop.f32.mrb[0].mxu0
        %v8516 = vadd.f32 0.0, %v8515
        %v8517 = vpop.f32.mrb[0].mxu0
        %v8518 = vpop.f32.mrb[0].mxu0
        %v8519 = vadd.f32 0.0, %v8518
        %v8520 = vpop.f32.mrb[0].mxu0
        %8521 = vmatprep.mubr.bf16.mxu0 0
        %8522 = vmatmul.mubr.bf16.gmra.mrb[0].mxu0 %v8232
        %v8523 = vpop.f32.mrb[0].mxu0
        %v8524 = vadd.f32 0.0, %v8523
        %v8525 = vpop.f32.mrb[0].mxu0
        %v8526 = vpop.f32.mrb[0].mxu0
        %v8527 = vadd.f32 0.0, %v8526
        %v8528 = vpop.f32.mrb[0].mxu0
        %8529 = vmatprep.mubr.bf16.mxu0 0
        %8530 = vmatmul.mubr.bf16.gmra.mrb[0].mxu0 %v8240
        %v8531 = vpop.f32.mrb[0].mxu0
        %v8532 = vadd.f32 0.0, %v8531
        %v8533 = vpop.f32.mrb[0].mxu0
        %v8534 = vpop.f32.mrb[0].mxu0
        %v8535 = vadd.f32 0.0, %v8534
        %v8536 = vpop.f32.mrb[0].mxu0
        %8537 = vmatprep.mubr.bf16.mxu0 0
        %8538 = vmatmul.mubr.bf16.gmra.mrb[0].mxu0 %v8248
        %v8539 = vpop.f32.mrb[0].mxu0
        %v8540 = vadd.f32 0.0, %v8539
        %v8541 = vpop.f32.mrb[0].mxu0
        %v8542 = vpop.f32.mrb[0].mxu0
        %v8543 = vadd.f32 0.0, %v8542
        %v8544 = vpop.f32.mrb[0].mxu0
        %8545 = vmatprep.mubr.bf16.mxu0 0
        %8546 = vmatmul.mubr.bf16.gmra.mrb[0].mxu0 %v8256
        %v8547 = vpop.f32.mrb[0].mxu0
        %v8548 = vadd.f32 0.0, %v8547
        %v8549 = vpop.f32.mrb[0].mxu0
        %v8550 = vpop.f32.mrb[0].mxu0
        %v8551 = vadd.f32 0.0, %v8550
        %v8552 = vpop.f32.mrb[0].mxu0
        %8553 = vmatprep.mubr.bf16.mxu0 0
        %8554 = vmatmul.mubr.bf16.gmra.mrb[0].mxu0 %v8264
        %v8555 = vpop.f32.mrb[0].mxu0
        %v8556 = vadd.f32 0.0, %v8555
        %v8557 = vpop.f32.mrb[0].mxu0
        %v8558 = vpop.f32.mrb[0].mxu0
        %v8559 = vadd.f32 0.0, %v8558
        %v8560 = vpop.f32.mrb[0].mxu0
        %8561 = vmatprep.mubr.bf16.mxu0 0
        %8562 = vmatmul.mubr.bf16.gmra.mrb[0].mxu0 %v8272
        %v8563 = vpop.f32.mrb[0].mxu0
        %v8564 = vadd.f32 0.0, %v8563
        %v8565 = vpop.f32.mrb[0].mxu0
        %v8566 = vpop.f32.mrb[0].mxu0
        %v8567 = vadd.f32 0.0, %v8566
        %v8568 = vpop.f32.mrb[0].mxu0
        %8569 = vmatprep.mubr.bf16.mxu0 0
        %8570 = vmatmul.mubr.bf16.gmra.mrb[0].mxu0 %v8280
        %v8571 = vpop.f32.mrb[0].mxu0
        %v8572 = vadd.f32 0.0, %v8571
        %v8573 = vpop.f32.mrb[0].mxu0
        %v8574 = vpop.f32.mrb[0].mxu0
        %v8575 = vadd.f32 0.0, %v8574
        %v8576 = vpop.f32.mrb[0].mxu0
        %8577 = vmatprep.mubr.bf16.mxu0 0
        %8578 = vmatmul.mubr.bf16.gmra.mrb[0].mxu0 %v8288
        %v8579 = vpop.f32.mrb[0].mxu0
        %v8580 = vadd.f32 0.0, %v8579
        %v8581 = vpop.f32.mrb[0].mxu0
        %v8582 = vpop.f32.mrb[0].mxu0
        %v8583 = vadd.f32 0.0, %v8582
        %v8584 = vpop.f32.mrb[0].mxu0
        %8585 = vmatprep.mubr.bf16.mxu0 0
        %8586 = vmatmul.mubr.bf16.gmra.mrb[0].mxu0 %v8296
        %v8587 = vpop.f32.mrb[0].mxu0
        %v8588 = vadd.f32 0.0, %v8587
        %v8589 = vpop.f32.mrb[0].mxu0
        %v8590 = vpop.f32.mrb[0].mxu0
        %v8591 = vadd.f32 0.0, %v8590
        %v8592 = vpop.f32.mrb[0].mxu0
        %8593 = vmatprep.mubr.bf16.mxu0 0
        %8594 = vmatmul.mubr.bf16.gmra.mrb[0].mxu0 %v8304
        %v8595 = vpop.f32.mrb[0].mxu0
        %v8596 = vadd.f32 0.0, %v8595
        %v8597 = vpop.f32.mrb[0].mxu0
        %v8598 = vpop.f32.mrb[0].mxu0
        %v8599 = vadd.f32 0.0, %v8598
        %v8600 = vpop.f32.mrb[0].mxu0
        %8601 = vmatprep.mubr.bf16.mxu0 0
        %8602 = vmatmul.mubr.bf16.gmra.mrb[0].mxu0 %v8312
        %v8603 = vpop.f32.mrb[0].mxu0
        %v8604 = vadd.f32 0.0, %v8603
        %v8605 = vpop.f32.mrb[0].mxu0
        %v8606 = vpop.f32.mrb[0].mxu0
        %v8607 = vadd.f32 0.0, %v8606
        %v8608 = vpop.f32.mrb[0].mxu0
        %8609 = vmatprep.mubr.bf16.mxu0 0
        %8610 = vmatmul.mubr.bf16.gmra.mrb[0].mxu0 %v8320
        %v8611 = vpop.f32.mrb[0].mxu0
        %v8612 = vadd.f32 0.0, %v8611
        %v8613 = vpop.f32.mrb[0].mxu0
        %v8614 = vpop.f32.mrb[0].mxu0
        %v8615 = vadd.f32 0.0, %v8614
        %v8616 = vpop.f32.mrb[0].mxu0
        %8617 = vmatprep.mubr.bf16.mxu0 0
        %8618 = vmatmul.mubr.bf16.gmra.mrb[0].mxu0 %v8328
        %v8619 = vpop.f32.mrb[0].mxu0
        %v8620 = vadd.f32 0.0, %v8619
        %v8621 = vpop.f32.mrb[0].mxu0
        %v8622 = vpop.f32.mrb[0].mxu0
        %v8623 = vadd.f32 0.0, %v8622
        %v8624 = vpop.f32.mrb[0].mxu0
        %8625 = vmatprep.mubr.bf16.mxu0 0
        %8626 = vmatmul.mubr.bf16.gmra.mrb[0].mxu0 %v8336
        %v8627 = vpop.f32.mrb[0].mxu0
        %v8628 = vadd.f32 0.0, %v8627
        %v8629 = vpop.f32.mrb[0].mxu0
        %v8630 = vpop.f32.mrb[0].mxu0
        %v8631 = vadd.f32 0.0, %v8630
        %v8632 = vpop.f32.mrb[0].mxu0
        %8633 = vmatprep.mubr.bf16.mxu0 0
        %8634 = vmatmul.mubr.bf16.gmra.mrb[0].mxu0 %v8344
        %v8635 = vpop.f32.mrb[0].mxu0
        %v8636 = vadd.f32 0.0, %v8635
        %v8637 = vpop.f32.mrb[0].mxu0
        %v8638 = vpop.f32.mrb[0].mxu0
        %v8639 = vadd.f32 0.0, %v8638
        %v8640 = vpop.f32.mrb[0].mxu0
        %8641 = vdwg.mxu0
        %v8642 = vadd.f32 %v8060, %v8452
        %v8643 = vadd.f32 %v8061, %v8455
        %v8644 = vadd.f32 %v8062, %v8460
        %v8645 = vadd.f32 %v8063, %v8463
        %v8646 = vadd.f32 %v8064, %v8468
        %v8647 = vadd.f32 %v8065, %v8471
        %v8648 = vadd.f32 %v8066, %v8476
        %v8649 = vadd.f32 %v8067, %v8479
        %v8650 = vadd.f32 %v8068, %v8484
        %v8651 = vadd.f32 %v8069, %v8487
        %v8652 = vadd.f32 %v8070, %v8492
        %v8653 = vadd.f32 %v8071, %v8495
        %v8654 = vadd.f32 %v8072, %v8500
        %v8655 = vadd.f32 %v8073, %v8503
        %v8656 = vadd.f32 %v8074, %v8508
        %v8657 = vadd.f32 %v8075, %v8511
        %v8658 = vadd.f32 %v8076, %v8516
        %v8659 = vadd.f32 %v8077, %v8519
        %v8660 = vadd.f32 %v8078, %v8524
        %v8661 = vadd.f32 %v8079, %v8527
        %v8662 = vadd.f32 %v8080, %v8532
        %v8663 = vadd.f32 %v8081, %v8535
        %v8664 = vadd.f32 %v8082, %v8540
        %v8665 = vadd.f32 %v8083, %v8543
        %v8666 = vadd.f32 %v8084, %v8548
        %v8667 = vadd.f32 %v8085, %v8551
        %v8668 = vadd.f32 %v8086, %v8556
        %v8669 = vadd.f32 %v8087, %v8559
        %v8670 = vadd.f32 %v8088, %v8564
        %v8671 = vadd.f32 %v8089, %v8567
        %v8672 = vadd.f32 %v8090, %v8572
        %v8673 = vadd.f32 %v8091, %v8575
        %v8674 = vadd.f32 %v8092, %v8580
        %v8675 = vadd.f32 %v8093, %v8583
        %v8676 = vadd.f32 %v8094, %v8588
        %v8677 = vadd.f32 %v8095, %v8591
        %v8678 = vadd.f32 %v8096, %v8596
        %v8679 = vadd.f32 %v8097, %v8599
        %v8680 = vadd.f32 %v8098, %v8604
        %v8681 = vadd.f32 %v8099, %v8607
        %v8682 = vadd.f32 %v8100, %v8612
        %v8683 = vadd.f32 %v8101, %v8615
        %v8684 = vadd.f32 %v8102, %v8620
        %v8685 = vadd.f32 %v8103, %v8623
        %v8686 = vadd.f32 %v8104, %v8628
        %v8687 = vadd.f32 %v8105, %v8631
        %v8688 = vadd.f32 %v8106, %v8636
        %v8689 = vadd.f32 %v8107, %v8639
        %v8690 = vld [vmem:[#allocation3 + $0x18] sm:$0xf8]
        %v8691 = vld [vmem:[#allocation3 + $0x20] sm:$0xff]
        %v8692 = vld [vmem:[#allocation3 + $0x28] sm:$0xff]
        %v8693 = vld [vmem:[#allocation3 + $0x30] sm:$0xff]
        %v8694 = vld [vmem:[#allocation3 + $0x38] sm:$0xff]
        %v8695 = vld [vmem:[#allocation3 + $0x40] sm:$0xff]
        %v8696 = vld [vmem:[#allocation3 + $0x48] sm:$0xff]
        %v8697 = vld [vmem:[#allocation3 + $0x50] sm:$0xff]
        %v8698 = vld [vmem:[#allocation3 + $0x58] sm:$0xff]
        %v8699 = vld [vmem:[#allocation3 + $0x60] sm:$0xff]
        %v8700 = vld [vmem:[#allocation3 + $0x68] sm:$0xff]
        %v8701 = vld [vmem:[#allocation3 + $0x70] sm:$0xff]
        %v8702 = vld [vmem:[#allocation3 + $0x78] sm:$0xff]
        %v8703 = vld [vmem:[#allocation3 + $0x80] sm:$0xff]
        %v8704 = vld [vmem:[#allocation3 + $0x88] sm:$0xff]
        %v8705 = vld [vmem:[#allocation3 + $0x90] sm:$0xff]
        %v8706 = vld [vmem:[#allocation3 + $0x98] sm:$0xff]
        %v8707 = vld [vmem:[#allocation3 + $0xa0] sm:$0xff]
        %v8708 = vld [vmem:[#allocation3 + $0xa8] sm:$0xff]
        %v8709 = vld [vmem:[#allocation3 + $0xb0] sm:$0xff]
        %v8710 = vld [vmem:[#allocation3 + $0xb8] sm:$0xff]
        %v8711 = vld [vmem:[#allocation3 + $0xc0] sm:$0xff]
        %v8712 = vld [vmem:[#allocation3 + $0xc8] sm:$0xff]
        %v8713 = vld [vmem:[#allocation3 + $0xd0] sm:$0xff]
        %v8714 = vld [vmem:[#allocation3 + $0xd8] sm:$0xf]
        %v8715 = vld [vmem:[#allocation9 + $0x180] sm:$0xf]
        %v8716 = vld [vmem:[#allocation9 + $0x184] sm:$0xf]
        %v8717 = vld [vmem:[#allocation9 + $0x188] sm:$0xf]
        %v8718 = vld [vmem:[#allocation9 + $0x18c] sm:$0xf]
        %v8719 = vld [vmem:[#allocation9 + $0x190] sm:$0xf]
        %v8720 = vld [vmem:[#allocation9 + $0x194] sm:$0xf]
        %v8721 = vld [vmem:[#allocation9 + $0x198] sm:$0xf]
        %v8722 = vld [vmem:[#allocation9 + $0x19c] sm:$0xf]
        %v8723 = vld [vmem:[#allocation9 + $0x1a0] sm:$0xf]
        %v8724 = vld [vmem:[#allocation9 + $0x1a4] sm:$0xf]
        %v8725 = vld [vmem:[#allocation9 + $0x1a8] sm:$0xf]
        %v8726 = vld [vmem:[#allocation9 + $0x1ac] sm:$0xf]
        %v8727 = vld [vmem:[#allocation9 + $0x1b0] sm:$0xf]
        %v8728 = vld [vmem:[#allocation9 + $0x1b4] sm:$0xf]
        %v8729 = vld [vmem:[#allocation9 + $0x1b8] sm:$0xf]
        %v8730 = vld [vmem:[#allocation9 + $0x1bc] sm:$0xf]
        %v8732 = vshrl.u32 %v8690, 16
        %v8734 = vrot.slane %v8732, 3
        %v8735 = vshll.u32 %v8690, 16
        %v8737 = vrot.slane %v8735, 4
        %v8738 = vor.u32 %v8734, %v8737
        %v8740 = vshrl.u32 %v8691, 16
        %v8742 = vrot.slane %v8740, 3
        %v8743 = vshll.u32 %v8691, 16
        %v8745 = vrot.slane %v8743, 4
        %v8746 = vor.u32 %v8742, %v8745
        %v8747 = vsel %vm1024, %v8738, %v8746
        %v8749 = vshrl.u32 %v8692, 16
        %v8751 = vrot.slane %v8749, 3
        %v8752 = vshll.u32 %v8692, 16
        %v8754 = vrot.slane %v8752, 4
        %v8755 = vor.u32 %v8751, %v8754
        %v8756 = vsel %vm1024, %v8746, %v8755
        %v8758 = vshrl.u32 %v8693, 16
        %v8760 = vrot.slane %v8758, 3
        %v8761 = vshll.u32 %v8693, 16
        %v8763 = vrot.slane %v8761, 4
        %v8764 = vor.u32 %v8760, %v8763
        %v8765 = vsel %vm1024, %v8755, %v8764
        %v8767 = vshrl.u32 %v8694, 16
        %v8769 = vrot.slane %v8767, 3
        %v8770 = vshll.u32 %v8694, 16
        %v8772 = vrot.slane %v8770, 4
        %v8773 = vor.u32 %v8769, %v8772
        %v8774 = vsel %vm1024, %v8764, %v8773
        %v8776 = vshrl.u32 %v8695, 16
        %v8778 = vrot.slane %v8776, 3
        %v8779 = vshll.u32 %v8695, 16
        %v8781 = vrot.slane %v8779, 4
        %v8782 = vor.u32 %v8778, %v8781
        %v8783 = vsel %vm1024, %v8773, %v8782
        %v8785 = vshrl.u32 %v8696, 16
        %v8787 = vrot.slane %v8785, 3
        %v8788 = vshll.u32 %v8696, 16
        %v8790 = vrot.slane %v8788, 4
        %v8791 = vor.u32 %v8787, %v8790
        %v8792 = vsel %vm1024, %v8782, %v8791
        %v8794 = vshrl.u32 %v8697, 16
        %v8796 = vrot.slane %v8794, 3
        %v8797 = vshll.u32 %v8697, 16
        %v8799 = vrot.slane %v8797, 4
        %v8800 = vor.u32 %v8796, %v8799
        %v8801 = vsel %vm1024, %v8791, %v8800
        %v8803 = vshrl.u32 %v8698, 16
        %v8805 = vrot.slane %v8803, 3
        %v8806 = vshll.u32 %v8698, 16
        %v8808 = vrot.slane %v8806, 4
        %v8809 = vor.u32 %v8805, %v8808
        %v8810 = vsel %vm1024, %v8800, %v8809
        %v8812 = vshrl.u32 %v8699, 16
        %v8814 = vrot.slane %v8812, 3
        %v8815 = vshll.u32 %v8699, 16
        %v8817 = vrot.slane %v8815, 4
        %v8818 = vor.u32 %v8814, %v8817
        %v8819 = vsel %vm1024, %v8809, %v8818
        %v8821 = vshrl.u32 %v8700, 16
        %v8823 = vrot.slane %v8821, 3
        %v8824 = vshll.u32 %v8700, 16
        %v8826 = vrot.slane %v8824, 4
        %v8827 = vor.u32 %v8823, %v8826
        %v8828 = vsel %vm1024, %v8818, %v8827
        %v8830 = vshrl.u32 %v8701, 16
        %v8832 = vrot.slane %v8830, 3
        %v8833 = vshll.u32 %v8701, 16
        %v8835 = vrot.slane %v8833, 4
        %v8836 = vor.u32 %v8832, %v8835
        %v8837 = vsel %vm1024, %v8827, %v8836
        %v8839 = vshrl.u32 %v8702, 16
        %v8841 = vrot.slane %v8839, 3
        %v8842 = vshll.u32 %v8702, 16
        %v8844 = vrot.slane %v8842, 4
        %v8845 = vor.u32 %v8841, %v8844
        %v8846 = vsel %vm1024, %v8836, %v8845
        %v8848 = vshrl.u32 %v8703, 16
        %v8850 = vrot.slane %v8848, 3
        %v8851 = vshll.u32 %v8703, 16
        %v8853 = vrot.slane %v8851, 4
        %v8854 = vor.u32 %v8850, %v8853
        %v8855 = vsel %vm1024, %v8845, %v8854
        %v8857 = vshrl.u32 %v8704, 16
        %v8859 = vrot.slane %v8857, 3
        %v8860 = vshll.u32 %v8704, 16
        %v8862 = vrot.slane %v8860, 4
        %v8863 = vor.u32 %v8859, %v8862
        %v8864 = vsel %vm1024, %v8854, %v8863
        %v8866 = vshrl.u32 %v8705, 16
        %v8868 = vrot.slane %v8866, 3
        %v8869 = vshll.u32 %v8705, 16
        %v8871 = vrot.slane %v8869, 4
        %v8872 = vor.u32 %v8868, %v8871
        %v8873 = vsel %vm1024, %v8863, %v8872
        %v8875 = vshrl.u32 %v8706, 16
        %v8877 = vrot.slane %v8875, 3
        %v8878 = vshll.u32 %v8706, 16
        %v8880 = vrot.slane %v8878, 4
        %v8881 = vor.u32 %v8877, %v8880
        %v8882 = vsel %vm1024, %v8872, %v8881
        %v8884 = vshrl.u32 %v8707, 16
        %v8886 = vrot.slane %v8884, 3
        %v8887 = vshll.u32 %v8707, 16
        %v8889 = vrot.slane %v8887, 4
        %v8890 = vor.u32 %v8886, %v8889
        %v8891 = vsel %vm1024, %v8881, %v8890
        %v8893 = vshrl.u32 %v8708, 16
        %v8895 = vrot.slane %v8893, 3
        %v8896 = vshll.u32 %v8708, 16
        %v8898 = vrot.slane %v8896, 4
        %v8899 = vor.u32 %v8895, %v8898
        %v8900 = vsel %vm1024, %v8890, %v8899
        %v8902 = vshrl.u32 %v8709, 16
        %v8904 = vrot.slane %v8902, 3
        %v8905 = vshll.u32 %v8709, 16
        %v8907 = vrot.slane %v8905, 4
        %v8908 = vor.u32 %v8904, %v8907
        %v8909 = vsel %vm1024, %v8899, %v8908
        %v8911 = vshrl.u32 %v8710, 16
        %v8913 = vrot.slane %v8911, 3
        %v8914 = vshll.u32 %v8710, 16
        %v8916 = vrot.slane %v8914, 4
        %v8917 = vor.u32 %v8913, %v8916
        %v8918 = vsel %vm1024, %v8908, %v8917
        %v8920 = vshrl.u32 %v8711, 16
        %v8922 = vrot.slane %v8920, 3
        %v8923 = vshll.u32 %v8711, 16
        %v8925 = vrot.slane %v8923, 4
        %v8926 = vor.u32 %v8922, %v8925
        %v8927 = vsel %vm1024, %v8917, %v8926
        %v8929 = vshrl.u32 %v8712, 16
        %v8931 = vrot.slane %v8929, 3
        %v8932 = vshll.u32 %v8712, 16
        %v8934 = vrot.slane %v8932, 4
        %v8935 = vor.u32 %v8931, %v8934
        %v8936 = vsel %vm1024, %v8926, %v8935
        %v8938 = vshrl.u32 %v8713, 16
        %v8940 = vrot.slane %v8938, 3
        %v8941 = vshll.u32 %v8713, 16
        %v8943 = vrot.slane %v8941, 4
        %v8944 = vor.u32 %v8940, %v8943
        %v8945 = vsel %vm1024, %v8935, %v8944
        %v8947 = vshrl.u32 %v8714, 16
        %v8949 = vrot.slane %v8947, 3
        %v8950 = vshll.u32 %v8714, 16
        %v8952 = vrot.slane %v8950, 4
        %v8953 = vor.u32 %v8949, %v8952
        %v8954 = vsel %vm1024, %v8944, %v8953
        %v8995 = vunpack.c.l.b16 %v8715
        %v8996 = vunpack.c.l.b16 %v8716
        %v8997 = vunpack.c.l.b16 %v8717
        %v8998 = vunpack.c.l.b16 %v8718
        %v8999 = vunpack.c.l.b16 %v8719
        %v9000 = vunpack.c.l.b16 %v8720
        %v9001 = vunpack.c.l.b16 %v8721
        %v9002 = vunpack.c.l.b16 %v8722
        %v9003 = vunpack.c.l.b16 %v8723
        %v9004 = vunpack.c.l.b16 %v8724
        %v9005 = vunpack.c.l.b16 %v8725
        %v9006 = vunpack.c.l.b16 %v8726
        %v9007 = vunpack.c.l.b16 %v8727
        %v9008 = vunpack.c.l.b16 %v8728
        %v9009 = vunpack.c.l.b16 %v8729
        %v9010 = vunpack.c.l.b16 %v8730
        %v9011 = vpack.c.b16 %v8996, %v8995
        %v9012 = vpack.c.b16 %v8998, %v8997
        %v9013 = vpack.c.b16 %v9000, %v8999
        %v9014 = vpack.c.b16 %v9002, %v9001
        %v9015 = vpack.c.b16 %v9004, %v9003
        %v9016 = vpack.c.b16 %v9006, %v9005
        %v9017 = vpack.c.b16 %v9008, %v9007
        %v9018 = vpack.c.b16 %v9010, %v9009
        %9027 = vmatprep.subr.bf16.mxu0 0
        %9028 = vmatpush1.bf16.msra.mxu0 %v9011
        %9029 = vmatprep.subr.bf16.mxu0 0
        %9030 = vmatpush1.bf16.msra.mxu0 %v9012
        %9031 = vmatprep.subr.bf16.mxu0 0
        %9032 = vmatpush1.bf16.msra.mxu0 %v9013
        %9033 = vmatprep.subr.bf16.mxu0 0
        %9034 = vmatpush1.bf16.msra.mxu0 %v9014
        %9035 = vmatprep.subr.bf16.mxu0 0
        %9036 = vmatpush1.bf16.msra.mxu0 %v9015
        %9037 = vmatprep.subr.bf16.mxu0 0
        %9038 = vmatpush1.bf16.msra.mxu0 %v9016
        %9039 = vmatprep.subr.bf16.mxu0 0
        %9040 = vmatpush1.bf16.msra.mxu0 %v9017
        %9041 = vmatprep.subr.bf16.mxu0 0
        %9042 = vmatpush1.bf16.msra.mxu0 %v9018
        %9043 = vmatprep.subr.bf16.mxu0 0
        %9044 = vmatpush1.bf16.msra.mxu0 0
        %9045 = vmatprep.subr.bf16.mxu0 0
        %9046 = vmatpush1.bf16.msra.mxu0 0
        %9047 = vmatprep.subr.bf16.mxu0 0
        %9048 = vmatpush1.bf16.msra.mxu0 0
        %9049 = vmatprep.subr.bf16.mxu0 0
        %9050 = vmatpush1.bf16.msra.mxu0 0
        %9051 = vmatprep.subr.bf16.mxu0 0
        %9052 = vmatpush1.bf16.msra.mxu0 0
        %9053 = vmatprep.subr.bf16.mxu0 0
        %9054 = vmatpush1.bf16.msra.mxu0 0
        %9055 = vmatprep.subr.bf16.mxu0 0
        %9056 = vmatpush1.bf16.msra.mxu0 0
        %9057 = vmatprep.subr.bf16.mxu0 0
        %9058 = vmatpush1.bf16.msra.mxu0 0
        %9059 = vmatprep.mubr.bf16.mxu0 0
        %9060 = vmatmul.mubr.bf16.gmra.mrb[0].mxu0 %v8747
        %v9061 = vpop.f32.mrb[0].mxu0
        %v9062 = vadd.f32 0.0, %v9061
        %v9063 = vpop.f32.mrb[0].mxu0
        %v9064 = vpop.f32.mrb[0].mxu0
        %v9065 = vadd.f32 0.0, %v9064
        %v9066 = vpop.f32.mrb[0].mxu0
        %9067 = vmatprep.mubr.bf16.mxu0 0
        %9068 = vmatmul.mubr.bf16.gmra.mrb[0].mxu0 %v8756
        %v9069 = vpop.f32.mrb[0].mxu0
        %v9070 = vadd.f32 0.0, %v9069
        %v9071 = vpop.f32.mrb[0].mxu0
        %v9072 = vpop.f32.mrb[0].mxu0
        %v9073 = vadd.f32 0.0, %v9072
        %v9074 = vpop.f32.mrb[0].mxu0
        %9075 = vmatprep.mubr.bf16.mxu0 0
        %9076 = vmatmul.mubr.bf16.gmra.mrb[0].mxu0 %v8765
        %v9077 = vpop.f32.mrb[0].mxu0
        %v9078 = vadd.f32 0.0, %v9077
        %v9079 = vpop.f32.mrb[0].mxu0
        %v9080 = vpop.f32.mrb[0].mxu0
        %v9081 = vadd.f32 0.0, %v9080
        %v9082 = vpop.f32.mrb[0].mxu0
        %9083 = vmatprep.mubr.bf16.mxu0 0
        %9084 = vmatmul.mubr.bf16.gmra.mrb[0].mxu0 %v8774
        %v9085 = vpop.f32.mrb[0].mxu0
        %v9086 = vadd.f32 0.0, %v9085
        %v9087 = vpop.f32.mrb[0].mxu0
        %v9088 = vpop.f32.mrb[0].mxu0
        %v9089 = vadd.f32 0.0, %v9088
        %v9090 = vpop.f32.mrb[0].mxu0
        %9091 = vmatprep.mubr.bf16.mxu0 0
        %9092 = vmatmul.mubr.bf16.gmra.mrb[0].mxu0 %v8783
        %v9093 = vpop.f32.mrb[0].mxu0
        %v9094 = vadd.f32 0.0, %v9093
        %v9095 = vpop.f32.mrb[0].mxu0
        %v9096 = vpop.f32.mrb[0].mxu0
        %v9097 = vadd.f32 0.0, %v9096
        %v9098 = vpop.f32.mrb[0].mxu0
        %9099 = vmatprep.mubr.bf16.mxu0 0
        %9100 = vmatmul.mubr.bf16.gmra.mrb[0].mxu0 %v8792
        %v9101 = vpop.f32.mrb[0].mxu0
        %v9102 = vadd.f32 0.0, %v9101
        %v9103 = vpop.f32.mrb[0].mxu0
        %v9104 = vpop.f32.mrb[0].mxu0
        %v9105 = vadd.f32 0.0, %v9104
        %v9106 = vpop.f32.mrb[0].mxu0
        %9107 = vmatprep.mubr.bf16.mxu0 0
        %9108 = vmatmul.mubr.bf16.gmra.mrb[0].mxu0 %v8801
        %v9109 = vpop.f32.mrb[0].mxu0
        %v9110 = vadd.f32 0.0, %v9109
        %v9111 = vpop.f32.mrb[0].mxu0
        %v9112 = vpop.f32.mrb[0].mxu0
        %v9113 = vadd.f32 0.0, %v9112
        %v9114 = vpop.f32.mrb[0].mxu0
        %9115 = vmatprep.mubr.bf16.mxu0 0
        %9116 = vmatmul.mubr.bf16.gmra.mrb[0].mxu0 %v8810
        %v9117 = vpop.f32.mrb[0].mxu0
        %v9118 = vadd.f32 0.0, %v9117
        %v9119 = vpop.f32.mrb[0].mxu0
        %v9120 = vpop.f32.mrb[0].mxu0
        %v9121 = vadd.f32 0.0, %v9120
        %v9122 = vpop.f32.mrb[0].mxu0
        %9123 = vmatprep.mubr.bf16.mxu0 0
        %9124 = vmatmul.mubr.bf16.gmra.mrb[0].mxu0 %v8819
        %v9125 = vpop.f32.mrb[0].mxu0
        %v9126 = vadd.f32 0.0, %v9125
        %v9127 = vpop.f32.mrb[0].mxu0
        %v9128 = vpop.f32.mrb[0].mxu0
        %v9129 = vadd.f32 0.0, %v9128
        %v9130 = vpop.f32.mrb[0].mxu0
        %9131 = vmatprep.mubr.bf16.mxu0 0
        %9132 = vmatmul.mubr.bf16.gmra.mrb[0].mxu0 %v8828
        %v9133 = vpop.f32.mrb[0].mxu0
        %v9134 = vadd.f32 0.0, %v9133
        %v9135 = vpop.f32.mrb[0].mxu0
        %v9136 = vpop.f32.mrb[0].mxu0
        %v9137 = vadd.f32 0.0, %v9136
        %v9138 = vpop.f32.mrb[0].mxu0
        %9139 = vmatprep.mubr.bf16.mxu0 0
        %9140 = vmatmul.mubr.bf16.gmra.mrb[0].mxu0 %v8837
        %v9141 = vpop.f32.mrb[0].mxu0
        %v9142 = vadd.f32 0.0, %v9141
        %v9143 = vpop.f32.mrb[0].mxu0
        %v9144 = vpop.f32.mrb[0].mxu0
        %v9145 = vadd.f32 0.0, %v9144
        %v9146 = vpop.f32.mrb[0].mxu0
        %9147 = vmatprep.mubr.bf16.mxu0 0
        %9148 = vmatmul.mubr.bf16.gmra.mrb[0].mxu0 %v8846
        %v9149 = vpop.f32.mrb[0].mxu0
        %v9150 = vadd.f32 0.0, %v9149
        %v9151 = vpop.f32.mrb[0].mxu0
        %v9152 = vpop.f32.mrb[0].mxu0
        %v9153 = vadd.f32 0.0, %v9152
        %v9154 = vpop.f32.mrb[0].mxu0
        %9155 = vmatprep.mubr.bf16.mxu0 0
        %9156 = vmatmul.mubr.bf16.gmra.mrb[0].mxu0 %v8855
        %v9157 = vpop.f32.mrb[0].mxu0
        %v9158 = vadd.f32 0.0, %v9157
        %v9159 = vpop.f32.mrb[0].mxu0
        %v9160 = vpop.f32.mrb[0].mxu0
        %v9161 = vadd.f32 0.0, %v9160
        %v9162 = vpop.f32.mrb[0].mxu0
        %9163 = vmatprep.mubr.bf16.mxu0 0
        %9164 = vmatmul.mubr.bf16.gmra.mrb[0].mxu0 %v8864
        %v9165 = vpop.f32.mrb[0].mxu0
        %v9166 = vadd.f32 0.0, %v9165
        %v9167 = vpop.f32.mrb[0].mxu0
        %v9168 = vpop.f32.mrb[0].mxu0
        %v9169 = vadd.f32 0.0, %v9168
        %v9170 = vpop.f32.mrb[0].mxu0
        %9171 = vmatprep.mubr.bf16.mxu0 0
        %9172 = vmatmul.mubr.bf16.gmra.mrb[0].mxu0 %v8873
        %v9173 = vpop.f32.mrb[0].mxu0
        %v9174 = vadd.f32 0.0, %v9173
        %v9175 = vpop.f32.mrb[0].mxu0
        %v9176 = vpop.f32.mrb[0].mxu0
        %v9177 = vadd.f32 0.0, %v9176
        %v9178 = vpop.f32.mrb[0].mxu0
        %9179 = vmatprep.mubr.bf16.mxu0 0
        %9180 = vmatmul.mubr.bf16.gmra.mrb[0].mxu0 %v8882
        %v9181 = vpop.f32.mrb[0].mxu0
        %v9182 = vadd.f32 0.0, %v9181
        %v9183 = vpop.f32.mrb[0].mxu0
        %v9184 = vpop.f32.mrb[0].mxu0
        %v9185 = vadd.f32 0.0, %v9184
        %v9186 = vpop.f32.mrb[0].mxu0
        %9187 = vmatprep.mubr.bf16.mxu0 0
        %9188 = vmatmul.mubr.bf16.gmra.mrb[0].mxu0 %v8891
        %v9189 = vpop.f32.mrb[0].mxu0
        %v9190 = vadd.f32 0.0, %v9189
        %v9191 = vpop.f32.mrb[0].mxu0
        %v9192 = vpop.f32.mrb[0].mxu0
        %v9193 = vadd.f32 0.0, %v9192
        %v9194 = vpop.f32.mrb[0].mxu0
        %9195 = vmatprep.mubr.bf16.mxu0 0
        %9196 = vmatmul.mubr.bf16.gmra.mrb[0].mxu0 %v8900
        %v9197 = vpop.f32.mrb[0].mxu0
        %v9198 = vadd.f32 0.0, %v9197
        %v9199 = vpop.f32.mrb[0].mxu0
        %v9200 = vpop.f32.mrb[0].mxu0
        %v9201 = vadd.f32 0.0, %v9200
        %v9202 = vpop.f32.mrb[0].mxu0
        %9203 = vmatprep.mubr.bf16.mxu0 0
        %9204 = vmatmul.mubr.bf16.gmra.mrb[0].mxu0 %v8909
        %v9205 = vpop.f32.mrb[0].mxu0
        %v9206 = vadd.f32 0.0, %v9205
        %v9207 = vpop.f32.mrb[0].mxu0
        %v9208 = vpop.f32.mrb[0].mxu0
        %v9209 = vadd.f32 0.0, %v9208
        %v9210 = vpop.f32.mrb[0].mxu0
        %9211 = vmatprep.mubr.bf16.mxu0 0
        %9212 = vmatmul.mubr.bf16.gmra.mrb[0].mxu0 %v8918
        %v9213 = vpop.f32.mrb[0].mxu0
        %v9214 = vadd.f32 0.0, %v9213
        %v9215 = vpop.f32.mrb[0].mxu0
        %v9216 = vpop.f32.mrb[0].mxu0
        %v9217 = vadd.f32 0.0, %v9216
        %v9218 = vpop.f32.mrb[0].mxu0
        %9219 = vmatprep.mubr.bf16.mxu0 0
        %9220 = vmatmul.mubr.bf16.gmra.mrb[0].mxu0 %v8927
        %v9221 = vpop.f32.mrb[0].mxu0
        %v9222 = vadd.f32 0.0, %v9221
        %v9223 = vpop.f32.mrb[0].mxu0
        %v9224 = vpop.f32.mrb[0].mxu0
        %v9225 = vadd.f32 0.0, %v9224
        %v9226 = vpop.f32.mrb[0].mxu0
        %9227 = vmatprep.mubr.bf16.mxu0 0
        %9228 = vmatmul.mubr.bf16.gmra.mrb[0].mxu0 %v8936
        %v9229 = vpop.f32.mrb[0].mxu0
        %v9230 = vadd.f32 0.0, %v9229
        %v9231 = vpop.f32.mrb[0].mxu0
        %v9232 = vpop.f32.mrb[0].mxu0
        %v9233 = vadd.f32 0.0, %v9232
        %v9234 = vpop.f32.mrb[0].mxu0
        %9235 = vmatprep.mubr.bf16.mxu0 0
        %9236 = vmatmul.mubr.bf16.gmra.mrb[0].mxu0 %v8945
        %v9237 = vpop.f32.mrb[0].mxu0
        %v9238 = vadd.f32 0.0, %v9237
        %v9239 = vpop.f32.mrb[0].mxu0
        %v9240 = vpop.f32.mrb[0].mxu0
        %v9241 = vadd.f32 0.0, %v9240
        %v9242 = vpop.f32.mrb[0].mxu0
        %9243 = vmatprep.mubr.bf16.mxu0 0
        %9244 = vmatmul.mubr.bf16.gmra.mrb[0].mxu0 %v8954
        %v9245 = vpop.f32.mrb[0].mxu0
        %v9246 = vadd.f32 0.0, %v9245
        %v9247 = vpop.f32.mrb[0].mxu0
        %v9248 = vpop.f32.mrb[0].mxu0
        %v9249 = vadd.f32 0.0, %v9248
        %v9250 = vpop.f32.mrb[0].mxu0
        %9251 = vdwg.mxu0
        %v9252 = vadd.f32 %v8642, %v9062
        %v9253 = vadd.f32 %v8643, %v9065
        %v9254 = vadd.f32 %v8644, %v9070
        %v9255 = vadd.f32 %v8645, %v9073
        %v9256 = vadd.f32 %v8646, %v9078
        %v9257 = vadd.f32 %v8647, %v9081
        %v9258 = vadd.f32 %v8648, %v9086
        %v9259 = vadd.f32 %v8649, %v9089
        %v9260 = vadd.f32 %v8650, %v9094
        %v9261 = vadd.f32 %v8651, %v9097
        %v9262 = vadd.f32 %v8652, %v9102
        %v9263 = vadd.f32 %v8653, %v9105
        %v9264 = vadd.f32 %v8654, %v9110
        %v9265 = vadd.f32 %v8655, %v9113
        %v9266 = vadd.f32 %v8656, %v9118
        %v9267 = vadd.f32 %v8657, %v9121
        %v9268 = vadd.f32 %v8658, %v9126
        %v9269 = vadd.f32 %v8659, %v9129
        %v9270 = vadd.f32 %v8660, %v9134
        %v9271 = vadd.f32 %v8661, %v9137
        %v9272 = vadd.f32 %v8662, %v9142
        %v9273 = vadd.f32 %v8663, %v9145
        %v9274 = vadd.f32 %v8664, %v9150
        %v9275 = vadd.f32 %v8665, %v9153
        %v9276 = vadd.f32 %v8666, %v9158
        %v9277 = vadd.f32 %v8667, %v9161
        %v9278 = vadd.f32 %v8668, %v9166
        %v9279 = vadd.f32 %v8669, %v9169
        %v9280 = vadd.f32 %v8670, %v9174
        %v9281 = vadd.f32 %v8671, %v9177
        %v9282 = vadd.f32 %v8672, %v9182
        %v9283 = vadd.f32 %v8673, %v9185
        %v9284 = vadd.f32 %v8674, %v9190
        %v9285 = vadd.f32 %v8675, %v9193
        %v9286 = vadd.f32 %v8676, %v9198
        %v9287 = vadd.f32 %v8677, %v9201
        %v9288 = vadd.f32 %v8678, %v9206
        %v9289 = vadd.f32 %v8679, %v9209
        %v9290 = vadd.f32 %v8680, %v9214
        %v9291 = vadd.f32 %v8681, %v9217
        %v9292 = vadd.f32 %v8682, %v9222
        %v9293 = vadd.f32 %v8683, %v9225
        %v9294 = vadd.f32 %v8684, %v9230
        %v9295 = vadd.f32 %v8685, %v9233
        %v9296 = vadd.f32 %v8686, %v9238
        %v9297 = vadd.f32 %v8687, %v9241
        %v9298 = vadd.f32 %v8688, %v9246
        %v9299 = vadd.f32 %v8689, %v9249
        %v9300 = vld [vmem:[#allocation3 + $0x18] sm:$0xf0]
        %v9301 = vld [vmem:[#allocation9 + $0x1c0] sm:$0xf]
        %v9302 = vld [vmem:[#allocation9 + $0x1c4] sm:$0xf]
        %v9303 = vld [vmem:[#allocation9 + $0x1c8] sm:$0xf]
        %v9304 = vld [vmem:[#allocation9 + $0x1cc] sm:$0xf]
        %v9305 = vld [vmem:[#allocation9 + $0x1d0] sm:$0xf]
        %v9306 = vld [vmem:[#allocation9 + $0x1d4] sm:$0xf]
        %v9307 = vld [vmem:[#allocation9 + $0x1d8] sm:$0xf]
        %v9308 = vld [vmem:[#allocation9 + $0x1dc] sm:$0xf]
        %v9309 = vld [vmem:[#allocation9 + $0x1e0] sm:$0xf]
        %v9310 = vld [vmem:[#allocation9 + $0x1e4] sm:$0xf]
        %v9311 = vld [vmem:[#allocation9 + $0x1e8] sm:$0xf]
        %v9312 = vld [vmem:[#allocation9 + $0x1ec] sm:$0xf]
        %v9313 = vld [vmem:[#allocation9 + $0x1f0] sm:$0xf]
        %v9314 = vld [vmem:[#allocation9 + $0x1f4] sm:$0xf]
        %v9315 = vld [vmem:[#allocation9 + $0x1f8] sm:$0xf]
        %v9316 = vld [vmem:[#allocation9 + $0x1fc] sm:$0xf]
        %v9342 = vrot.slane %v9300, 4
        %v9343 = vrot.slane %v8691, 4
        %v9344 = vsel %vm644, %v9342, %v9343
        %v9345 = vrot.slane %v8692, 4
        %v9346 = vsel %vm644, %v9343, %v9345
        %v9347 = vrot.slane %v8693, 4
        %v9348 = vsel %vm644, %v9345, %v9347
        %v9349 = vrot.slane %v8694, 4
        %v9350 = vsel %vm644, %v9347, %v9349
        %v9351 = vrot.slane %v8695, 4
        %v9352 = vsel %vm644, %v9349, %v9351
        %v9353 = vrot.slane %v8696, 4
        %v9354 = vsel %vm644, %v9351, %v9353
        %v9355 = vrot.slane %v8697, 4
        %v9356 = vsel %vm644, %v9353, %v9355
        %v9357 = vrot.slane %v8698, 4
        %v9358 = vsel %vm644, %v9355, %v9357
        %v9359 = vrot.slane %v8699, 4
        %v9360 = vsel %vm644, %v9357, %v9359
        %v9361 = vrot.slane %v8700, 4
        %v9362 = vsel %vm644, %v9359, %v9361
        %v9363 = vrot.slane %v8701, 4
        %v9364 = vsel %vm644, %v9361, %v9363
        %v9365 = vrot.slane %v8702, 4
        %v9366 = vsel %vm644, %v9363, %v9365
        %v9367 = vrot.slane %v8703, 4
        %v9368 = vsel %vm644, %v9365, %v9367
        %v9369 = vrot.slane %v8704, 4
        %v9370 = vsel %vm644, %v9367, %v9369
        %v9371 = vrot.slane %v8705, 4
        %v9372 = vsel %vm644, %v9369, %v9371
        %v9373 = vrot.slane %v8706, 4
        %v9374 = vsel %vm644, %v9371, %v9373
        %v9375 = vrot.slane %v8707, 4
        %v9376 = vsel %vm644, %v9373, %v9375
        %v9377 = vrot.slane %v8708, 4
        %v9378 = vsel %vm644, %v9375, %v9377
        %v9379 = vrot.slane %v8709, 4
        %v9380 = vsel %vm644, %v9377, %v9379
        %v9381 = vrot.slane %v8710, 4
        %v9382 = vsel %vm644, %v9379, %v9381
        %v9383 = vrot.slane %v8711, 4
        %v9384 = vsel %vm644, %v9381, %v9383
        %v9385 = vrot.slane %v8712, 4
        %v9386 = vsel %vm644, %v9383, %v9385
        %v9387 = vrot.slane %v8713, 4
        %v9388 = vsel %vm644, %v9385, %v9387
        %v9389 = vrot.slane %v8714, 4
        %v9390 = vsel %vm644, %v9387, %v9389
        %v9431 = vunpack.c.l.b16 %v9301
        %v9432 = vunpack.c.l.b16 %v9302
        %v9433 = vunpack.c.l.b16 %v9303
        %v9434 = vunpack.c.l.b16 %v9304
        %v9435 = vunpack.c.l.b16 %v9305
        %v9436 = vunpack.c.l.b16 %v9306
        %v9437 = vunpack.c.l.b16 %v9307
        %v9438 = vunpack.c.l.b16 %v9308
        %v9439 = vunpack.c.l.b16 %v9309
        %v9440 = vunpack.c.l.b16 %v9310
        %v9441 = vunpack.c.l.b16 %v9311
        %v9442 = vunpack.c.l.b16 %v9312
        %v9443 = vunpack.c.l.b16 %v9313
        %v9444 = vunpack.c.l.b16 %v9314
        %v9445 = vunpack.c.l.b16 %v9315
        %v9446 = vunpack.c.l.b16 %v9316
        %v9447 = vpack.c.b16 %v9432, %v9431
        %v9448 = vpack.c.b16 %v9434, %v9433
        %v9449 = vpack.c.b16 %v9436, %v9435
        %v9450 = vpack.c.b16 %v9438, %v9437
        %v9451 = vpack.c.b16 %v9440, %v9439
        %v9452 = vpack.c.b16 %v9442, %v9441
        %v9453 = vpack.c.b16 %v9444, %v9443
        %v9454 = vpack.c.b16 %v9446, %v9445
        %9463 = vmatprep.subr.bf16.mxu0 0
        %9464 = vmatpush1.bf16.msra.mxu0 %v9447
        %9465 = vmatprep.subr.bf16.mxu0 0
        %9466 = vmatpush1.bf16.msra.mxu0 %v9448
        %9467 = vmatprep.subr.bf16.mxu0 0
        %9468 = vmatpush1.bf16.msra.mxu0 %v9449
        %9469 = vmatprep.subr.bf16.mxu0 0
        %9470 = vmatpush1.bf16.msra.mxu0 %v9450
        %9471 = vmatprep.subr.bf16.mxu0 0
        %9472 = vmatpush1.bf16.msra.mxu0 %v9451
        %9473 = vmatprep.subr.bf16.mxu0 0
        %9474 = vmatpush1.bf16.msra.mxu0 %v9452
        %9475 = vmatprep.subr.bf16.mxu0 0
        %9476 = vmatpush1.bf16.msra.mxu0 %v9453
        %9477 = vmatprep.subr.bf16.mxu0 0
        %9478 = vmatpush1.bf16.msra.mxu0 %v9454
        %9479 = vmatprep.subr.bf16.mxu0 0
        %9480 = vmatpush1.bf16.msra.mxu0 0
        %9481 = vmatprep.subr.bf16.mxu0 0
        %9482 = vmatpush1.bf16.msra.mxu0 0
        %9483 = vmatprep.subr.bf16.mxu0 0
        %9484 = vmatpush1.bf16.msra.mxu0 0
        %9485 = vmatprep.subr.bf16.mxu0 0
        %9486 = vmatpush1.bf16.msra.mxu0 0
        %9487 = vmatprep.subr.bf16.mxu0 0
        %9488 = vmatpush1.bf16.msra.mxu0 0
        %9489 = vmatprep.subr.bf16.mxu0 0
        %9490 = vmatpush1.bf16.msra.mxu0 0
        %9491 = vmatprep.subr.bf16.mxu0 0
        %9492 = vmatpush1.bf16.msra.mxu0 0
        %9493 = vmatprep.subr.bf16.mxu0 0
        %9494 = vmatpush1.bf16.msra.mxu0 0
        %9495 = vmatprep.mubr.bf16.mxu0 0
        %9496 = vmatmul.mubr.bf16.gmra.mrb[0].mxu0 %v9344
        %v9497 = vpop.f32.mrb[0].mxu0
        %v9498 = vadd.f32 0.0, %v9497
        %v9499 = vpop.f32.mrb[0].mxu0
        %v9500 = vpop.f32.mrb[0].mxu0
        %v9501 = vadd.f32 0.0, %v9500
        %v9502 = vpop.f32.mrb[0].mxu0
        %9503 = vmatprep.mubr.bf16.mxu0 0
        %9504 = vmatmul.mubr.bf16.gmra.mrb[0].mxu0 %v9346
        %v9505 = vpop.f32.mrb[0].mxu0
        %v9506 = vadd.f32 0.0, %v9505
        %v9507 = vpop.f32.mrb[0].mxu0
        %v9508 = vpop.f32.mrb[0].mxu0
        %v9509 = vadd.f32 0.0, %v9508
        %v9510 = vpop.f32.mrb[0].mxu0
        %9511 = vmatprep.mubr.bf16.mxu0 0
        %9512 = vmatmul.mubr.bf16.gmra.mrb[0].mxu0 %v9348
        %v9513 = vpop.f32.mrb[0].mxu0
        %v9514 = vadd.f32 0.0, %v9513
        %v9515 = vpop.f32.mrb[0].mxu0
        %v9516 = vpop.f32.mrb[0].mxu0
        %v9517 = vadd.f32 0.0, %v9516
        %v9518 = vpop.f32.mrb[0].mxu0
        %9519 = vmatprep.mubr.bf16.mxu0 0
        %9520 = vmatmul.mubr.bf16.gmra.mrb[0].mxu0 %v9350
        %v9521 = vpop.f32.mrb[0].mxu0
        %v9522 = vadd.f32 0.0, %v9521
        %v9523 = vpop.f32.mrb[0].mxu0
        %v9524 = vpop.f32.mrb[0].mxu0
        %v9525 = vadd.f32 0.0, %v9524
        %v9526 = vpop.f32.mrb[0].mxu0
        %9527 = vmatprep.mubr.bf16.mxu0 0
        %9528 = vmatmul.mubr.bf16.gmra.mrb[0].mxu0 %v9352
        %v9529 = vpop.f32.mrb[0].mxu0
        %v9530 = vadd.f32 0.0, %v9529
        %v9531 = vpop.f32.mrb[0].mxu0
        %v9532 = vpop.f32.mrb[0].mxu0
        %v9533 = vadd.f32 0.0, %v9532
        %v9534 = vpop.f32.mrb[0].mxu0
        %9535 = vmatprep.mubr.bf16.mxu0 0
        %9536 = vmatmul.mubr.bf16.gmra.mrb[0].mxu0 %v9354
        %v9537 = vpop.f32.mrb[0].mxu0
        %v9538 = vadd.f32 0.0, %v9537
        %v9539 = vpop.f32.mrb[0].mxu0
        %v9540 = vpop.f32.mrb[0].mxu0
        %v9541 = vadd.f32 0.0, %v9540
        %v9542 = vpop.f32.mrb[0].mxu0
        %9543 = vmatprep.mubr.bf16.mxu0 0
        %9544 = vmatmul.mubr.bf16.gmra.mrb[0].mxu0 %v9356
        %v9545 = vpop.f32.mrb[0].mxu0
        %v9546 = vadd.f32 0.0, %v9545
        %v9547 = vpop.f32.mrb[0].mxu0
        %v9548 = vpop.f32.mrb[0].mxu0
        %v9549 = vadd.f32 0.0, %v9548
        %v9550 = vpop.f32.mrb[0].mxu0
        %9551 = vmatprep.mubr.bf16.mxu0 0
        %9552 = vmatmul.mubr.bf16.gmra.mrb[0].mxu0 %v9358
        %v9553 = vpop.f32.mrb[0].mxu0
        %v9554 = vadd.f32 0.0, %v9553
        %v9555 = vpop.f32.mrb[0].mxu0
        %v9556 = vpop.f32.mrb[0].mxu0
        %v9557 = vadd.f32 0.0, %v9556
        %v9558 = vpop.f32.mrb[0].mxu0
        %9559 = vmatprep.mubr.bf16.mxu0 0
        %9560 = vmatmul.mubr.bf16.gmra.mrb[0].mxu0 %v9360
        %v9561 = vpop.f32.mrb[0].mxu0
        %v9562 = vadd.f32 0.0, %v9561
        %v9563 = vpop.f32.mrb[0].mxu0
        %v9564 = vpop.f32.mrb[0].mxu0
        %v9565 = vadd.f32 0.0, %v9564
        %v9566 = vpop.f32.mrb[0].mxu0
        %9567 = vmatprep.mubr.bf16.mxu0 0
        %9568 = vmatmul.mubr.bf16.gmra.mrb[0].mxu0 %v9362
        %v9569 = vpop.f32.mrb[0].mxu0
        %v9570 = vadd.f32 0.0, %v9569
        %v9571 = vpop.f32.mrb[0].mxu0
        %v9572 = vpop.f32.mrb[0].mxu0
        %v9573 = vadd.f32 0.0, %v9572
        %v9574 = vpop.f32.mrb[0].mxu0
        %9575 = vmatprep.mubr.bf16.mxu0 0
        %9576 = vmatmul.mubr.bf16.gmra.mrb[0].mxu0 %v9364
        %v9577 = vpop.f32.mrb[0].mxu0
        %v9578 = vadd.f32 0.0, %v9577
        %v9579 = vpop.f32.mrb[0].mxu0
        %v9580 = vpop.f32.mrb[0].mxu0
        %v9581 = vadd.f32 0.0, %v9580
        %v9582 = vpop.f32.mrb[0].mxu0
        %9583 = vmatprep.mubr.bf16.mxu0 0
        %9584 = vmatmul.mubr.bf16.gmra.mrb[0].mxu0 %v9366
        %v9585 = vpop.f32.mrb[0].mxu0
        %v9586 = vadd.f32 0.0, %v9585
        %v9587 = vpop.f32.mrb[0].mxu0
        %v9588 = vpop.f32.mrb[0].mxu0
        %v9589 = vadd.f32 0.0, %v9588
        %v9590 = vpop.f32.mrb[0].mxu0
        %9591 = vmatprep.mubr.bf16.mxu0 0
        %9592 = vmatmul.mubr.bf16.gmra.mrb[0].mxu0 %v9368
        %v9593 = vpop.f32.mrb[0].mxu0
        %v9594 = vadd.f32 0.0, %v9593
        %v9595 = vpop.f32.mrb[0].mxu0
        %v9596 = vpop.f32.mrb[0].mxu0
        %v9597 = vadd.f32 0.0, %v9596
        %v9598 = vpop.f32.mrb[0].mxu0
        %9599 = vmatprep.mubr.bf16.mxu0 0
        %9600 = vmatmul.mubr.bf16.gmra.mrb[0].mxu0 %v9370
        %v9601 = vpop.f32.mrb[0].mxu0
        %v9602 = vadd.f32 0.0, %v9601
        %v9603 = vpop.f32.mrb[0].mxu0
        %v9604 = vpop.f32.mrb[0].mxu0
        %v9605 = vadd.f32 0.0, %v9604
        %v9606 = vpop.f32.mrb[0].mxu0
        %9607 = vmatprep.mubr.bf16.mxu0 0
        %9608 = vmatmul.mubr.bf16.gmra.mrb[0].mxu0 %v9372
        %v9609 = vpop.f32.mrb[0].mxu0
        %v9610 = vadd.f32 0.0, %v9609
        %v9611 = vpop.f32.mrb[0].mxu0
        %v9612 = vpop.f32.mrb[0].mxu0
        %v9613 = vadd.f32 0.0, %v9612
        %v9614 = vpop.f32.mrb[0].mxu0
        %9615 = vmatprep.mubr.bf16.mxu0 0
        %9616 = vmatmul.mubr.bf16.gmra.mrb[0].mxu0 %v9374
        %v9617 = vpop.f32.mrb[0].mxu0
        %v9618 = vadd.f32 0.0, %v9617
        %v9619 = vpop.f32.mrb[0].mxu0
        %v9620 = vpop.f32.mrb[0].mxu0
        %v9621 = vadd.f32 0.0, %v9620
        %v9622 = vpop.f32.mrb[0].mxu0
        %9623 = vmatprep.mubr.bf16.mxu0 0
        %9624 = vmatmul.mubr.bf16.gmra.mrb[0].mxu0 %v9376
        %v9625 = vpop.f32.mrb[0].mxu0
        %v9626 = vadd.f32 0.0, %v9625
        %v9627 = vpop.f32.mrb[0].mxu0
        %v9628 = vpop.f32.mrb[0].mxu0
        %v9629 = vadd.f32 0.0, %v9628
        %v9630 = vpop.f32.mrb[0].mxu0
        %9631 = vmatprep.mubr.bf16.mxu0 0
        %9632 = vmatmul.mubr.bf16.gmra.mrb[0].mxu0 %v9378
        %v9633 = vpop.f32.mrb[0].mxu0
        %v9634 = vadd.f32 0.0, %v9633
        %v9635 = vpop.f32.mrb[0].mxu0
        %v9636 = vpop.f32.mrb[0].mxu0
        %v9637 = vadd.f32 0.0, %v9636
        %v9638 = vpop.f32.mrb[0].mxu0
        %9639 = vmatprep.mubr.bf16.mxu0 0
        %9640 = vmatmul.mubr.bf16.gmra.mrb[0].mxu0 %v9380
        %v9641 = vpop.f32.mrb[0].mxu0
        %v9642 = vadd.f32 0.0, %v9641
        %v9643 = vpop.f32.mrb[0].mxu0
        %v9644 = vpop.f32.mrb[0].mxu0
        %v9645 = vadd.f32 0.0, %v9644
        %v9646 = vpop.f32.mrb[0].mxu0
        %9647 = vmatprep.mubr.bf16.mxu0 0
        %9648 = vmatmul.mubr.bf16.gmra.mrb[0].mxu0 %v9382
        %v9649 = vpop.f32.mrb[0].mxu0
        %v9650 = vadd.f32 0.0, %v9649
        %v9651 = vpop.f32.mrb[0].mxu0
        %v9652 = vpop.f32.mrb[0].mxu0
        %v9653 = vadd.f32 0.0, %v9652
        %v9654 = vpop.f32.mrb[0].mxu0
        %9655 = vmatprep.mubr.bf16.mxu0 0
        %9656 = vmatmul.mubr.bf16.gmra.mrb[0].mxu0 %v9384
        %v9657 = vpop.f32.mrb[0].mxu0
        %v9658 = vadd.f32 0.0, %v9657
        %v9659 = vpop.f32.mrb[0].mxu0
        %v9660 = vpop.f32.mrb[0].mxu0
        %v9661 = vadd.f32 0.0, %v9660
        %v9662 = vpop.f32.mrb[0].mxu0
        %9663 = vmatprep.mubr.bf16.mxu0 0
        %9664 = vmatmul.mubr.bf16.gmra.mrb[0].mxu0 %v9386
        %v9665 = vpop.f32.mrb[0].mxu0
        %v9666 = vadd.f32 0.0, %v9665
        %v9667 = vpop.f32.mrb[0].mxu0
        %v9668 = vpop.f32.mrb[0].mxu0
        %v9669 = vadd.f32 0.0, %v9668
        %v9670 = vpop.f32.mrb[0].mxu0
        %9671 = vmatprep.mubr.bf16.mxu0 0
        %9672 = vmatmul.mubr.bf16.gmra.mrb[0].mxu0 %v9388
        %v9673 = vpop.f32.mrb[0].mxu0
        %v9674 = vadd.f32 0.0, %v9673
        %v9675 = vpop.f32.mrb[0].mxu0
        %v9676 = vpop.f32.mrb[0].mxu0
        %v9677 = vadd.f32 0.0, %v9676
        %v9678 = vpop.f32.mrb[0].mxu0
        %9679 = vmatprep.mubr.bf16.mxu0 0
        %9680 = vmatmul.mubr.bf16.gmra.mrb[0].mxu0 %v9390
        %v9681 = vpop.f32.mrb[0].mxu0
        %v9682 = vadd.f32 0.0, %v9681
        %v9683 = vpop.f32.mrb[0].mxu0
        %v9684 = vpop.f32.mrb[0].mxu0
        %v9685 = vadd.f32 0.0, %v9684
        %v9686 = vpop.f32.mrb[0].mxu0
        %9687 = vdwg.mxu0
        %v9688 = vadd.f32 %v9252, %v9498
        %v9689 = vadd.f32 %v9253, %v9501
        %v9690 = vadd.f32 %v9254, %v9506
        %v9691 = vadd.f32 %v9255, %v9509
        %v9692 = vadd.f32 %v9256, %v9514
        %v9693 = vadd.f32 %v9257, %v9517
        %v9694 = vadd.f32 %v9258, %v9522
        %v9695 = vadd.f32 %v9259, %v9525
        %v9696 = vadd.f32 %v9260, %v9530
        %v9697 = vadd.f32 %v9261, %v9533
        %v9698 = vadd.f32 %v9262, %v9538
        %v9699 = vadd.f32 %v9263, %v9541
        %v9700 = vadd.f32 %v9264, %v9546
        %v9701 = vadd.f32 %v9265, %v9549
        %v9702 = vadd.f32 %v9266, %v9554
        %v9703 = vadd.f32 %v9267, %v9557
        %v9704 = vadd.f32 %v9268, %v9562
        %v9705 = vadd.f32 %v9269, %v9565
        %v9706 = vadd.f32 %v9270, %v9570
        %v9707 = vadd.f32 %v9271, %v9573
        %v9708 = vadd.f32 %v9272, %v9578
        %v9709 = vadd.f32 %v9273, %v9581
        %v9710 = vadd.f32 %v9274, %v9586
        %v9711 = vadd.f32 %v9275, %v9589
        %v9712 = vadd.f32 %v9276, %v9594
        %v9713 = vadd.f32 %v9277, %v9597
        %v9714 = vadd.f32 %v9278, %v9602
        %v9715 = vadd.f32 %v9279, %v9605
        %v9716 = vadd.f32 %v9280, %v9610
        %v9717 = vadd.f32 %v9281, %v9613
        %v9718 = vadd.f32 %v9282, %v9618
        %v9719 = vadd.f32 %v9283, %v9621
        %v9720 = vadd.f32 %v9284, %v9626
        %v9721 = vadd.f32 %v9285, %v9629
        %v9722 = vadd.f32 %v9286, %v9634
        %v9723 = vadd.f32 %v9287, %v9637
        %v9724 = vadd.f32 %v9288, %v9642
        %v9725 = vadd.f32 %v9289, %v9645
        %v9726 = vadd.f32 %v9290, %v9650
        %v9727 = vadd.f32 %v9291, %v9653
        %v9728 = vadd.f32 %v9292, %v9658
        %v9729 = vadd.f32 %v9293, %v9661
        %v9730 = vadd.f32 %v9294, %v9666
        %v9731 = vadd.f32 %v9295, %v9669
        %v9732 = vadd.f32 %v9296, %v9674
        %v9733 = vadd.f32 %v9297, %v9677
        %v9734 = vadd.f32 %v9298, %v9682
        %v9735 = vadd.f32 %v9299, %v9685
        %v9736 = vld [vmem:[#allocation3 + $0xd8] sm:$0x1f]
        %v9737 = vld [vmem:[#allocation9 + $0x200] sm:$0xf]
        %v9738 = vld [vmem:[#allocation9 + $0x204] sm:$0xf]
        %v9739 = vld [vmem:[#allocation9 + $0x208] sm:$0xf]
        %v9740 = vld [vmem:[#allocation9 + $0x20c] sm:$0xf]
        %v9741 = vld [vmem:[#allocation9 + $0x210] sm:$0xf]
        %v9742 = vld [vmem:[#allocation9 + $0x214] sm:$0xf]
        %v9743 = vld [vmem:[#allocation9 + $0x218] sm:$0xf]
        %v9744 = vld [vmem:[#allocation9 + $0x21c] sm:$0xf]
        %v9745 = vld [vmem:[#allocation9 + $0x220] sm:$0xf]
        %v9746 = vld [vmem:[#allocation9 + $0x224] sm:$0xf]
        %v9747 = vld [vmem:[#allocation9 + $0x228] sm:$0xf]
        %v9748 = vld [vmem:[#allocation9 + $0x22c] sm:$0xf]
        %v9749 = vld [vmem:[#allocation9 + $0x230] sm:$0xf]
        %v9750 = vld [vmem:[#allocation9 + $0x234] sm:$0xf]
        %v9751 = vld [vmem:[#allocation9 + $0x238] sm:$0xf]
        %v9752 = vld [vmem:[#allocation9 + $0x23c] sm:$0xf]
        %v9754 = vshrl.u32 %v9300, 16
        %v9756 = vrot.slane %v9754, 4
        %v9757 = vshll.u32 %v9300, 16
        %v9759 = vrot.slane %v9757, 5
        %v9760 = vor.u32 %v9756, %v9759
        %v9761 = vrot.slane %v8740, 4
        %v9762 = vrot.slane %v8743, 5
        %v9763 = vor.u32 %v9761, %v9762
        %v9764 = vsel %vm1617, %v9760, %v9763
        %v9765 = vrot.slane %v8749, 4
        %v9766 = vrot.slane %v8752, 5
        %v9767 = vor.u32 %v9765, %v9766
        %v9768 = vsel %vm1617, %v9763, %v9767
        %v9769 = vrot.slane %v8758, 4
        %v9770 = vrot.slane %v8761, 5
        %v9771 = vor.u32 %v9769, %v9770
        %v9772 = vsel %vm1617, %v9767, %v9771
        %v9773 = vrot.slane %v8767, 4
        %v9774 = vrot.slane %v8770, 5
        %v9775 = vor.u32 %v9773, %v9774
        %v9776 = vsel %vm1617, %v9771, %v9775
        %v9777 = vrot.slane %v8776, 4
        %v9778 = vrot.slane %v8779, 5
        %v9779 = vor.u32 %v9777, %v9778
        %v9780 = vsel %vm1617, %v9775, %v9779
        %v9781 = vrot.slane %v8785, 4
        %v9782 = vrot.slane %v8788, 5
        %v9783 = vor.u32 %v9781, %v9782
        %v9784 = vsel %vm1617, %v9779, %v9783
        %v9785 = vrot.slane %v8794, 4
        %v9786 = vrot.slane %v8797, 5
        %v9787 = vor.u32 %v9785, %v9786
        %v9788 = vsel %vm1617, %v9783, %v9787
        %v9789 = vrot.slane %v8803, 4
        %v9790 = vrot.slane %v8806, 5
        %v9791 = vor.u32 %v9789, %v9790
        %v9792 = vsel %vm1617, %v9787, %v9791
        %v9793 = vrot.slane %v8812, 4
        %v9794 = vrot.slane %v8815, 5
        %v9795 = vor.u32 %v9793, %v9794
        %v9796 = vsel %vm1617, %v9791, %v9795
        %v9797 = vrot.slane %v8821, 4
        %v9798 = vrot.slane %v8824, 5
        %v9799 = vor.u32 %v9797, %v9798
        %v9800 = vsel %vm1617, %v9795, %v9799
        %v9801 = vrot.slane %v8830, 4
        %v9802 = vrot.slane %v8833, 5
        %v9803 = vor.u32 %v9801, %v9802
        %v9804 = vsel %vm1617, %v9799, %v9803
        %v9805 = vrot.slane %v8839, 4
        %v9806 = vrot.slane %v8842, 5
        %v9807 = vor.u32 %v9805, %v9806
        %v9808 = vsel %vm1617, %v9803, %v9807
        %v9809 = vrot.slane %v8848, 4
        %v9810 = vrot.slane %v8851, 5
        %v9811 = vor.u32 %v9809, %v9810
        %v9812 = vsel %vm1617, %v9807, %v9811
        %v9813 = vrot.slane %v8857, 4
        %v9814 = vrot.slane %v8860, 5
        %v9815 = vor.u32 %v9813, %v9814
        %v9816 = vsel %vm1617, %v9811, %v9815
        %v9817 = vrot.slane %v8866, 4
        %v9818 = vrot.slane %v8869, 5
        %v9819 = vor.u32 %v9817, %v9818
        %v9820 = vsel %vm1617, %v9815, %v9819
        %v9821 = vrot.slane %v8875, 4
        %v9822 = vrot.slane %v8878, 5
        %v9823 = vor.u32 %v9821, %v9822
        %v9824 = vsel %vm1617, %v9819, %v9823
        %v9825 = vrot.slane %v8884, 4
        %v9826 = vrot.slane %v8887, 5
        %v9827 = vor.u32 %v9825, %v9826
        %v9828 = vsel %vm1617, %v9823, %v9827
        %v9829 = vrot.slane %v8893, 4
        %v9830 = vrot.slane %v8896, 5
        %v9831 = vor.u32 %v9829, %v9830
        %v9832 = vsel %vm1617, %v9827, %v9831
        %v9833 = vrot.slane %v8902, 4
        %v9834 = vrot.slane %v8905, 5
        %v9835 = vor.u32 %v9833, %v9834
        %v9836 = vsel %vm1617, %v9831, %v9835
        %v9837 = vrot.slane %v8911, 4
        %v9838 = vrot.slane %v8914, 5
        %v9839 = vor.u32 %v9837, %v9838
        %v9840 = vsel %vm1617, %v9835, %v9839
        %v9841 = vrot.slane %v8920, 4
        %v9842 = vrot.slane %v8923, 5
        %v9843 = vor.u32 %v9841, %v9842
        %v9844 = vsel %vm1617, %v9839, %v9843
        %v9845 = vrot.slane %v8929, 4
        %v9846 = vrot.slane %v8932, 5
        %v9847 = vor.u32 %v9845, %v9846
        %v9848 = vsel %vm1617, %v9843, %v9847
        %v9849 = vrot.slane %v8938, 4
        %v9850 = vrot.slane %v8941, 5
        %v9851 = vor.u32 %v9849, %v9850
        %v9852 = vsel %vm1617, %v9847, %v9851
        %v9854 = vshrl.u32 %v9736, 16
        %v9856 = vrot.slane %v9854, 4
        %v9857 = vshll.u32 %v9736, 16
        %v9859 = vrot.slane %v9857, 5
        %v9860 = vor.u32 %v9856, %v9859
        %v9861 = vsel %vm1617, %v9851, %v9860
        %v9902 = vunpack.c.l.b16 %v9737
        %v9903 = vunpack.c.l.b16 %v9738
        %v9904 = vunpack.c.l.b16 %v9739
        %v9905 = vunpack.c.l.b16 %v9740
        %v9906 = vunpack.c.l.b16 %v9741
        %v9907 = vunpack.c.l.b16 %v9742
        %v9908 = vunpack.c.l.b16 %v9743
        %v9909 = vunpack.c.l.b16 %v9744
        %v9910 = vunpack.c.l.b16 %v9745
        %v9911 = vunpack.c.l.b16 %v9746
        %v9912 = vunpack.c.l.b16 %v9747
        %v9913 = vunpack.c.l.b16 %v9748
        %v9914 = vunpack.c.l.b16 %v9749
        %v9915 = vunpack.c.l.b16 %v9750
        %v9916 = vunpack.c.l.b16 %v9751
        %v9917 = vunpack.c.l.b16 %v9752
        %v9918 = vpack.c.b16 %v9903, %v9902
        %v9919 = vpack.c.b16 %v9905, %v9904
        %v9920 = vpack.c.b16 %v9907, %v9906
        %v9921 = vpack.c.b16 %v9909, %v9908
        %v9922 = vpack.c.b16 %v9911, %v9910
        %v9923 = vpack.c.b16 %v9913, %v9912
        %v9924 = vpack.c.b16 %v9915, %v9914
        %v9925 = vpack.c.b16 %v9917, %v9916
        %9934 = vmatprep.subr.bf16.mxu0 0
        %9935 = vmatpush1.bf16.msra.mxu0 %v9918
        %9936 = vmatprep.subr.bf16.mxu0 0
        %9937 = vmatpush1.bf16.msra.mxu0 %v9919
        %9938 = vmatprep.subr.bf16.mxu0 0
        %9939 = vmatpush1.bf16.msra.mxu0 %v9920
        %9940 = vmatprep.subr.bf16.mxu0 0
        %9941 = vmatpush1.bf16.msra.mxu0 %v9921
        %9942 = vmatprep.subr.bf16.mxu0 0
        %9943 = vmatpush1.bf16.msra.mxu0 %v9922
        %9944 = vmatprep.subr.bf16.mxu0 0
        %9945 = vmatpush1.bf16.msra.mxu0 %v9923
        %9946 = vmatprep.subr.bf16.mxu0 0
        %9947 = vmatpush1.bf16.msra.mxu0 %v9924
        %9948 = vmatprep.subr.bf16.mxu0 0
        %9949 = vmatpush1.bf16.msra.mxu0 %v9925
        %9950 = vmatprep.subr.bf16.mxu0 0
        %9951 = vmatpush1.bf16.msra.mxu0 0
        %9952 = vmatprep.subr.bf16.mxu0 0
        %9953 = vmatpush1.bf16.msra.mxu0 0
        %9954 = vmatprep.subr.bf16.mxu0 0
        %9955 = vmatpush1.bf16.msra.mxu0 0
        %9956 = vmatprep.subr.bf16.mxu0 0
        %9957 = vmatpush1.bf16.msra.mxu0 0
        %9958 = vmatprep.subr.bf16.mxu0 0
        %9959 = vmatpush1.bf16.msra.mxu0 0
        %9960 = vmatprep.subr.bf16.mxu0 0
        %9961 = vmatpush1.bf16.msra.mxu0 0
        %9962 = vmatprep.subr.bf16.mxu0 0
        %9963 = vmatpush1.bf16.msra.mxu0 0
        %9964 = vmatprep.subr.bf16.mxu0 0
        %9965 = vmatpush1.bf16.msra.mxu0 0
        %9966 = vmatprep.mubr.bf16.mxu0 0
        %9967 = vmatmul.mubr.bf16.gmra.mrb[0].mxu0 %v9764
        %v9968 = vpop.f32.mrb[0].mxu0
        %v9969 = vadd.f32 0.0, %v9968
        %v9970 = vpop.f32.mrb[0].mxu0
        %v9971 = vpop.f32.mrb[0].mxu0
        %v9972 = vadd.f32 0.0, %v9971
        %v9973 = vpop.f32.mrb[0].mxu0
        %9974 = vmatprep.mubr.bf16.mxu0 0
        %9975 = vmatmul.mubr.bf16.gmra.mrb[0].mxu0 %v9768
        %v9976 = vpop.f32.mrb[0].mxu0
        %v9977 = vadd.f32 0.0, %v9976
        %v9978 = vpop.f32.mrb[0].mxu0
        %v9979 = vpop.f32.mrb[0].mxu0
        %v9980 = vadd.f32 0.0, %v9979
        %v9981 = vpop.f32.mrb[0].mxu0
        %9982 = vmatprep.mubr.bf16.mxu0 0
        %9983 = vmatmul.mubr.bf16.gmra.mrb[0].mxu0 %v9772
        %v9984 = vpop.f32.mrb[0].mxu0
        %v9985 = vadd.f32 0.0, %v9984
        %v9986 = vpop.f32.mrb[0].mxu0
        %v9987 = vpop.f32.mrb[0].mxu0
        %v9988 = vadd.f32 0.0, %v9987
        %v9989 = vpop.f32.mrb[0].mxu0
        %9990 = vmatprep.mubr.bf16.mxu0 0
        %9991 = vmatmul.mubr.bf16.gmra.mrb[0].mxu0 %v9776
        %v9992 = vpop.f32.mrb[0].mxu0
        %v9993 = vadd.f32 0.0, %v9992
        %v9994 = vpop.f32.mrb[0].mxu0
        %v9995 = vpop.f32.mrb[0].mxu0
        %v9996 = vadd.f32 0.0, %v9995
        %v9997 = vpop.f32.mrb[0].mxu0
        %9998 = vmatprep.mubr.bf16.mxu0 0
        %9999 = vmatmul.mubr.bf16.gmra.mrb[0].mxu0 %v9780
        %v10000 = vpop.f32.mrb[0].mxu0
        %v10001 = vadd.f32 0.0, %v10000
        %v10002 = vpop.f32.mrb[0].mxu0
        %v10003 = vpop.f32.mrb[0].mxu0
        %v10004 = vadd.f32 0.0, %v10003
        %v10005 = vpop.f32.mrb[0].mxu0
        %10006 = vmatprep.mubr.bf16.mxu0 0
        %10007 = vmatmul.mubr.bf16.gmra.mrb[0].mxu0 %v9784
        %v10008 = vpop.f32.mrb[0].mxu0
        %v10009 = vadd.f32 0.0, %v10008
        %v10010 = vpop.f32.mrb[0].mxu0
        %v10011 = vpop.f32.mrb[0].mxu0
        %v10012 = vadd.f32 0.0, %v10011
        %v10013 = vpop.f32.mrb[0].mxu0
        %10014 = vmatprep.mubr.bf16.mxu0 0
        %10015 = vmatmul.mubr.bf16.gmra.mrb[0].mxu0 %v9788
        %v10016 = vpop.f32.mrb[0].mxu0
        %v10017 = vadd.f32 0.0, %v10016
        %v10018 = vpop.f32.mrb[0].mxu0
        %v10019 = vpop.f32.mrb[0].mxu0
        %v10020 = vadd.f32 0.0, %v10019
        %v10021 = vpop.f32.mrb[0].mxu0
        %10022 = vmatprep.mubr.bf16.mxu0 0
        %10023 = vmatmul.mubr.bf16.gmra.mrb[0].mxu0 %v9792
        %v10024 = vpop.f32.mrb[0].mxu0
        %v10025 = vadd.f32 0.0, %v10024
        %v10026 = vpop.f32.mrb[0].mxu0
        %v10027 = vpop.f32.mrb[0].mxu0
        %v10028 = vadd.f32 0.0, %v10027
        %v10029 = vpop.f32.mrb[0].mxu0
        %10030 = vmatprep.mubr.bf16.mxu0 0
        %10031 = vmatmul.mubr.bf16.gmra.mrb[0].mxu0 %v9796
        %v10032 = vpop.f32.mrb[0].mxu0
        %v10033 = vadd.f32 0.0, %v10032
        %v10034 = vpop.f32.mrb[0].mxu0
        %v10035 = vpop.f32.mrb[0].mxu0
        %v10036 = vadd.f32 0.0, %v10035
        %v10037 = vpop.f32.mrb[0].mxu0
        %10038 = vmatprep.mubr.bf16.mxu0 0
        %10039 = vmatmul.mubr.bf16.gmra.mrb[0].mxu0 %v9800
        %v10040 = vpop.f32.mrb[0].mxu0
        %v10041 = vadd.f32 0.0, %v10040
        %v10042 = vpop.f32.mrb[0].mxu0
        %v10043 = vpop.f32.mrb[0].mxu0
        %v10044 = vadd.f32 0.0, %v10043
        %v10045 = vpop.f32.mrb[0].mxu0
        %10046 = vmatprep.mubr.bf16.mxu0 0
        %10047 = vmatmul.mubr.bf16.gmra.mrb[0].mxu0 %v9804
        %v10048 = vpop.f32.mrb[0].mxu0
        %v10049 = vadd.f32 0.0, %v10048
        %v10050 = vpop.f32.mrb[0].mxu0
        %v10051 = vpop.f32.mrb[0].mxu0
        %v10052 = vadd.f32 0.0, %v10051
        %v10053 = vpop.f32.mrb[0].mxu0
        %10054 = vmatprep.mubr.bf16.mxu0 0
        %10055 = vmatmul.mubr.bf16.gmra.mrb[0].mxu0 %v9808
        %v10056 = vpop.f32.mrb[0].mxu0
        %v10057 = vadd.f32 0.0, %v10056
        %v10058 = vpop.f32.mrb[0].mxu0
        %v10059 = vpop.f32.mrb[0].mxu0
        %v10060 = vadd.f32 0.0, %v10059
        %v10061 = vpop.f32.mrb[0].mxu0
        %10062 = vmatprep.mubr.bf16.mxu0 0
        %10063 = vmatmul.mubr.bf16.gmra.mrb[0].mxu0 %v9812
        %v10064 = vpop.f32.mrb[0].mxu0
        %v10065 = vadd.f32 0.0, %v10064
        %v10066 = vpop.f32.mrb[0].mxu0
        %v10067 = vpop.f32.mrb[0].mxu0
        %v10068 = vadd.f32 0.0, %v10067
        %v10069 = vpop.f32.mrb[0].mxu0
        %10070 = vmatprep.mubr.bf16.mxu0 0
        %10071 = vmatmul.mubr.bf16.gmra.mrb[0].mxu0 %v9816
        %v10072 = vpop.f32.mrb[0].mxu0
        %v10073 = vadd.f32 0.0, %v10072
        %v10074 = vpop.f32.mrb[0].mxu0
        %v10075 = vpop.f32.mrb[0].mxu0
        %v10076 = vadd.f32 0.0, %v10075
        %v10077 = vpop.f32.mrb[0].mxu0
        %10078 = vmatprep.mubr.bf16.mxu0 0
        %10079 = vmatmul.mubr.bf16.gmra.mrb[0].mxu0 %v9820
        %v10080 = vpop.f32.mrb[0].mxu0
        %v10081 = vadd.f32 0.0, %v10080
        %v10082 = vpop.f32.mrb[0].mxu0
        %v10083 = vpop.f32.mrb[0].mxu0
        %v10084 = vadd.f32 0.0, %v10083
        %v10085 = vpop.f32.mrb[0].mxu0
        %10086 = vmatprep.mubr.bf16.mxu0 0
        %10087 = vmatmul.mubr.bf16.gmra.mrb[0].mxu0 %v9824
        %v10088 = vpop.f32.mrb[0].mxu0
        %v10089 = vadd.f32 0.0, %v10088
        %v10090 = vpop.f32.mrb[0].mxu0
        %v10091 = vpop.f32.mrb[0].mxu0
        %v10092 = vadd.f32 0.0, %v10091
        %v10093 = vpop.f32.mrb[0].mxu0
        %10094 = vmatprep.mubr.bf16.mxu0 0
        %10095 = vmatmul.mubr.bf16.gmra.mrb[0].mxu0 %v9828
        %v10096 = vpop.f32.mrb[0].mxu0
        %v10097 = vadd.f32 0.0, %v10096
        %v10098 = vpop.f32.mrb[0].mxu0
        %v10099 = vpop.f32.mrb[0].mxu0
        %v10100 = vadd.f32 0.0, %v10099
        %v10101 = vpop.f32.mrb[0].mxu0
        %10102 = vmatprep.mubr.bf16.mxu0 0
        %10103 = vmatmul.mubr.bf16.gmra.mrb[0].mxu0 %v9832
        %v10104 = vpop.f32.mrb[0].mxu0
        %v10105 = vadd.f32 0.0, %v10104
        %v10106 = vpop.f32.mrb[0].mxu0
        %v10107 = vpop.f32.mrb[0].mxu0
        %v10108 = vadd.f32 0.0, %v10107
        %v10109 = vpop.f32.mrb[0].mxu0
        %10110 = vmatprep.mubr.bf16.mxu0 0
        %10111 = vmatmul.mubr.bf16.gmra.mrb[0].mxu0 %v9836
        %v10112 = vpop.f32.mrb[0].mxu0
        %v10113 = vadd.f32 0.0, %v10112
        %v10114 = vpop.f32.mrb[0].mxu0
        %v10115 = vpop.f32.mrb[0].mxu0
        %v10116 = vadd.f32 0.0, %v10115
        %v10117 = vpop.f32.mrb[0].mxu0
        %10118 = vmatprep.mubr.bf16.mxu0 0
        %10119 = vmatmul.mubr.bf16.gmra.mrb[0].mxu0 %v9840
        %v10120 = vpop.f32.mrb[0].mxu0
        %v10121 = vadd.f32 0.0, %v10120
        %v10122 = vpop.f32.mrb[0].mxu0
        %v10123 = vpop.f32.mrb[0].mxu0
        %v10124 = vadd.f32 0.0, %v10123
        %v10125 = vpop.f32.mrb[0].mxu0
        %10126 = vmatprep.mubr.bf16.mxu0 0
        %10127 = vmatmul.mubr.bf16.gmra.mrb[0].mxu0 %v9844
        %v10128 = vpop.f32.mrb[0].mxu0
        %v10129 = vadd.f32 0.0, %v10128
        %v10130 = vpop.f32.mrb[0].mxu0
        %v10131 = vpop.f32.mrb[0].mxu0
        %v10132 = vadd.f32 0.0, %v10131
        %v10133 = vpop.f32.mrb[0].mxu0
        %10134 = vmatprep.mubr.bf16.mxu0 0
        %10135 = vmatmul.mubr.bf16.gmra.mrb[0].mxu0 %v9848
        %v10136 = vpop.f32.mrb[0].mxu0
        %v10137 = vadd.f32 0.0, %v10136
        %v10138 = vpop.f32.mrb[0].mxu0
        %v10139 = vpop.f32.mrb[0].mxu0
        %v10140 = vadd.f32 0.0, %v10139
        %v10141 = vpop.f32.mrb[0].mxu0
        %10142 = vmatprep.mubr.bf16.mxu0 0
        %10143 = vmatmul.mubr.bf16.gmra.mrb[0].mxu0 %v9852
        %v10144 = vpop.f32.mrb[0].mxu0
        %v10145 = vadd.f32 0.0, %v10144
        %v10146 = vpop.f32.mrb[0].mxu0
        %v10147 = vpop.f32.mrb[0].mxu0
        %v10148 = vadd.f32 0.0, %v10147
        %v10149 = vpop.f32.mrb[0].mxu0
        %10150 = vmatprep.mubr.bf16.mxu0 0
        %10151 = vmatmul.mubr.bf16.gmra.mrb[0].mxu0 %v9861
        %v10152 = vpop.f32.mrb[0].mxu0
        %v10153 = vadd.f32 0.0, %v10152
        %v10154 = vpop.f32.mrb[0].mxu0
        %v10155 = vpop.f32.mrb[0].mxu0
        %v10156 = vadd.f32 0.0, %v10155
        %v10157 = vpop.f32.mrb[0].mxu0
        %10158 = vdwg.mxu0
        %v10159 = vadd.f32 %v9688, %v9969
        %v10160 = vadd.f32 %v9689, %v9972
        %v10161 = vadd.f32 %v9690, %v9977
        %v10162 = vadd.f32 %v9691, %v9980
        %v10163 = vadd.f32 %v9692, %v9985
        %v10164 = vadd.f32 %v9693, %v9988
        %v10165 = vadd.f32 %v9694, %v9993
        %v10166 = vadd.f32 %v9695, %v9996
        %v10167 = vadd.f32 %v9696, %v10001
        %v10168 = vadd.f32 %v9697, %v10004
        %v10169 = vadd.f32 %v9698, %v10009
        %v10170 = vadd.f32 %v9699, %v10012
        %v10171 = vadd.f32 %v9700, %v10017
        %v10172 = vadd.f32 %v9701, %v10020
        %v10173 = vadd.f32 %v9702, %v10025
        %v10174 = vadd.f32 %v9703, %v10028
        %v10175 = vadd.f32 %v9704, %v10033
        %v10176 = vadd.f32 %v9705, %v10036
        %v10177 = vadd.f32 %v9706, %v10041
        %v10178 = vadd.f32 %v9707, %v10044
        %v10179 = vadd.f32 %v9708, %v10049
        %v10180 = vadd.f32 %v9709, %v10052
        %v10181 = vadd.f32 %v9710, %v10057
        %v10182 = vadd.f32 %v9711, %v10060
        %v10183 = vadd.f32 %v9712, %v10065
        %v10184 = vadd.f32 %v9713, %v10068
        %v10185 = vadd.f32 %v9714, %v10073
        %v10186 = vadd.f32 %v9715, %v10076
        %v10187 = vadd.f32 %v9716, %v10081
        %v10188 = vadd.f32 %v9717, %v10084
        %v10189 = vadd.f32 %v9718, %v10089
        %v10190 = vadd.f32 %v9719, %v10092
        %v10191 = vadd.f32 %v9720, %v10097
        %v10192 = vadd.f32 %v9721, %v10100
        %v10193 = vadd.f32 %v9722, %v10105
        %v10194 = vadd.f32 %v9723, %v10108
        %v10195 = vadd.f32 %v9724, %v10113
        %v10196 = vadd.f32 %v9725, %v10116
        %v10197 = vadd.f32 %v9726, %v10121
        %v10198 = vadd.f32 %v9727, %v10124
        %v10199 = vadd.f32 %v9728, %v10129
        %v10200 = vadd.f32 %v9729, %v10132
        %v10201 = vadd.f32 %v9730, %v10137
        %v10202 = vadd.f32 %v9731, %v10140
        %v10203 = vadd.f32 %v9732, %v10145
        %v10204 = vadd.f32 %v9733, %v10148
        %v10205 = vadd.f32 %v9734, %v10153
        %v10206 = vadd.f32 %v9735, %v10156
        %v10207 = vld [vmem:[#allocation10 + $0x18] sm:$0x1]
        %v10208 = vlaneseq
        %v10209 = vshrl.u32 %v10208, 7
        %v10210 = vsub.s32 0, %v10209
        %v10211 = vrot.slane %v10207, %v10210
        %v10212 = vadd.f32 %v10159, %v10211
        %v10213 = vadd.f32 %v10160, %v10211
        %v10214 = vadd.f32 %v10161, %v10211
        %v10215 = vadd.f32 %v10162, %v10211
        %v10216 = vadd.f32 %v10163, %v10211
        %v10217 = vadd.f32 %v10164, %v10211
        %v10218 = vadd.f32 %v10165, %v10211
        %v10219 = vadd.f32 %v10166, %v10211
        %v10220 = vadd.f32 %v10167, %v10211
        %v10221 = vadd.f32 %v10168, %v10211
        %v10222 = vadd.f32 %v10169, %v10211
        %v10223 = vadd.f32 %v10170, %v10211
        %v10224 = vadd.f32 %v10171, %v10211
        %v10225 = vadd.f32 %v10172, %v10211
        %v10226 = vadd.f32 %v10173, %v10211
        %v10227 = vadd.f32 %v10174, %v10211
        %v10228 = vadd.f32 %v10175, %v10211
        %v10229 = vadd.f32 %v10176, %v10211
        %v10230 = vadd.f32 %v10177, %v10211
        %v10231 = vadd.f32 %v10178, %v10211
        %v10232 = vadd.f32 %v10179, %v10211
        %v10233 = vadd.f32 %v10180, %v10211
        %v10234 = vadd.f32 %v10181, %v10211
        %v10235 = vadd.f32 %v10182, %v10211
        %v10236 = vadd.f32 %v10183, %v10211
        %v10237 = vadd.f32 %v10184, %v10211
        %v10238 = vadd.f32 %v10185, %v10211
        %v10239 = vadd.f32 %v10186, %v10211
        %v10240 = vadd.f32 %v10187, %v10211
        %v10241 = vadd.f32 %v10188, %v10211
        %v10242 = vadd.f32 %v10189, %v10211
        %v10243 = vadd.f32 %v10190, %v10211
        %v10244 = vadd.f32 %v10191, %v10211
        %v10245 = vadd.f32 %v10192, %v10211
        %v10246 = vadd.f32 %v10193, %v10211
        %v10247 = vadd.f32 %v10194, %v10211
        %v10248 = vadd.f32 %v10195, %v10211
        %v10249 = vadd.f32 %v10196, %v10211
        %v10250 = vadd.f32 %v10197, %v10211
        %v10251 = vadd.f32 %v10198, %v10211
        %v10252 = vadd.f32 %v10199, %v10211
        %v10253 = vadd.f32 %v10200, %v10211
        %v10254 = vadd.f32 %v10201, %v10211
        %v10255 = vadd.f32 %v10202, %v10211
        %v10256 = vadd.f32 %v10203, %v10211
        %v10257 = vadd.f32 %v10204, %v10211
        %v10258 = vadd.f32 %v10205, %v10211
        %v10259 = vadd.f32 %v10206, %v10211
        %v10260 = vld [vmem:[#allocation2 + $0x18] sm:$0xf0]
        %v10261 = vld [vmem:[#allocation2 + $0x20] sm:$0xff]
        %v10262 = vld [vmem:[#allocation2 + $0x28] sm:$0xff]
        %v10263 = vld [vmem:[#allocation2 + $0x30] sm:$0xff]
        %v10264 = vld [vmem:[#allocation2 + $0x38] sm:$0xff]
        %v10265 = vld [vmem:[#allocation2 + $0x40] sm:$0xff]
        %v10266 = vld [vmem:[#allocation2 + $0x48] sm:$0xff]
        %v10267 = vld [vmem:[#allocation2 + $0x50] sm:$0xff]
        %v10268 = vld [vmem:[#allocation2 + $0x58] sm:$0xff]
        %v10269 = vld [vmem:[#allocation2 + $0x60] sm:$0xff]
        %v10270 = vld [vmem:[#allocation2 + $0x68] sm:$0xff]
        %v10271 = vld [vmem:[#allocation2 + $0x70] sm:$0xff]
        %v10272 = vld [vmem:[#allocation2 + $0x78] sm:$0xff]
        %v10273 = vld [vmem:[#allocation2 + $0x80] sm:$0xff]
        %v10274 = vld [vmem:[#allocation2 + $0x88] sm:$0xff]
        %v10275 = vld [vmem:[#allocation2 + $0x90] sm:$0xff]
        %v10276 = vld [vmem:[#allocation2 + $0x98] sm:$0xff]
        %v10277 = vld [vmem:[#allocation2 + $0xa0] sm:$0xff]
        %v10278 = vld [vmem:[#allocation2 + $0xa8] sm:$0xff]
        %v10279 = vld [vmem:[#allocation2 + $0xb0] sm:$0xff]
        %v10280 = vld [vmem:[#allocation2 + $0xb8] sm:$0xff]
        %v10281 = vld [vmem:[#allocation2 + $0xc0] sm:$0xff]
        %v10282 = vld [vmem:[#allocation2 + $0xc8] sm:$0xff]
        %v10283 = vld [vmem:[#allocation2 + $0xd0] sm:$0xff]
        %v10284 = vld [vmem:[#allocation2 + $0xd8] sm:$0xf]
        %v10310 = vrot.slane %v10260, 4
        %v10311 = vrot.slane %v10261, 4
        %v10312 = vsel %vm644, %v10310, %v10311
        %v10313 = vrot.slane %v10262, 4
        %v10314 = vsel %vm644, %v10311, %v10313
        %v10315 = vrot.slane %v10263, 4
        %v10316 = vsel %vm644, %v10313, %v10315
        %v10317 = vrot.slane %v10264, 4
        %v10318 = vsel %vm644, %v10315, %v10317
        %v10319 = vrot.slane %v10265, 4
        %v10320 = vsel %vm644, %v10317, %v10319
        %v10321 = vrot.slane %v10266, 4
        %v10322 = vsel %vm644, %v10319, %v10321
        %v10323 = vrot.slane %v10267, 4
        %v10324 = vsel %vm644, %v10321, %v10323
        %v10325 = vrot.slane %v10268, 4
        %v10326 = vsel %vm644, %v10323, %v10325
        %v10327 = vrot.slane %v10269, 4
        %v10328 = vsel %vm644, %v10325, %v10327
        %v10329 = vrot.slane %v10270, 4
        %v10330 = vsel %vm644, %v10327, %v10329
        %v10331 = vrot.slane %v10271, 4
        %v10332 = vsel %vm644, %v10329, %v10331
        %v10333 = vrot.slane %v10272, 4
        %v10334 = vsel %vm644, %v10331, %v10333
        %v10335 = vrot.slane %v10273, 4
        %v10336 = vsel %vm644, %v10333, %v10335
        %v10337 = vrot.slane %v10274, 4
        %v10338 = vsel %vm644, %v10335, %v10337
        %v10339 = vrot.slane %v10275, 4
        %v10340 = vsel %vm644, %v10337, %v10339
        %v10341 = vrot.slane %v10276, 4
        %v10342 = vsel %vm644, %v10339, %v10341
        %v10343 = vrot.slane %v10277, 4
        %v10344 = vsel %vm644, %v10341, %v10343
        %v10345 = vrot.slane %v10278, 4
        %v10346 = vsel %vm644, %v10343, %v10345
        %v10347 = vrot.slane %v10279, 4
        %v10348 = vsel %vm644, %v10345, %v10347
        %v10349 = vrot.slane %v10280, 4
        %v10350 = vsel %vm644, %v10347, %v10349
        %v10351 = vrot.slane %v10281, 4
        %v10352 = vsel %vm644, %v10349, %v10351
        %v10353 = vrot.slane %v10282, 4
        %v10354 = vsel %vm644, %v10351, %v10353
        %v10355 = vrot.slane %v10283, 4
        %v10356 = vsel %vm644, %v10353, %v10355
        %v10357 = vrot.slane %v10284, 4
        %v10358 = vsel %vm644, %v10355, %v10357
        %v10383 = vunpack.c.l.bf16 %v10312
        %v10384 = vunpack.c.h.bf16 %v10312
        %v10385 = vunpack.c.l.bf16 %v10314
        %v10386 = vunpack.c.h.bf16 %v10314
        %v10387 = vunpack.c.l.bf16 %v10316
        %v10388 = vunpack.c.h.bf16 %v10316
        %v10389 = vunpack.c.l.bf16 %v10318
        %v10390 = vunpack.c.h.bf16 %v10318
        %v10391 = vunpack.c.l.bf16 %v10320
        %v10392 = vunpack.c.h.bf16 %v10320
        %v10393 = vunpack.c.l.bf16 %v10322
        %v10394 = vunpack.c.h.bf16 %v10322
        %v10395 = vunpack.c.l.bf16 %v10324
        %v10396 = vunpack.c.h.bf16 %v10324
        %v10397 = vunpack.c.l.bf16 %v10326
        %v10398 = vunpack.c.h.bf16 %v10326
        %v10399 = vunpack.c.l.bf16 %v10328
        %v10400 = vunpack.c.h.bf16 %v10328
        %v10401 = vunpack.c.l.bf16 %v10330
        %v10402 = vunpack.c.h.bf16 %v10330
        %v10403 = vunpack.c.l.bf16 %v10332
        %v10404 = vunpack.c.h.bf16 %v10332
        %v10405 = vunpack.c.l.bf16 %v10334
        %v10406 = vunpack.c.h.bf16 %v10334
        %v10407 = vunpack.c.l.bf16 %v10336
        %v10408 = vunpack.c.h.bf16 %v10336
        %v10409 = vunpack.c.l.bf16 %v10338
        %v10410 = vunpack.c.h.bf16 %v10338
        %v10411 = vunpack.c.l.bf16 %v10340
        %v10412 = vunpack.c.h.bf16 %v10340
        %v10413 = vunpack.c.l.bf16 %v10342
        %v10414 = vunpack.c.h.bf16 %v10342
        %v10415 = vunpack.c.l.bf16 %v10344
        %v10416 = vunpack.c.h.bf16 %v10344
        %v10417 = vunpack.c.l.bf16 %v10346
        %v10418 = vunpack.c.h.bf16 %v10346
        %v10419 = vunpack.c.l.bf16 %v10348
        %v10420 = vunpack.c.h.bf16 %v10348
        %v10421 = vunpack.c.l.bf16 %v10350
        %v10422 = vunpack.c.h.bf16 %v10350
        %v10423 = vunpack.c.l.bf16 %v10352
        %v10424 = vunpack.c.h.bf16 %v10352
        %v10425 = vunpack.c.l.bf16 %v10354
        %v10426 = vunpack.c.h.bf16 %v10354
        %v10427 = vunpack.c.l.bf16 %v10356
        %v10428 = vunpack.c.h.bf16 %v10356
        %v10429 = vunpack.c.l.bf16 %v10358
        %v10430 = vunpack.c.h.bf16 %v10358
        %v10431 = vadd.f32 %v10212, %v10383
        %v10432 = vadd.f32 %v10213, %v10384
        %v10433 = vadd.f32 %v10214, %v10385
        %v10434 = vadd.f32 %v10215, %v10386
        %v10435 = vadd.f32 %v10216, %v10387
        %v10436 = vadd.f32 %v10217, %v10388
        %v10437 = vadd.f32 %v10218, %v10389
        %v10438 = vadd.f32 %v10219, %v10390
        %v10439 = vadd.f32 %v10220, %v10391
        %v10440 = vadd.f32 %v10221, %v10392
        %v10441 = vadd.f32 %v10222, %v10393
        %v10442 = vadd.f32 %v10223, %v10394
        %v10443 = vadd.f32 %v10224, %v10395
        %v10444 = vadd.f32 %v10225, %v10396
        %v10445 = vadd.f32 %v10226, %v10397
        %v10446 = vadd.f32 %v10227, %v10398
        %v10447 = vadd.f32 %v10228, %v10399
        %v10448 = vadd.f32 %v10229, %v10400
        %v10449 = vadd.f32 %v10230, %v10401
        %v10450 = vadd.f32 %v10231, %v10402
        %v10451 = vadd.f32 %v10232, %v10403
        %v10452 = vadd.f32 %v10233, %v10404
        %v10453 = vadd.f32 %v10234, %v10405
        %v10454 = vadd.f32 %v10235, %v10406
        %v10455 = vadd.f32 %v10236, %v10407
        %v10456 = vadd.f32 %v10237, %v10408
        %v10457 = vadd.f32 %v10238, %v10409
        %v10458 = vadd.f32 %v10239, %v10410
        %v10459 = vadd.f32 %v10240, %v10411
        %v10460 = vadd.f32 %v10241, %v10412
        %v10461 = vadd.f32 %v10242, %v10413
        %v10462 = vadd.f32 %v10243, %v10414
        %v10463 = vadd.f32 %v10244, %v10415
        %v10464 = vadd.f32 %v10245, %v10416
        %v10465 = vadd.f32 %v10246, %v10417
        %v10466 = vadd.f32 %v10247, %v10418
        %v10467 = vadd.f32 %v10248, %v10419
        %v10468 = vadd.f32 %v10249, %v10420
        %v10469 = vadd.f32 %v10250, %v10421
        %v10470 = vadd.f32 %v10251, %v10422
        %v10471 = vadd.f32 %v10252, %v10423
        %v10472 = vadd.f32 %v10253, %v10424
        %v10473 = vadd.f32 %v10254, %v10425
        %v10474 = vadd.f32 %v10255, %v10426
        %v10475 = vadd.f32 %v10256, %v10427
        %v10476 = vadd.f32 %v10257, %v10428
        %v10477 = vadd.f32 %v10258, %v10429
        %v10478 = vadd.f32 %v10259, %v10430
        %v10479 = vmax.f32 %v10431, 0.0
        %v10480 = vmax.f32 %v10432, 0.0
        %v10481 = vmax.f32 %v10433, 0.0
        %v10482 = vmax.f32 %v10434, 0.0
        %v10483 = vmax.f32 %v10435, 0.0
        %v10484 = vmax.f32 %v10436, 0.0
        %v10485 = vmax.f32 %v10437, 0.0
        %v10486 = vmax.f32 %v10438, 0.0
        %v10487 = vmax.f32 %v10439, 0.0
        %v10488 = vmax.f32 %v10440, 0.0
        %v10489 = vmax.f32 %v10441, 0.0
        %v10490 = vmax.f32 %v10442, 0.0
        %v10491 = vmax.f32 %v10443, 0.0
        %v10492 = vmax.f32 %v10444, 0.0
        %v10493 = vmax.f32 %v10445, 0.0
        %v10494 = vmax.f32 %v10446, 0.0
        %v10495 = vmax.f32 %v10447, 0.0
        %v10496 = vmax.f32 %v10448, 0.0
        %v10497 = vmax.f32 %v10449, 0.0
        %v10498 = vmax.f32 %v10450, 0.0
        %v10499 = vmax.f32 %v10451, 0.0
        %v10500 = vmax.f32 %v10452, 0.0
        %v10501 = vmax.f32 %v10453, 0.0
        %v10502 = vmax.f32 %v10454, 0.0
        %v10503 = vmax.f32 %v10455, 0.0
        %v10504 = vmax.f32 %v10456, 0.0
        %v10505 = vmax.f32 %v10457, 0.0
        %v10506 = vmax.f32 %v10458, 0.0
        %v10507 = vmax.f32 %v10459, 0.0
        %v10508 = vmax.f32 %v10460, 0.0
        %v10509 = vmax.f32 %v10461, 0.0
        %v10510 = vmax.f32 %v10462, 0.0
        %v10511 = vmax.f32 %v10463, 0.0
        %v10512 = vmax.f32 %v10464, 0.0
        %v10513 = vmax.f32 %v10465, 0.0
        %v10514 = vmax.f32 %v10466, 0.0
        %v10515 = vmax.f32 %v10467, 0.0
        %v10516 = vmax.f32 %v10468, 0.0
        %v10517 = vmax.f32 %v10469, 0.0
        %v10518 = vmax.f32 %v10470, 0.0
        %v10519 = vmax.f32 %v10471, 0.0
        %v10520 = vmax.f32 %v10472, 0.0
        %v10521 = vmax.f32 %v10473, 0.0
        %v10522 = vmax.f32 %v10474, 0.0
        %v10523 = vmax.f32 %v10475, 0.0
        %v10524 = vmax.f32 %v10476, 0.0
        %v10525 = vmax.f32 %v10477, 0.0
        %v10526 = vmax.f32 %v10478, 0.0
        %v10527 = vpack.c.bf16 %v10480, %v10479
        %v10528 = vpack.c.bf16 %v10482, %v10481
        %v10529 = vpack.c.bf16 %v10484, %v10483
        %v10530 = vpack.c.bf16 %v10486, %v10485
        %v10531 = vpack.c.bf16 %v10488, %v10487
        %v10532 = vpack.c.bf16 %v10490, %v10489
        %v10533 = vpack.c.bf16 %v10492, %v10491
        %v10534 = vpack.c.bf16 %v10494, %v10493
        %v10535 = vpack.c.bf16 %v10496, %v10495
        %v10536 = vpack.c.bf16 %v10498, %v10497
        %v10537 = vpack.c.bf16 %v10500, %v10499
        %v10538 = vpack.c.bf16 %v10502, %v10501
        %v10539 = vpack.c.bf16 %v10504, %v10503
        %v10540 = vpack.c.bf16 %v10506, %v10505
        %v10541 = vpack.c.bf16 %v10508, %v10507
        %v10542 = vpack.c.bf16 %v10510, %v10509
        %v10543 = vpack.c.bf16 %v10512, %v10511
        %v10544 = vpack.c.bf16 %v10514, %v10513
        %v10545 = vpack.c.bf16 %v10516, %v10515
        %v10546 = vpack.c.bf16 %v10518, %v10517
        %v10547 = vpack.c.bf16 %v10520, %v10519
        %v10548 = vpack.c.bf16 %v10522, %v10521
        %v10549 = vpack.c.bf16 %v10524, %v10523
        %v10550 = vpack.c.bf16 %v10526, %v10525
        %v10575 = vunpack.c.l.b16 %v10527
        %v10576 = vunpack.c.h.b16 %v10527
        %v10577 = vunpack.c.l.b16 %v10528
        %v10578 = vunpack.c.h.b16 %v10528
        %v10579 = vunpack.c.l.b16 %v10529
        %v10580 = vunpack.c.h.b16 %v10529
        %v10581 = vunpack.c.l.b16 %v10530
        %v10582 = vunpack.c.h.b16 %v10530
        %v10583 = vunpack.c.l.b16 %v10531
        %v10584 = vunpack.c.h.b16 %v10531
        %v10585 = vunpack.c.l.b16 %v10532
        %v10586 = vunpack.c.h.b16 %v10532
        %v10587 = vunpack.c.l.b16 %v10533
        %v10588 = vunpack.c.h.b16 %v10533
        %v10589 = vunpack.c.l.b16 %v10534
        %v10590 = vunpack.c.h.b16 %v10534
        %v10591 = vunpack.c.l.b16 %v10535
        %v10592 = vunpack.c.h.b16 %v10535
        %v10593 = vunpack.c.l.b16 %v10536
        %v10594 = vunpack.c.h.b16 %v10536
        %v10595 = vunpack.c.l.b16 %v10537
        %v10596 = vunpack.c.h.b16 %v10537
        %v10597 = vunpack.c.l.b16 %v10538
        %v10598 = vunpack.c.h.b16 %v10538
        %v10599 = vunpack.c.l.b16 %v10539
        %v10600 = vunpack.c.h.b16 %v10539
        %v10601 = vunpack.c.l.b16 %v10540
        %v10602 = vunpack.c.h.b16 %v10540
        %v10603 = vunpack.c.l.b16 %v10541
        %v10604 = vunpack.c.h.b16 %v10541
        %v10605 = vunpack.c.l.b16 %v10542
        %v10606 = vunpack.c.h.b16 %v10542
        %v10607 = vunpack.c.l.b16 %v10543
        %v10608 = vunpack.c.h.b16 %v10543
        %v10609 = vunpack.c.l.b16 %v10544
        %v10610 = vunpack.c.h.b16 %v10544
        %v10611 = vunpack.c.l.b16 %v10545
        %v10612 = vunpack.c.h.b16 %v10545
        %v10613 = vunpack.c.l.b16 %v10546
        %v10614 = vunpack.c.h.b16 %v10546
        %v10615 = vunpack.c.l.b16 %v10547
        %v10616 = vunpack.c.h.b16 %v10547
        %v10617 = vunpack.c.l.b16 %v10548
        %v10618 = vunpack.c.h.b16 %v10548
        %v10619 = vunpack.c.l.b16 %v10549
        %v10620 = vunpack.c.h.b16 %v10549
        %v10621 = vunpack.c.l.b16 %v10550
        %v10622 = vunpack.c.h.b16 %v10550
        %v10623 = vpack.c.b16 %v10575, %v10575
        %v10624 = vpack.c.b16 %v10576, %v10576
        %v10625 = vpack.c.b16 %v10577, %v10577
        %v10626 = vpack.c.b16 %v10578, %v10578
        %v10627 = vpack.c.b16 %v10579, %v10579
        %v10628 = vpack.c.b16 %v10580, %v10580
        %v10629 = vpack.c.b16 %v10581, %v10581
        %v10630 = vpack.c.b16 %v10582, %v10582
        %v10631 = vpack.c.b16 %v10583, %v10583
        %v10632 = vpack.c.b16 %v10584, %v10584
        %v10633 = vpack.c.b16 %v10585, %v10585
        %v10634 = vpack.c.b16 %v10586, %v10586
        %v10635 = vpack.c.b16 %v10587, %v10587
        %v10636 = vpack.c.b16 %v10588, %v10588
        %v10637 = vpack.c.b16 %v10589, %v10589
        %v10638 = vpack.c.b16 %v10590, %v10590
        %v10639 = vpack.c.b16 %v10591, %v10591
        %v10640 = vpack.c.b16 %v10592, %v10592
        %v10641 = vpack.c.b16 %v10593, %v10593
        %v10642 = vpack.c.b16 %v10594, %v10594
        %v10643 = vpack.c.b16 %v10595, %v10595
        %v10644 = vpack.c.b16 %v10596, %v10596
        %v10645 = vpack.c.b16 %v10597, %v10597
        %v10646 = vpack.c.b16 %v10598, %v10598
        %v10647 = vpack.c.b16 %v10599, %v10599
        %v10648 = vpack.c.b16 %v10600, %v10600
        %v10649 = vpack.c.b16 %v10601, %v10601
        %v10650 = vpack.c.b16 %v10602, %v10602
        %v10651 = vpack.c.b16 %v10603, %v10603
        %v10652 = vpack.c.b16 %v10604, %v10604
        %v10653 = vpack.c.b16 %v10605, %v10605
        %v10654 = vpack.c.b16 %v10606, %v10606
        %v10655 = vpack.c.b16 %v10607, %v10607
        %v10656 = vpack.c.b16 %v10608, %v10608
        %v10657 = vpack.c.b16 %v10609, %v10609
        %v10658 = vpack.c.b16 %v10610, %v10610
        %v10659 = vpack.c.b16 %v10611, %v10611
        %v10660 = vpack.c.b16 %v10612, %v10612
        %v10661 = vpack.c.b16 %v10613, %v10613
        %v10662 = vpack.c.b16 %v10614, %v10614
        %v10663 = vpack.c.b16 %v10615, %v10615
        %v10664 = vpack.c.b16 %v10616, %v10616
        %v10665 = vpack.c.b16 %v10617, %v10617
        %v10666 = vpack.c.b16 %v10618, %v10618
        %v10667 = vpack.c.b16 %v10619, %v10619
        %v10668 = vpack.c.b16 %v10620, %v10620
        %v10669 = vpack.c.b16 %v10621, %v10621
        %v10670 = vpack.c.b16 %v10622, %v10622
        %10719 = vst [vmem:[%s273] sm:$0xf] %v10623
        %10720 = vst [vmem:[%s273 + $0x4] sm:$0xf] %v10624
        %10721 = vst [vmem:[%s273 + $0x8] sm:$0xf] %v10625
        %10722 = vst [vmem:[%s273 + $0xc] sm:$0xf] %v10626
        %10723 = vst [vmem:[%s273 + $0x10] sm:$0xf] %v10627
        %10724 = vst [vmem:[%s273 + $0x14] sm:$0xf] %v10628
        %10725 = vst [vmem:[%s273 + $0x18] sm:$0xf] %v10629
        %10726 = vst [vmem:[%s273 + $0x1c] sm:$0xf] %v10630
        %10727 = vst [vmem:[%s273 + $0x20] sm:$0xf] %v10631
        %10728 = vst [vmem:[%s273 + $0x24] sm:$0xf] %v10632
        %10729 = vst [vmem:[%s273 + $0x28] sm:$0xf] %v10633
        %10730 = vst [vmem:[%s273 + $0x2c] sm:$0xf] %v10634
        %10731 = vst [vmem:[%s273 + $0x30] sm:$0xf] %v10635
        %10732 = vst [vmem:[%s273 + $0x34] sm:$0xf] %v10636
        %10733 = vst [vmem:[%s273 + $0x38] sm:$0xf] %v10637
        %10734 = vst [vmem:[%s273 + $0x3c] sm:$0xf] %v10638
        %10735 = vst [vmem:[%s273 + $0x40] sm:$0xf] %v10639
        %10736 = vst [vmem:[%s273 + $0x44] sm:$0xf] %v10640
        %10737 = vst [vmem:[%s273 + $0x48] sm:$0xf] %v10641
        %10738 = vst [vmem:[%s273 + $0x4c] sm:$0xf] %v10642
        %10739 = vst [vmem:[%s273 + $0x50] sm:$0xf] %v10643
        %10740 = vst [vmem:[%s273 + $0x54] sm:$0xf] %v10644
        %10741 = vst [vmem:[%s273 + $0x58] sm:$0xf] %v10645
        %10742 = vst [vmem:[%s273 + $0x5c] sm:$0xf] %v10646
        %10743 = vst [vmem:[%s273 + $0x60] sm:$0xf] %v10647
        %10744 = vst [vmem:[%s273 + $0x64] sm:$0xf] %v10648
        %10745 = vst [vmem:[%s273 + $0x68] sm:$0xf] %v10649
        %10746 = vst [vmem:[%s273 + $0x6c] sm:$0xf] %v10650
        %10747 = vst [vmem:[%s273 + $0x70] sm:$0xf] %v10651
        %10748 = vst [vmem:[%s273 + $0x74] sm:$0xf] %v10652
        %10749 = vst [vmem:[%s273 + $0x78] sm:$0xf] %v10653
        %10750 = vst [vmem:[%s273 + $0x7c] sm:$0xf] %v10654
        %10751 = vst [vmem:[%s273 + $0x80] sm:$0xf] %v10655
        %10752 = vst [vmem:[%s273 + $0x84] sm:$0xf] %v10656
        %10753 = vst [vmem:[%s273 + $0x88] sm:$0xf] %v10657
        %10754 = vst [vmem:[%s273 + $0x8c] sm:$0xf] %v10658
        %10755 = vst [vmem:[%s273 + $0x90] sm:$0xf] %v10659
        %10756 = vst [vmem:[%s273 + $0x94] sm:$0xf] %v10660
        %10757 = vst [vmem:[%s273 + $0x98] sm:$0xf] %v10661
        %10758 = vst [vmem:[%s273 + $0x9c] sm:$0xf] %v10662
        %10759 = vst [vmem:[%s273 + $0xa0] sm:$0xf] %v10663
        %10760 = vst [vmem:[%s273 + $0xa4] sm:$0xf] %v10664
        %10761 = vst [vmem:[%s273 + $0xa8] sm:$0xf] %v10665
        %10762 = vst [vmem:[%s273 + $0xac] sm:$0xf] %v10666
        %10763 = vst [vmem:[%s273 + $0xb0] sm:$0xf] %v10667
        %10764 = vst [vmem:[%s273 + $0xb4] sm:$0xf] %v10668
        %10765 = vst [vmem:[%s273 + $0xb8] sm:$0xf] %v10669
        %10766 = vst [vmem:[%s273 + $0xbc] sm:$0xf] %v10670
        %s10767 = sand.u32 %s134, 1
        %s10768 = scalar_lea.sflag [#allocation6], %s10767
        %s10769 = sand.u32 %s134, 1
        %s10770 = smul.addr %s10769, 192
        %s10771 = scalar_lea.vmem [#allocation12], %s10770
        // Predicated region
        $region57: #{tpu_custom_call.1} parent=35 // pred_check
          %p10772 = pneg %p144
        $region58: #{tpu_custom_call.1} parent=35 // pred_check_branch
          %10774 = sbr.rel (%p10772) target = $region60
        $region59: #{tpu_custom_call.1} parent=35 // pred_region
          %s10775 = smul.u32 16, %s28
          %s10777 = ssub.s32 3072, 3072
          %10778 = vsyncadd %s10768, %s10777
          %s10779 = smul.addr %s10775, 3
          %s10780 = smul.addr %s27, 48
          %s10781 = sadd.s32 %s10779, %s10780
          %s10782 = smul.addr %s10781, 64
          %s10783 = scalar_lea.hbm %s4, %s10782
          %s10784 = sshll.u32 %s10771, 4
          %s10785 = int_to_ptr.vmem [resolvable:$true] %s10784
          %10790 = dma.vmem_to_hbm [thread:$0]  %s10785, 3072, %s10783, %s10768, 64, 64, 4
        $region60: #{tpu_custom_call.1} parent=35 // pred_fallthru
          _
      $region36: #{tpu_custom_call.1} parent=5 // pred_fallthru
        _
      %p10791 = scmp.le.s32.totalorder 2, %s18
      // Predicated region
      $region61: #{tpu_custom_call.1} parent=5 // pred_check
        %p10792 = pneg %p10791
      $region62: #{tpu_custom_call.1} parent=5 // pred_check_branch
        %10794 = sbr.rel (%p10792) target = $region64
      $region63: #{tpu_custom_call.1} parent=5 // pred_region
        %s10795 = ssub.s32 %s18, 2
        // Predicated region
        $region65: #{tpu_custom_call.1} parent=63 // pred_check
          %p10796 = pneg %p150
        $region66: #{tpu_custom_call.1} parent=63 // pred_check_branch
          %10798 = sbr.rel (%p10796) target = $region68
        $region67: #{tpu_custom_call.1} parent=63 // pred_region
          %s10799 = sand.u32 %s135, 1
          %s10800 = scalar_lea.sflag [#allocation6], %s10799
          %s10801 = sand.u32 %s135, 1
          %s10802 = smul.addr %s10801, 192
          %s10803 = scalar_lea.vmem [#allocation12], %s10802
          %10804 = dma.done %s10800, 3072
        $region68: #{tpu_custom_call.1} parent=63 // pred_fallthru
          _
      $region64: #{tpu_custom_call.1} parent=5 // pred_fallthru
        _
    $region6: #{tpu_custom_call.1} parent=1 // loop_footer
      %s22 = sadd.s32 1, %s18
    $region7: #{tpu_custom_call.1} parent=1 // loop_footer_branch
      %17 = sbr.rel target = $region3
    $region8: #{tpu_custom_call.1} parent=1 // loop_exit
      _
    %10805 = vsyncpa [#allocation5], 1
    %s10806 = scalar_lea.sflag [#allocation5], 1
    %10807 = vsyncpa %s10806, 1
    %10808 = vsyncpa [#allocation8], 1
    %10809 = vsyncpa [#allocation11], 1
    %10810 = vsyncpa [#allocation6], 1
    %s10811 = scalar_lea.sflag [#allocation6], 1
    %10812 = vsyncpa %s10811, 1

</llo_original>
